<compile_context>
chip_gen: v6e
topology: v6e:2x2x1
jax: 0.10.0
libtpu: 0.0.40
codegen_flags: <defaults>
</compile_context>

<pallas_src>
import functools
import numpy as np
import jax
import jax.numpy as jnp
from jax.experimental import pallas as pl
from jax.experimental.pallas import tpu as pltpu


# Gate-matmul operand precision inside the recurrent kernel (mirrored by the pure-JAX
# reference).  Set to jnp.float32 to validate at full precision.
GATE_DTYPE = jnp.bfloat16


# ----------------------------------------------------------------------------- params
def _xavier(key, shape):
    fan_out, fan_in = shape[0], shape[1]
    bound = float(np.sqrt(6.0 / (fan_in + fan_out)))
    return jax.random.uniform(key, shape, jnp.float32, -bound, bound)


def init_params(key, hidden, input_size):
    D2 = hidden // 2
    keys = iter(jax.random.split(key, 32))
    p = {}
    for g in ("i", "f", "c", "o"):
        p[f"W_{g}"] = _xavier(next(keys), (hidden, hidden))
        p[f"U_{g}"] = _xavier(next(keys), (hidden, hidden))
        p[f"V_{g}"] = _xavier(next(keys), (hidden, hidden))
        p[f"b_{g}"] = jnp.zeros((hidden,), jnp.float32)
    p["w_att"] = _xavier(next(keys), (1, D2))
    p["W_e"] = _xavier(next(keys), (D2, hidden))
    p["U_e"] = _xavier(next(keys), (D2, D2))
    p["b_e"] = jnp.zeros((D2,), jnp.float32)
    p["fc2_w"] = _xavier(next(keys), (2, hidden))
    p["fc2_b"] = jnp.zeros((2,), jnp.float32)
    p["bn_obj_w"] = _xavier(next(keys), (D2, input_size))
    p["bn_obj_b"] = jnp.zeros((D2,), jnp.float32)
    p["bn_ff_w"] = _xavier(next(keys), (D2, input_size))
    p["bn_ff_b"] = jnp.zeros((D2,), jnp.float32)
    # Note: the reference module also defines fc1 (unused in forward) — omitted.
    return p


def build_kernel_weights(p, hidden):
    """Stack per-gate weights as columns [i | f | c | o] and split the input rows.

    x = cat([phi, X_F]) so W rows 0:D2 act on phi, rows D2:H on X_F.  The candidate
    gate has no peephole (c) term in the reference module -> zero block in Vg.
    """
    H = hidden
    D2 = H // 2

    def gate_cols(mats):
        return jnp.concatenate([m.T for m in mats], axis=1)  # (H, 4H)

    W_all = gate_cols([p["W_i"], p["W_f"], p["W_c"], p["W_o"]])
    U_all = gate_cols([p["U_i"], p["U_f"], p["U_c"], p["U_o"]])
    V_all = gate_cols([p["V_i"], p["V_f"], jnp.zeros_like(p["V_c"]), p["V_o"]])
    # shape asserts guard against silent mis-wiring of the [phi|xf] row split and
    # the [i|f|c|o] column order.
    assert W_all.shape == (H, 4 * H)
    assert U_all.shape == (H, 4 * H)
    assert V_all.shape == (H, 4 * H)
    return dict(
        Ue_t=p["U_e"].T,                            # (D2, D2)
        be=p["b_e"][None, :],                       # (1, D2)
        We_t=p["W_e"].T,                            # (H, D2)
        watt=p["w_att"],                            # (1, D2)
        Wg_phi=W_all[:D2].astype(GATE_DTYPE),       # (D2, 4H)  rows acting on phi
        Wg_xf=W_all[D2:].astype(GATE_DTYPE),        # (D2, 4H)  rows acting on X_F
        Ug=U_all.astype(GATE_DTYPE),                # (H, 4H)   rows acting on h
        Vg=V_all.astype(GATE_DTYPE),                # (H, 4H)   rows acting on c (peephole)
        bg=jnp.concatenate([p["b_i"], p["b_f"], p["b_c"], p["b_o"]])[None, :],  # (1,4H)
        Wfc2_t=p["fc2_w"].T,                        # (H, 2)
        bfc2=p["fc2_b"][None, :],                   # (1, 2)
    )


def _round_up(x, m):
    return ((x + m - 1) // m) * m


def _pick_chunk(T, max_chunk=8):
    for c in range(min(T, max_chunk), 0, -1):
        if T % c == 0:
            return c
    return 1


# ------------------------------------------------------------------ bottleneck kernel
def _bottleneck_kernel(x_ref, w_ref, b_ref, o_ref):
    # bf16 cast happens on the VMEM tile (no extra HBM pass); f32 accumulate + bias + ReLU.
    x = x_ref[...].astype(jnp.bfloat16)
    y = jnp.dot(x, w_ref[...], preferred_element_type=jnp.float32) + b_ref[...]
    o_ref[...] = jnp.maximum(y, 0.0)


def bottleneck(x, w_t, b_row, *, tm_max=512):
    """relu(x @ w_t + b): x (M, 4096) f32, w_t (4096, D2).  Row-tiled, pipelined."""
    M, K = x.shape
    D2 = w_t.shape[1]
    tm = min(tm_max, _round_up(M, 8))
    return pl.pallas_call(
        _bottleneck_kernel,
        out_shape=jax.ShapeDtypeStruct((M, D2), jnp.float32),
        grid=(pl.cdiv(M, tm),),                       # ragged tail = partial last block
        in_specs=[
            pl.BlockSpec((tm, K), lambda i: (i, 0)),
            pl.BlockSpec((K, D2), lambda i: (0, 0)),
            pl.BlockSpec((1, D2), lambda i: (0, 0)),
        ],
        out_specs=pl.BlockSpec((tm, D2), lambda i: (i, 0)),
        compiler_params=pltpu.CompilerParams(
            dimension_semantics=("parallel",),
            # 512x4096 f32 tile x2 buffers + bf16 weight + outputs ~ 17.3 MiB.
            vmem_limit_bytes=32 * 1024 * 1024),
    )(x, w_t.astype(jnp.bfloat16), b_row)


# -------------------------------------------------------------- recurrent DSA-LSTM kernel
def dsa_recurrent_kernel(obj_ref, mask_ref, ff_ref, h0_ref, c0_ref,
                         Ue_ref, be_ref, We_ref, watt_ref,
                         Wphi_ref, Wxf_ref, Ug_ref, Vg_ref, bg_ref,
                         hall_ref, hN_ref, cN_ref,
                         h_state, c_state):
    TC = hall_ref.shape[0]          # timesteps in this chunk (static)
    B, H = hN_ref.shape
    N = obj_ref.shape[2]
    D2 = obj_ref.shape[3]

    @pl.when(pl.program_id(0) == 0)
    def _():
        h_state[...] = h0_ref[...]
        c_state[...] = c0_ref[...]

    # loop-invariant weights: load once, outside the unrolled time loop
    Ue = Ue_ref[...]
    be = be_ref[...]
    We = We_ref[...]
    watt = watt_ref[...]            # (1, D2): broadcasts over (B, N, D2)
    Wphi = Wphi_ref[...]
    Wxf = Wxf_ref[...]
    Ug = Ug_ref[...]
    Vg = Vg_ref[...]
    bg = bg_ref[...]

    h = h_state[...]
    c = c_state[...]

    # Fully unrolled time loop (chunk is small); all ref indices are static.
    for t in range(TC):
        xj = obj_ref[:, t]          # (B, N, D2)  batch-major block, T walked by index_map
        xm = mask_ref[t]            # (B, N)
        xf = ff_ref[t]              # (B, D2)

        # ---- soft attention over detected objects ----
        # h-independent projection x_j @ U_e^T + b_e recomputed in VMEM (never hits HBM)
        xjp = jnp.dot(xj.reshape(B * N, D2), Ue,
                      preferred_element_type=jnp.float32).reshape(B, N, D2)
        h_proj = jnp.dot(h, We, preferred_element_type=jnp.float32)     # (B, D2)
        tv = jnp.tanh(h_proj[:, None, :] + xjp + be)                    # (B, N, D2)
        e = jnp.sum(tv * watt, axis=-1)                                  # (B, N)
        e = jnp.where(xm > 0.5, e, -1e9)                                 # masked_fill(~mask)
        e = e - jnp.max(e, axis=-1, keepdims=True)
        pexp = jnp.exp(e)
        a = pexp * pl.reciprocal(jnp.sum(pexp, axis=-1, keepdims=True), approx=True)
        phi = jnp.sum(a[:, :, None] * xj, axis=1)                        # (B, D2)

        # ---- peephole LSTM: split row dots (no per-step lane concat), bf16 operands ----
        gates = (jnp.dot(phi.astype(Wphi.dtype), Wphi, preferred_element_type=jnp.float32)
                 + jnp.dot(xf.astype(Wxf.dtype), Wxf, preferred_element_type=jnp.float32)
                 + jnp.dot(h.astype(Ug.dtype), Ug, preferred_element_type=jnp.float32)
                 + jnp.dot(c.astype(Vg.dtype), Vg, preferred_element_type=jnp.float32)
                 + bg)                                                   # (B, 4H)
        i_g = jax.nn.sigmoid(gates[:, 0:H])
        f_g = jax.nn.sigmoid(gates[:, H:2 * H])
        g_g = jnp.tanh(gates[:, 2 * H:3 * H])
        o_g = jax.nn.sigmoid(gates[:, 3 * H:4 * H])
        c = f_g * c + i_g * g_g
        h = o_g * jnp.tanh(c)

        hall_ref[t] = h             # lane-dense (B, 128) store per step

    # carry state to the next chunk and expose final state
    h_state[...] = h
    c_state[...] = c
    hN_ref[...] = h
    cN_ref[...] = c


def dsa_recurrent(obj, mask_t, ff_t, h0, c0, kw, *, hidden, time_chunk=None):
    B, T, N, D2 = obj.shape
    H = hidden
    tc = _pick_chunk(T, 8) if time_chunk is None else time_chunk
    assert T % tc == 0, "time_chunk must divide n_frames"
    n_chunks = T // tc

    def fixed(shape):
        return pl.BlockSpec(shape, lambda i, _s=shape: (0,) * len(_s))

    return pl.pallas_call(
        dsa_recurrent_kernel,
        out_shape=(jax.ShapeDtypeStruct((T, B, H), jnp.float32),   # all h_t (lane-dense)
                   jax.ShapeDtypeStruct((B, H), jnp.float32),      # final h
                   jax.ShapeDtypeStruct((B, H), jnp.float32)),     # final c
        grid=(n_chunks,),
        in_specs=[
            pl.BlockSpec((B, tc, N, D2), lambda i: (0, i, 0, 0)),  # obj stays batch-major
            pl.BlockSpec((tc, B, N), lambda i: (i, 0, 0)),
            pl.BlockSpec((tc, B, D2), lambda i: (i, 0, 0)),
            fixed((B, H)), fixed((B, H)),
            fixed((D2, D2)), fixed((1, D2)), fixed((H, D2)), fixed((1, D2)),
            fixed((D2, 4 * H)), fixed((D2, 4 * H)),
            fixed((H, 4 * H)), fixed((H, 4 * H)), fixed((1, 4 * H)),
        ],
        out_specs=(
            pl.BlockSpec((tc, B, H), lambda i: (i, 0, 0)),
            fixed((B, H)), fixed((B, H)),
        ),
        scratch_shapes=[pltpu.VMEM((B, H), jnp.float32),           # h carried across chunks
                        pltpu.VMEM((B, H), jnp.float32)],          # c carried across chunks
        compiler_params=pltpu.CompilerParams(
            dimension_semantics=("arbitrary",)),
    )(obj, mask_t, ff_t, h0, c0,
      kw["Ue_t"], kw["be"], kw["We_t"], kw["watt"],
      kw["Wg_phi"], kw["Wg_xf"], kw["Ug"], kw["Vg"], kw["bg"])


# ------------------------------------------------------------------------- full forward
@functools.partial(jax.jit, static_argnames=("hidden", "time_chunk"))
def dsa_rnn_forward(obj_feats, mask, ff_feats, params, hidden=128, time_chunk=None):
    """obj_feats (B,T,N,4096), mask (B,T,N) bool, ff_feats (B,T,4096)."""
    B, T, N, F = obj_feats.shape
    D2 = hidden // 2
    kw = build_kernel_weights(params, hidden)

    # bottleneck_obj / bottleneck_fullframe: Linear(4096 -> H/2) + ReLU (Dropout(0.0) = id)
    obj_bn = bottleneck(obj_feats.reshape(B * T * N, F),
                        params["bn_obj_w"].T, params["bn_obj_b"][None, :])
    ff_bn = bottleneck(ff_feats.reshape(B * T, F),
                       params["bn_ff_w"].T, params["bn_ff_b"][None, :])

    obj_bn = obj_bn.reshape(B, T, N, D2)                   # big tensor: NO transpose
    ff_t = ff_bn.reshape(B, T, D2).transpose(1, 0, 2)      # (T,B,D2)  tiny
    mask_t = mask.astype(jnp.float32).transpose(1, 0, 2)   # (T,B,N)   tiny

    h0 = jnp.zeros((B, hidden), jnp.float32)
    c0 = jnp.zeros((B, hidden), jnp.float32)
    h_all, h_fin, c_fin = dsa_recurrent(obj_bn, mask_t, ff_t, h0, c0, kw,
                                        hidden=hidden, time_chunk=time_chunk)

    # fc2 (output width 2) once over all timesteps, outside the serial loop
    scores = jnp.einsum("tbh,hk->tbk", h_all, kw["Wfc2_t"]) + kw["bfc2"]   # (T,B,2)
    output = scores.transpose(1, 0, 2)                                      # (B,T,2)
    return output, (h_fin[:, None, :], c_fin[:, None, :])                   # (B,1,H) each


# ------------------------------------------------- synthetic (frozen) "object detector"
def synthetic_object_detector(x, n_obj, feat_dim, key):
    # TODO(synk): the original `object_detector` is an external frozen module with no
    # definition in the source; replaced with a deterministic random-projection feature
    # extractor so the pipeline still consumes the raw video tensor x.
    B, T, C, H, W = x.shape
    flat = x.reshape(B, T, C * H * W)
    k1, k2, k3 = jax.random.split(key, 3)
    P_obj = jax.random.normal(k1, (C * H * W, feat_dim), jnp.float32) / np.sqrt(C * H * W)
    P_ff = jax.random.normal(k2, (C * H * W, feat_dim), jnp.float32) / np.sqrt(C * H * W)
    obj_emb = jax.random.normal(k3, (n_obj, feat_dim), jnp.float32) * 0.5
    base = jnp.einsum("btk,kf->btf", flat, P_obj)
    obj_feats = base[:, :, None, :] + obj_emb[None, None, :, :]          # (B,T,N,F)
    ff_feats = jnp.einsum("btk,kf->btf", flat, P_ff)                     # (B,T,F)
    n_valid = (3 + jnp.arange(B)[:, None] + jnp.arange(T)[None, :]) % n_obj + 1
    mask = jnp.arange(n_obj)[None, None, :] < n_valid[:, :, None]        # (B,T,N) bool
    return obj_feats, mask, ff_feats


# ---------------------------------------------------------------- pure-JAX reference
def reference_forward(obj_feats, mask, ff_feats, p, hidden):
    # Mirrors the kernels' matmul precision (bf16 operands, f32 accumulation) so the
    # comparison verifies kernel logic rather than dtype drift.  Set GATE_DTYPE=float32
    # (and drop the bf16 casts below) to validate against full f32 semantics.
    B, T, N, F = obj_feats.shape
    obj_bn = jax.nn.relu(
        jnp.einsum("btnf,df->btnd", obj_feats.astype(jnp.bfloat16),
                   p["bn_obj_w"].astype(jnp.bfloat16),
                   preferred_element_type=jnp.float32) + p["bn_obj_b"])
    ff_bn = jax.nn.relu(
        jnp.einsum("btf,df->btd", ff_feats.astype(jnp.bfloat16),
                   p["bn_ff_w"].astype(jnp.bfloat16),
                   preferred_element_type=jnp.float32) + p["bn_ff_b"])

    def g(a, w):  # gate matmul at kernel precision
        return jnp.dot(a.astype(GATE_DTYPE), w.T.astype(GATE_DTYPE),
                       preferred_element_type=jnp.float32)

    h = jnp.zeros((B, hidden), jnp.float32)
    c = jnp.zeros((B, hidden), jnp.float32)
    outs = []
    for t in range(T):
        xj, xm, xf = obj_bn[:, t], mask[:, t], ff_bn[:, t]
        hp = h @ p["W_e"].T
        xp = jnp.einsum("bnd,ed->bne", xj, p["U_e"])
        tv = jnp.tanh(hp[:, None, :] + xp + p["b_e"])
        e = jnp.einsum("bnd,d->bn", tv, p["w_att"][0])
        e = jnp.where(xm, e, -1e9)
        a = jax.nn.softmax(e, axis=1)
        phi = jnp.einsum("bn,bnd->bd", a, xj)
        xcat = jnp.concatenate([phi, xf], axis=1)
        i_g = jax.nn.sigmoid(g(xcat, p["W_i"]) + g(h, p["U_i"]) + g(c, p["V_i"]) + p["b_i"])
        f_g = jax.nn.sigmoid(g(xcat, p["W_f"]) + g(h, p["U_f"]) + g(c, p["V_f"]) + p["b_f"])
        g_g = jnp.tanh(g(xcat, p["W_c"]) + g(h, p["U_c"]) + p["b_c"])
        o_g = jax.nn.sigmoid(g(xcat, p["W_o"]) + g(h, p["U_o"]) + g(c, p["V_o"]) + p["b_o"])
        c = f_g * c + i_g * g_g
        h = o_g * jnp.tanh(c)
        outs.append(h @ p["fc2_w"].T + p["fc2_b"])
    return jnp.stack(outs, axis=1), (h, c)


# --------------------------------------------------------------------------------- main
if __name__ == "__main__":
    B, T, C, HH, WW = 2, 8, 4, 16, 16
    N_OBJ = 8
    FEAT = 4096       # module asserts input_size == 4096
    HIDDEN = 128

    root = jax.random.PRNGKey(0)
    k_param, k_x, k_det = jax.random.split(root, 3)
    params = init_params(k_param, HIDDEN, FEAT)
    x = jax.random.normal(k_x, (B, T, C, HH, WW), jnp.float32)

    obj_feats, mask, ff_feats = synthetic_object_detector(x, N_OBJ, FEAT, k_det)

    # time_chunk=4 -> 2 grid chunks: exercises the VMEM-carried h/c across grid steps.
    out, (h_n, c_n) = dsa_rnn_forward(obj_feats, mask, ff_feats, params,
                                      hidden=HIDDEN, time_chunk=4)
    jax.block_until_ready((out, h_n, c_n))

    ref_out, (ref_h, ref_c) = reference_forward(obj_feats, mask, ff_feats, params, HIDDEN)
    assert out.shape == (B, T, 2)
    assert h_n.shape == (B, 1, HIDDEN) and c_n.shape == (B, 1, HIDDEN)
    max_diff = float(jnp.max(jnp.abs(out - ref_out)))
    max_diff_h = float(jnp.max(jnp.abs(h_n[:, 0, :] - ref_h)))
    max_diff_c = float(jnp.max(jnp.abs(c_n[:, 0, :] - ref_c)))
    assert np.isfinite(max_diff) and max_diff < 2e-2, f"score mismatch {max_diff}"
    assert np.isfinite(max_diff_h) and max_diff_h < 2e-2, f"state mismatch {max_diff_h}"
    assert np.isfinite(max_diff_c) and max_diff_c < 2e-2, f"cell mismatch {max_diff_c}"
    print("KERNEL_OK")
</pallas_src>

<mosaic_0001>
module attributes {stable_mosaic.version = 11 : i64} {
  func.func @_bottleneck_kernel(%arg0: i32, %arg1: memref<128x4096xf32, #tpu.memory_space<vmem>>, %arg2: memref<4096x64xbf16, #tpu.memory_space<vmem>>, %arg3: memref<1x64xf32, #tpu.memory_space<vmem>>, %arg4: memref<128x64xf32, #tpu.memory_space<vmem>>) attributes {dimension_semantics = [#tpu.dimension_semantics<parallel>], iteration_bounds = array<i64: 1>, scalar_prefetch = 0 : i64, scratch_operands = 0 : i64, tpu.core_type = #tpu.core_type<tc>, window_params = [{transform_indices = @transform_0, window_bounds = array<i64: 128, 4096>}, {pipeline_mode = #tpu.pipeline_mode<synchronous>, transform_indices = @transform_1, window_bounds = array<i64: 4096, 64>}, {pipeline_mode = #tpu.pipeline_mode<synchronous>, transform_indices = @transform_2, window_bounds = array<i64: 1, 64>}, {transform_indices = @transform_3, window_bounds = array<i64: 128, 64>}]} {
    %c0 = arith.constant 0 : index
    %c0_0 = arith.constant 0 : index
    %0 = vector.load %arg1[%c0, %c0_0] : memref<128x4096xf32, #tpu.memory_space<vmem>>, vector<128x4096xf32>
    %1 = arith.truncf %0 : vector<128x4096xf32> to vector<128x4096xbf16>
    %c0_1 = arith.constant 0 : index
    %c0_2 = arith.constant 0 : index
    %2 = vector.load %arg2[%c0_1, %c0_2] : memref<4096x64xbf16, #tpu.memory_space<vmem>>, vector<4096x64xbf16>
    %cst = arith.constant dense<0.000000e+00> : vector<128x64xf32>
    %3 = tpu.matmul %1, %2, %cst {dimension_numbers = #tpu.dot_dimension_numbers<[1], [0], [0], [1], [0, 0, 1, 1], [], []>} : vector<128x4096xbf16>, vector<4096x64xbf16>, vector<128x64xf32> -> vector<128x64xf32>
    %c0_3 = arith.constant 0 : index
    %c0_4 = arith.constant 0 : index
    %4 = vector.load %arg3[%c0_3, %c0_4] : memref<1x64xf32, #tpu.memory_space<vmem>>, vector<1x64xf32>
    %5 = vector.broadcast %4 : vector<1x64xf32> to vector<128x64xf32>
    %6 = arith.addf %3, %5 : vector<128x64xf32>
    %cst_5 = arith.constant 0.000000e+00 : f32
    %7 = vector.broadcast %cst_5 : f32 to vector<128x64xf32>
    %8 = arith.maximumf %6, %7 : vector<128x64xf32>
    %c0_6 = arith.constant 0 : index
    %c0_7 = arith.constant 0 : index
    %9 = vector.load %arg4[%c0_6, %c0_7] : memref<128x64xf32, #tpu.memory_space<vmem>>, vector<128x64xf32>
    tpu.vector_store %arg4[%c0_6, %c0_7], %8 {strides = array<i32>} : memref<128x64xf32, #tpu.memory_space<vmem>>, vector<128x64xf32>,
    return
  }
  func.func @transform_0(%arg0: i32) -> (i32, i32) {
    %c0_i32 = arith.constant 0 : i32
    %c0_i32_0 = arith.constant 0 : i32
    return %arg0, %c0_i32 : i32, i32
  }
  func.func @transform_1(%arg0: i32) -> (i32, i32) {
    %c0_i32 = arith.constant 0 : i32
    %c0_i32_0 = arith.constant 0 : i32
    %c0_i32_1 = arith.constant 0 : i32
    return %c0_i32, %c0_i32_0 : i32, i32
  }
  func.func @transform_2(%arg0: i32) -> (i32, i32) {
    %c0_i32 = arith.constant 0 : i32
    %c0_i32_0 = arith.constant 0 : i32
    %c0_i32_1 = arith.constant 0 : i32
    return %c0_i32, %c0_i32_0 : i32, i32
  }
  func.func @transform_3(%arg0: i32) -> (i32, i32) {
    %c0_i32 = arith.constant 0 : i32
    %c0_i32_0 = arith.constant 0 : i32
    return %arg0, %c0_i32 : i32, i32
  }
}

module attributes {stable_mosaic.version = 11 : i64} {
  func.func @_bottleneck_kernel(%arg0: i32, %arg1: memref<16x4096xf32, #tpu.memory_space<vmem>>, %arg2: memref<4096x64xbf16, #tpu.memory_space<vmem>>, %arg3: memref<1x64xf32, #tpu.memory_space<vmem>>, %arg4: memref<16x64xf32, #tpu.memory_space<vmem>>) attributes {dimension_semantics = [#tpu.dimension_semantics<parallel>], iteration_bounds = array<i64: 1>, scalar_prefetch = 0 : i64, scratch_operands = 0 : i64, tpu.core_type = #tpu.core_type<tc>, window_params = [{transform_indices = @transform_0, window_bounds = array<i64: 16, 4096>}, {pipeline_mode = #tpu.pipeline_mode<synchronous>, transform_indices = @transform_1, window_bounds = array<i64: 4096, 64>}, {pipeline_mode = #tpu.pipeline_mode<synchronous>, transform_indices = @transform_2, window_bounds = array<i64: 1, 64>}, {transform_indices = @transform_3, window_bounds = array<i64: 16, 64>}]} {
    %c0 = arith.constant 0 : index
    %c0_0 = arith.constant 0 : index
    %0 = vector.load %arg1[%c0, %c0_0] : memref<16x4096xf32, #tpu.memory_space<vmem>>, vector<16x4096xf32>
    %1 = arith.truncf %0 : vector<16x4096xf32> to vector<16x4096xbf16>
    %c0_1 = arith.constant 0 : index
    %c0_2 = arith.constant 0 : index
    %2 = vector.load %arg2[%c0_1, %c0_2] : memref<4096x64xbf16, #tpu.memory_space<vmem>>, vector<4096x64xbf16>
    %cst = arith.constant dense<0.000000e+00> : vector<16x64xf32>
    %3 = tpu.matmul %1, %2, %cst {dimension_numbers = #tpu.dot_dimension_numbers<[1], [0], [0], [1], [0, 0, 1, 1], [], []>} : vector<16x4096xbf16>, vector<4096x64xbf16>, vector<16x64xf32> -> vector<16x64xf32>
    %c0_3 = arith.constant 0 : index
    %c0_4 = arith.constant 0 : index
    %4 = vector.load %arg3[%c0_3, %c0_4] : memref<1x64xf32, #tpu.memory_space<vmem>>, vector<1x64xf32>
    %5 = vector.broadcast %4 : vector<1x64xf32> to vector<16x64xf32>
    %6 = arith.addf %3, %5 : vector<16x64xf32>
    %cst_5 = arith.constant 0.000000e+00 : f32
    %7 = vector.broadcast %cst_5 : f32 to vector<16x64xf32>
    %8 = arith.maximumf %6, %7 : vector<16x64xf32>
    %c0_6 = arith.constant 0 : index
    %c0_7 = arith.constant 0 : index
    %9 = vector.load %arg4[%c0_6, %c0_7] : memref<16x64xf32, #tpu.memory_space<vmem>>, vector<16x64xf32>
    tpu.vector_store %arg4[%c0_6, %c0_7], %8 {strides = array<i32>} : memref<16x64xf32, #tpu.memory_space<vmem>>, vector<16x64xf32>,
    return
  }
  func.func @transform_0(%arg0: i32) -> (i32, i32) {
    %c0_i32 = arith.constant 0 : i32
    %c0_i32_0 = arith.constant 0 : i32
    return %arg0, %c0_i32 : i32, i32
  }
  func.func @transform_1(%arg0: i32) -> (i32, i32) {
    %c0_i32 = arith.constant 0 : i32
    %c0_i32_0 = arith.constant 0 : i32
    %c0_i32_1 = arith.constant 0 : i32
    return %c0_i32, %c0_i32_0 : i32, i32
  }
  func.func @transform_2(%arg0: i32) -> (i32, i32) {
    %c0_i32 = arith.constant 0 : i32
    %c0_i32_0 = arith.constant 0 : i32
    %c0_i32_1 = arith.constant 0 : i32
    return %c0_i32, %c0_i32_0 : i32, i32
  }
  func.func @transform_3(%arg0: i32) -> (i32, i32) {
    %c0_i32 = arith.constant 0 : i32
    %c0_i32_0 = arith.constant 0 : i32
    return %arg0, %c0_i32 : i32, i32
  }
}

module attributes {stable_mosaic.version = 11 : i64} {
  func.func @dsa_recurrent_kernel(%arg0: i32, %arg1: memref<2x4x8x64xf32, #tpu.memory_space<vmem>>, %arg2: memref<4x2x8xf32, #tpu.memory_space<vmem>>, %arg3: memref<4x2x64xf32, #tpu.memory_space<vmem>>, %arg4: memref<2x128xf32, #tpu.memory_space<vmem>>, %arg5: memref<2x128xf32, #tpu.memory_space<vmem>>, %arg6: memref<64x64xf32, #tpu.memory_space<vmem>>, %arg7: memref<1x64xf32, #tpu.memory_space<vmem>>, %arg8: memref<128x64xf32, #tpu.memory_space<vmem>>, %arg9: memref<1x64xf32, #tpu.memory_space<vmem>>, %arg10: memref<64x512xbf16, #tpu.memory_space<vmem>>, %arg11: memref<64x512xbf16, #tpu.memory_space<vmem>>, %arg12: memref<128x512xbf16, #tpu.memory_space<vmem>>, %arg13: memref<128x512xbf16, #tpu.memory_space<vmem>>, %arg14: memref<1x512xf32, #tpu.memory_space<vmem>>, %arg15: memref<4x2x128xf32, #tpu.memory_space<vmem>>, %arg16: memref<2x128xf32, #tpu.memory_space<vmem>>, %arg17: memref<2x128xf32, #tpu.memory_space<vmem>>, %arg18: memref<2x128xf32, #tpu.memory_space<vmem>>, %arg19: memref<2x128xf32, #tpu.memory_space<vmem>>) attributes {dimension_semantics = [#tpu.dimension_semantics<arbitrary>], iteration_bounds = array<i64: 2>, scalar_prefetch = 0 : i64, scratch_operands = 2 : i64, tpu.core_type = #tpu.core_type<tc>, window_params = [{transform_indices = @transform_0, window_bounds = array<i64: 2, 4, 8, 64>}, {transform_indices = @transform_1, window_bounds = array<i64: 4, 2, 8>}, {transform_indices = @transform_2, window_bounds = array<i64: 4, 2, 64>}, {pipeline_mode = #tpu.pipeline_mode<synchronous>, transform_indices = @transform_3, window_bounds = array<i64: 2, 128>}, {pipeline_mode = #tpu.pipeline_mode<synchronous>, transform_indices = @transform_4, window_bounds = array<i64: 2, 128>}, {pipeline_mode = #tpu.pipeline_mode<synchronous>, transform_indices = @transform_5, window_bounds = array<i64: 64, 64>}, {pipeline_mode = #tpu.pipeline_mode<synchronous>, transform_indices = @transform_6, window_bounds = array<i64: 1, 64>}, {pipeline_mode = #tpu.pipeline_mode<synchronous>, transform_indices = @transform_7, window_bounds = array<i64: 128, 64>}, {pipeline_mode = #tpu.pipeline_mode<synchronous>, transform_indices = @transform_8, window_bounds = array<i64: 1, 64>}, {pipeline_mode = #tpu.pipeline_mode<synchronous>, transform_indices = @transform_9, window_bounds = array<i64: 64, 512>}, {pipeline_mode = #tpu.pipeline_mode<synchronous>, transform_indices = @transform_10, window_bounds = array<i64: 64, 512>}, {pipeline_mode = #tpu.pipeline_mode<synchronous>, transform_indices = @transform_11, window_bounds = array<i64: 128, 512>}, {pipeline_mode = #tpu.pipeline_mode<synchronous>, transform_indices = @transform_12, window_bounds = array<i64: 128, 512>}, {pipeline_mode = #tpu.pipeline_mode<synchronous>, transform_indices = @transform_13, window_bounds = array<i64: 1, 512>}, {transform_indices = @transform_14, window_bounds = array<i64: 4, 2, 128>}, {pipeline_mode = #tpu.pipeline_mode<synchronous>, transform_indices = @transform_15, window_bounds = array<i64: 2, 128>}, {pipeline_mode = #tpu.pipeline_mode<synchronous>, transform_indices = @transform_16, window_bounds = array<i64: 2, 128>}]} {
    %c0_i32 = arith.constant 0 : i32
    %0 = arith.cmpi eq, %arg0, %c0_i32 : i32
    %1 = arith.extui %0 : i1 to i32
    %c0_i32_0 = arith.constant 0 : i32
    %2 = arith.cmpi ne, %1, %c0_i32_0 : i32
    scf.if %2 {
      %c0_138 = arith.constant 0 : index
      %c0_139 = arith.constant 0 : index
      %338 = vector.load %arg4[%c0_138, %c0_139] : memref<2x128xf32, #tpu.memory_space<vmem>>, vector<2x128xf32>
      %c0_140 = arith.constant 0 : index
      %c0_141 = arith.constant 0 : index
      %339 = vector.load %arg18[%c0_140, %c0_141] : memref<2x128xf32, #tpu.memory_space<vmem>>, vector<2x128xf32>
      tpu.vector_store %arg18[%c0_140, %c0_141], %338 {strides = array<i32>} : memref<2x128xf32, #tpu.memory_space<vmem>>, vector<2x128xf32>,
      %c0_142 = arith.constant 0 : index
      %c0_143 = arith.constant 0 : index
      %340 = vector.load %arg5[%c0_142, %c0_143] : memref<2x128xf32, #tpu.memory_space<vmem>>, vector<2x128xf32>
      %c0_144 = arith.constant 0 : index
      %c0_145 = arith.constant 0 : index
      %341 = vector.load %arg19[%c0_144, %c0_145] : memref<2x128xf32, #tpu.memory_space<vmem>>, vector<2x128xf32>
      tpu.vector_store %arg19[%c0_144, %c0_145], %340 {strides = array<i32>} : memref<2x128xf32, #tpu.memory_space<vmem>>, vector<2x128xf32>,
    } else {
    }
    %c0 = arith.constant 0 : index
    %c0_1 = arith.constant 0 : index
    %3 = vector.load %arg6[%c0, %c0_1] : memref<64x64xf32, #tpu.memory_space<vmem>>, vector<64x64xf32>
    %c0_2 = arith.constant 0 : index
    %c0_3 = arith.constant 0 : index
    %4 = vector.load %arg7[%c0_2, %c0_3] : memref<1x64xf32, #tpu.memory_space<vmem>>, vector<1x64xf32>
    %c0_4 = arith.constant 0 : index
    %c0_5 = arith.constant 0 : index
    %5 = vector.load %arg8[%c0_4, %c0_5] : memref<128x64xf32, #tpu.memory_space<vmem>>, vector<128x64xf32>
    %c0_6 = arith.constant 0 : index
    %c0_7 = arith.constant 0 : index
    %6 = vector.load %arg9[%c0_6, %c0_7] : memref<1x64xf32, #tpu.memory_space<vmem>>, vector<1x64xf32>
    %c0_8 = arith.constant 0 : index
    %c0_9 = arith.constant 0 : index
    %7 = vector.load %arg10[%c0_8, %c0_9] : memref<64x512xbf16, #tpu.memory_space<vmem>>, vector<64x512xbf16>
    %c0_10 = arith.constant 0 : index
    %c0_11 = arith.constant 0 : index
    %8 = vector.load %arg11[%c0_10, %c0_11] : memref<64x512xbf16, #tpu.memory_space<vmem>>, vector<64x512xbf16>
    %c0_12 = arith.constant 0 : index
    %c0_13 = arith.constant 0 : index
    %9 = vector.load %arg12[%c0_12, %c0_13] : memref<128x512xbf16, #tpu.memory_space<vmem>>, vector<128x512xbf16>
    %c0_14 = arith.constant 0 : index
    %c0_15 = arith.constant 0 : index
    %10 = vector.load %arg13[%c0_14, %c0_15] : memref<128x512xbf16, #tpu.memory_space<vmem>>, vector<128x512xbf16>
    %c0_16 = arith.constant 0 : index
    %c0_17 = arith.constant 0 : index
    %11 = vector.load %arg14[%c0_16, %c0_17] : memref<1x512xf32, #tpu.memory_space<vmem>>, vector<1x512xf32>
    %c0_18 = arith.constant 0 : index
    %c0_19 = arith.constant 0 : index
    %12 = vector.load %arg18[%c0_18, %c0_19] : memref<2x128xf32, #tpu.memory_space<vmem>>, vector<2x128xf32>
    %c0_20 = arith.constant 0 : index
    %c0_21 = arith.constant 0 : index
    %13 = vector.load %arg19[%c0_20, %c0_21] : memref<2x128xf32, #tpu.memory_space<vmem>>, vector<2x128xf32>
    %c0_22 = arith.constant 0 : index
    %c0_23 = arith.constant 0 : index
    %c0_24 = arith.constant 0 : index
    %c0_25 = arith.constant 0 : index
    %14 = vector.load %arg1[%c0_22, %c0_23, %c0_24, %c0_25] : memref<2x4x8x64xf32, #tpu.memory_space<vmem>>, vector<2x1x8x64xf32>
    %15 = vector.shape_cast %14 : vector<2x1x8x64xf32> to vector<2x8x64xf32>
    %c0_26 = arith.constant 0 : index
    %c0_27 = arith.constant 0 : index
    %c0_28 = arith.constant 0 : index
    %16 = vector.load %arg2[%c0_26, %c0_27, %c0_28] : memref<4x2x8xf32, #tpu.memory_space<vmem>>, vector<1x2x8xf32>
    %17 = vector.shape_cast %16 : vector<1x2x8xf32> to vector<2x8xf32>
    %c0_29 = arith.constant 0 : index
    %c0_30 = arith.constant 0 : index
    %c0_31 = arith.constant 0 : index
    %18 = vector.load %arg3[%c0_29, %c0_30, %c0_31] : memref<4x2x64xf32, #tpu.memory_space<vmem>>, vector<1x2x64xf32>
    %19 = vector.shape_cast %18 : vector<1x2x64xf32> to vector<2x64xf32>
    %20 = vector.shape_cast %15 : vector<2x8x64xf32> to vector<16x64xf32>
    %cst = arith.constant dense<0.000000e+00> : vector<16x64xf32>
    %21 = tpu.matmul %20, %3, %cst {dimension_numbers = #tpu.dot_dimension_numbers<[1], [0], [0], [1], [0, 0, 1, 1], [], []>} : vector<16x64xf32>, vector<64x64xf32>, vector<16x64xf32> -> vector<16x64xf32>
    %22 = vector.shape_cast %21 : vector<16x64xf32> to vector<2x8x64xf32>
    %cst_32 = arith.constant dense<0.000000e+00> : vector<2x64xf32>
    %23 = tpu.matmul %12, %5, %cst_32 {dimension_numbers = #tpu.dot_dimension_numbers<[1], [0], [0], [1], [0, 0, 1, 1], [], []>} : vector<2x128xf32>, vector<128x64xf32>, vector<2x64xf32> -> vector<2x64xf32>
    %24 = vector.shape_cast %23 : vector<2x64xf32> to vector<2x1x64xf32>
    %25 = vector.broadcast %24 : vector<2x1x64xf32> to vector<2x8x64xf32>
    %26 = arith.addf %25, %22 : vector<2x8x64xf32>
    %27 = vector.shape_cast %4 : vector<1x64xf32> to vector<1x1x64xf32>
    %28 = vector.broadcast %27 : vector<1x1x64xf32> to vector<2x8x64xf32>
    %29 = arith.addf %26, %28 : vector<2x8x64xf32>
    %30 = math.tanh %29 : vector<2x8x64xf32>
    %31 = vector.shape_cast %6 : vector<1x64xf32> to vector<1x1x64xf32>
    %32 = vector.broadcast %31 : vector<1x1x64xf32> to vector<2x8x64xf32>
    %33 = arith.mulf %30, %32 : vector<2x8x64xf32>
    %cst_33 = arith.constant dense<0.000000e+00> : vector<2x8xf32>
    %34 = vector.multi_reduction <add>, %33, %cst_33 [2] : vector<2x8x64xf32> to vector<2x8xf32>
    %cst_34 = arith.constant 5.000000e-01 : f32
    %35 = vector.broadcast %cst_34 : f32 to vector<2x8xf32>
    %36 = arith.cmpf ogt, %17, %35 : vector<2x8xf32>
    %cst_35 = arith.constant -1.000000e+09 : f32
    %37 = vector.broadcast %cst_35 : f32 to vector<2x8xf32>
    %38 = arith.select %36, %34, %37 : vector<2x8xi1>, vector<2x8xf32>
    %cst_36 = arith.constant dense<0xFF800000> : vector<2xf32>
    %39 = vector.multi_reduction <maximumf>, %38, %cst_36 [1] : vector<2x8xf32> to vector<2xf32>
    %40 = vector.shape_cast %39 : vector<2xf32> to vector<2x1xf32>
    %41 = vector.broadcast %40 : vector<2x1xf32> to vector<2x8xf32>
    %42 = arith.subf %38, %41 : vector<2x8xf32>
    %43 = math.exp %42 : vector<2x8xf32>
    %cst_37 = arith.constant dense<0.000000e+00> : vector<2xf32>
    %44 = vector.multi_reduction <add>, %43, %cst_37 [1] : vector<2x8xf32> to vector<2xf32>
    %45 = vector.shape_cast %44 : vector<2xf32> to vector<2x1xf32>
    %46 = tpu.reciprocal %45 {approx = true} : vector<2x1xf32> -> vector<2x1xf32>
    %47 = vector.broadcast %46 : vector<2x1xf32> to vector<2x8xf32>
    %48 = arith.mulf %43, %47 : vector<2x8xf32>
    %49 = vector.shape_cast %48 : vector<2x8xf32> to vector<2x8x1xf32>
    %50 = vector.broadcast %49 : vector<2x8x1xf32> to vector<2x8x64xf32>
    %51 = arith.mulf %50, %15 : vector<2x8x64xf32>
    %cst_38 = arith.constant dense<0.000000e+00> : vector<2x64xf32>
    %52 = vector.multi_reduction <add>, %51, %cst_38 [1] : vector<2x8x64xf32> to vector<2x64xf32>
    %53 = arith.truncf %52 : vector<2x64xf32> to vector<2x64xbf16>
    %cst_39 = arith.constant dense<0.000000e+00> : vector<2x512xf32>
    %54 = tpu.matmul %53, %7, %cst_39 {dimension_numbers = #tpu.dot_dimension_numbers<[1], [0], [0], [1], [0, 0, 1, 1], [], []>} : vector<2x64xbf16>, vector<64x512xbf16>, vector<2x512xf32> -> vector<2x512xf32>
    %55 = arith.truncf %19 : vector<2x64xf32> to vector<2x64xbf16>
    %cst_40 = arith.constant dense<0.000000e+00> : vector<2x512xf32>
    %56 = tpu.matmul %55, %8, %cst_40 {dimension_numbers = #tpu.dot_dimension_numbers<[1], [0], [0], [1], [0, 0, 1, 1], [], []>} : vector<2x64xbf16>, vector<64x512xbf16>, vector<2x512xf32> -> vector<2x512xf32>
    %57 = arith.addf %54, %56 : vector<2x512xf32>
    %58 = arith.truncf %12 : vector<2x128xf32> to vector<2x128xbf16>
    %cst_41 = arith.constant dense<0.000000e+00> : vector<2x512xf32>
    %59 = tpu.matmul %58, %9, %cst_41 {dimension_numbers = #tpu.dot_dimension_numbers<[1], [0], [0], [1], [0, 0, 1, 1], [], []>} : vector<2x128xbf16>, vector<128x512xbf16>, vector<2x512xf32> -> vector<2x512xf32>
    %60 = arith.addf %57, %59 : vector<2x512xf32>
    %61 = arith.truncf %13 : vector<2x128xf32> to vector<2x128xbf16>
    %cst_42 = arith.constant dense<0.000000e+00> : vector<2x512xf32>
    %62 = tpu.matmul %61, %10, %cst_42 {dimension_numbers = #tpu.dot_dimension_numbers<[1], [0], [0], [1], [0, 0, 1, 1], [], []>} : vector<2x128xbf16>, vector<128x512xbf16>, vector<2x512xf32> -> vector<2x512xf32>
    %63 = arith.addf %60, %62 : vector<2x512xf32>
    %64 = vector.broadcast %11 : vector<1x512xf32> to vector<2x512xf32>
    %65 = arith.addf %63, %64 : vector<2x512xf32>
    %66 = vector.extract_strided_slice %65 {offsets = [0, 0], sizes = [2, 128], strides = [1, 1]} : vector<2x512xf32> to vector<2x128xf32>
    %67 = arith.negf %66 : vector<2x128xf32>
    %68 = math.exp %67 : vector<2x128xf32>
    %cst_43 = arith.constant 1.000000e+00 : f32
    %69 = vector.broadcast %cst_43 : f32 to vector<2x128xf32>
    %70 = arith.addf %69, %68 : vector<2x128xf32>
    %71 = arith.divf %69, %70 : vector<2x128xf32>
    %72 = vector.extract_strided_slice %65 {offsets = [0, 128], sizes = [2, 128], strides = [1, 1]} : vector<2x512xf32> to vector<2x128xf32>
    %73 = arith.negf %72 : vector<2x128xf32>
    %74 = math.exp %73 : vector<2x128xf32>
    %cst_44 = arith.constant 1.000000e+00 : f32
    %75 = vector.broadcast %cst_44 : f32 to vector<2x128xf32>
    %76 = arith.addf %75, %74 : vector<2x128xf32>
    %77 = arith.divf %75, %76 : vector<2x128xf32>
    %78 = vector.extract_strided_slice %65 {offsets = [0, 256], sizes = [2, 128], strides = [1, 1]} : vector<2x512xf32> to vector<2x128xf32>
    %79 = math.tanh %78 : vector<2x128xf32>
    %80 = vector.extract_strided_slice %65 {offsets = [0, 384], sizes = [2, 128], strides = [1, 1]} : vector<2x512xf32> to vector<2x128xf32>
    %81 = arith.negf %80 : vector<2x128xf32>
    %82 = math.exp %81 : vector<2x128xf32>
    %cst_45 = arith.constant 1.000000e+00 : f32
    %83 = vector.broadcast %cst_45 : f32 to vector<2x128xf32>
    %84 = arith.addf %83, %82 : vector<2x128xf32>
    %85 = arith.divf %83, %84 : vector<2x128xf32>
    %86 = arith.mulf %77, %13 : vector<2x128xf32>
    %87 = arith.mulf %71, %79 : vector<2x128xf32>
    %88 = arith.addf %86, %87 : vector<2x128xf32>
    %89 = math.tanh %88 : vector<2x128xf32>
    %90 = arith.mulf %85, %89 : vector<2x128xf32>
    %c0_46 = arith.constant 0 : index
    %c0_47 = arith.constant 0 : index
    %c0_48 = arith.constant 0 : index
    %91 = vector.load %arg15[%c0_46, %c0_47, %c0_48] : memref<4x2x128xf32, #tpu.memory_space<vmem>>, vector<1x2x128xf32>
    %92 = vector.shape_cast %91 : vector<1x2x128xf32> to vector<2x128xf32>
    %93 = vector.shape_cast %90 : vector<2x128xf32> to vector<1x2x128xf32>
    tpu.vector_store %arg15[%c0_46, %c0_47, %c0_48], %93 {strides = array<i32>} : memref<4x2x128xf32, #tpu.memory_space<vmem>>, vector<1x2x128xf32>,
    %c0_49 = arith.constant 0 : index
    %c1 = arith.constant 1 : index
    %c0_50 = arith.constant 0 : index
    %c0_51 = arith.constant 0 : index
    %94 = vector.load %arg1[%c0_49, %c1, %c0_50, %c0_51] : memref<2x4x8x64xf32, #tpu.memory_space<vmem>>, vector<2x1x8x64xf32>
    %95 = vector.shape_cast %94 : vector<2x1x8x64xf32> to vector<2x8x64xf32>
    %c1_52 = arith.constant 1 : index
    %c0_53 = arith.constant 0 : index
    %c0_54 = arith.constant 0 : index
    %96 = vector.load %arg2[%c1_52, %c0_53, %c0_54] : memref<4x2x8xf32, #tpu.memory_space<vmem>>, vector<1x2x8xf32>
    %97 = vector.shape_cast %96 : vector<1x2x8xf32> to vector<2x8xf32>
    %c1_55 = arith.constant 1 : index
    %c0_56 = arith.constant 0 : index
    %c0_57 = arith.constant 0 : index
    %98 = vector.load %arg3[%c1_55, %c0_56, %c0_57] : memref<4x2x64xf32, #tpu.memory_space<vmem>>, vector<1x2x64xf32>
    %99 = vector.shape_cast %98 : vector<1x2x64xf32> to vector<2x64xf32>
    %100 = vector.shape_cast %95 : vector<2x8x64xf32> to vector<16x64xf32>
    %cst_58 = arith.constant dense<0.000000e+00> : vector<16x64xf32>
    %101 = tpu.matmul %100, %3, %cst_58 {dimension_numbers = #tpu.dot_dimension_numbers<[1], [0], [0], [1], [0, 0, 1, 1], [], []>} : vector<16x64xf32>, vector<64x64xf32>, vector<16x64xf32> -> vector<16x64xf32>
    %102 = vector.shape_cast %101 : vector<16x64xf32> to vector<2x8x64xf32>
    %cst_59 = arith.constant dense<0.000000e+00> : vector<2x64xf32>
    %103 = tpu.matmul %90, %5, %cst_59 {dimension_numbers = #tpu.dot_dimension_numbers<[1], [0], [0], [1], [0, 0, 1, 1], [], []>} : vector<2x128xf32>, vector<128x64xf32>, vector<2x64xf32> -> vector<2x64xf32>
    %104 = vector.shape_cast %103 : vector<2x64xf32> to vector<2x1x64xf32>
    %105 = vector.broadcast %104 : vector<2x1x64xf32> to vector<2x8x64xf32>
    %106 = arith.addf %105, %102 : vector<2x8x64xf32>
    %107 = vector.shape_cast %4 : vector<1x64xf32> to vector<1x1x64xf32>
    %108 = vector.broadcast %107 : vector<1x1x64xf32> to vector<2x8x64xf32>
    %109 = arith.addf %106, %108 : vector<2x8x64xf32>
    %110 = math.tanh %109 : vector<2x8x64xf32>
    %111 = vector.shape_cast %6 : vector<1x64xf32> to vector<1x1x64xf32>
    %112 = vector.broadcast %111 : vector<1x1x64xf32> to vector<2x8x64xf32>
    %113 = arith.mulf %110, %112 : vector<2x8x64xf32>
    %cst_60 = arith.constant dense<0.000000e+00> : vector<2x8xf32>
    %114 = vector.multi_reduction <add>, %113, %cst_60 [2] : vector<2x8x64xf32> to vector<2x8xf32>
    %cst_61 = arith.constant 5.000000e-01 : f32
    %115 = vector.broadcast %cst_61 : f32 to vector<2x8xf32>
    %116 = arith.cmpf ogt, %97, %115 : vector<2x8xf32>
    %cst_62 = arith.constant -1.000000e+09 : f32
    %117 = vector.broadcast %cst_62 : f32 to vector<2x8xf32>
    %118 = arith.select %116, %114, %117 : vector<2x8xi1>, vector<2x8xf32>
    %cst_63 = arith.constant dense<0xFF800000> : vector<2xf32>
    %119 = vector.multi_reduction <maximumf>, %118, %cst_63 [1] : vector<2x8xf32> to vector<2xf32>
    %120 = vector.shape_cast %119 : vector<2xf32> to vector<2x1xf32>
    %121 = vector.broadcast %120 : vector<2x1xf32> to vector<2x8xf32>
    %122 = arith.subf %118, %121 : vector<2x8xf32>
    %123 = math.exp %122 : vector<2x8xf32>
    %cst_64 = arith.constant dense<0.000000e+00> : vector<2xf32>
    %124 = vector.multi_reduction <add>, %123, %cst_64 [1] : vector<2x8xf32> to vector<2xf32>
    %125 = vector.shape_cast %124 : vector<2xf32> to vector<2x1xf32>
    %126 = tpu.reciprocal %125 {approx = true} : vector<2x1xf32> -> vector<2x1xf32>
    %127 = vector.broadcast %126 : vector<2x1xf32> to vector<2x8xf32>
    %128 = arith.mulf %123, %127 : vector<2x8xf32>
    %129 = vector.shape_cast %128 : vector<2x8xf32> to vector<2x8x1xf32>
    %130 = vector.broadcast %129 : vector<2x8x1xf32> to vector<2x8x64xf32>
    %131 = arith.mulf %130, %95 : vector<2x8x64xf32>
    %cst_65 = arith.constant dense<0.000000e+00> : vector<2x64xf32>
    %132 = vector.multi_reduction <add>, %131, %cst_65 [1] : vector<2x8x64xf32> to vector<2x64xf32>
    %133 = arith.truncf %132 : vector<2x64xf32> to vector<2x64xbf16>
    %cst_66 = arith.constant dense<0.000000e+00> : vector<2x512xf32>
    %134 = tpu.matmul %133, %7, %cst_66 {dimension_numbers = #tpu.dot_dimension_numbers<[1], [0], [0], [1], [0, 0, 1, 1], [], []>} : vector<2x64xbf16>, vector<64x512xbf16>, vector<2x512xf32> -> vector<2x512xf32>
    %135 = arith.truncf %99 : vector<2x64xf32> to vector<2x64xbf16>
    %cst_67 = arith.constant dense<0.000000e+00> : vector<2x512xf32>
    %136 = tpu.matmul %135, %8, %cst_67 {dimension_numbers = #tpu.dot_dimension_numbers<[1], [0], [0], [1], [0, 0, 1, 1], [], []>} : vector<2x64xbf16>, vector<64x512xbf16>, vector<2x512xf32> -> vector<2x512xf32>
    %137 = arith.addf %134, %136 : vector<2x512xf32>
    %138 = arith.truncf %90 : vector<2x128xf32> to vector<2x128xbf16>
    %cst_68 = arith.constant dense<0.000000e+00> : vector<2x512xf32>
    %139 = tpu.matmul %138, %9, %cst_68 {dimension_numbers = #tpu.dot_dimension_numbers<[1], [0], [0], [1], [0, 0, 1, 1], [], []>} : vector<2x128xbf16>, vector<128x512xbf16>, vector<2x512xf32> -> vector<2x512xf32>
    %140 = arith.addf %137, %139 : vector<2x512xf32>
    %141 = arith.truncf %88 : vector<2x128xf32> to vector<2x128xbf16>
    %cst_69 = arith.constant dense<0.000000e+00> : vector<2x512xf32>
    %142 = tpu.matmul %141, %10, %cst_69 {dimension_numbers = #tpu.dot_dimension_numbers<[1], [0], [0], [1], [0, 0, 1, 1], [], []>} : vector<2x128xbf16>, vector<128x512xbf16>, vector<2x512xf32> -> vector<2x512xf32>
    %143 = arith.addf %140, %142 : vector<2x512xf32>
    %144 = vector.broadcast %11 : vector<1x512xf32> to vector<2x512xf32>
    %145 = arith.addf %143, %144 : vector<2x512xf32>
    %146 = vector.extract_strided_slice %145 {offsets = [0, 0], sizes = [2, 128], strides = [1, 1]} : vector<2x512xf32> to vector<2x128xf32>
    %147 = arith.negf %146 : vector<2x128xf32>
    %148 = math.exp %147 : vector<2x128xf32>
    %cst_70 = arith.constant 1.000000e+00 : f32
    %149 = vector.broadcast %cst_70 : f32 to vector<2x128xf32>
    %150 = arith.addf %149, %148 : vector<2x128xf32>
    %151 = arith.divf %149, %150 : vector<2x128xf32>
    %152 = vector.extract_strided_slice %145 {offsets = [0, 128], sizes = [2, 128], strides = [1, 1]} : vector<2x512xf32> to vector<2x128xf32>
    %153 = arith.negf %152 : vector<2x128xf32>
    %154 = math.exp %153 : vector<2x128xf32>
    %cst_71 = arith.constant 1.000000e+00 : f32
    %155 = vector.broadcast %cst_71 : f32 to vector<2x128xf32>
    %156 = arith.addf %155, %154 : vector<2x128xf32>
    %157 = arith.divf %155, %156 : vector<2x128xf32>
    %158 = vector.extract_strided_slice %145 {offsets = [0, 256], sizes = [2, 128], strides = [1, 1]} : vector<2x512xf32> to vector<2x128xf32>
    %159 = math.tanh %158 : vector<2x128xf32>
    %160 = vector.extract_strided_slice %145 {offsets = [0, 384], sizes = [2, 128], strides = [1, 1]} : vector<2x512xf32> to vector<2x128xf32>
    %161 = arith.negf %160 : vector<2x128xf32>
    %162 = math.exp %161 : vector<2x128xf32>
    %cst_72 = arith.constant 1.000000e+00 : f32
    %163 = vector.broadcast %cst_72 : f32 to vector<2x128xf32>
    %164 = arith.addf %163, %162 : vector<2x128xf32>
    %165 = arith.divf %163, %164 : vector<2x128xf32>
    %166 = arith.mulf %157, %88 : vector<2x128xf32>
    %167 = arith.mulf %151, %159 : vector<2x128xf32>
    %168 = arith.addf %166, %167 : vector<2x128xf32>
    %169 = math.tanh %168 : vector<2x128xf32>
    %170 = arith.mulf %165, %169 : vector<2x128xf32>
    %c1_73 = arith.constant 1 : index
    %c0_74 = arith.constant 0 : index
    %c0_75 = arith.constant 0 : index
    %171 = vector.load %arg15[%c1_73, %c0_74, %c0_75] : memref<4x2x128xf32, #tpu.memory_space<vmem>>, vector<1x2x128xf32>
    %172 = vector.shape_cast %171 : vector<1x2x128xf32> to vector<2x128xf32>
    %173 = vector.shape_cast %170 : vector<2x128xf32> to vector<1x2x128xf32>
    tpu.vector_store %arg15[%c1_73, %c0_74, %c0_75], %173 {strides = array<i32>} : memref<4x2x128xf32, #tpu.memory_space<vmem>>, vector<1x2x128xf32>,
    %c0_76 = arith.constant 0 : index
    %c2 = arith.constant 2 : index
    %c0_77 = arith.constant 0 : index
    %c0_78 = arith.constant 0 : index
    %174 = vector.load %arg1[%c0_76, %c2, %c0_77, %c0_78] : memref<2x4x8x64xf32, #tpu.memory_space<vmem>>, vector<2x1x8x64xf32>
    %175 = vector.shape_cast %174 : vector<2x1x8x64xf32> to vector<2x8x64xf32>
    %c2_79 = arith.constant 2 : index
    %c0_80 = arith.constant 0 : index
    %c0_81 = arith.constant 0 : index
    %176 = vector.load %arg2[%c2_79, %c0_80, %c0_81] : memref<4x2x8xf32, #tpu.memory_space<vmem>>, vector<1x2x8xf32>
    %177 = vector.shape_cast %176 : vector<1x2x8xf32> to vector<2x8xf32>
    %c2_82 = arith.constant 2 : index
    %c0_83 = arith.constant 0 : index
    %c0_84 = arith.constant 0 : index
    %178 = vector.load %arg3[%c2_82, %c0_83, %c0_84] : memref<4x2x64xf32, #tpu.memory_space<vmem>>, vector<1x2x64xf32>
    %179 = vector.shape_cast %178 : vector<1x2x64xf32> to vector<2x64xf32>
    %180 = vector.shape_cast %175 : vector<2x8x64xf32> to vector<16x64xf32>
    %cst_85 = arith.constant dense<0.000000e+00> : vector<16x64xf32>
    %181 = tpu.matmul %180, %3, %cst_85 {dimension_numbers = #tpu.dot_dimension_numbers<[1], [0], [0], [1], [0, 0, 1, 1], [], []>} : vector<16x64xf32>, vector<64x64xf32>, vector<16x64xf32> -> vector<16x64xf32>
    %182 = vector.shape_cast %181 : vector<16x64xf32> to vector<2x8x64xf32>
    %cst_86 = arith.constant dense<0.000000e+00> : vector<2x64xf32>
    %183 = tpu.matmul %170, %5, %cst_86 {dimension_numbers = #tpu.dot_dimension_numbers<[1], [0], [0], [1], [0, 0, 1, 1], [], []>} : vector<2x128xf32>, vector<128x64xf32>, vector<2x64xf32> -> vector<2x64xf32>
    %184 = vector.shape_cast %183 : vector<2x64xf32> to vector<2x1x64xf32>
    %185 = vector.broadcast %184 : vector<2x1x64xf32> to vector<2x8x64xf32>
    %186 = arith.addf %185, %182 : vector<2x8x64xf32>
    %187 = vector.shape_cast %4 : vector<1x64xf32> to vector<1x1x64xf32>
    %188 = vector.broadcast %187 : vector<1x1x64xf32> to vector<2x8x64xf32>
    %189 = arith.addf %186, %188 : vector<2x8x64xf32>
    %190 = math.tanh %189 : vector<2x8x64xf32>
    %191 = vector.shape_cast %6 : vector<1x64xf32> to vector<1x1x64xf32>
    %192 = vector.broadcast %191 : vector<1x1x64xf32> to vector<2x8x64xf32>
    %193 = arith.mulf %190, %192 : vector<2x8x64xf32>
    %cst_87 = arith.constant dense<0.000000e+00> : vector<2x8xf32>
    %194 = vector.multi_reduction <add>, %193, %cst_87 [2] : vector<2x8x64xf32> to vector<2x8xf32>
    %cst_88 = arith.constant 5.000000e-01 : f32
    %195 = vector.broadcast %cst_88 : f32 to vector<2x8xf32>
    %196 = arith.cmpf ogt, %177, %195 : vector<2x8xf32>
    %cst_89 = arith.constant -1.000000e+09 : f32
    %197 = vector.broadcast %cst_89 : f32 to vector<2x8xf32>
    %198 = arith.select %196, %194, %197 : vector<2x8xi1>, vector<2x8xf32>
    %cst_90 = arith.constant dense<0xFF800000> : vector<2xf32>
    %199 = vector.multi_reduction <maximumf>, %198, %cst_90 [1] : vector<2x8xf32> to vector<2xf32>
    %200 = vector.shape_cast %199 : vector<2xf32> to vector<2x1xf32>
    %201 = vector.broadcast %200 : vector<2x1xf32> to vector<2x8xf32>
    %202 = arith.subf %198, %201 : vector<2x8xf32>
    %203 = math.exp %202 : vector<2x8xf32>
    %cst_91 = arith.constant dense<0.000000e+00> : vector<2xf32>
    %204 = vector.multi_reduction <add>, %203, %cst_91 [1] : vector<2x8xf32> to vector<2xf32>
    %205 = vector.shape_cast %204 : vector<2xf32> to vector<2x1xf32>
    %206 = tpu.reciprocal %205 {approx = true} : vector<2x1xf32> -> vector<2x1xf32>
    %207 = vector.broadcast %206 : vector<2x1xf32> to vector<2x8xf32>
    %208 = arith.mulf %203, %207 : vector<2x8xf32>
    %209 = vector.shape_cast %208 : vector<2x8xf32> to vector<2x8x1xf32>
    %210 = vector.broadcast %209 : vector<2x8x1xf32> to vector<2x8x64xf32>
    %211 = arith.mulf %210, %175 : vector<2x8x64xf32>
    %cst_92 = arith.constant dense<0.000000e+00> : vector<2x64xf32>
    %212 = vector.multi_reduction <add>, %211, %cst_92 [1] : vector<2x8x64xf32> to vector<2x64xf32>
    %213 = arith.truncf %212 : vector<2x64xf32> to vector<2x64xbf16>
    %cst_93 = arith.constant dense<0.000000e+00> : vector<2x512xf32>
    %214 = tpu.matmul %213, %7, %cst_93 {dimension_numbers = #tpu.dot_dimension_numbers<[1], [0], [0], [1], [0, 0, 1, 1], [], []>} : vector<2x64xbf16>, vector<64x512xbf16>, vector<2x512xf32> -> vector<2x512xf32>
    %215 = arith.truncf %179 : vector<2x64xf32> to vector<2x64xbf16>
    %cst_94 = arith.constant dense<0.000000e+00> : vector<2x512xf32>
    %216 = tpu.matmul %215, %8, %cst_94 {dimension_numbers = #tpu.dot_dimension_numbers<[1], [0], [0], [1], [0, 0, 1, 1], [], []>} : vector<2x64xbf16>, vector<64x512xbf16>, vector<2x512xf32> -> vector<2x512xf32>
    %217 = arith.addf %214, %216 : vector<2x512xf32>
    %218 = arith.truncf %170 : vector<2x128xf32> to vector<2x128xbf16>
    %cst_95 = arith.constant dense<0.000000e+00> : vector<2x512xf32>
    %219 = tpu.matmul %218, %9, %cst_95 {dimension_numbers = #tpu.dot_dimension_numbers<[1], [0], [0], [1], [0, 0, 1, 1], [], []>} : vector<2x128xbf16>, vector<128x512xbf16>, vector<2x512xf32> -> vector<2x512xf32>
    %220 = arith.addf %217, %219 : vector<2x512xf32>
    %221 = arith.truncf %168 : vector<2x128xf32> to vector<2x128xbf16>
    %cst_96 = arith.constant dense<0.000000e+00> : vector<2x512xf32>
    %222 = tpu.matmul %221, %10, %cst_96 {dimension_numbers = #tpu.dot_dimension_numbers<[1], [0], [0], [1], [0, 0, 1, 1], [], []>} : vector<2x128xbf16>, vector<128x512xbf16>, vector<2x512xf32> -> vector<2x512xf32>
    %223 = arith.addf %220, %222 : vector<2x512xf32>
    %224 = vector.broadcast %11 : vector<1x512xf32> to vector<2x512xf32>
    %225 = arith.addf %223, %224 : vector<2x512xf32>
    %226 = vector.extract_strided_slice %225 {offsets = [0, 0], sizes = [2, 128], strides = [1, 1]} : vector<2x512xf32> to vector<2x128xf32>
    %227 = arith.negf %226 : vector<2x128xf32>
    %228 = math.exp %227 : vector<2x128xf32>
    %cst_97 = arith.constant 1.000000e+00 : f32
    %229 = vector.broadcast %cst_97 : f32 to vector<2x128xf32>
    %230 = arith.addf %229, %228 : vector<2x128xf32>
    %231 = arith.divf %229, %230 : vector<2x128xf32>
    %232 = vector.extract_strided_slice %225 {offsets = [0, 128], sizes = [2, 128], strides = [1, 1]} : vector<2x512xf32> to vector<2x128xf32>
    %233 = arith.negf %232 : vector<2x128xf32>
    %234 = math.exp %233 : vector<2x128xf32>
    %cst_98 = arith.constant 1.000000e+00 : f32
    %235 = vector.broadcast %cst_98 : f32 to vector<2x128xf32>
    %236 = arith.addf %235, %234 : vector<2x128xf32>
    %237 = arith.divf %235, %236 : vector<2x128xf32>
    %238 = vector.extract_strided_slice %225 {offsets = [0, 256], sizes = [2, 128], strides = [1, 1]} : vector<2x512xf32> to vector<2x128xf32>
    %239 = math.tanh %238 : vector<2x128xf32>
    %240 = vector.extract_strided_slice %225 {offsets = [0, 384], sizes = [2, 128], strides = [1, 1]} : vector<2x512xf32> to vector<2x128xf32>
    %241 = arith.negf %240 : vector<2x128xf32>
    %242 = math.exp %241 : vector<2x128xf32>
    %cst_99 = arith.constant 1.000000e+00 : f32
    %243 = vector.broadcast %cst_99 : f32 to vector<2x128xf32>
    %244 = arith.addf %243, %242 : vector<2x128xf32>
    %245 = arith.divf %243, %244 : vector<2x128xf32>
    %246 = arith.mulf %237, %168 : vector<2x128xf32>
    %247 = arith.mulf %231, %239 : vector<2x128xf32>
    %248 = arith.addf %246, %247 : vector<2x128xf32>
    %249 = math.tanh %248 : vector<2x128xf32>
    %250 = arith.mulf %245, %249 : vector<2x128xf32>
    %c2_100 = arith.constant 2 : index
    %c0_101 = arith.constant 0 : index
    %c0_102 = arith.constant 0 : index
    %251 = vector.load %arg15[%c2_100, %c0_101, %c0_102] : memref<4x2x128xf32, #tpu.memory_space<vmem>>, vector<1x2x128xf32>
    %252 = vector.shape_cast %251 : vector<1x2x128xf32> to vector<2x128xf32>
    %253 = vector.shape_cast %250 : vector<2x128xf32> to vector<1x2x128xf32>
    tpu.vector_store %arg15[%c2_100, %c0_101, %c0_102], %253 {strides = array<i32>} : memref<4x2x128xf32, #tpu.memory_space<vmem>>, vector<1x2x128xf32>,
    %c0_103 = arith.constant 0 : index
    %c3 = arith.constant 3 : index
    %c0_104 = arith.constant 0 : index
    %c0_105 = arith.constant 0 : index
    %254 = vector.load %arg1[%c0_103, %c3, %c0_104, %c0_105] : memref<2x4x8x64xf32, #tpu.memory_space<vmem>>, vector<2x1x8x64xf32>
    %255 = vector.shape_cast %254 : vector<2x1x8x64xf32> to vector<2x8x64xf32>
    %c3_106 = arith.constant 3 : index
    %c0_107 = arith.constant 0 : index
    %c0_108 = arith.constant 0 : index
    %256 = vector.load %arg2[%c3_106, %c0_107, %c0_108] : memref<4x2x8xf32, #tpu.memory_space<vmem>>, vector<1x2x8xf32>
    %257 = vector.shape_cast %256 : vector<1x2x8xf32> to vector<2x8xf32>
    %c3_109 = arith.constant 3 : index
    %c0_110 = arith.constant 0 : index
    %c0_111 = arith.constant 0 : index
    %258 = vector.load %arg3[%c3_109, %c0_110, %c0_111] : memref<4x2x64xf32, #tpu.memory_space<vmem>>, vector<1x2x64xf32>
    %259 = vector.shape_cast %258 : vector<1x2x64xf32> to vector<2x64xf32>
    %260 = vector.shape_cast %255 : vector<2x8x64xf32> to vector<16x64xf32>
    %cst_112 = arith.constant dense<0.000000e+00> : vector<16x64xf32>
    %261 = tpu.matmul %260, %3, %cst_112 {dimension_numbers = #tpu.dot_dimension_numbers<[1], [0], [0], [1], [0, 0, 1, 1], [], []>} : vector<16x64xf32>, vector<64x64xf32>, vector<16x64xf32> -> vector<16x64xf32>
    %262 = vector.shape_cast %261 : vector<16x64xf32> to vector<2x8x64xf32>
    %cst_113 = arith.constant dense<0.000000e+00> : vector<2x64xf32>
    %263 = tpu.matmul %250, %5, %cst_113 {dimension_numbers = #tpu.dot_dimension_numbers<[1], [0], [0], [1], [0, 0, 1, 1], [], []>} : vector<2x128xf32>, vector<128x64xf32>, vector<2x64xf32> -> vector<2x64xf32>
    %264 = vector.shape_cast %263 : vector<2x64xf32> to vector<2x1x64xf32>
    %265 = vector.broadcast %264 : vector<2x1x64xf32> to vector<2x8x64xf32>
    %266 = arith.addf %265, %262 : vector<2x8x64xf32>
    %267 = vector.shape_cast %4 : vector<1x64xf32> to vector<1x1x64xf32>
    %268 = vector.broadcast %267 : vector<1x1x64xf32> to vector<2x8x64xf32>
    %269 = arith.addf %266, %268 : vector<2x8x64xf32>
    %270 = math.tanh %269 : vector<2x8x64xf32>
    %271 = vector.shape_cast %6 : vector<1x64xf32> to vector<1x1x64xf32>
    %272 = vector.broadcast %271 : vector<1x1x64xf32> to vector<2x8x64xf32>
    %273 = arith.mulf %270, %272 : vector<2x8x64xf32>
    %cst_114 = arith.constant dense<0.000000e+00> : vector<2x8xf32>
    %274 = vector.multi_reduction <add>, %273, %cst_114 [2] : vector<2x8x64xf32> to vector<2x8xf32>
    %cst_115 = arith.constant 5.000000e-01 : f32
    %275 = vector.broadcast %cst_115 : f32 to vector<2x8xf32>
    %276 = arith.cmpf ogt, %257, %275 : vector<2x8xf32>
    %cst_116 = arith.constant -1.000000e+09 : f32
    %277 = vector.broadcast %cst_116 : f32 to vector<2x8xf32>
    %278 = arith.select %276, %274, %277 : vector<2x8xi1>, vector<2x8xf32>
    %cst_117 = arith.constant dense<0xFF800000> : vector<2xf32>
    %279 = vector.multi_reduction <maximumf>, %278, %cst_117 [1] : vector<2x8xf32> to vector<2xf32>
    %280 = vector.shape_cast %279 : vector<2xf32> to vector<2x1xf32>
    %281 = vector.broadcast %280 : vector<2x1xf32> to vector<2x8xf32>
    %282 = arith.subf %278, %281 : vector<2x8xf32>
    %283 = math.exp %282 : vector<2x8xf32>
    %cst_118 = arith.constant dense<0.000000e+00> : vector<2xf32>
    %284 = vector.multi_reduction <add>, %283, %cst_118 [1] : vector<2x8xf32> to vector<2xf32>
    %285 = vector.shape_cast %284 : vector<2xf32> to vector<2x1xf32>
    %286 = tpu.reciprocal %285 {approx = true} : vector<2x1xf32> -> vector<2x1xf32>
    %287 = vector.broadcast %286 : vector<2x1xf32> to vector<2x8xf32>
    %288 = arith.mulf %283, %287 : vector<2x8xf32>
    %289 = vector.shape_cast %288 : vector<2x8xf32> to vector<2x8x1xf32>
    %290 = vector.broadcast %289 : vector<2x8x1xf32> to vector<2x8x64xf32>
    %291 = arith.mulf %290, %255 : vector<2x8x64xf32>
    %cst_119 = arith.constant dense<0.000000e+00> : vector<2x64xf32>
    %292 = vector.multi_reduction <add>, %291, %cst_119 [1] : vector<2x8x64xf32> to vector<2x64xf32>
    %293 = arith.truncf %292 : vector<2x64xf32> to vector<2x64xbf16>
    %cst_120 = arith.constant dense<0.000000e+00> : vector<2x512xf32>
    %294 = tpu.matmul %293, %7, %cst_120 {dimension_numbers = #tpu.dot_dimension_numbers<[1], [0], [0], [1], [0, 0, 1, 1], [], []>} : vector<2x64xbf16>, vector<64x512xbf16>, vector<2x512xf32> -> vector<2x512xf32>
    %295 = arith.truncf %259 : vector<2x64xf32> to vector<2x64xbf16>
    %cst_121 = arith.constant dense<0.000000e+00> : vector<2x512xf32>
    %296 = tpu.matmul %295, %8, %cst_121 {dimension_numbers = #tpu.dot_dimension_numbers<[1], [0], [0], [1], [0, 0, 1, 1], [], []>} : vector<2x64xbf16>, vector<64x512xbf16>, vector<2x512xf32> -> vector<2x512xf32>
    %297 = arith.addf %294, %296 : vector<2x512xf32>
    %298 = arith.truncf %250 : vector<2x128xf32> to vector<2x128xbf16>
    %cst_122 = arith.constant dense<0.000000e+00> : vector<2x512xf32>
    %299 = tpu.matmul %298, %9, %cst_122 {dimension_numbers = #tpu.dot_dimension_numbers<[1], [0], [0], [1], [0, 0, 1, 1], [], []>} : vector<2x128xbf16>, vector<128x512xbf16>, vector<2x512xf32> -> vector<2x512xf32>
    %300 = arith.addf %297, %299 : vector<2x512xf32>
    %301 = arith.truncf %248 : vector<2x128xf32> to vector<2x128xbf16>
    %cst_123 = arith.constant dense<0.000000e+00> : vector<2x512xf32>
    %302 = tpu.matmul %301, %10, %cst_123 {dimension_numbers = #tpu.dot_dimension_numbers<[1], [0], [0], [1], [0, 0, 1, 1], [], []>} : vector<2x128xbf16>, vector<128x512xbf16>, vector<2x512xf32> -> vector<2x512xf32>
    %303 = arith.addf %300, %302 : vector<2x512xf32>
    %304 = vector.broadcast %11 : vector<1x512xf32> to vector<2x512xf32>
    %305 = arith.addf %303, %304 : vector<2x512xf32>
    %306 = vector.extract_strided_slice %305 {offsets = [0, 0], sizes = [2, 128], strides = [1, 1]} : vector<2x512xf32> to vector<2x128xf32>
    %307 = arith.negf %306 : vector<2x128xf32>
    %308 = math.exp %307 : vector<2x128xf32>
    %cst_124 = arith.constant 1.000000e+00 : f32
    %309 = vector.broadcast %cst_124 : f32 to vector<2x128xf32>
    %310 = arith.addf %309, %308 : vector<2x128xf32>
    %311 = arith.divf %309, %310 : vector<2x128xf32>
    %312 = vector.extract_strided_slice %305 {offsets = [0, 128], sizes = [2, 128], strides = [1, 1]} : vector<2x512xf32> to vector<2x128xf32>
    %313 = arith.negf %312 : vector<2x128xf32>
    %314 = math.exp %313 : vector<2x128xf32>
    %cst_125 = arith.constant 1.000000e+00 : f32
    %315 = vector.broadcast %cst_125 : f32 to vector<2x128xf32>
    %316 = arith.addf %315, %314 : vector<2x128xf32>
    %317 = arith.divf %315, %316 : vector<2x128xf32>
    %318 = vector.extract_strided_slice %305 {offsets = [0, 256], sizes = [2, 128], strides = [1, 1]} : vector<2x512xf32> to vector<2x128xf32>
    %319 = math.tanh %318 : vector<2x128xf32>
    %320 = vector.extract_strided_slice %305 {offsets = [0, 384], sizes = [2, 128], strides = [1, 1]} : vector<2x512xf32> to vector<2x128xf32>
    %321 = arith.negf %320 : vector<2x128xf32>
    %322 = math.exp %321 : vector<2x128xf32>
    %cst_126 = arith.constant 1.000000e+00 : f32
    %323 = vector.broadcast %cst_126 : f32 to vector<2x128xf32>
    %324 = arith.addf %323, %322 : vector<2x128xf32>
    %325 = arith.divf %323, %324 : vector<2x128xf32>
    %326 = arith.mulf %317, %248 : vector<2x128xf32>
    %327 = arith.mulf %311, %319 : vector<2x128xf32>
    %328 = arith.addf %326, %327 : vector<2x128xf32>
    %329 = math.tanh %328 : vector<2x128xf32>
    %330 = arith.mulf %325, %329 : vector<2x128xf32>
    %c3_127 = arith.constant 3 : index
    %c0_128 = arith.constant 0 : index
    %c0_129 = arith.constant 0 : index
    %331 = vector.load %arg15[%c3_127, %c0_128, %c0_129] : memref<4x2x128xf32, #tpu.memory_space<vmem>>, vector<1x2x128xf32>
    %332 = vector.shape_cast %331 : vector<1x2x128xf32> to vector<2x128xf32>
    %333 = vector.shape_cast %330 : vector<2x128xf32> to vector<1x2x128xf32>
    tpu.vector_store %arg15[%c3_127, %c0_128, %c0_129], %333 {strides = array<i32>} : memref<4x2x128xf32, #tpu.memory_space<vmem>>, vector<1x2x128xf32>,
    %c0_130 = arith.constant 0 : index
    %c0_131 = arith.constant 0 : index
    %334 = vector.load %arg18[%c0_130, %c0_131] : memref<2x128xf32, #tpu.memory_space<vmem>>, vector<2x128xf32>
    tpu.vector_store %arg18[%c0_130, %c0_131], %330 {strides = array<i32>} : memref<2x128xf32, #tpu.memory_space<vmem>>, vector<2x128xf32>,
    %c0_132 = arith.constant 0 : index
    %c0_133 = arith.constant 0 : index
    %335 = vector.load %arg19[%c0_132, %c0_133] : memref<2x128xf32, #tpu.memory_space<vmem>>, vector<2x128xf32>
    tpu.vector_store %arg19[%c0_132, %c0_133], %328 {strides = array<i32>} : memref<2x128xf32, #tpu.memory_space<vmem>>, vector<2x128xf32>,
    %c0_134 = arith.constant 0 : index
    %c0_135 = arith.constant 0 : index
    %336 = vector.load %arg16[%c0_134, %c0_135] : memref<2x128xf32, #tpu.memory_space<vmem>>, vector<2x128xf32>
    tpu.vector_store %arg16[%c0_134, %c0_135], %330 {strides = array<i32>} : memref<2x128xf32, #tpu.memory_space<vmem>>, vector<2x128xf32>,
    %c0_136 = arith.constant 0 : index
    %c0_137 = arith.constant 0 : index
    %337 = vector.load %arg17[%c0_136, %c0_137] : memref<2x128xf32, #tpu.memory_space<vmem>>, vector<2x128xf32>
    tpu.vector_store %arg17[%c0_136, %c0_137], %328 {strides = array<i32>} : memref<2x128xf32, #tpu.memory_space<vmem>>, vector<2x128xf32>,
    return
  }
  func.func @transform_0(%arg0: i32) -> (i32, i32, i32, i32) {
    %c0_i32 = arith.constant 0 : i32
    %c0_i32_0 = arith.constant 0 : i32
    %c0_i32_1 = arith.constant 0 : i32
    %c0_i32_2 = arith.constant 0 : i32
    return %c0_i32, %arg0, %c0_i32_0, %c0_i32_1 : i32, i32, i32, i32
  }
  func.func @transform_1(%arg0: i32) -> (i32, i32, i32) {
    %c0_i32 = arith.constant 0 : i32
    %c0_i32_0 = arith.constant 0 : i32
    %c0_i32_1 = arith.constant 0 : i32
    return %arg0, %c0_i32, %c0_i32_0 : i32, i32, i32
  }
  func.func @transform_2(%arg0: i32) -> (i32, i32, i32) {
    %c0_i32 = arith.constant 0 : i32
    %c0_i32_0 = arith.constant 0 : i32
    %c0_i32_1 = arith.constant 0 : i32
    return %arg0, %c0_i32, %c0_i32_0 : i32, i32, i32
  }
  func.func @transform_3(%arg0: i32) -> (i32, i32) {
    %c0_i32 = arith.constant 0 : i32
    %c0_i32_0 = arith.constant 0 : i32
    %c0_i32_1 = arith.constant 0 : i32
    return %c0_i32, %c0_i32_0 : i32, i32
  }
  func.func @transform_4(%arg0: i32) -> (i32, i32) {
    %c0_i32 = arith.constant 0 : i32
    %c0_i32_0 = arith.constant 0 : i32
    %c0_i32_1 = arith.constant 0 : i32
    return %c0_i32, %c0_i32_0 : i32, i32
  }
  func.func @transform_5(%arg0: i32) -> (i32, i32) {
    %c0_i32 = arith.constant 0 : i32
    %c0_i32_0 = arith.constant 0 : i32
    %c0_i32_1 = arith.constant 0 : i32
    return %c0_i32, %c0_i32_0 : i32, i32
  }
  func.func @transform_6(%arg0: i32) -> (i32, i32) {
    %c0_i32 = arith.constant 0 : i32
    %c0_i32_0 = arith.constant 0 : i32
    %c0_i32_1 = arith.constant 0 : i32
    return %c0_i32, %c0_i32_0 : i32, i32
  }
  func.func @transform_7(%arg0: i32) -> (i32, i32) {
    %c0_i32 = arith.constant 0 : i32
    %c0_i32_0 = arith.constant 0 : i32
    %c0_i32_1 = arith.constant 0 : i32
    return %c0_i32, %c0_i32_0 : i32, i32
  }
  func.func @transform_8(%arg0: i32) -> (i32, i32) {
    %c0_i32 = arith.constant 0 : i32
    %c0_i32_0 = arith.constant 0 : i32
    %c0_i32_1 = arith.constant 0 : i32
    return %c0_i32, %c0_i32_0 : i32, i32
  }
  func.func @transform_9(%arg0: i32) -> (i32, i32) {
    %c0_i32 = arith.constant 0 : i32
    %c0_i32_0 = arith.constant 0 : i32
    %c0_i32_1 = arith.constant 0 : i32
    return %c0_i32, %c0_i32_0 : i32, i32
  }
  func.func @transform_10(%arg0: i32) -> (i32, i32) {
    %c0_i32 = arith.constant 0 : i32
    %c0_i32_0 = arith.constant 0 : i32
    %c0_i32_1 = arith.constant 0 : i32
    return %c0_i32, %c0_i32_0 : i32, i32
  }
  func.func @transform_11(%arg0: i32) -> (i32, i32) {
    %c0_i32 = arith.constant 0 : i32
    %c0_i32_0 = arith.constant 0 : i32
    %c0_i32_1 = arith.constant 0 : i32
    return %c0_i32, %c0_i32_0 : i32, i32
  }
  func.func @transform_12(%arg0: i32) -> (i32, i32) {
    %c0_i32 = arith.constant 0 : i32
    %c0_i32_0 = arith.constant 0 : i32
    %c0_i32_1 = arith.constant 0 : i32
    return %c0_i32, %c0_i32_0 : i32, i32
  }
  func.func @transform_13(%arg0: i32) -> (i32, i32) {
    %c0_i32 = arith.constant 0 : i32
    %c0_i32_0 = arith.constant 0 : i32
    %c0_i32_1 = arith.constant 0 : i32
    return %c0_i32, %c0_i32_0 : i32, i32
  }
  func.func @transform_14(%arg0: i32) -> (i32, i32, i32) {
    %c0_i32 = arith.constant 0 : i32
    %c0_i32_0 = arith.constant 0 : i32
    %c0_i32_1 = arith.constant 0 : i32
    return %arg0, %c0_i32, %c0_i32_0 : i32, i32, i32
  }
  func.func @transform_15(%arg0: i32) -> (i32, i32) {
    %c0_i32 = arith.constant 0 : i32
    %c0_i32_0 = arith.constant 0 : i32
    %c0_i32_1 = arith.constant 0 : i32
    return %c0_i32, %c0_i32_0 : i32, i32
  }
  func.func @transform_16(%arg0: i32) -> (i32, i32) {
    %c0_i32 = arith.constant 0 : i32
    %c0_i32_0 = arith.constant 0 : i32
    %c0_i32_1 = arith.constant 0 : i32
    return %c0_i32, %c0_i32_0 : i32, i32
  }
}

</mosaic_0001>

<llo_original>
// kernel: dsa_rnn_forward.4
$region0: #{dsa_rnn_forward.4}
  #allocation0 [shape = 'u32[]', space=smem, size = 0x4, offset = 0x4, fixed_abs, tag = 'smem constant byte address 0x4 - core index']
  #allocation1 [shape = 'u32[144,128]{1,0:T(1,128)}', space=vmem, size = 0x12000, scoped, tag = 'internal scratch']
  %s0 = inlined_call_operand.vmem [shape: f32[16,4096], index: 0, kind: input, shape index: {}]
  %s1 = inlined_call_operand.vmem [shape: bf16[4096,64], index: 1, kind: input, shape index: {}]
  %s2 = inlined_call_operand.vmem [shape: f32[1,64], index: 2, kind: input, shape index: {}]
  %s3 = inlined_call_operand.vmem [shape: f32[16,64], index: 3, kind: output, shape index: {}]
  %s4 = sld [smem:[#allocation0]]
  $region22: #{dsa_rnn_forward.4} parent=0
    _
  %s6 = ssub.s32 1, %s4
  %s7 = scalar_select 0, %s6, %s4
  // Predicated region
  $region2: #{dsa_rnn_forward.4} parent=0 // pred_check
    _
  $region3: #{dsa_rnn_forward.4} parent=0 // pred_check_branch
    %9 = sbr.rel (0) target = $region5
  $region4: #{dsa_rnn_forward.4} parent=0 // pred_region
    _
  $region5: #{dsa_rnn_forward.4} parent=0 // pred_fallthru
    _
  // Predicated region
  $region6: #{dsa_rnn_forward.4} parent=0 // pred_check
    _
  $region7: #{dsa_rnn_forward.4} parent=0 // pred_check_branch
    %11 = sbr.rel (0) target = $region9
  $region8: #{dsa_rnn_forward.4} parent=0 // pred_region
    _
  $region9: #{dsa_rnn_forward.4} parent=0 // pred_fallthru
    _
  // Predicated region
  $region10: #{dsa_rnn_forward.4} parent=0 // pred_check
    _
  $region11: #{dsa_rnn_forward.4} parent=0 // pred_check_branch
    %13 = sbr.rel (0) target = $region13
  $region12: #{dsa_rnn_forward.4} parent=0 // pred_region
    _
  $region13: #{dsa_rnn_forward.4} parent=0 // pred_fallthru
    _
  %v15 = vld [vmem:[%s0] sm:$0xff]
  %v16 = vld [vmem:[%s0 + $0x8] sm:$0xff]
  %v17 = vld [vmem:[%s0 + $0x10] sm:$0xff]
  %v18 = vld [vmem:[%s0 + $0x18] sm:$0xff]
  %v19 = vld [vmem:[%s0 + $0x20] sm:$0xff]
  %v20 = vld [vmem:[%s0 + $0x28] sm:$0xff]
  %v21 = vld [vmem:[%s0 + $0x30] sm:$0xff]
  %v22 = vld [vmem:[%s0 + $0x38] sm:$0xff]
  %v23 = vld [vmem:[%s0 + $0x40] sm:$0xff]
  %v24 = vld [vmem:[%s0 + $0x48] sm:$0xff]
  %v25 = vld [vmem:[%s0 + $0x50] sm:$0xff]
  %v26 = vld [vmem:[%s0 + $0x58] sm:$0xff]
  %v27 = vld [vmem:[%s0 + $0x60] sm:$0xff]
  %v28 = vld [vmem:[%s0 + $0x68] sm:$0xff]
  %v29 = vld [vmem:[%s0 + $0x70] sm:$0xff]
  %v30 = vld [vmem:[%s0 + $0x78] sm:$0xff]
  %v31 = vld [vmem:[%s0 + $0x80] sm:$0xff]
  %v32 = vld [vmem:[%s0 + $0x88] sm:$0xff]
  %v33 = vld [vmem:[%s0 + $0x90] sm:$0xff]
  %v34 = vld [vmem:[%s0 + $0x98] sm:$0xff]
  %v35 = vld [vmem:[%s0 + $0xa0] sm:$0xff]
  %v36 = vld [vmem:[%s0 + $0xa8] sm:$0xff]
  %v37 = vld [vmem:[%s0 + $0xb0] sm:$0xff]
  %v38 = vld [vmem:[%s0 + $0xb8] sm:$0xff]
  %v39 = vld [vmem:[%s0 + $0xc0] sm:$0xff]
  %v40 = vld [vmem:[%s0 + $0xc8] sm:$0xff]
  %v41 = vld [vmem:[%s0 + $0xd0] sm:$0xff]
  %v42 = vld [vmem:[%s0 + $0xd8] sm:$0xff]
  %v43 = vld [vmem:[%s0 + $0xe0] sm:$0xff]
  %v44 = vld [vmem:[%s0 + $0xe8] sm:$0xff]
  %v45 = vld [vmem:[%s0 + $0xf0] sm:$0xff]
  %v46 = vld [vmem:[%s0 + $0xf8] sm:$0xff]
  %v47 = vld [vmem:[%s0 + $0x100] sm:$0xff]
  %v48 = vld [vmem:[%s0 + $0x108] sm:$0xff]
  %v49 = vld [vmem:[%s0 + $0x110] sm:$0xff]
  %v50 = vld [vmem:[%s0 + $0x118] sm:$0xff]
  %v51 = vld [vmem:[%s0 + $0x120] sm:$0xff]
  %v52 = vld [vmem:[%s0 + $0x128] sm:$0xff]
  %v53 = vld [vmem:[%s0 + $0x130] sm:$0xff]
  %v54 = vld [vmem:[%s0 + $0x138] sm:$0xff]
  %v55 = vld [vmem:[%s0 + $0x140] sm:$0xff]
  %v56 = vld [vmem:[%s0 + $0x148] sm:$0xff]
  %v57 = vld [vmem:[%s0 + $0x150] sm:$0xff]
  %v58 = vld [vmem:[%s0 + $0x158] sm:$0xff]
  %v59 = vld [vmem:[%s0 + $0x160] sm:$0xff]
  %v60 = vld [vmem:[%s0 + $0x168] sm:$0xff]
  %v61 = vld [vmem:[%s0 + $0x170] sm:$0xff]
  %v62 = vld [vmem:[%s0 + $0x178] sm:$0xff]
  %v63 = vld [vmem:[%s0 + $0x180] sm:$0xff]
  %v64 = vld [vmem:[%s0 + $0x188] sm:$0xff]
  %v65 = vld [vmem:[%s0 + $0x190] sm:$0xff]
  %v66 = vld [vmem:[%s0 + $0x198] sm:$0xff]
  %v67 = vld [vmem:[%s0 + $0x1a0] sm:$0xff]
  %v68 = vld [vmem:[%s0 + $0x1a8] sm:$0xff]
  %v69 = vld [vmem:[%s0 + $0x1b0] sm:$0xff]
  %v70 = vld [vmem:[%s0 + $0x1b8] sm:$0xff]
  %v71 = vld [vmem:[%s0 + $0x1c0] sm:$0xff]
  %v72 = vld [vmem:[%s0 + $0x1c8] sm:$0xff]
  %v73 = vld [vmem:[%s0 + $0x1d0] sm:$0xff]
  %v74 = vld [vmem:[%s0 + $0x1d8] sm:$0xff]
  %v75 = vld [vmem:[%s0 + $0x1e0] sm:$0xff]
  %v76 = vld [vmem:[%s0 + $0x1e8] sm:$0xff]
  %v77 = vld [vmem:[%s0 + $0x1f0] sm:$0xff]
  %v78 = vld [vmem:[%s0 + $0x1f8] sm:$0xff]
  %v79 = vpack.c.bf16 %v47, %v15
  %v80 = vpack.c.bf16 %v48, %v16
  %v81 = vpack.c.bf16 %v49, %v17
  %v82 = vpack.c.bf16 %v50, %v18
  %v83 = vpack.c.bf16 %v51, %v19
  %v84 = vpack.c.bf16 %v52, %v20
  %v85 = vpack.c.bf16 %v53, %v21
  %v86 = vpack.c.bf16 %v54, %v22
  %v87 = vpack.c.bf16 %v55, %v23
  %v88 = vpack.c.bf16 %v56, %v24
  %v89 = vpack.c.bf16 %v57, %v25
  %v90 = vpack.c.bf16 %v58, %v26
  %v91 = vpack.c.bf16 %v59, %v27
  %v92 = vpack.c.bf16 %v60, %v28
  %v93 = vpack.c.bf16 %v61, %v29
  %v94 = vpack.c.bf16 %v62, %v30
  %v95 = vpack.c.bf16 %v63, %v31
  %v96 = vpack.c.bf16 %v64, %v32
  %v97 = vpack.c.bf16 %v65, %v33
  %v98 = vpack.c.bf16 %v66, %v34
  %v99 = vpack.c.bf16 %v67, %v35
  %v100 = vpack.c.bf16 %v68, %v36
  %v101 = vpack.c.bf16 %v69, %v37
  %v102 = vpack.c.bf16 %v70, %v38
  %v103 = vpack.c.bf16 %v71, %v39
  %v104 = vpack.c.bf16 %v72, %v40
  %v105 = vpack.c.bf16 %v73, %v41
  %v106 = vpack.c.bf16 %v74, %v42
  %v107 = vpack.c.bf16 %v75, %v43
  %v108 = vpack.c.bf16 %v76, %v44
  %v109 = vpack.c.bf16 %v77, %v45
  %v110 = vpack.c.bf16 %v78, %v46
  %v111 = vld [vmem:[%s1] sm:$0xf]
  %v112 = vld [vmem:[%s1 + $0x4] sm:$0xf]
  %v113 = vld [vmem:[%s1 + $0x8] sm:$0xf]
  %v114 = vld [vmem:[%s1 + $0xc] sm:$0xf]
  %v115 = vld [vmem:[%s1 + $0x10] sm:$0xf]
  %v116 = vld [vmem:[%s1 + $0x14] sm:$0xf]
  %v117 = vld [vmem:[%s1 + $0x18] sm:$0xf]
  %v118 = vld [vmem:[%s1 + $0x1c] sm:$0xf]
  %v119 = vld [vmem:[%s1 + $0x20] sm:$0xf]
  %v120 = vld [vmem:[%s1 + $0x24] sm:$0xf]
  %v121 = vld [vmem:[%s1 + $0x28] sm:$0xf]
  %v122 = vld [vmem:[%s1 + $0x2c] sm:$0xf]
  %v123 = vld [vmem:[%s1 + $0x30] sm:$0xf]
  %v124 = vld [vmem:[%s1 + $0x34] sm:$0xf]
  %v125 = vld [vmem:[%s1 + $0x38] sm:$0xf]
  %v126 = vld [vmem:[%s1 + $0x3c] sm:$0xf]
  %v127 = vld [vmem:[%s1 + $0x40] sm:$0xf]
  %v128 = vld [vmem:[%s1 + $0x44] sm:$0xf]
  %v129 = vld [vmem:[%s1 + $0x48] sm:$0xf]
  %v130 = vld [vmem:[%s1 + $0x4c] sm:$0xf]
  %v131 = vld [vmem:[%s1 + $0x50] sm:$0xf]
  %v132 = vld [vmem:[%s1 + $0x54] sm:$0xf]
  %v133 = vld [vmem:[%s1 + $0x58] sm:$0xf]
  %v134 = vld [vmem:[%s1 + $0x5c] sm:$0xf]
  %v135 = vld [vmem:[%s1 + $0x60] sm:$0xf]
  %v136 = vld [vmem:[%s1 + $0x64] sm:$0xf]
  %v137 = vld [vmem:[%s1 + $0x68] sm:$0xf]
  %v138 = vld [vmem:[%s1 + $0x6c] sm:$0xf]
  %v139 = vld [vmem:[%s1 + $0x70] sm:$0xf]
  %v140 = vld [vmem:[%s1 + $0x74] sm:$0xf]
  %v141 = vld [vmem:[%s1 + $0x78] sm:$0xf]
  %v142 = vld [vmem:[%s1 + $0x7c] sm:$0xf]
  %v143 = vld [vmem:[%s1 + $0x80] sm:$0xf]
  %v144 = vld [vmem:[%s1 + $0x84] sm:$0xf]
  %v145 = vld [vmem:[%s1 + $0x88] sm:$0xf]
  %v146 = vld [vmem:[%s1 + $0x8c] sm:$0xf]
  %v147 = vld [vmem:[%s1 + $0x90] sm:$0xf]
  %v148 = vld [vmem:[%s1 + $0x94] sm:$0xf]
  %v149 = vld [vmem:[%s1 + $0x98] sm:$0xf]
  %v150 = vld [vmem:[%s1 + $0x9c] sm:$0xf]
  %v151 = vld [vmem:[%s1 + $0xa0] sm:$0xf]
  %v152 = vld [vmem:[%s1 + $0xa4] sm:$0xf]
  %v153 = vld [vmem:[%s1 + $0xa8] sm:$0xf]
  %v154 = vld [vmem:[%s1 + $0xac] sm:$0xf]
  %v155 = vld [vmem:[%s1 + $0xb0] sm:$0xf]
  %v156 = vld [vmem:[%s1 + $0xb4] sm:$0xf]
  %v157 = vld [vmem:[%s1 + $0xb8] sm:$0xf]
  %v158 = vld [vmem:[%s1 + $0xbc] sm:$0xf]
  %v159 = vld [vmem:[%s1 + $0xc0] sm:$0xf]
  %v160 = vld [vmem:[%s1 + $0xc4] sm:$0xf]
  %v161 = vld [vmem:[%s1 + $0xc8] sm:$0xf]
  %v162 = vld [vmem:[%s1 + $0xcc] sm:$0xf]
  %v163 = vld [vmem:[%s1 + $0xd0] sm:$0xf]
  %v164 = vld [vmem:[%s1 + $0xd4] sm:$0xf]
  %v165 = vld [vmem:[%s1 + $0xd8] sm:$0xf]
  %v166 = vld [vmem:[%s1 + $0xdc] sm:$0xf]
  %v167 = vld [vmem:[%s1 + $0xe0] sm:$0xf]
  %v168 = vld [vmem:[%s1 + $0xe4] sm:$0xf]
  %v169 = vld [vmem:[%s1 + $0xe8] sm:$0xf]
  %v170 = vld [vmem:[%s1 + $0xec] sm:$0xf]
  %v171 = vld [vmem:[%s1 + $0xf0] sm:$0xf]
  %v172 = vld [vmem:[%s1 + $0xf4] sm:$0xf]
  %v173 = vld [vmem:[%s1 + $0xf8] sm:$0xf]
  %v174 = vld [vmem:[%s1 + $0xfc] sm:$0xf]
  %v175 = vld [vmem:[%s1 + $0x100] sm:$0xf]
  %v176 = vld [vmem:[%s1 + $0x104] sm:$0xf]
  %v177 = vld [vmem:[%s1 + $0x108] sm:$0xf]
  %v178 = vld [vmem:[%s1 + $0x10c] sm:$0xf]
  %v179 = vld [vmem:[%s1 + $0x110] sm:$0xf]
  %v180 = vld [vmem:[%s1 + $0x114] sm:$0xf]
  %v181 = vld [vmem:[%s1 + $0x118] sm:$0xf]
  %v182 = vld [vmem:[%s1 + $0x11c] sm:$0xf]
  %v183 = vld [vmem:[%s1 + $0x120] sm:$0xf]
  %v184 = vld [vmem:[%s1 + $0x124] sm:$0xf]
  %v185 = vld [vmem:[%s1 + $0x128] sm:$0xf]
  %v186 = vld [vmem:[%s1 + $0x12c] sm:$0xf]
  %v187 = vld [vmem:[%s1 + $0x130] sm:$0xf]
  %v188 = vld [vmem:[%s1 + $0x134] sm:$0xf]
  %v189 = vld [vmem:[%s1 + $0x138] sm:$0xf]
  %v190 = vld [vmem:[%s1 + $0x13c] sm:$0xf]
  %v191 = vld [vmem:[%s1 + $0x140] sm:$0xf]
  %v192 = vld [vmem:[%s1 + $0x144] sm:$0xf]
  %v193 = vld [vmem:[%s1 + $0x148] sm:$0xf]
  %v194 = vld [vmem:[%s1 + $0x14c] sm:$0xf]
  %v195 = vld [vmem:[%s1 + $0x150] sm:$0xf]
  %v196 = vld [vmem:[%s1 + $0x154] sm:$0xf]
  %v197 = vld [vmem:[%s1 + $0x158] sm:$0xf]
  %v198 = vld [vmem:[%s1 + $0x15c] sm:$0xf]
  %v199 = vld [vmem:[%s1 + $0x160] sm:$0xf]
  %v200 = vld [vmem:[%s1 + $0x164] sm:$0xf]
  %v201 = vld [vmem:[%s1 + $0x168] sm:$0xf]
  %v202 = vld [vmem:[%s1 + $0x16c] sm:$0xf]
  %v203 = vld [vmem:[%s1 + $0x170] sm:$0xf]
  %v204 = vld [vmem:[%s1 + $0x174] sm:$0xf]
  %v205 = vld [vmem:[%s1 + $0x178] sm:$0xf]
  %v206 = vld [vmem:[%s1 + $0x17c] sm:$0xf]
  %v207 = vld [vmem:[%s1 + $0x180] sm:$0xf]
  %v208 = vld [vmem:[%s1 + $0x184] sm:$0xf]
  %v209 = vld [vmem:[%s1 + $0x188] sm:$0xf]
  %v210 = vld [vmem:[%s1 + $0x18c] sm:$0xf]
  %v211 = vld [vmem:[%s1 + $0x190] sm:$0xf]
  %v212 = vld [vmem:[%s1 + $0x194] sm:$0xf]
  %v213 = vld [vmem:[%s1 + $0x198] sm:$0xf]
  %v214 = vld [vmem:[%s1 + $0x19c] sm:$0xf]
  %v215 = vld [vmem:[%s1 + $0x1a0] sm:$0xf]
  %v216 = vld [vmem:[%s1 + $0x1a4] sm:$0xf]
  %v217 = vld [vmem:[%s1 + $0x1a8] sm:$0xf]
  %v218 = vld [vmem:[%s1 + $0x1ac] sm:$0xf]
  %v219 = vld [vmem:[%s1 + $0x1b0] sm:$0xf]
  %v220 = vld [vmem:[%s1 + $0x1b4] sm:$0xf]
  %v221 = vld [vmem:[%s1 + $0x1b8] sm:$0xf]
  %v222 = vld [vmem:[%s1 + $0x1bc] sm:$0xf]
  %v223 = vld [vmem:[%s1 + $0x1c0] sm:$0xf]
  %v224 = vld [vmem:[%s1 + $0x1c4] sm:$0xf]
  %v225 = vld [vmem:[%s1 + $0x1c8] sm:$0xf]
  %v226 = vld [vmem:[%s1 + $0x1cc] sm:$0xf]
  %v227 = vld [vmem:[%s1 + $0x1d0] sm:$0xf]
  %v228 = vld [vmem:[%s1 + $0x1d4] sm:$0xf]
  %v229 = vld [vmem:[%s1 + $0x1d8] sm:$0xf]
  %v230 = vld [vmem:[%s1 + $0x1dc] sm:$0xf]
  %v231 = vld [vmem:[%s1 + $0x1e0] sm:$0xf]
  %v232 = vld [vmem:[%s1 + $0x1e4] sm:$0xf]
  %v233 = vld [vmem:[%s1 + $0x1e8] sm:$0xf]
  %v234 = vld [vmem:[%s1 + $0x1ec] sm:$0xf]
  %v235 = vld [vmem:[%s1 + $0x1f0] sm:$0xf]
  %v236 = vld [vmem:[%s1 + $0x1f4] sm:$0xf]
  %v237 = vld [vmem:[%s1 + $0x1f8] sm:$0xf]
  %v238 = vld [vmem:[%s1 + $0x1fc] sm:$0xf]
  %v239 = vld [vmem:[%s1 + $0x200] sm:$0xf]
  %v240 = vld [vmem:[%s1 + $0x204] sm:$0xf]
  %v241 = vld [vmem:[%s1 + $0x208] sm:$0xf]
  %v242 = vld [vmem:[%s1 + $0x20c] sm:$0xf]
  %v243 = vld [vmem:[%s1 + $0x210] sm:$0xf]
  %v244 = vld [vmem:[%s1 + $0x214] sm:$0xf]
  %v245 = vld [vmem:[%s1 + $0x218] sm:$0xf]
  %v246 = vld [vmem:[%s1 + $0x21c] sm:$0xf]
  %v247 = vld [vmem:[%s1 + $0x220] sm:$0xf]
  %v248 = vld [vmem:[%s1 + $0x224] sm:$0xf]
  %v249 = vld [vmem:[%s1 + $0x228] sm:$0xf]
  %v250 = vld [vmem:[%s1 + $0x22c] sm:$0xf]
  %v251 = vld [vmem:[%s1 + $0x230] sm:$0xf]
  %v252 = vld [vmem:[%s1 + $0x234] sm:$0xf]
  %v253 = vld [vmem:[%s1 + $0x238] sm:$0xf]
  %v254 = vld [vmem:[%s1 + $0x23c] sm:$0xf]
  %v255 = vld [vmem:[%s1 + $0x240] sm:$0xf]
  %v256 = vld [vmem:[%s1 + $0x244] sm:$0xf]
  %v257 = vld [vmem:[%s1 + $0x248] sm:$0xf]
  %v258 = vld [vmem:[%s1 + $0x24c] sm:$0xf]
  %v259 = vld [vmem:[%s1 + $0x250] sm:$0xf]
  %v260 = vld [vmem:[%s1 + $0x254] sm:$0xf]
  %v261 = vld [vmem:[%s1 + $0x258] sm:$0xf]
  %v262 = vld [vmem:[%s1 + $0x25c] sm:$0xf]
  %v263 = vld [vmem:[%s1 + $0x260] sm:$0xf]
  %v264 = vld [vmem:[%s1 + $0x264] sm:$0xf]
  %v265 = vld [vmem:[%s1 + $0x268] sm:$0xf]
  %v266 = vld [vmem:[%s1 + $0x26c] sm:$0xf]
  %v267 = vld [vmem:[%s1 + $0x270] sm:$0xf]
  %v268 = vld [vmem:[%s1 + $0x274] sm:$0xf]
  %v269 = vld [vmem:[%s1 + $0x278] sm:$0xf]
  %v270 = vld [vmem:[%s1 + $0x27c] sm:$0xf]
  %v271 = vld [vmem:[%s1 + $0x280] sm:$0xf]
  %v272 = vld [vmem:[%s1 + $0x284] sm:$0xf]
  %v273 = vld [vmem:[%s1 + $0x288] sm:$0xf]
  %v274 = vld [vmem:[%s1 + $0x28c] sm:$0xf]
  %v275 = vld [vmem:[%s1 + $0x290] sm:$0xf]
  %v276 = vld [vmem:[%s1 + $0x294] sm:$0xf]
  %v277 = vld [vmem:[%s1 + $0x298] sm:$0xf]
  %v278 = vld [vmem:[%s1 + $0x29c] sm:$0xf]
  %v279 = vld [vmem:[%s1 + $0x2a0] sm:$0xf]
  %v280 = vld [vmem:[%s1 + $0x2a4] sm:$0xf]
  %v281 = vld [vmem:[%s1 + $0x2a8] sm:$0xf]
  %v282 = vld [vmem:[%s1 + $0x2ac] sm:$0xf]
  %v283 = vld [vmem:[%s1 + $0x2b0] sm:$0xf]
  %v284 = vld [vmem:[%s1 + $0x2b4] sm:$0xf]
  %v285 = vld [vmem:[%s1 + $0x2b8] sm:$0xf]
  %v286 = vld [vmem:[%s1 + $0x2bc] sm:$0xf]
  %v287 = vld [vmem:[%s1 + $0x2c0] sm:$0xf]
  %v288 = vld [vmem:[%s1 + $0x2c4] sm:$0xf]
  %v289 = vld [vmem:[%s1 + $0x2c8] sm:$0xf]
  %v290 = vld [vmem:[%s1 + $0x2cc] sm:$0xf]
  %v291 = vld [vmem:[%s1 + $0x2d0] sm:$0xf]
  %v292 = vld [vmem:[%s1 + $0x2d4] sm:$0xf]
  %v293 = vld [vmem:[%s1 + $0x2d8] sm:$0xf]
  %v294 = vld [vmem:[%s1 + $0x2dc] sm:$0xf]
  %v295 = vld [vmem:[%s1 + $0x2e0] sm:$0xf]
  %v296 = vld [vmem:[%s1 + $0x2e4] sm:$0xf]
  %v297 = vld [vmem:[%s1 + $0x2e8] sm:$0xf]
  %v298 = vld [vmem:[%s1 + $0x2ec] sm:$0xf]
  %v299 = vld [vmem:[%s1 + $0x2f0] sm:$0xf]
  %v300 = vld [vmem:[%s1 + $0x2f4] sm:$0xf]
  %v301 = vld [vmem:[%s1 + $0x2f8] sm:$0xf]
  %v302 = vld [vmem:[%s1 + $0x2fc] sm:$0xf]
  %v303 = vld [vmem:[%s1 + $0x300] sm:$0xf]
  %v304 = vld [vmem:[%s1 + $0x304] sm:$0xf]
  %v305 = vld [vmem:[%s1 + $0x308] sm:$0xf]
  %v306 = vld [vmem:[%s1 + $0x30c] sm:$0xf]
  %v307 = vld [vmem:[%s1 + $0x310] sm:$0xf]
  %v308 = vld [vmem:[%s1 + $0x314] sm:$0xf]
  %v309 = vld [vmem:[%s1 + $0x318] sm:$0xf]
  %v310 = vld [vmem:[%s1 + $0x31c] sm:$0xf]
  %v311 = vld [vmem:[%s1 + $0x320] sm:$0xf]
  %v312 = vld [vmem:[%s1 + $0x324] sm:$0xf]
  %v313 = vld [vmem:[%s1 + $0x328] sm:$0xf]
  %v314 = vld [vmem:[%s1 + $0x32c] sm:$0xf]
  %v315 = vld [vmem:[%s1 + $0x330] sm:$0xf]
  %v316 = vld [vmem:[%s1 + $0x334] sm:$0xf]
  %v317 = vld [vmem:[%s1 + $0x338] sm:$0xf]
  %v318 = vld [vmem:[%s1 + $0x33c] sm:$0xf]
  %v319 = vld [vmem:[%s1 + $0x340] sm:$0xf]
  %v320 = vld [vmem:[%s1 + $0x344] sm:$0xf]
  %v321 = vld [vmem:[%s1 + $0x348] sm:$0xf]
  %v322 = vld [vmem:[%s1 + $0x34c] sm:$0xf]
  %v323 = vld [vmem:[%s1 + $0x350] sm:$0xf]
  %v324 = vld [vmem:[%s1 + $0x354] sm:$0xf]
  %v325 = vld [vmem:[%s1 + $0x358] sm:$0xf]
  %v326 = vld [vmem:[%s1 + $0x35c] sm:$0xf]
  %v327 = vld [vmem:[%s1 + $0x360] sm:$0xf]
  %v328 = vld [vmem:[%s1 + $0x364] sm:$0xf]
  %v329 = vld [vmem:[%s1 + $0x368] sm:$0xf]
  %v330 = vld [vmem:[%s1 + $0x36c] sm:$0xf]
  %v331 = vld [vmem:[%s1 + $0x370] sm:$0xf]
  %v332 = vld [vmem:[%s1 + $0x374] sm:$0xf]
  %v333 = vld [vmem:[%s1 + $0x378] sm:$0xf]
  %v334 = vld [vmem:[%s1 + $0x37c] sm:$0xf]
  %v335 = vld [vmem:[%s1 + $0x380] sm:$0xf]
  %v336 = vld [vmem:[%s1 + $0x384] sm:$0xf]
  %v337 = vld [vmem:[%s1 + $0x388] sm:$0xf]
  %v338 = vld [vmem:[%s1 + $0x38c] sm:$0xf]
  %v339 = vld [vmem:[%s1 + $0x390] sm:$0xf]
  %v340 = vld [vmem:[%s1 + $0x394] sm:$0xf]
  %v341 = vld [vmem:[%s1 + $0x398] sm:$0xf]
  %v342 = vld [vmem:[%s1 + $0x39c] sm:$0xf]
  %v343 = vld [vmem:[%s1 + $0x3a0] sm:$0xf]
  %v344 = vld [vmem:[%s1 + $0x3a4] sm:$0xf]
  %v345 = vld [vmem:[%s1 + $0x3a8] sm:$0xf]
  %v346 = vld [vmem:[%s1 + $0x3ac] sm:$0xf]
  %v347 = vld [vmem:[%s1 + $0x3b0] sm:$0xf]
  %v348 = vld [vmem:[%s1 + $0x3b4] sm:$0xf]
  %v349 = vld [vmem:[%s1 + $0x3b8] sm:$0xf]
  %v350 = vld [vmem:[%s1 + $0x3bc] sm:$0xf]
  %v351 = vld [vmem:[%s1 + $0x3c0] sm:$0xf]
  %v352 = vld [vmem:[%s1 + $0x3c4] sm:$0xf]
  %v353 = vld [vmem:[%s1 + $0x3c8] sm:$0xf]
  %v354 = vld [vmem:[%s1 + $0x3cc] sm:$0xf]
  %v355 = vld [vmem:[%s1 + $0x3d0] sm:$0xf]
  %v356 = vld [vmem:[%s1 + $0x3d4] sm:$0xf]
  %v357 = vld [vmem:[%s1 + $0x3d8] sm:$0xf]
  %v358 = vld [vmem:[%s1 + $0x3dc] sm:$0xf]
  %v359 = vld [vmem:[%s1 + $0x3e0] sm:$0xf]
  %v360 = vld [vmem:[%s1 + $0x3e4] sm:$0xf]
  %v361 = vld [vmem:[%s1 + $0x3e8] sm:$0xf]
  %v362 = vld [vmem:[%s1 + $0x3ec] sm:$0xf]
  %v363 = vld [vmem:[%s1 + $0x3f0] sm:$0xf]
  %v364 = vld [vmem:[%s1 + $0x3f4] sm:$0xf]
  %v365 = vld [vmem:[%s1 + $0x3f8] sm:$0xf]
  %v366 = vld [vmem:[%s1 + $0x3fc] sm:$0xf]
  %v367 = vld [vmem:[%s1 + $0x400] sm:$0xf]
  %v368 = vld [vmem:[%s1 + $0x404] sm:$0xf]
  %v369 = vld [vmem:[%s1 + $0x408] sm:$0xf]
  %v370 = vld [vmem:[%s1 + $0x40c] sm:$0xf]
  %v371 = vld [vmem:[%s1 + $0x410] sm:$0xf]
  %v372 = vld [vmem:[%s1 + $0x414] sm:$0xf]
  %v373 = vld [vmem:[%s1 + $0x418] sm:$0xf]
  %v374 = vld [vmem:[%s1 + $0x41c] sm:$0xf]
  %v375 = vld [vmem:[%s1 + $0x420] sm:$0xf]
  %v376 = vld [vmem:[%s1 + $0x424] sm:$0xf]
  %v377 = vld [vmem:[%s1 + $0x428] sm:$0xf]
  %v378 = vld [vmem:[%s1 + $0x42c] sm:$0xf]
  %v379 = vld [vmem:[%s1 + $0x430] sm:$0xf]
  %v380 = vld [vmem:[%s1 + $0x434] sm:$0xf]
  %v381 = vld [vmem:[%s1 + $0x438] sm:$0xf]
  %v382 = vld [vmem:[%s1 + $0x43c] sm:$0xf]
  %v383 = vld [vmem:[%s1 + $0x440] sm:$0xf]
  %v384 = vld [vmem:[%s1 + $0x444] sm:$0xf]
  %v385 = vld [vmem:[%s1 + $0x448] sm:$0xf]
  %v386 = vld [vmem:[%s1 + $0x44c] sm:$0xf]
  %v387 = vld [vmem:[%s1 + $0x450] sm:$0xf]
  %v388 = vld [vmem:[%s1 + $0x454] sm:$0xf]
  %v389 = vld [vmem:[%s1 + $0x458] sm:$0xf]
  %v390 = vld [vmem:[%s1 + $0x45c] sm:$0xf]
  %v391 = vld [vmem:[%s1 + $0x460] sm:$0xf]
  %v392 = vld [vmem:[%s1 + $0x464] sm:$0xf]
  %v393 = vld [vmem:[%s1 + $0x468] sm:$0xf]
  %v394 = vld [vmem:[%s1 + $0x46c] sm:$0xf]
  %v395 = vld [vmem:[%s1 + $0x470] sm:$0xf]
  %v396 = vld [vmem:[%s1 + $0x474] sm:$0xf]
  %v397 = vld [vmem:[%s1 + $0x478] sm:$0xf]
  %v398 = vld [vmem:[%s1 + $0x47c] sm:$0xf]
  %v399 = vld [vmem:[%s1 + $0x480] sm:$0xf]
  %v400 = vld [vmem:[%s1 + $0x484] sm:$0xf]
  %v401 = vld [vmem:[%s1 + $0x488] sm:$0xf]
  %v402 = vld [vmem:[%s1 + $0x48c] sm:$0xf]
  %v403 = vld [vmem:[%s1 + $0x490] sm:$0xf]
  %v404 = vld [vmem:[%s1 + $0x494] sm:$0xf]
  %v405 = vld [vmem:[%s1 + $0x498] sm:$0xf]
  %v406 = vld [vmem:[%s1 + $0x49c] sm:$0xf]
  %v407 = vld [vmem:[%s1 + $0x4a0] sm:$0xf]
  %v408 = vld [vmem:[%s1 + $0x4a4] sm:$0xf]
  %v409 = vld [vmem:[%s1 + $0x4a8] sm:$0xf]
  %v410 = vld [vmem:[%s1 + $0x4ac] sm:$0xf]
  %v411 = vld [vmem:[%s1 + $0x4b0] sm:$0xf]
  %v412 = vld [vmem:[%s1 + $0x4b4] sm:$0xf]
  %v413 = vld [vmem:[%s1 + $0x4b8] sm:$0xf]
  %v414 = vld [vmem:[%s1 + $0x4bc] sm:$0xf]
  %v415 = vld [vmem:[%s1 + $0x4c0] sm:$0xf]
  %v416 = vld [vmem:[%s1 + $0x4c4] sm:$0xf]
  %v417 = vld [vmem:[%s1 + $0x4c8] sm:$0xf]
  %v418 = vld [vmem:[%s1 + $0x4cc] sm:$0xf]
  %v419 = vld [vmem:[%s1 + $0x4d0] sm:$0xf]
  %v420 = vld [vmem:[%s1 + $0x4d4] sm:$0xf]
  %v421 = vld [vmem:[%s1 + $0x4d8] sm:$0xf]
  %v422 = vld [vmem:[%s1 + $0x4dc] sm:$0xf]
  %v423 = vld [vmem:[%s1 + $0x4e0] sm:$0xf]
  %v424 = vld [vmem:[%s1 + $0x4e4] sm:$0xf]
  %v425 = vld [vmem:[%s1 + $0x4e8] sm:$0xf]
  %v426 = vld [vmem:[%s1 + $0x4ec] sm:$0xf]
  %v427 = vld [vmem:[%s1 + $0x4f0] sm:$0xf]
  %v428 = vld [vmem:[%s1 + $0x4f4] sm:$0xf]
  %v429 = vld [vmem:[%s1 + $0x4f8] sm:$0xf]
  %v430 = vld [vmem:[%s1 + $0x4fc] sm:$0xf]
  %v431 = vld [vmem:[%s1 + $0x500] sm:$0xf]
  %v432 = vld [vmem:[%s1 + $0x504] sm:$0xf]
  %v433 = vld [vmem:[%s1 + $0x508] sm:$0xf]
  %v434 = vld [vmem:[%s1 + $0x50c] sm:$0xf]
  %v435 = vld [vmem:[%s1 + $0x510] sm:$0xf]
  %v436 = vld [vmem:[%s1 + $0x514] sm:$0xf]
  %v437 = vld [vmem:[%s1 + $0x518] sm:$0xf]
  %v438 = vld [vmem:[%s1 + $0x51c] sm:$0xf]
  %v439 = vld [vmem:[%s1 + $0x520] sm:$0xf]
  %v440 = vld [vmem:[%s1 + $0x524] sm:$0xf]
  %v441 = vld [vmem:[%s1 + $0x528] sm:$0xf]
  %v442 = vld [vmem:[%s1 + $0x52c] sm:$0xf]
  %v443 = vld [vmem:[%s1 + $0x530] sm:$0xf]
  %v444 = vld [vmem:[%s1 + $0x534] sm:$0xf]
  %v445 = vld [vmem:[%s1 + $0x538] sm:$0xf]
  %v446 = vld [vmem:[%s1 + $0x53c] sm:$0xf]
  %v447 = vld [vmem:[%s1 + $0x540] sm:$0xf]
  %v448 = vld [vmem:[%s1 + $0x544] sm:$0xf]
  %v449 = vld [vmem:[%s1 + $0x548] sm:$0xf]
  %v450 = vld [vmem:[%s1 + $0x54c] sm:$0xf]
  %v451 = vld [vmem:[%s1 + $0x550] sm:$0xf]
  %v452 = vld [vmem:[%s1 + $0x554] sm:$0xf]
  %v453 = vld [vmem:[%s1 + $0x558] sm:$0xf]
  %v454 = vld [vmem:[%s1 + $0x55c] sm:$0xf]
  %v455 = vld [vmem:[%s1 + $0x560] sm:$0xf]
  %v456 = vld [vmem:[%s1 + $0x564] sm:$0xf]
  %v457 = vld [vmem:[%s1 + $0x568] sm:$0xf]
  %v458 = vld [vmem:[%s1 + $0x56c] sm:$0xf]
  %v459 = vld [vmem:[%s1 + $0x570] sm:$0xf]
  %v460 = vld [vmem:[%s1 + $0x574] sm:$0xf]
  %v461 = vld [vmem:[%s1 + $0x578] sm:$0xf]
  %v462 = vld [vmem:[%s1 + $0x57c] sm:$0xf]
  %v463 = vld [vmem:[%s1 + $0x580] sm:$0xf]
  %v464 = vld [vmem:[%s1 + $0x584] sm:$0xf]
  %v465 = vld [vmem:[%s1 + $0x588] sm:$0xf]
  %v466 = vld [vmem:[%s1 + $0x58c] sm:$0xf]
  %v467 = vld [vmem:[%s1 + $0x590] sm:$0xf]
  %v468 = vld [vmem:[%s1 + $0x594] sm:$0xf]
  %v469 = vld [vmem:[%s1 + $0x598] sm:$0xf]
  %v470 = vld [vmem:[%s1 + $0x59c] sm:$0xf]
  %v471 = vld [vmem:[%s1 + $0x5a0] sm:$0xf]
  %v472 = vld [vmem:[%s1 + $0x5a4] sm:$0xf]
  %v473 = vld [vmem:[%s1 + $0x5a8] sm:$0xf]
  %v474 = vld [vmem:[%s1 + $0x5ac] sm:$0xf]
  %v475 = vld [vmem:[%s1 + $0x5b0] sm:$0xf]
  %v476 = vld [vmem:[%s1 + $0x5b4] sm:$0xf]
  %v477 = vld [vmem:[%s1 + $0x5b8] sm:$0xf]
  %v478 = vld [vmem:[%s1 + $0x5bc] sm:$0xf]
  %v479 = vld [vmem:[%s1 + $0x5c0] sm:$0xf]
  %v480 = vld [vmem:[%s1 + $0x5c4] sm:$0xf]
  %v481 = vld [vmem:[%s1 + $0x5c8] sm:$0xf]
  %v482 = vld [vmem:[%s1 + $0x5cc] sm:$0xf]
  %v483 = vld [vmem:[%s1 + $0x5d0] sm:$0xf]
  %v484 = vld [vmem:[%s1 + $0x5d4] sm:$0xf]
  %v485 = vld [vmem:[%s1 + $0x5d8] sm:$0xf]
  %v486 = vld [vmem:[%s1 + $0x5dc] sm:$0xf]
  %v487 = vld [vmem:[%s1 + $0x5e0] sm:$0xf]
  %v488 = vld [vmem:[%s1 + $0x5e4] sm:$0xf]
  %v489 = vld [vmem:[%s1 + $0x5e8] sm:$0xf]
  %v490 = vld [vmem:[%s1 + $0x5ec] sm:$0xf]
  %v491 = vld [vmem:[%s1 + $0x5f0] sm:$0xf]
  %v492 = vld [vmem:[%s1 + $0x5f4] sm:$0xf]
  %v493 = vld [vmem:[%s1 + $0x5f8] sm:$0xf]
  %v494 = vld [vmem:[%s1 + $0x5fc] sm:$0xf]
  %v495 = vld [vmem:[%s1 + $0x600] sm:$0xf]
  %v496 = vld [vmem:[%s1 + $0x604] sm:$0xf]
  %v497 = vld [vmem:[%s1 + $0x608] sm:$0xf]
  %v498 = vld [vmem:[%s1 + $0x60c] sm:$0xf]
  %v499 = vld [vmem:[%s1 + $0x610] sm:$0xf]
  %v500 = vld [vmem:[%s1 + $0x614] sm:$0xf]
  %v501 = vld [vmem:[%s1 + $0x618] sm:$0xf]
  %v502 = vld [vmem:[%s1 + $0x61c] sm:$0xf]
  %v503 = vld [vmem:[%s1 + $0x620] sm:$0xf]
  %v504 = vld [vmem:[%s1 + $0x624] sm:$0xf]
  %v505 = vld [vmem:[%s1 + $0x628] sm:$0xf]
  %v506 = vld [vmem:[%s1 + $0x62c] sm:$0xf]
  %v507 = vld [vmem:[%s1 + $0x630] sm:$0xf]
  %v508 = vld [vmem:[%s1 + $0x634] sm:$0xf]
  %v509 = vld [vmem:[%s1 + $0x638] sm:$0xf]
  %v510 = vld [vmem:[%s1 + $0x63c] sm:$0xf]
  %v511 = vld [vmem:[%s1 + $0x640] sm:$0xf]
  %v512 = vld [vmem:[%s1 + $0x644] sm:$0xf]
  %v513 = vld [vmem:[%s1 + $0x648] sm:$0xf]
  %v514 = vld [vmem:[%s1 + $0x64c] sm:$0xf]
  %v515 = vld [vmem:[%s1 + $0x650] sm:$0xf]
  %v516 = vld [vmem:[%s1 + $0x654] sm:$0xf]
  %v517 = vld [vmem:[%s1 + $0x658] sm:$0xf]
  %v518 = vld [vmem:[%s1 + $0x65c] sm:$0xf]
  %v519 = vld [vmem:[%s1 + $0x660] sm:$0xf]
  %v520 = vld [vmem:[%s1 + $0x664] sm:$0xf]
  %v521 = vld [vmem:[%s1 + $0x668] sm:$0xf]
  %v522 = vld [vmem:[%s1 + $0x66c] sm:$0xf]
  %v523 = vld [vmem:[%s1 + $0x670] sm:$0xf]
  %v524 = vld [vmem:[%s1 + $0x674] sm:$0xf]
  %v525 = vld [vmem:[%s1 + $0x678] sm:$0xf]
  %v526 = vld [vmem:[%s1 + $0x67c] sm:$0xf]
  %v527 = vld [vmem:[%s1 + $0x680] sm:$0xf]
  %v528 = vld [vmem:[%s1 + $0x684] sm:$0xf]
  %v529 = vld [vmem:[%s1 + $0x688] sm:$0xf]
  %v530 = vld [vmem:[%s1 + $0x68c] sm:$0xf]
  %v531 = vld [vmem:[%s1 + $0x690] sm:$0xf]
  %v532 = vld [vmem:[%s1 + $0x694] sm:$0xf]
  %v533 = vld [vmem:[%s1 + $0x698] sm:$0xf]
  %v534 = vld [vmem:[%s1 + $0x69c] sm:$0xf]
  %v535 = vld [vmem:[%s1 + $0x6a0] sm:$0xf]
  %v536 = vld [vmem:[%s1 + $0x6a4] sm:$0xf]
  %v537 = vld [vmem:[%s1 + $0x6a8] sm:$0xf]
  %v538 = vld [vmem:[%s1 + $0x6ac] sm:$0xf]
  %v539 = vld [vmem:[%s1 + $0x6b0] sm:$0xf]
  %v540 = vld [vmem:[%s1 + $0x6b4] sm:$0xf]
  %v541 = vld [vmem:[%s1 + $0x6b8] sm:$0xf]
  %v542 = vld [vmem:[%s1 + $0x6bc] sm:$0xf]
  %v543 = vld [vmem:[%s1 + $0x6c0] sm:$0xf]
  %v544 = vld [vmem:[%s1 + $0x6c4] sm:$0xf]
  %v545 = vld [vmem:[%s1 + $0x6c8] sm:$0xf]
  %v546 = vld [vmem:[%s1 + $0x6cc] sm:$0xf]
  %v547 = vld [vmem:[%s1 + $0x6d0] sm:$0xf]
  %v548 = vld [vmem:[%s1 + $0x6d4] sm:$0xf]
  %v549 = vld [vmem:[%s1 + $0x6d8] sm:$0xf]
  %v550 = vld [vmem:[%s1 + $0x6dc] sm:$0xf]
  %v551 = vld [vmem:[%s1 + $0x6e0] sm:$0xf]
  %v552 = vld [vmem:[%s1 + $0x6e4] sm:$0xf]
  %v553 = vld [vmem:[%s1 + $0x6e8] sm:$0xf]
  %v554 = vld [vmem:[%s1 + $0x6ec] sm:$0xf]
  %v555 = vld [vmem:[%s1 + $0x6f0] sm:$0xf]
  %v556 = vld [vmem:[%s1 + $0x6f4] sm:$0xf]
  %v557 = vld [vmem:[%s1 + $0x6f8] sm:$0xf]
  %v558 = vld [vmem:[%s1 + $0x6fc] sm:$0xf]
  %v559 = vld [vmem:[%s1 + $0x700] sm:$0xf]
  %v560 = vld [vmem:[%s1 + $0x704] sm:$0xf]
  %v561 = vld [vmem:[%s1 + $0x708] sm:$0xf]
  %v562 = vld [vmem:[%s1 + $0x70c] sm:$0xf]
  %v563 = vld [vmem:[%s1 + $0x710] sm:$0xf]
  %v564 = vld [vmem:[%s1 + $0x714] sm:$0xf]
  %v565 = vld [vmem:[%s1 + $0x718] sm:$0xf]
  %v566 = vld [vmem:[%s1 + $0x71c] sm:$0xf]
  %v567 = vld [vmem:[%s1 + $0x720] sm:$0xf]
  %v568 = vld [vmem:[%s1 + $0x724] sm:$0xf]
  %v569 = vld [vmem:[%s1 + $0x728] sm:$0xf]
  %v570 = vld [vmem:[%s1 + $0x72c] sm:$0xf]
  %v571 = vld [vmem:[%s1 + $0x730] sm:$0xf]
  %v572 = vld [vmem:[%s1 + $0x734] sm:$0xf]
  %v573 = vld [vmem:[%s1 + $0x738] sm:$0xf]
  %v574 = vld [vmem:[%s1 + $0x73c] sm:$0xf]
  %v575 = vld [vmem:[%s1 + $0x740] sm:$0xf]
  %v576 = vld [vmem:[%s1 + $0x744] sm:$0xf]
  %v577 = vld [vmem:[%s1 + $0x748] sm:$0xf]
  %v578 = vld [vmem:[%s1 + $0x74c] sm:$0xf]
  %v579 = vld [vmem:[%s1 + $0x750] sm:$0xf]
  %v580 = vld [vmem:[%s1 + $0x754] sm:$0xf]
  %v581 = vld [vmem:[%s1 + $0x758] sm:$0xf]
  %v582 = vld [vmem:[%s1 + $0x75c] sm:$0xf]
  %v583 = vld [vmem:[%s1 + $0x760] sm:$0xf]
  %v584 = vld [vmem:[%s1 + $0x764] sm:$0xf]
  %v585 = vld [vmem:[%s1 + $0x768] sm:$0xf]
  %v586 = vld [vmem:[%s1 + $0x76c] sm:$0xf]
  %v587 = vld [vmem:[%s1 + $0x770] sm:$0xf]
  %v588 = vld [vmem:[%s1 + $0x774] sm:$0xf]
  %v589 = vld [vmem:[%s1 + $0x778] sm:$0xf]
  %v590 = vld [vmem:[%s1 + $0x77c] sm:$0xf]
  %v591 = vld [vmem:[%s1 + $0x780] sm:$0xf]
  %v592 = vld [vmem:[%s1 + $0x784] sm:$0xf]
  %v593 = vld [vmem:[%s1 + $0x788] sm:$0xf]
  %v594 = vld [vmem:[%s1 + $0x78c] sm:$0xf]
  %v595 = vld [vmem:[%s1 + $0x790] sm:$0xf]
  %v596 = vld [vmem:[%s1 + $0x794] sm:$0xf]
  %v597 = vld [vmem:[%s1 + $0x798] sm:$0xf]
  %v598 = vld [vmem:[%s1 + $0x79c] sm:$0xf]
  %v599 = vld [vmem:[%s1 + $0x7a0] sm:$0xf]
  %v600 = vld [vmem:[%s1 + $0x7a4] sm:$0xf]
  %v601 = vld [vmem:[%s1 + $0x7a8] sm:$0xf]
  %v602 = vld [vmem:[%s1 + $0x7ac] sm:$0xf]
  %v603 = vld [vmem:[%s1 + $0x7b0] sm:$0xf]
  %v604 = vld [vmem:[%s1 + $0x7b4] sm:$0xf]
  %v605 = vld [vmem:[%s1 + $0x7b8] sm:$0xf]
  %v606 = vld [vmem:[%s1 + $0x7bc] sm:$0xf]
  %v607 = vld [vmem:[%s1 + $0x7c0] sm:$0xf]
  %v608 = vld [vmem:[%s1 + $0x7c4] sm:$0xf]
  %v609 = vld [vmem:[%s1 + $0x7c8] sm:$0xf]
  %v610 = vld [vmem:[%s1 + $0x7cc] sm:$0xf]
  %v611 = vld [vmem:[%s1 + $0x7d0] sm:$0xf]
  %v612 = vld [vmem:[%s1 + $0x7d4] sm:$0xf]
  %v613 = vld [vmem:[%s1 + $0x7d8] sm:$0xf]
  %v614 = vld [vmem:[%s1 + $0x7dc] sm:$0xf]
  %v615 = vld [vmem:[%s1 + $0x7e0] sm:$0xf]
  %v616 = vld [vmem:[%s1 + $0x7e4] sm:$0xf]
  %v617 = vld [vmem:[%s1 + $0x7e8] sm:$0xf]
  %v618 = vld [vmem:[%s1 + $0x7ec] sm:$0xf]
  %v619 = vld [vmem:[%s1 + $0x7f0] sm:$0xf]
  %v620 = vld [vmem:[%s1 + $0x7f4] sm:$0xf]
  %v621 = vld [vmem:[%s1 + $0x7f8] sm:$0xf]
  %v622 = vld [vmem:[%s1 + $0x7fc] sm:$0xf]
  %v623 = vld [vmem:[%s2] sm:$0x1]
  %v625 = vlaneseq
  %v626 = vshrl.u32 %v625, 7
  %v627 = vsub.s32 0, %v626
  %v628 = vrot.slane %v623, %v627
  %v1142 = vunpack.c.l.b16 %v111
  %v1143 = vunpack.c.l.b16 %v112
  %v1144 = vunpack.c.l.b16 %v113
  %v1145 = vunpack.c.l.b16 %v114
  %v1146 = vunpack.c.l.b16 %v115
  %v1147 = vunpack.c.l.b16 %v116
  %v1148 = vunpack.c.l.b16 %v117
  %v1149 = vunpack.c.l.b16 %v118
  %v1150 = vunpack.c.l.b16 %v119
  %v1151 = vunpack.c.l.b16 %v120
  %v1152 = vunpack.c.l.b16 %v121
  %v1153 = vunpack.c.l.b16 %v122
  %v1154 = vunpack.c.l.b16 %v123
  %v1155 = vunpack.c.l.b16 %v124
  %v1156 = vunpack.c.l.b16 %v125
  %v1157 = vunpack.c.l.b16 %v126
  %v1158 = vunpack.c.l.b16 %v127
  %v1159 = vunpack.c.l.b16 %v128
  %v1160 = vunpack.c.l.b16 %v129
  %v1161 = vunpack.c.l.b16 %v130
  %v1162 = vunpack.c.l.b16 %v131
  %v1163 = vunpack.c.l.b16 %v132
  %v1164 = vunpack.c.l.b16 %v133
  %v1165 = vunpack.c.l.b16 %v134
  %v1166 = vunpack.c.l.b16 %v135
  %v1167 = vunpack.c.l.b16 %v136
  %v1168 = vunpack.c.l.b16 %v137
  %v1169 = vunpack.c.l.b16 %v138
  %v1170 = vunpack.c.l.b16 %v139
  %v1171 = vunpack.c.l.b16 %v140
  %v1172 = vunpack.c.l.b16 %v141
  %v1173 = vunpack.c.l.b16 %v142
  %v1174 = vunpack.c.l.b16 %v143
  %v1175 = vunpack.c.l.b16 %v144
  %v1176 = vunpack.c.l.b16 %v145
  %v1177 = vunpack.c.l.b16 %v146
  %v1178 = vunpack.c.l.b16 %v147
  %v1179 = vunpack.c.l.b16 %v148
  %v1180 = vunpack.c.l.b16 %v149
  %v1181 = vunpack.c.l.b16 %v150
  %v1182 = vunpack.c.l.b16 %v151
  %v1183 = vunpack.c.l.b16 %v152
  %v1184 = vunpack.c.l.b16 %v153
  %v1185 = vunpack.c.l.b16 %v154
  %v1186 = vunpack.c.l.b16 %v155
  %v1187 = vunpack.c.l.b16 %v156
  %v1188 = vunpack.c.l.b16 %v157
  %v1189 = vunpack.c.l.b16 %v158
  %v1190 = vunpack.c.l.b16 %v159
  %v1191 = vunpack.c.l.b16 %v160
  %v1192 = vunpack.c.l.b16 %v161
  %v1193 = vunpack.c.l.b16 %v162
  %v1194 = vunpack.c.l.b16 %v163
  %v1195 = vunpack.c.l.b16 %v164
  %v1196 = vunpack.c.l.b16 %v165
  %v1197 = vunpack.c.l.b16 %v166
  %v1198 = vunpack.c.l.b16 %v167
  %v1199 = vunpack.c.l.b16 %v168
  %v1200 = vunpack.c.l.b16 %v169
  %v1201 = vunpack.c.l.b16 %v170
  %v1202 = vunpack.c.l.b16 %v171
  %v1203 = vunpack.c.l.b16 %v172
  %v1204 = vunpack.c.l.b16 %v173
  %v1205 = vunpack.c.l.b16 %v174
  %v1206 = vunpack.c.l.b16 %v175
  %v1207 = vunpack.c.l.b16 %v176
  %v1208 = vunpack.c.l.b16 %v177
  %v1209 = vunpack.c.l.b16 %v178
  %v1210 = vunpack.c.l.b16 %v179
  %v1211 = vunpack.c.l.b16 %v180
  %v1212 = vunpack.c.l.b16 %v181
  %v1213 = vunpack.c.l.b16 %v182
  %v1214 = vunpack.c.l.b16 %v183
  %v1215 = vunpack.c.l.b16 %v184
  %v1216 = vunpack.c.l.b16 %v185
  %v1217 = vunpack.c.l.b16 %v186
  %v1218 = vunpack.c.l.b16 %v187
  %v1219 = vunpack.c.l.b16 %v188
  %v1220 = vunpack.c.l.b16 %v189
  %v1221 = vunpack.c.l.b16 %v190
  %v1222 = vunpack.c.l.b16 %v191
  %v1223 = vunpack.c.l.b16 %v192
  %v1224 = vunpack.c.l.b16 %v193
  %v1225 = vunpack.c.l.b16 %v194
  %v1226 = vunpack.c.l.b16 %v195
  %v1227 = vunpack.c.l.b16 %v196
  %v1228 = vunpack.c.l.b16 %v197
  %v1229 = vunpack.c.l.b16 %v198
  %v1230 = vunpack.c.l.b16 %v199
  %v1231 = vunpack.c.l.b16 %v200
  %v1232 = vunpack.c.l.b16 %v201
  %v1233 = vunpack.c.l.b16 %v202
  %v1234 = vunpack.c.l.b16 %v203
  %v1235 = vunpack.c.l.b16 %v204
  %v1236 = vunpack.c.l.b16 %v205
  %v1237 = vunpack.c.l.b16 %v206
  %v1238 = vunpack.c.l.b16 %v207
  %v1239 = vunpack.c.l.b16 %v208
  %v1240 = vunpack.c.l.b16 %v209
  %v1241 = vunpack.c.l.b16 %v210
  %v1242 = vunpack.c.l.b16 %v211
  %v1243 = vunpack.c.l.b16 %v212
  %v1244 = vunpack.c.l.b16 %v213
  %v1245 = vunpack.c.l.b16 %v214
  %v1246 = vunpack.c.l.b16 %v215
  %v1247 = vunpack.c.l.b16 %v216
  %v1248 = vunpack.c.l.b16 %v217
  %v1249 = vunpack.c.l.b16 %v218
  %v1250 = vunpack.c.l.b16 %v219
  %v1251 = vunpack.c.l.b16 %v220
  %v1252 = vunpack.c.l.b16 %v221
  %v1253 = vunpack.c.l.b16 %v222
  %v1254 = vunpack.c.l.b16 %v223
  %v1255 = vunpack.c.l.b16 %v224
  %v1256 = vunpack.c.l.b16 %v225
  %v1257 = vunpack.c.l.b16 %v226
  %v1258 = vunpack.c.l.b16 %v227
  %v1259 = vunpack.c.l.b16 %v228
  %v1260 = vunpack.c.l.b16 %v229
  %v1261 = vunpack.c.l.b16 %v230
  %v1262 = vunpack.c.l.b16 %v231
  %v1263 = vunpack.c.l.b16 %v232
  %v1264 = vunpack.c.l.b16 %v233
  %v1265 = vunpack.c.l.b16 %v234
  %v1266 = vunpack.c.l.b16 %v235
  %v1267 = vunpack.c.l.b16 %v236
  %v1268 = vunpack.c.l.b16 %v237
  %v1269 = vunpack.c.l.b16 %v238
  %v1270 = vunpack.c.l.b16 %v239
  %v1271 = vunpack.c.l.b16 %v240
  %v1272 = vunpack.c.l.b16 %v241
  %v1273 = vunpack.c.l.b16 %v242
  %v1274 = vunpack.c.l.b16 %v243
  %v1275 = vunpack.c.l.b16 %v244
  %v1276 = vunpack.c.l.b16 %v245
  %v1277 = vunpack.c.l.b16 %v246
  %v1278 = vunpack.c.l.b16 %v247
  %v1279 = vunpack.c.l.b16 %v248
  %v1280 = vunpack.c.l.b16 %v249
  %v1281 = vunpack.c.l.b16 %v250
  %v1282 = vunpack.c.l.b16 %v251
  %v1283 = vunpack.c.l.b16 %v252
  %v1284 = vunpack.c.l.b16 %v253
  %v1285 = vunpack.c.l.b16 %v254
  %v1286 = vunpack.c.l.b16 %v255
  %v1287 = vunpack.c.l.b16 %v256
  %v1288 = vunpack.c.l.b16 %v257
  %v1289 = vunpack.c.l.b16 %v258
  %v1290 = vunpack.c.l.b16 %v259
  %v1291 = vunpack.c.l.b16 %v260
  %v1292 = vunpack.c.l.b16 %v261
  %v1293 = vunpack.c.l.b16 %v262
  %v1294 = vunpack.c.l.b16 %v263
  %v1295 = vunpack.c.l.b16 %v264
  %v1296 = vunpack.c.l.b16 %v265
  %v1297 = vunpack.c.l.b16 %v266
  %v1298 = vunpack.c.l.b16 %v267
  %v1299 = vunpack.c.l.b16 %v268
  %v1300 = vunpack.c.l.b16 %v269
  %v1301 = vunpack.c.l.b16 %v270
  %v1302 = vunpack.c.l.b16 %v271
  %v1303 = vunpack.c.l.b16 %v272
  %v1304 = vunpack.c.l.b16 %v273
  %v1305 = vunpack.c.l.b16 %v274
  %v1306 = vunpack.c.l.b16 %v275
  %v1307 = vunpack.c.l.b16 %v276
  %v1308 = vunpack.c.l.b16 %v277
  %v1309 = vunpack.c.l.b16 %v278
  %v1310 = vunpack.c.l.b16 %v279
  %v1311 = vunpack.c.l.b16 %v280
  %v1312 = vunpack.c.l.b16 %v281
  %v1313 = vunpack.c.l.b16 %v282
  %v1314 = vunpack.c.l.b16 %v283
  %v1315 = vunpack.c.l.b16 %v284
  %v1316 = vunpack.c.l.b16 %v285
  %v1317 = vunpack.c.l.b16 %v286
  %v1318 = vunpack.c.l.b16 %v287
  %v1319 = vunpack.c.l.b16 %v288
  %v1320 = vunpack.c.l.b16 %v289
  %v1321 = vunpack.c.l.b16 %v290
  %v1322 = vunpack.c.l.b16 %v291
  %v1323 = vunpack.c.l.b16 %v292
  %v1324 = vunpack.c.l.b16 %v293
  %v1325 = vunpack.c.l.b16 %v294
  %v1326 = vunpack.c.l.b16 %v295
  %v1327 = vunpack.c.l.b16 %v296
  %v1328 = vunpack.c.l.b16 %v297
  %v1329 = vunpack.c.l.b16 %v298
  %v1330 = vunpack.c.l.b16 %v299
  %v1331 = vunpack.c.l.b16 %v300
  %v1332 = vunpack.c.l.b16 %v301
  %v1333 = vunpack.c.l.b16 %v302
  %v1334 = vunpack.c.l.b16 %v303
  %v1335 = vunpack.c.l.b16 %v304
  %v1336 = vunpack.c.l.b16 %v305
  %v1337 = vunpack.c.l.b16 %v306
  %v1338 = vunpack.c.l.b16 %v307
  %v1339 = vunpack.c.l.b16 %v308
  %v1340 = vunpack.c.l.b16 %v309
  %v1341 = vunpack.c.l.b16 %v310
  %v1342 = vunpack.c.l.b16 %v311
  %v1343 = vunpack.c.l.b16 %v312
  %v1344 = vunpack.c.l.b16 %v313
  %v1345 = vunpack.c.l.b16 %v314
  %v1346 = vunpack.c.l.b16 %v315
  %v1347 = vunpack.c.l.b16 %v316
  %v1348 = vunpack.c.l.b16 %v317
  %v1349 = vunpack.c.l.b16 %v318
  %v1350 = vunpack.c.l.b16 %v319
  %v1351 = vunpack.c.l.b16 %v320
  %v1352 = vunpack.c.l.b16 %v321
  %v1353 = vunpack.c.l.b16 %v322
  %v1354 = vunpack.c.l.b16 %v323
  %v1355 = vunpack.c.l.b16 %v324
  %v1356 = vunpack.c.l.b16 %v325
  %v1357 = vunpack.c.l.b16 %v326
  %v1358 = vunpack.c.l.b16 %v327
  %v1359 = vunpack.c.l.b16 %v328
  %v1360 = vunpack.c.l.b16 %v329
  %v1361 = vunpack.c.l.b16 %v330
  %v1362 = vunpack.c.l.b16 %v331
  %v1363 = vunpack.c.l.b16 %v332
  %v1364 = vunpack.c.l.b16 %v333
  %v1365 = vunpack.c.l.b16 %v334
  %v1366 = vunpack.c.l.b16 %v335
  %v1367 = vunpack.c.l.b16 %v336
  %v1368 = vunpack.c.l.b16 %v337
  %v1369 = vunpack.c.l.b16 %v338
  %v1370 = vunpack.c.l.b16 %v339
  %v1371 = vunpack.c.l.b16 %v340
  %v1372 = vunpack.c.l.b16 %v341
  %v1373 = vunpack.c.l.b16 %v342
  %v1374 = vunpack.c.l.b16 %v343
  %v1375 = vunpack.c.l.b16 %v344
  %v1376 = vunpack.c.l.b16 %v345
  %v1377 = vunpack.c.l.b16 %v346
  %v1378 = vunpack.c.l.b16 %v347
  %v1379 = vunpack.c.l.b16 %v348
  %v1380 = vunpack.c.l.b16 %v349
  %v1381 = vunpack.c.l.b16 %v350
  %v1382 = vunpack.c.l.b16 %v351
  %v1383 = vunpack.c.l.b16 %v352
  %v1384 = vunpack.c.l.b16 %v353
  %v1385 = vunpack.c.l.b16 %v354
  %v1386 = vunpack.c.l.b16 %v355
  %v1387 = vunpack.c.l.b16 %v356
  %v1388 = vunpack.c.l.b16 %v357
  %v1389 = vunpack.c.l.b16 %v358
  %v1390 = vunpack.c.l.b16 %v359
  %v1391 = vunpack.c.l.b16 %v360
  %v1392 = vunpack.c.l.b16 %v361
  %v1393 = vunpack.c.l.b16 %v362
  %v1394 = vunpack.c.l.b16 %v363
  %v1395 = vunpack.c.l.b16 %v364
  %v1396 = vunpack.c.l.b16 %v365
  %v1397 = vunpack.c.l.b16 %v366
  %v1398 = vunpack.c.l.b16 %v367
  %v1399 = vunpack.c.l.b16 %v368
  %v1400 = vunpack.c.l.b16 %v369
  %v1401 = vunpack.c.l.b16 %v370
  %v1402 = vunpack.c.l.b16 %v371
  %v1403 = vunpack.c.l.b16 %v372
  %v1404 = vunpack.c.l.b16 %v373
  %v1405 = vunpack.c.l.b16 %v374
  %v1406 = vunpack.c.l.b16 %v375
  %v1407 = vunpack.c.l.b16 %v376
  %v1408 = vunpack.c.l.b16 %v377
  %v1409 = vunpack.c.l.b16 %v378
  %v1410 = vunpack.c.l.b16 %v379
  %v1411 = vunpack.c.l.b16 %v380
  %v1412 = vunpack.c.l.b16 %v381
  %v1413 = vunpack.c.l.b16 %v382
  %v1414 = vunpack.c.l.b16 %v383
  %v1415 = vunpack.c.l.b16 %v384
  %v1416 = vunpack.c.l.b16 %v385
  %v1417 = vunpack.c.l.b16 %v386
  %v1418 = vunpack.c.l.b16 %v387
  %v1419 = vunpack.c.l.b16 %v388
  %v1420 = vunpack.c.l.b16 %v389
  %v1421 = vunpack.c.l.b16 %v390
  %v1422 = vunpack.c.l.b16 %v391
  %v1423 = vunpack.c.l.b16 %v392
  %v1424 = vunpack.c.l.b16 %v393
  %v1425 = vunpack.c.l.b16 %v394
  %v1426 = vunpack.c.l.b16 %v395
  %v1427 = vunpack.c.l.b16 %v396
  %v1428 = vunpack.c.l.b16 %v397
  %v1429 = vunpack.c.l.b16 %v398
  %v1430 = vunpack.c.l.b16 %v399
  %v1431 = vunpack.c.l.b16 %v400
  %v1432 = vunpack.c.l.b16 %v401
  %v1433 = vunpack.c.l.b16 %v402
  %v1434 = vunpack.c.l.b16 %v403
  %v1435 = vunpack.c.l.b16 %v404
  %v1436 = vunpack.c.l.b16 %v405
  %v1437 = vunpack.c.l.b16 %v406
  %v1438 = vunpack.c.l.b16 %v407
  %v1439 = vunpack.c.l.b16 %v408
  %v1440 = vunpack.c.l.b16 %v409
  %v1441 = vunpack.c.l.b16 %v410
  %v1442 = vunpack.c.l.b16 %v411
  %v1443 = vunpack.c.l.b16 %v412
  %v1444 = vunpack.c.l.b16 %v413
  %v1445 = vunpack.c.l.b16 %v414
  %v1446 = vunpack.c.l.b16 %v415
  %v1447 = vunpack.c.l.b16 %v416
  %v1448 = vunpack.c.l.b16 %v417
  %v1449 = vunpack.c.l.b16 %v418
  %v1450 = vunpack.c.l.b16 %v419
  %v1451 = vunpack.c.l.b16 %v420
  %v1452 = vunpack.c.l.b16 %v421
  %v1453 = vunpack.c.l.b16 %v422
  %v1454 = vunpack.c.l.b16 %v423
  %v1455 = vunpack.c.l.b16 %v424
  %v1456 = vunpack.c.l.b16 %v425
  %v1457 = vunpack.c.l.b16 %v426
  %v1458 = vunpack.c.l.b16 %v427
  %v1459 = vunpack.c.l.b16 %v428
  %v1460 = vunpack.c.l.b16 %v429
  %v1461 = vunpack.c.l.b16 %v430
  %v1462 = vunpack.c.l.b16 %v431
  %v1463 = vunpack.c.l.b16 %v432
  %v1464 = vunpack.c.l.b16 %v433
  %v1465 = vunpack.c.l.b16 %v434
  %v1466 = vunpack.c.l.b16 %v435
  %v1467 = vunpack.c.l.b16 %v436
  %v1468 = vunpack.c.l.b16 %v437
  %v1469 = vunpack.c.l.b16 %v438
  %v1470 = vunpack.c.l.b16 %v439
  %v1471 = vunpack.c.l.b16 %v440
  %v1472 = vunpack.c.l.b16 %v441
  %v1473 = vunpack.c.l.b16 %v442
  %v1474 = vunpack.c.l.b16 %v443
  %v1475 = vunpack.c.l.b16 %v444
  %v1476 = vunpack.c.l.b16 %v445
  %v1477 = vunpack.c.l.b16 %v446
  %v1478 = vunpack.c.l.b16 %v447
  %v1479 = vunpack.c.l.b16 %v448
  %v1480 = vunpack.c.l.b16 %v449
  %v1481 = vunpack.c.l.b16 %v450
  %v1482 = vunpack.c.l.b16 %v451
  %v1483 = vunpack.c.l.b16 %v452
  %v1484 = vunpack.c.l.b16 %v453
  %v1485 = vunpack.c.l.b16 %v454
  %v1486 = vunpack.c.l.b16 %v455
  %v1487 = vunpack.c.l.b16 %v456
  %v1488 = vunpack.c.l.b16 %v457
  %v1489 = vunpack.c.l.b16 %v458
  %v1490 = vunpack.c.l.b16 %v459
  %v1491 = vunpack.c.l.b16 %v460
  %v1492 = vunpack.c.l.b16 %v461
  %v1493 = vunpack.c.l.b16 %v462
  %v1494 = vunpack.c.l.b16 %v463
  %v1495 = vunpack.c.l.b16 %v464
  %v1496 = vunpack.c.l.b16 %v465
  %v1497 = vunpack.c.l.b16 %v466
  %v1498 = vunpack.c.l.b16 %v467
  %v1499 = vunpack.c.l.b16 %v468
  %v1500 = vunpack.c.l.b16 %v469
  %v1501 = vunpack.c.l.b16 %v470
  %v1502 = vunpack.c.l.b16 %v471
  %v1503 = vunpack.c.l.b16 %v472
  %v1504 = vunpack.c.l.b16 %v473
  %v1505 = vunpack.c.l.b16 %v474
  %v1506 = vunpack.c.l.b16 %v475
  %v1507 = vunpack.c.l.b16 %v476
  %v1508 = vunpack.c.l.b16 %v477
  %v1509 = vunpack.c.l.b16 %v478
  %v1510 = vunpack.c.l.b16 %v479
  %v1511 = vunpack.c.l.b16 %v480
  %v1512 = vunpack.c.l.b16 %v481
  %v1513 = vunpack.c.l.b16 %v482
  %v1514 = vunpack.c.l.b16 %v483
  %v1515 = vunpack.c.l.b16 %v484
  %v1516 = vunpack.c.l.b16 %v485
  %v1517 = vunpack.c.l.b16 %v486
  %v1518 = vunpack.c.l.b16 %v487
  %v1519 = vunpack.c.l.b16 %v488
  %v1520 = vunpack.c.l.b16 %v489
  %v1521 = vunpack.c.l.b16 %v490
  %v1522 = vunpack.c.l.b16 %v491
  %v1523 = vunpack.c.l.b16 %v492
  %v1524 = vunpack.c.l.b16 %v493
  %v1525 = vunpack.c.l.b16 %v494
  %v1526 = vunpack.c.l.b16 %v495
  %v1527 = vunpack.c.l.b16 %v496
  %v1528 = vunpack.c.l.b16 %v497
  %v1529 = vunpack.c.l.b16 %v498
  %v1530 = vunpack.c.l.b16 %v499
  %v1531 = vunpack.c.l.b16 %v500
  %v1532 = vunpack.c.l.b16 %v501
  %v1533 = vunpack.c.l.b16 %v502
  %v1534 = vunpack.c.l.b16 %v503
  %v1535 = vunpack.c.l.b16 %v504
  %v1536 = vunpack.c.l.b16 %v505
  %v1537 = vunpack.c.l.b16 %v506
  %v1538 = vunpack.c.l.b16 %v507
  %v1539 = vunpack.c.l.b16 %v508
  %v1540 = vunpack.c.l.b16 %v509
  %v1541 = vunpack.c.l.b16 %v510
  %v1542 = vunpack.c.l.b16 %v511
  %v1543 = vunpack.c.l.b16 %v512
  %v1544 = vunpack.c.l.b16 %v513
  %v1545 = vunpack.c.l.b16 %v514
  %v1546 = vunpack.c.l.b16 %v515
  %v1547 = vunpack.c.l.b16 %v516
  %v1548 = vunpack.c.l.b16 %v517
  %v1549 = vunpack.c.l.b16 %v518
  %v1550 = vunpack.c.l.b16 %v519
  %v1551 = vunpack.c.l.b16 %v520
  %v1552 = vunpack.c.l.b16 %v521
  %v1553 = vunpack.c.l.b16 %v522
  %v1554 = vunpack.c.l.b16 %v523
  %v1555 = vunpack.c.l.b16 %v524
  %v1556 = vunpack.c.l.b16 %v525
  %v1557 = vunpack.c.l.b16 %v526
  %v1558 = vunpack.c.l.b16 %v527
  %v1559 = vunpack.c.l.b16 %v528
  %v1560 = vunpack.c.l.b16 %v529
  %v1561 = vunpack.c.l.b16 %v530
  %v1562 = vunpack.c.l.b16 %v531
  %v1563 = vunpack.c.l.b16 %v532
  %v1564 = vunpack.c.l.b16 %v533
  %v1565 = vunpack.c.l.b16 %v534
  %v1566 = vunpack.c.l.b16 %v535
  %v1567 = vunpack.c.l.b16 %v536
  %v1568 = vunpack.c.l.b16 %v537
  %v1569 = vunpack.c.l.b16 %v538
  %v1570 = vunpack.c.l.b16 %v539
  %v1571 = vunpack.c.l.b16 %v540
  %v1572 = vunpack.c.l.b16 %v541
  %v1573 = vunpack.c.l.b16 %v542
  %v1574 = vunpack.c.l.b16 %v543
  %v1575 = vunpack.c.l.b16 %v544
  %v1576 = vunpack.c.l.b16 %v545
  %v1577 = vunpack.c.l.b16 %v546
  %v1578 = vunpack.c.l.b16 %v547
  %v1579 = vunpack.c.l.b16 %v548
  %v1580 = vunpack.c.l.b16 %v549
  %v1581 = vunpack.c.l.b16 %v550
  %v1582 = vunpack.c.l.b16 %v551
  %v1583 = vunpack.c.l.b16 %v552
  %v1584 = vunpack.c.l.b16 %v553
  %v1585 = vunpack.c.l.b16 %v554
  %v1586 = vunpack.c.l.b16 %v555
  %v1587 = vunpack.c.l.b16 %v556
  %v1588 = vunpack.c.l.b16 %v557
  %v1589 = vunpack.c.l.b16 %v558
  %v1590 = vunpack.c.l.b16 %v559
  %v1591 = vunpack.c.l.b16 %v560
  %v1592 = vunpack.c.l.b16 %v561
  %v1593 = vunpack.c.l.b16 %v562
  %v1594 = vunpack.c.l.b16 %v563
  %v1595 = vunpack.c.l.b16 %v564
  %v1596 = vunpack.c.l.b16 %v565
  %v1597 = vunpack.c.l.b16 %v566
  %v1598 = vunpack.c.l.b16 %v567
  %v1599 = vunpack.c.l.b16 %v568
  %v1600 = vunpack.c.l.b16 %v569
  %v1601 = vunpack.c.l.b16 %v570
  %v1602 = vunpack.c.l.b16 %v571
  %v1603 = vunpack.c.l.b16 %v572
  %v1604 = vunpack.c.l.b16 %v573
  %v1605 = vunpack.c.l.b16 %v574
  %v1606 = vunpack.c.l.b16 %v575
  %v1607 = vunpack.c.l.b16 %v576
  %v1608 = vunpack.c.l.b16 %v577
  %v1609 = vunpack.c.l.b16 %v578
  %v1610 = vunpack.c.l.b16 %v579
  %v1611 = vunpack.c.l.b16 %v580
  %v1612 = vunpack.c.l.b16 %v581
  %v1613 = vunpack.c.l.b16 %v582
  %v1614 = vunpack.c.l.b16 %v583
  %v1615 = vunpack.c.l.b16 %v584
  %v1616 = vunpack.c.l.b16 %v585
  %v1617 = vunpack.c.l.b16 %v586
  %v1618 = vunpack.c.l.b16 %v587
  %v1619 = vunpack.c.l.b16 %v588
  %v1620 = vunpack.c.l.b16 %v589
  %v1621 = vunpack.c.l.b16 %v590
  %v1622 = vunpack.c.l.b16 %v591
  %v1623 = vunpack.c.l.b16 %v592
  %v1624 = vunpack.c.l.b16 %v593
  %v1625 = vunpack.c.l.b16 %v594
  %v1626 = vunpack.c.l.b16 %v595
  %v1627 = vunpack.c.l.b16 %v596
  %v1628 = vunpack.c.l.b16 %v597
  %v1629 = vunpack.c.l.b16 %v598
  %v1630 = vunpack.c.l.b16 %v599
  %v1631 = vunpack.c.l.b16 %v600
  %v1632 = vunpack.c.l.b16 %v601
  %v1633 = vunpack.c.l.b16 %v602
  %v1634 = vunpack.c.l.b16 %v603
  %v1635 = vunpack.c.l.b16 %v604
  %v1636 = vunpack.c.l.b16 %v605
  %v1637 = vunpack.c.l.b16 %v606
  %v1638 = vunpack.c.l.b16 %v607
  %v1639 = vunpack.c.l.b16 %v608
  %v1640 = vunpack.c.l.b16 %v609
  %v1641 = vunpack.c.l.b16 %v610
  %v1642 = vunpack.c.l.b16 %v611
  %v1643 = vunpack.c.l.b16 %v612
  %v1644 = vunpack.c.l.b16 %v613
  %v1645 = vunpack.c.l.b16 %v614
  %v1646 = vunpack.c.l.b16 %v615
  %v1647 = vunpack.c.l.b16 %v616
  %v1648 = vunpack.c.l.b16 %v617
  %v1649 = vunpack.c.l.b16 %v618
  %v1650 = vunpack.c.l.b16 %v619
  %v1651 = vunpack.c.l.b16 %v620
  %v1652 = vunpack.c.l.b16 %v621
  %v1653 = vunpack.c.l.b16 %v622
  %v1654 = vpack.c.b16 %v1143, %v1142
  %v1655 = vpack.c.b16 %v1145, %v1144
  %v1656 = vpack.c.b16 %v1147, %v1146
  %v1657 = vpack.c.b16 %v1149, %v1148
  %v1658 = vpack.c.b16 %v1151, %v1150
  %v1659 = vpack.c.b16 %v1153, %v1152
  %v1660 = vpack.c.b16 %v1155, %v1154
  %v1661 = vpack.c.b16 %v1157, %v1156
  %v1662 = vpack.c.b16 %v1159, %v1158
  %v1663 = vpack.c.b16 %v1161, %v1160
  %v1664 = vpack.c.b16 %v1163, %v1162
  %v1665 = vpack.c.b16 %v1165, %v1164
  %v1666 = vpack.c.b16 %v1167, %v1166
  %v1667 = vpack.c.b16 %v1169, %v1168
  %v1668 = vpack.c.b16 %v1171, %v1170
  %v1669 = vpack.c.b16 %v1173, %v1172
  %v1670 = vpack.c.b16 %v1175, %v1174
  %v1671 = vpack.c.b16 %v1177, %v1176
  %v1672 = vpack.c.b16 %v1179, %v1178
  %v1673 = vpack.c.b16 %v1181, %v1180
  %v1674 = vpack.c.b16 %v1183, %v1182
  %v1675 = vpack.c.b16 %v1185, %v1184
  %v1676 = vpack.c.b16 %v1187, %v1186
  %v1677 = vpack.c.b16 %v1189, %v1188
  %v1678 = vpack.c.b16 %v1191, %v1190
  %v1679 = vpack.c.b16 %v1193, %v1192
  %v1680 = vpack.c.b16 %v1195, %v1194
  %v1681 = vpack.c.b16 %v1197, %v1196
  %v1682 = vpack.c.b16 %v1199, %v1198
  %v1683 = vpack.c.b16 %v1201, %v1200
  %v1684 = vpack.c.b16 %v1203, %v1202
  %v1685 = vpack.c.b16 %v1205, %v1204
  %v1686 = vpack.c.b16 %v1207, %v1206
  %v1687 = vpack.c.b16 %v1209, %v1208
  %v1688 = vpack.c.b16 %v1211, %v1210
  %v1689 = vpack.c.b16 %v1213, %v1212
  %v1690 = vpack.c.b16 %v1215, %v1214
  %v1691 = vpack.c.b16 %v1217, %v1216
  %v1692 = vpack.c.b16 %v1219, %v1218
  %v1693 = vpack.c.b16 %v1221, %v1220
  %v1694 = vpack.c.b16 %v1223, %v1222
  %v1695 = vpack.c.b16 %v1225, %v1224
  %v1696 = vpack.c.b16 %v1227, %v1226
  %v1697 = vpack.c.b16 %v1229, %v1228
  %v1698 = vpack.c.b16 %v1231, %v1230
  %v1699 = vpack.c.b16 %v1233, %v1232
  %v1700 = vpack.c.b16 %v1235, %v1234
  %v1701 = vpack.c.b16 %v1237, %v1236
  %v1702 = vpack.c.b16 %v1239, %v1238
  %v1703 = vpack.c.b16 %v1241, %v1240
  %v1704 = vpack.c.b16 %v1243, %v1242
  %v1705 = vpack.c.b16 %v1245, %v1244
  %v1706 = vpack.c.b16 %v1247, %v1246
  %v1707 = vpack.c.b16 %v1249, %v1248
  %v1708 = vpack.c.b16 %v1251, %v1250
  %v1709 = vpack.c.b16 %v1253, %v1252
  %v1710 = vpack.c.b16 %v1255, %v1254
  %v1711 = vpack.c.b16 %v1257, %v1256
  %v1712 = vpack.c.b16 %v1259, %v1258
  %v1713 = vpack.c.b16 %v1261, %v1260
  %v1714 = vpack.c.b16 %v1263, %v1262
  %v1715 = vpack.c.b16 %v1265, %v1264
  %v1716 = vpack.c.b16 %v1267, %v1266
  %v1717 = vpack.c.b16 %v1269, %v1268
  %v1718 = vpack.c.b16 %v1271, %v1270
  %v1719 = vpack.c.b16 %v1273, %v1272
  %v1720 = vpack.c.b16 %v1275, %v1274
  %v1721 = vpack.c.b16 %v1277, %v1276
  %v1722 = vpack.c.b16 %v1279, %v1278
  %v1723 = vpack.c.b16 %v1281, %v1280
  %v1724 = vpack.c.b16 %v1283, %v1282
  %v1725 = vpack.c.b16 %v1285, %v1284
  %v1726 = vpack.c.b16 %v1287, %v1286
  %v1727 = vpack.c.b16 %v1289, %v1288
  %v1728 = vpack.c.b16 %v1291, %v1290
  %v1729 = vpack.c.b16 %v1293, %v1292
  %v1730 = vpack.c.b16 %v1295, %v1294
  %v1731 = vpack.c.b16 %v1297, %v1296
  %v1732 = vpack.c.b16 %v1299, %v1298
  %v1733 = vpack.c.b16 %v1301, %v1300
  %v1734 = vpack.c.b16 %v1303, %v1302
  %v1735 = vpack.c.b16 %v1305, %v1304
  %v1736 = vpack.c.b16 %v1307, %v1306
  %v1737 = vpack.c.b16 %v1309, %v1308
  %v1738 = vpack.c.b16 %v1311, %v1310
  %v1739 = vpack.c.b16 %v1313, %v1312
  %v1740 = vpack.c.b16 %v1315, %v1314
  %v1741 = vpack.c.b16 %v1317, %v1316
  %v1742 = vpack.c.b16 %v1319, %v1318
  %v1743 = vpack.c.b16 %v1321, %v1320
  %v1744 = vpack.c.b16 %v1323, %v1322
  %v1745 = vpack.c.b16 %v1325, %v1324
  %v1746 = vpack.c.b16 %v1327, %v1326
  %v1747 = vpack.c.b16 %v1329, %v1328
  %v1748 = vpack.c.b16 %v1331, %v1330
  %v1749 = vpack.c.b16 %v1333, %v1332
  %v1750 = vpack.c.b16 %v1335, %v1334
  %v1751 = vpack.c.b16 %v1337, %v1336
  %v1752 = vpack.c.b16 %v1339, %v1338
  %v1753 = vpack.c.b16 %v1341, %v1340
  %v1754 = vpack.c.b16 %v1343, %v1342
  %v1755 = vpack.c.b16 %v1345, %v1344
  %v1756 = vpack.c.b16 %v1347, %v1346
  %v1757 = vpack.c.b16 %v1349, %v1348
  %v1758 = vpack.c.b16 %v1351, %v1350
  %v1759 = vpack.c.b16 %v1353, %v1352
  %v1760 = vpack.c.b16 %v1355, %v1354
  %v1761 = vpack.c.b16 %v1357, %v1356
  %v1762 = vpack.c.b16 %v1359, %v1358
  %v1763 = vpack.c.b16 %v1361, %v1360
  %v1764 = vpack.c.b16 %v1363, %v1362
  %v1765 = vpack.c.b16 %v1365, %v1364
  %v1766 = vpack.c.b16 %v1367, %v1366
  %v1767 = vpack.c.b16 %v1369, %v1368
  %v1768 = vpack.c.b16 %v1371, %v1370
  %v1769 = vpack.c.b16 %v1373, %v1372
  %v1770 = vpack.c.b16 %v1375, %v1374
  %v1771 = vpack.c.b16 %v1377, %v1376
  %v1772 = vpack.c.b16 %v1379, %v1378
  %v1773 = vpack.c.b16 %v1381, %v1380
  %v1774 = vpack.c.b16 %v1383, %v1382
  %v1775 = vpack.c.b16 %v1385, %v1384
  %v1776 = vpack.c.b16 %v1387, %v1386
  %v1777 = vpack.c.b16 %v1389, %v1388
  %v1778 = vpack.c.b16 %v1391, %v1390
  %v1779 = vpack.c.b16 %v1393, %v1392
  %v1780 = vpack.c.b16 %v1395, %v1394
  %v1781 = vpack.c.b16 %v1397, %v1396
  %v1782 = vpack.c.b16 %v1399, %v1398
  %v1783 = vpack.c.b16 %v1401, %v1400
  %v1784 = vpack.c.b16 %v1403, %v1402
  %v1785 = vpack.c.b16 %v1405, %v1404
  %v1786 = vpack.c.b16 %v1407, %v1406
  %v1787 = vpack.c.b16 %v1409, %v1408
  %v1788 = vpack.c.b16 %v1411, %v1410
  %v1789 = vpack.c.b16 %v1413, %v1412
  %v1790 = vpack.c.b16 %v1415, %v1414
  %v1791 = vpack.c.b16 %v1417, %v1416
  %v1792 = vpack.c.b16 %v1419, %v1418
  %v1793 = vpack.c.b16 %v1421, %v1420
  %v1794 = vpack.c.b16 %v1423, %v1422
  %v1795 = vpack.c.b16 %v1425, %v1424
  %v1796 = vpack.c.b16 %v1427, %v1426
  %v1797 = vpack.c.b16 %v1429, %v1428
  %v1798 = vpack.c.b16 %v1431, %v1430
  %v1799 = vpack.c.b16 %v1433, %v1432
  %v1800 = vpack.c.b16 %v1435, %v1434
  %v1801 = vpack.c.b16 %v1437, %v1436
  %v1802 = vpack.c.b16 %v1439, %v1438
  %v1803 = vpack.c.b16 %v1441, %v1440
  %v1804 = vpack.c.b16 %v1443, %v1442
  %v1805 = vpack.c.b16 %v1445, %v1444
  %v1806 = vpack.c.b16 %v1447, %v1446
  %v1807 = vpack.c.b16 %v1449, %v1448
  %v1808 = vpack.c.b16 %v1451, %v1450
  %v1809 = vpack.c.b16 %v1453, %v1452
  %v1810 = vpack.c.b16 %v1455, %v1454
  %v1811 = vpack.c.b16 %v1457, %v1456
  %v1812 = vpack.c.b16 %v1459, %v1458
  %v1813 = vpack.c.b16 %v1461, %v1460
  %v1814 = vpack.c.b16 %v1463, %v1462
  %v1815 = vpack.c.b16 %v1465, %v1464
  %v1816 = vpack.c.b16 %v1467, %v1466
  %v1817 = vpack.c.b16 %v1469, %v1468
  %v1818 = vpack.c.b16 %v1471, %v1470
  %v1819 = vpack.c.b16 %v1473, %v1472
  %v1820 = vpack.c.b16 %v1475, %v1474
  %v1821 = vpack.c.b16 %v1477, %v1476
  %v1822 = vpack.c.b16 %v1479, %v1478
  %v1823 = vpack.c.b16 %v1481, %v1480
  %v1824 = vpack.c.b16 %v1483, %v1482
  %v1825 = vpack.c.b16 %v1485, %v1484
  %v1826 = vpack.c.b16 %v1487, %v1486
  %v1827 = vpack.c.b16 %v1489, %v1488
  %v1828 = vpack.c.b16 %v1491, %v1490
  %v1829 = vpack.c.b16 %v1493, %v1492
  %v1830 = vpack.c.b16 %v1495, %v1494
  %v1831 = vpack.c.b16 %v1497, %v1496
  %v1832 = vpack.c.b16 %v1499, %v1498
  %v1833 = vpack.c.b16 %v1501, %v1500
  %v1834 = vpack.c.b16 %v1503, %v1502
  %v1835 = vpack.c.b16 %v1505, %v1504
  %v1836 = vpack.c.b16 %v1507, %v1506
  %v1837 = vpack.c.b16 %v1509, %v1508
  %v1838 = vpack.c.b16 %v1511, %v1510
  %v1839 = vpack.c.b16 %v1513, %v1512
  %v1840 = vpack.c.b16 %v1515, %v1514
  %v1841 = vpack.c.b16 %v1517, %v1516
  %v1842 = vpack.c.b16 %v1519, %v1518
  %v1843 = vpack.c.b16 %v1521, %v1520
  %v1844 = vpack.c.b16 %v1523, %v1522
  %v1845 = vpack.c.b16 %v1525, %v1524
  %v1846 = vpack.c.b16 %v1527, %v1526
  %v1847 = vpack.c.b16 %v1529, %v1528
  %v1848 = vpack.c.b16 %v1531, %v1530
  %v1849 = vpack.c.b16 %v1533, %v1532
  %v1850 = vpack.c.b16 %v1535, %v1534
  %v1851 = vpack.c.b16 %v1537, %v1536
  %v1852 = vpack.c.b16 %v1539, %v1538
  %v1853 = vpack.c.b16 %v1541, %v1540
  %v1854 = vpack.c.b16 %v1543, %v1542
  %v1855 = vpack.c.b16 %v1545, %v1544
  %v1856 = vpack.c.b16 %v1547, %v1546
  %v1857 = vpack.c.b16 %v1549, %v1548
  %v1858 = vpack.c.b16 %v1551, %v1550
  %v1859 = vpack.c.b16 %v1553, %v1552
  %v1860 = vpack.c.b16 %v1555, %v1554
  %v1861 = vpack.c.b16 %v1557, %v1556
  %v1862 = vpack.c.b16 %v1559, %v1558
  %v1863 = vpack.c.b16 %v1561, %v1560
  %v1864 = vpack.c.b16 %v1563, %v1562
  %v1865 = vpack.c.b16 %v1565, %v1564
  %v1866 = vpack.c.b16 %v1567, %v1566
  %v1867 = vpack.c.b16 %v1569, %v1568
  %v1868 = vpack.c.b16 %v1571, %v1570
  %v1869 = vpack.c.b16 %v1573, %v1572
  %v1870 = vpack.c.b16 %v1575, %v1574
  %v1871 = vpack.c.b16 %v1577, %v1576
  %v1872 = vpack.c.b16 %v1579, %v1578
  %v1873 = vpack.c.b16 %v1581, %v1580
  %v1874 = vpack.c.b16 %v1583, %v1582
  %v1875 = vpack.c.b16 %v1585, %v1584
  %v1876 = vpack.c.b16 %v1587, %v1586
  %v1877 = vpack.c.b16 %v1589, %v1588
  %v1878 = vpack.c.b16 %v1591, %v1590
  %v1879 = vpack.c.b16 %v1593, %v1592
  %v1880 = vpack.c.b16 %v1595, %v1594
  %v1881 = vpack.c.b16 %v1597, %v1596
  %v1882 = vpack.c.b16 %v1599, %v1598
  %v1883 = vpack.c.b16 %v1601, %v1600
  %v1884 = vpack.c.b16 %v1603, %v1602
  %v1885 = vpack.c.b16 %v1605, %v1604
  %v1886 = vpack.c.b16 %v1607, %v1606
  %v1887 = vpack.c.b16 %v1609, %v1608
  %v1888 = vpack.c.b16 %v1611, %v1610
  %v1889 = vpack.c.b16 %v1613, %v1612
  %v1890 = vpack.c.b16 %v1615, %v1614
  %v1891 = vpack.c.b16 %v1617, %v1616
  %v1892 = vpack.c.b16 %v1619, %v1618
  %v1893 = vpack.c.b16 %v1621, %v1620
  %v1894 = vpack.c.b16 %v1623, %v1622
  %v1895 = vpack.c.b16 %v1625, %v1624
  %v1896 = vpack.c.b16 %v1627, %v1626
  %v1897 = vpack.c.b16 %v1629, %v1628
  %v1898 = vpack.c.b16 %v1631, %v1630
  %v1899 = vpack.c.b16 %v1633, %v1632
  %v1900 = vpack.c.b16 %v1635, %v1634
  %v1901 = vpack.c.b16 %v1637, %v1636
  %v1902 = vpack.c.b16 %v1639, %v1638
  %v1903 = vpack.c.b16 %v1641, %v1640
  %v1904 = vpack.c.b16 %v1643, %v1642
  %v1905 = vpack.c.b16 %v1645, %v1644
  %v1906 = vpack.c.b16 %v1647, %v1646
  %v1907 = vpack.c.b16 %v1649, %v1648
  %v1908 = vpack.c.b16 %v1651, %v1650
  %v1909 = vpack.c.b16 %v1653, %v1652
  %2166 = vmatprep.subr.bf16.mxu0 0
  %2167 = vmatpush1.bf16.msra.mxu0 %v1661
  %2168 = vmatprep.subr.bf16.mxu0 0
  %2169 = vmatpush1.bf16.msra.mxu0 %v1660
  %2170 = vmatprep.subr.bf16.mxu0 0
  %2171 = vmatpush1.bf16.msra.mxu0 %v1659
  %2172 = vmatprep.subr.bf16.mxu0 0
  %2173 = vmatpush1.bf16.msra.mxu0 %v1658
  %2174 = vmatprep.subr.bf16.mxu0 0
  %2175 = vmatpush1.bf16.msra.mxu0 %v1657
  %2176 = vmatprep.subr.bf16.mxu0 0
  %2177 = vmatpush1.bf16.msra.mxu0 %v1656
  %2178 = vmatprep.subr.bf16.mxu0 0
  %2179 = vmatpush1.bf16.msra.mxu0 %v1655
  %2180 = vmatprep.subr.bf16.mxu0 0
  %2181 = vmatpush1.bf16.msra.mxu0 %v1654
  %2182 = vmatprep.subr.bf16.mxu0 0
  %2183 = vmatpush2.bf16.msra.mxu0 %v1669
  %2184 = vmatprep.subr.bf16.mxu0 0
  %2185 = vmatpush2.bf16.msra.mxu0 %v1668
  %2186 = vmatprep.subr.bf16.mxu0 0
  %2187 = vmatpush2.bf16.msra.mxu0 %v1667
  %2188 = vmatprep.subr.bf16.mxu0 0
  %2189 = vmatpush2.bf16.msra.mxu0 %v1666
  %2190 = vmatprep.subr.bf16.mxu0 0
  %2191 = vmatpush2.bf16.msra.mxu0 %v1665
  %2192 = vmatprep.subr.bf16.mxu0 0
  %2193 = vmatpush2.bf16.msra.mxu0 %v1664
  %2194 = vmatprep.subr.bf16.mxu0 0
  %2195 = vmatpush2.bf16.msra.mxu0 %v1663
  %2196 = vmatprep.subr.bf16.mxu0 0
  %2197 = vmatpush2.bf16.msra.mxu0 %v1662
  %2198 = vmatprep.mubr.bf16.mxu0 %v80
  %2199 = vmatmul.mubr.bf16.gmra.mxu0 %v79
  %v2200 = vpop.f32.mrf.mxu0
  %v2201 = vadd.f32 %v628, %v2200
  %v2202 = vpop.f32.mrf.mxu0
  %v2203 = vpop.f32.mrf.mxu0
  %v2204 = vadd.f32 %v628, %v2203
  %v2205 = vpop.f32.mrf.mxu0
  %2206 = vdwg.mxu0
  %2207 = vmatprep.subr.bf16.mxu0 0
  %2208 = vmatpush1.bf16.msra.mxu0 %v1677
  %2209 = vmatprep.subr.bf16.mxu0 0
  %2210 = vmatpush1.bf16.msra.mxu0 %v1676
  %2211 = vmatprep.subr.bf16.mxu0 0
  %2212 = vmatpush1.bf16.msra.mxu0 %v1675
  %2213 = vmatprep.subr.bf16.mxu0 0
  %2214 = vmatpush1.bf16.msra.mxu0 %v1674
  %2215 = vmatprep.subr.bf16.mxu0 0
  %2216 = vmatpush1.bf16.msra.mxu0 %v1673
  %2217 = vmatprep.subr.bf16.mxu0 0
  %2218 = vmatpush1.bf16.msra.mxu0 %v1672
  %2219 = vmatprep.subr.bf16.mxu0 0
  %2220 = vmatpush1.bf16.msra.mxu0 %v1671
  %2221 = vmatprep.subr.bf16.mxu0 0
  %2222 = vmatpush1.bf16.msra.mxu0 %v1670
  %2223 = vmatprep.subr.bf16.mxu0 0
  %2224 = vmatpush2.bf16.msra.mxu0 %v1685
  %2225 = vmatprep.subr.bf16.mxu0 0
  %2226 = vmatpush2.bf16.msra.mxu0 %v1684
  %2227 = vmatprep.subr.bf16.mxu0 0
  %2228 = vmatpush2.bf16.msra.mxu0 %v1683
  %2229 = vmatprep.subr.bf16.mxu0 0
  %2230 = vmatpush2.bf16.msra.mxu0 %v1682
  %2231 = vmatprep.subr.bf16.mxu0 0
  %2232 = vmatpush2.bf16.msra.mxu0 %v1681
  %2233 = vmatprep.subr.bf16.mxu0 0
  %2234 = vmatpush2.bf16.msra.mxu0 %v1680
  %2235 = vmatprep.subr.bf16.mxu0 0
  %2236 = vmatpush2.bf16.msra.mxu0 %v1679
  %2237 = vmatprep.subr.bf16.mxu0 0
  %2238 = vmatpush2.bf16.msra.mxu0 %v1678
  %2239 = vmatprep.mubr.bf16.mxu0 %v82
  %2240 = vmatmul.mubr.bf16.gmra.mxu0 %v81
  %v2241 = vpop.f32.mrf.mxu0
  %v2242 = vadd.f32 %v2201, %v2241
  %v2243 = vpop.f32.mrf.mxu0
  %v2244 = vpop.f32.mrf.mxu0
  %v2245 = vadd.f32 %v2204, %v2244
  %v2246 = vpop.f32.mrf.mxu0
  %2247 = vdwg.mxu0
  %2248 = vmatprep.subr.bf16.mxu0 0
  %2249 = vmatpush1.bf16.msra.mxu0 %v1693
  %2250 = vmatprep.subr.bf16.mxu0 0
  %2251 = vmatpush1.bf16.msra.mxu0 %v1692
  %2252 = vmatprep.subr.bf16.mxu0 0
  %2253 = vmatpush1.bf16.msra.mxu0 %v1691
  %2254 = vmatprep.subr.bf16.mxu0 0
  %2255 = vmatpush1.bf16.msra.mxu0 %v1690
  %2256 = vmatprep.subr.bf16.mxu0 0
  %2257 = vmatpush1.bf16.msra.mxu0 %v1689
  %2258 = vmatprep.subr.bf16.mxu0 0
  %2259 = vmatpush1.bf16.msra.mxu0 %v1688
  %2260 = vmatprep.subr.bf16.mxu0 0
  %2261 = vmatpush1.bf16.msra.mxu0 %v1687
  %2262 = vmatprep.subr.bf16.mxu0 0
  %2263 = vmatpush1.bf16.msra.mxu0 %v1686
  %2264 = vmatprep.subr.bf16.mxu0 0
  %2265 = vmatpush2.bf16.msra.mxu0 %v1701
  %2266 = vmatprep.subr.bf16.mxu0 0
  %2267 = vmatpush2.bf16.msra.mxu0 %v1700
  %2268 = vmatprep.subr.bf16.mxu0 0
  %2269 = vmatpush2.bf16.msra.mxu0 %v1699
  %2270 = vmatprep.subr.bf16.mxu0 0
  %2271 = vmatpush2.bf16.msra.mxu0 %v1698
  %2272 = vmatprep.subr.bf16.mxu0 0
  %2273 = vmatpush2.bf16.msra.mxu0 %v1697
  %2274 = vmatprep.subr.bf16.mxu0 0
  %2275 = vmatpush2.bf16.msra.mxu0 %v1696
  %2276 = vmatprep.subr.bf16.mxu0 0
  %2277 = vmatpush2.bf16.msra.mxu0 %v1695
  %2278 = vmatprep.subr.bf16.mxu0 0
  %2279 = vmatpush2.bf16.msra.mxu0 %v1694
  %2280 = vmatprep.mubr.bf16.mxu0 %v84
  %2281 = vmatmul.mubr.bf16.gmra.mxu0 %v83
  %v2282 = vpop.f32.mrf.mxu0
  %v2283 = vadd.f32 %v2242, %v2282
  %v2284 = vpop.f32.mrf.mxu0
  %v2285 = vpop.f32.mrf.mxu0
  %v2286 = vadd.f32 %v2245, %v2285
  %v2287 = vpop.f32.mrf.mxu0
  %2288 = vdwg.mxu0
  %2289 = vmatprep.subr.bf16.mxu0 0
  %2290 = vmatpush1.bf16.msra.mxu0 %v1709
  %2291 = vmatprep.subr.bf16.mxu0 0
  %2292 = vmatpush1.bf16.msra.mxu0 %v1708
  %2293 = vmatprep.subr.bf16.mxu0 0
  %2294 = vmatpush1.bf16.msra.mxu0 %v1707
  %2295 = vmatprep.subr.bf16.mxu0 0
  %2296 = vmatpush1.bf16.msra.mxu0 %v1706
  %2297 = vmatprep.subr.bf16.mxu0 0
  %2298 = vmatpush1.bf16.msra.mxu0 %v1705
  %2299 = vmatprep.subr.bf16.mxu0 0
  %2300 = vmatpush1.bf16.msra.mxu0 %v1704
  %2301 = vmatprep.subr.bf16.mxu0 0
  %2302 = vmatpush1.bf16.msra.mxu0 %v1703
  %2303 = vmatprep.subr.bf16.mxu0 0
  %2304 = vmatpush1.bf16.msra.mxu0 %v1702
  %2305 = vmatprep.subr.bf16.mxu0 0
  %2306 = vmatpush2.bf16.msra.mxu0 %v1717
  %2307 = vmatprep.subr.bf16.mxu0 0
  %2308 = vmatpush2.bf16.msra.mxu0 %v1716
  %2309 = vmatprep.subr.bf16.mxu0 0
  %2310 = vmatpush2.bf16.msra.mxu0 %v1715
  %2311 = vmatprep.subr.bf16.mxu0 0
  %2312 = vmatpush2.bf16.msra.mxu0 %v1714
  %2313 = vmatprep.subr.bf16.mxu0 0
  %2314 = vmatpush2.bf16.msra.mxu0 %v1713
  %2315 = vmatprep.subr.bf16.mxu0 0
  %2316 = vmatpush2.bf16.msra.mxu0 %v1712
  %2317 = vmatprep.subr.bf16.mxu0 0
  %2318 = vmatpush2.bf16.msra.mxu0 %v1711
  %2319 = vmatprep.subr.bf16.mxu0 0
  %2320 = vmatpush2.bf16.msra.mxu0 %v1710
  %2321 = vmatprep.mubr.bf16.mxu0 %v86
  %2322 = vmatmul.mubr.bf16.gmra.mxu0 %v85
  %v2323 = vpop.f32.mrf.mxu0
  %v2324 = vadd.f32 %v2283, %v2323
  %v2325 = vpop.f32.mrf.mxu0
  %v2326 = vpop.f32.mrf.mxu0
  %v2327 = vadd.f32 %v2286, %v2326
  %v2328 = vpop.f32.mrf.mxu0
  %2329 = vdwg.mxu0
  %2330 = vmatprep.subr.bf16.mxu0 0
  %2331 = vmatpush1.bf16.msra.mxu0 %v1725
  %2332 = vmatprep.subr.bf16.mxu0 0
  %2333 = vmatpush1.bf16.msra.mxu0 %v1724
  %2334 = vmatprep.subr.bf16.mxu0 0
  %2335 = vmatpush1.bf16.msra.mxu0 %v1723
  %2336 = vmatprep.subr.bf16.mxu0 0
  %2337 = vmatpush1.bf16.msra.mxu0 %v1722
  %2338 = vmatprep.subr.bf16.mxu0 0
  %2339 = vmatpush1.bf16.msra.mxu0 %v1721
  %2340 = vmatprep.subr.bf16.mxu0 0
  %2341 = vmatpush1.bf16.msra.mxu0 %v1720
  %2342 = vmatprep.subr.bf16.mxu0 0
  %2343 = vmatpush1.bf16.msra.mxu0 %v1719
  %2344 = vmatprep.subr.bf16.mxu0 0
  %2345 = vmatpush1.bf16.msra.mxu0 %v1718
  %2346 = vmatprep.subr.bf16.mxu0 0
  %2347 = vmatpush2.bf16.msra.mxu0 %v1733
  %2348 = vmatprep.subr.bf16.mxu0 0
  %2349 = vmatpush2.bf16.msra.mxu0 %v1732
  %2350 = vmatprep.subr.bf16.mxu0 0
  %2351 = vmatpush2.bf16.msra.mxu0 %v1731
  %2352 = vmatprep.subr.bf16.mxu0 0
  %2353 = vmatpush2.bf16.msra.mxu0 %v1730
  %2354 = vmatprep.subr.bf16.mxu0 0
  %2355 = vmatpush2.bf16.msra.mxu0 %v1729
  %2356 = vmatprep.subr.bf16.mxu0 0
  %2357 = vmatpush2.bf16.msra.mxu0 %v1728
  %2358 = vmatprep.subr.bf16.mxu0 0
  %2359 = vmatpush2.bf16.msra.mxu0 %v1727
  %2360 = vmatprep.subr.bf16.mxu0 0
  %2361 = vmatpush2.bf16.msra.mxu0 %v1726
  %2362 = vmatprep.mubr.bf16.mxu0 %v88
  %2363 = vmatmul.mubr.bf16.gmra.mxu0 %v87
  %v2364 = vpop.f32.mrf.mxu0
  %v2365 = vadd.f32 %v2324, %v2364
  %v2366 = vpop.f32.mrf.mxu0
  %v2367 = vpop.f32.mrf.mxu0
  %v2368 = vadd.f32 %v2327, %v2367
  %v2369 = vpop.f32.mrf.mxu0
  %2370 = vdwg.mxu0
  %2371 = vmatprep.subr.bf16.mxu0 0
  %2372 = vmatpush1.bf16.msra.mxu0 %v1741
  %2373 = vmatprep.subr.bf16.mxu0 0
  %2374 = vmatpush1.bf16.msra.mxu0 %v1740
  %2375 = vmatprep.subr.bf16.mxu0 0
  %2376 = vmatpush1.bf16.msra.mxu0 %v1739
  %2377 = vmatprep.subr.bf16.mxu0 0
  %2378 = vmatpush1.bf16.msra.mxu0 %v1738
  %2379 = vmatprep.subr.bf16.mxu0 0
  %2380 = vmatpush1.bf16.msra.mxu0 %v1737
  %2381 = vmatprep.subr.bf16.mxu0 0
  %2382 = vmatpush1.bf16.msra.mxu0 %v1736
  %2383 = vmatprep.subr.bf16.mxu0 0
  %2384 = vmatpush1.bf16.msra.mxu0 %v1735
  %2385 = vmatprep.subr.bf16.mxu0 0
  %2386 = vmatpush1.bf16.msra.mxu0 %v1734
  %2387 = vmatprep.subr.bf16.mxu0 0
  %2388 = vmatpush2.bf16.msra.mxu0 %v1749
  %2389 = vmatprep.subr.bf16.mxu0 0
  %2390 = vmatpush2.bf16.msra.mxu0 %v1748
  %2391 = vmatprep.subr.bf16.mxu0 0
  %2392 = vmatpush2.bf16.msra.mxu0 %v1747
  %2393 = vmatprep.subr.bf16.mxu0 0
  %2394 = vmatpush2.bf16.msra.mxu0 %v1746
  %2395 = vmatprep.subr.bf16.mxu0 0
  %2396 = vmatpush2.bf16.msra.mxu0 %v1745
  %2397 = vmatprep.subr.bf16.mxu0 0
  %2398 = vmatpush2.bf16.msra.mxu0 %v1744
  %2399 = vmatprep.subr.bf16.mxu0 0
  %2400 = vmatpush2.bf16.msra.mxu0 %v1743
  %2401 = vmatprep.subr.bf16.mxu0 0
  %2402 = vmatpush2.bf16.msra.mxu0 %v1742
  %2403 = vmatprep.mubr.bf16.mxu0 %v90
  %2404 = vmatmul.mubr.bf16.gmra.mxu0 %v89
  %v2405 = vpop.f32.mrf.mxu0
  %v2406 = vadd.f32 %v2365, %v2405
  %v2407 = vpop.f32.mrf.mxu0
  %v2408 = vpop.f32.mrf.mxu0
  %v2409 = vadd.f32 %v2368, %v2408
  %v2410 = vpop.f32.mrf.mxu0
  %2411 = vdwg.mxu0
  %2412 = vmatprep.subr.bf16.mxu0 0
  %2413 = vmatpush1.bf16.msra.mxu0 %v1757
  %2414 = vmatprep.subr.bf16.mxu0 0
  %2415 = vmatpush1.bf16.msra.mxu0 %v1756
  %2416 = vmatprep.subr.bf16.mxu0 0
  %2417 = vmatpush1.bf16.msra.mxu0 %v1755
  %2418 = vmatprep.subr.bf16.mxu0 0
  %2419 = vmatpush1.bf16.msra.mxu0 %v1754
  %2420 = vmatprep.subr.bf16.mxu0 0
  %2421 = vmatpush1.bf16.msra.mxu0 %v1753
  %2422 = vmatprep.subr.bf16.mxu0 0
  %2423 = vmatpush1.bf16.msra.mxu0 %v1752
  %2424 = vmatprep.subr.bf16.mxu0 0
  %2425 = vmatpush1.bf16.msra.mxu0 %v1751
  %2426 = vmatprep.subr.bf16.mxu0 0
  %2427 = vmatpush1.bf16.msra.mxu0 %v1750
  %2428 = vmatprep.subr.bf16.mxu0 0
  %2429 = vmatpush2.bf16.msra.mxu0 %v1765
  %2430 = vmatprep.subr.bf16.mxu0 0
  %2431 = vmatpush2.bf16.msra.mxu0 %v1764
  %2432 = vmatprep.subr.bf16.mxu0 0
  %2433 = vmatpush2.bf16.msra.mxu0 %v1763
  %2434 = vmatprep.subr.bf16.mxu0 0
  %2435 = vmatpush2.bf16.msra.mxu0 %v1762
  %2436 = vmatprep.subr.bf16.mxu0 0
  %2437 = vmatpush2.bf16.msra.mxu0 %v1761
  %2438 = vmatprep.subr.bf16.mxu0 0
  %2439 = vmatpush2.bf16.msra.mxu0 %v1760
  %2440 = vmatprep.subr.bf16.mxu0 0
  %2441 = vmatpush2.bf16.msra.mxu0 %v1759
  %2442 = vmatprep.subr.bf16.mxu0 0
  %2443 = vmatpush2.bf16.msra.mxu0 %v1758
  %2444 = vmatprep.mubr.bf16.mxu0 %v92
  %2445 = vmatmul.mubr.bf16.gmra.mxu0 %v91
  %v2446 = vpop.f32.mrf.mxu0
  %v2447 = vadd.f32 %v2406, %v2446
  %v2448 = vpop.f32.mrf.mxu0
  %v2449 = vpop.f32.mrf.mxu0
  %v2450 = vadd.f32 %v2409, %v2449
  %v2451 = vpop.f32.mrf.mxu0
  %2452 = vdwg.mxu0
  %2453 = vmatprep.subr.bf16.mxu0 0
  %2454 = vmatpush1.bf16.msra.mxu0 %v1773
  %2455 = vmatprep.subr.bf16.mxu0 0
  %2456 = vmatpush1.bf16.msra.mxu0 %v1772
  %2457 = vmatprep.subr.bf16.mxu0 0
  %2458 = vmatpush1.bf16.msra.mxu0 %v1771
  %2459 = vmatprep.subr.bf16.mxu0 0
  %2460 = vmatpush1.bf16.msra.mxu0 %v1770
  %2461 = vmatprep.subr.bf16.mxu0 0
  %2462 = vmatpush1.bf16.msra.mxu0 %v1769
  %2463 = vmatprep.subr.bf16.mxu0 0
  %2464 = vmatpush1.bf16.msra.mxu0 %v1768
  %2465 = vmatprep.subr.bf16.mxu0 0
  %2466 = vmatpush1.bf16.msra.mxu0 %v1767
  %2467 = vmatprep.subr.bf16.mxu0 0
  %2468 = vmatpush1.bf16.msra.mxu0 %v1766
  %2469 = vmatprep.subr.bf16.mxu0 0
  %2470 = vmatpush2.bf16.msra.mxu0 %v1781
  %2471 = vmatprep.subr.bf16.mxu0 0
  %2472 = vmatpush2.bf16.msra.mxu0 %v1780
  %2473 = vmatprep.subr.bf16.mxu0 0
  %2474 = vmatpush2.bf16.msra.mxu0 %v1779
  %2475 = vmatprep.subr.bf16.mxu0 0
  %2476 = vmatpush2.bf16.msra.mxu0 %v1778
  %2477 = vmatprep.subr.bf16.mxu0 0
  %2478 = vmatpush2.bf16.msra.mxu0 %v1777
  %2479 = vmatprep.subr.bf16.mxu0 0
  %2480 = vmatpush2.bf16.msra.mxu0 %v1776
  %2481 = vmatprep.subr.bf16.mxu0 0
  %2482 = vmatpush2.bf16.msra.mxu0 %v1775
  %2483 = vmatprep.subr.bf16.mxu0 0
  %2484 = vmatpush2.bf16.msra.mxu0 %v1774
  %2485 = vmatprep.mubr.bf16.mxu0 %v94
  %2486 = vmatmul.mubr.bf16.gmra.mxu0 %v93
  %v2487 = vpop.f32.mrf.mxu0
  %v2488 = vadd.f32 %v2447, %v2487
  %v2489 = vpop.f32.mrf.mxu0
  %v2490 = vpop.f32.mrf.mxu0
  %v2491 = vadd.f32 %v2450, %v2490
  %v2492 = vpop.f32.mrf.mxu0
  %2493 = vdwg.mxu0
  %2494 = vmatprep.subr.bf16.mxu0 0
  %2495 = vmatpush1.bf16.msra.mxu0 %v1789
  %2496 = vmatprep.subr.bf16.mxu0 0
  %2497 = vmatpush1.bf16.msra.mxu0 %v1788
  %2498 = vmatprep.subr.bf16.mxu0 0
  %2499 = vmatpush1.bf16.msra.mxu0 %v1787
  %2500 = vmatprep.subr.bf16.mxu0 0
  %2501 = vmatpush1.bf16.msra.mxu0 %v1786
  %2502 = vmatprep.subr.bf16.mxu0 0
  %2503 = vmatpush1.bf16.msra.mxu0 %v1785
  %2504 = vmatprep.subr.bf16.mxu0 0
  %2505 = vmatpush1.bf16.msra.mxu0 %v1784
  %2506 = vmatprep.subr.bf16.mxu0 0
  %2507 = vmatpush1.bf16.msra.mxu0 %v1783
  %2508 = vmatprep.subr.bf16.mxu0 0
  %2509 = vmatpush1.bf16.msra.mxu0 %v1782
  %2510 = vmatprep.subr.bf16.mxu0 0
  %2511 = vmatpush2.bf16.msra.mxu0 %v1797
  %2512 = vmatprep.subr.bf16.mxu0 0
  %2513 = vmatpush2.bf16.msra.mxu0 %v1796
  %2514 = vmatprep.subr.bf16.mxu0 0
  %2515 = vmatpush2.bf16.msra.mxu0 %v1795
  %2516 = vmatprep.subr.bf16.mxu0 0
  %2517 = vmatpush2.bf16.msra.mxu0 %v1794
  %2518 = vmatprep.subr.bf16.mxu0 0
  %2519 = vmatpush2.bf16.msra.mxu0 %v1793
  %2520 = vmatprep.subr.bf16.mxu0 0
  %2521 = vmatpush2.bf16.msra.mxu0 %v1792
  %2522 = vmatprep.subr.bf16.mxu0 0
  %2523 = vmatpush2.bf16.msra.mxu0 %v1791
  %2524 = vmatprep.subr.bf16.mxu0 0
  %2525 = vmatpush2.bf16.msra.mxu0 %v1790
  %2526 = vmatprep.mubr.bf16.mxu0 %v96
  %2527 = vmatmul.mubr.bf16.gmra.mxu0 %v95
  %v2528 = vpop.f32.mrf.mxu0
  %v2529 = vadd.f32 %v2488, %v2528
  %v2530 = vpop.f32.mrf.mxu0
  %v2531 = vpop.f32.mrf.mxu0
  %v2532 = vadd.f32 %v2491, %v2531
  %v2533 = vpop.f32.mrf.mxu0
  %2534 = vdwg.mxu0
  %2535 = vmatprep.subr.bf16.mxu0 0
  %2536 = vmatpush1.bf16.msra.mxu0 %v1805
  %2537 = vmatprep.subr.bf16.mxu0 0
  %2538 = vmatpush1.bf16.msra.mxu0 %v1804
  %2539 = vmatprep.subr.bf16.mxu0 0
  %2540 = vmatpush1.bf16.msra.mxu0 %v1803
  %2541 = vmatprep.subr.bf16.mxu0 0
  %2542 = vmatpush1.bf16.msra.mxu0 %v1802
  %2543 = vmatprep.subr.bf16.mxu0 0
  %2544 = vmatpush1.bf16.msra.mxu0 %v1801
  %2545 = vmatprep.subr.bf16.mxu0 0
  %2546 = vmatpush1.bf16.msra.mxu0 %v1800
  %2547 = vmatprep.subr.bf16.mxu0 0
  %2548 = vmatpush1.bf16.msra.mxu0 %v1799
  %2549 = vmatprep.subr.bf16.mxu0 0
  %2550 = vmatpush1.bf16.msra.mxu0 %v1798
  %2551 = vmatprep.subr.bf16.mxu0 0
  %2552 = vmatpush2.bf16.msra.mxu0 %v1813
  %2553 = vmatprep.subr.bf16.mxu0 0
  %2554 = vmatpush2.bf16.msra.mxu0 %v1812
  %2555 = vmatprep.subr.bf16.mxu0 0
  %2556 = vmatpush2.bf16.msra.mxu0 %v1811
  %2557 = vmatprep.subr.bf16.mxu0 0
  %2558 = vmatpush2.bf16.msra.mxu0 %v1810
  %2559 = vmatprep.subr.bf16.mxu0 0
  %2560 = vmatpush2.bf16.msra.mxu0 %v1809
  %2561 = vmatprep.subr.bf16.mxu0 0
  %2562 = vmatpush2.bf16.msra.mxu0 %v1808
  %2563 = vmatprep.subr.bf16.mxu0 0
  %2564 = vmatpush2.bf16.msra.mxu0 %v1807
  %2565 = vmatprep.subr.bf16.mxu0 0
  %2566 = vmatpush2.bf16.msra.mxu0 %v1806
  %2567 = vmatprep.mubr.bf16.mxu0 %v98
  %2568 = vmatmul.mubr.bf16.gmra.mxu0 %v97
  %v2569 = vpop.f32.mrf.mxu0
  %v2570 = vadd.f32 %v2529, %v2569
  %v2571 = vpop.f32.mrf.mxu0
  %v2572 = vpop.f32.mrf.mxu0
  %v2573 = vadd.f32 %v2532, %v2572
  %v2574 = vpop.f32.mrf.mxu0
  %2575 = vdwg.mxu0
  %2576 = vmatprep.subr.bf16.mxu0 0
  %2577 = vmatpush1.bf16.msra.mxu0 %v1821
  %2578 = vmatprep.subr.bf16.mxu0 0
  %2579 = vmatpush1.bf16.msra.mxu0 %v1820
  %2580 = vmatprep.subr.bf16.mxu0 0
  %2581 = vmatpush1.bf16.msra.mxu0 %v1819
  %2582 = vmatprep.subr.bf16.mxu0 0
  %2583 = vmatpush1.bf16.msra.mxu0 %v1818
  %2584 = vmatprep.subr.bf16.mxu0 0
  %2585 = vmatpush1.bf16.msra.mxu0 %v1817
  %2586 = vmatprep.subr.bf16.mxu0 0
  %2587 = vmatpush1.bf16.msra.mxu0 %v1816
  %2588 = vmatprep.subr.bf16.mxu0 0
  %2589 = vmatpush1.bf16.msra.mxu0 %v1815
  %2590 = vmatprep.subr.bf16.mxu0 0
  %2591 = vmatpush1.bf16.msra.mxu0 %v1814
  %2592 = vmatprep.subr.bf16.mxu0 0
  %2593 = vmatpush2.bf16.msra.mxu0 %v1829
  %2594 = vmatprep.subr.bf16.mxu0 0
  %2595 = vmatpush2.bf16.msra.mxu0 %v1828
  %2596 = vmatprep.subr.bf16.mxu0 0
  %2597 = vmatpush2.bf16.msra.mxu0 %v1827
  %2598 = vmatprep.subr.bf16.mxu0 0
  %2599 = vmatpush2.bf16.msra.mxu0 %v1826
  %2600 = vmatprep.subr.bf16.mxu0 0
  %2601 = vmatpush2.bf16.msra.mxu0 %v1825
  %2602 = vmatprep.subr.bf16.mxu0 0
  %2603 = vmatpush2.bf16.msra.mxu0 %v1824
  %2604 = vmatprep.subr.bf16.mxu0 0
  %2605 = vmatpush2.bf16.msra.mxu0 %v1823
  %2606 = vmatprep.subr.bf16.mxu0 0
  %2607 = vmatpush2.bf16.msra.mxu0 %v1822
  %2608 = vmatprep.mubr.bf16.mxu0 %v100
  %2609 = vmatmul.mubr.bf16.gmra.mxu0 %v99
  %v2610 = vpop.f32.mrf.mxu0
  %v2611 = vadd.f32 %v2570, %v2610
  %v2612 = vpop.f32.mrf.mxu0
  %v2613 = vpop.f32.mrf.mxu0
  %v2614 = vadd.f32 %v2573, %v2613
  %v2615 = vpop.f32.mrf.mxu0
  %2616 = vdwg.mxu0
  %2617 = vmatprep.subr.bf16.mxu0 0
  %2618 = vmatpush1.bf16.msra.mxu0 %v1837
  %2619 = vmatprep.subr.bf16.mxu0 0
  %2620 = vmatpush1.bf16.msra.mxu0 %v1836
  %2621 = vmatprep.subr.bf16.mxu0 0
  %2622 = vmatpush1.bf16.msra.mxu0 %v1835
  %2623 = vmatprep.subr.bf16.mxu0 0
  %2624 = vmatpush1.bf16.msra.mxu0 %v1834
  %2625 = vmatprep.subr.bf16.mxu0 0
  %2626 = vmatpush1.bf16.msra.mxu0 %v1833
  %2627 = vmatprep.subr.bf16.mxu0 0
  %2628 = vmatpush1.bf16.msra.mxu0 %v1832
  %2629 = vmatprep.subr.bf16.mxu0 0
  %2630 = vmatpush1.bf16.msra.mxu0 %v1831
  %2631 = vmatprep.subr.bf16.mxu0 0
  %2632 = vmatpush1.bf16.msra.mxu0 %v1830
  %2633 = vmatprep.subr.bf16.mxu0 0
  %2634 = vmatpush2.bf16.msra.mxu0 %v1845
  %2635 = vmatprep.subr.bf16.mxu0 0
  %2636 = vmatpush2.bf16.msra.mxu0 %v1844
  %2637 = vmatprep.subr.bf16.mxu0 0
  %2638 = vmatpush2.bf16.msra.mxu0 %v1843
  %2639 = vmatprep.subr.bf16.mxu0 0
  %2640 = vmatpush2.bf16.msra.mxu0 %v1842
  %2641 = vmatprep.subr.bf16.mxu0 0
  %2642 = vmatpush2.bf16.msra.mxu0 %v1841
  %2643 = vmatprep.subr.bf16.mxu0 0
  %2644 = vmatpush2.bf16.msra.mxu0 %v1840
  %2645 = vmatprep.subr.bf16.mxu0 0
  %2646 = vmatpush2.bf16.msra.mxu0 %v1839
  %2647 = vmatprep.subr.bf16.mxu0 0
  %2648 = vmatpush2.bf16.msra.mxu0 %v1838
  %2649 = vmatprep.mubr.bf16.mxu0 %v102
  %2650 = vmatmul.mubr.bf16.gmra.mxu0 %v101
  %v2651 = vpop.f32.mrf.mxu0
  %v2652 = vadd.f32 %v2611, %v2651
  %v2653 = vpop.f32.mrf.mxu0
  %v2654 = vpop.f32.mrf.mxu0
  %v2655 = vadd.f32 %v2614, %v2654
  %v2656 = vpop.f32.mrf.mxu0
  %2657 = vdwg.mxu0
  %2658 = vmatprep.subr.bf16.mxu0 0
  %2659 = vmatpush1.bf16.msra.mxu0 %v1853
  %2660 = vmatprep.subr.bf16.mxu0 0
  %2661 = vmatpush1.bf16.msra.mxu0 %v1852
  %2662 = vmatprep.subr.bf16.mxu0 0
  %2663 = vmatpush1.bf16.msra.mxu0 %v1851
  %2664 = vmatprep.subr.bf16.mxu0 0
  %2665 = vmatpush1.bf16.msra.mxu0 %v1850
  %2666 = vmatprep.subr.bf16.mxu0 0
  %2667 = vmatpush1.bf16.msra.mxu0 %v1849
  %2668 = vmatprep.subr.bf16.mxu0 0
  %2669 = vmatpush1.bf16.msra.mxu0 %v1848
  %2670 = vmatprep.subr.bf16.mxu0 0
  %2671 = vmatpush1.bf16.msra.mxu0 %v1847
  %2672 = vmatprep.subr.bf16.mxu0 0
  %2673 = vmatpush1.bf16.msra.mxu0 %v1846
  %2674 = vmatprep.subr.bf16.mxu0 0
  %2675 = vmatpush2.bf16.msra.mxu0 %v1861
  %2676 = vmatprep.subr.bf16.mxu0 0
  %2677 = vmatpush2.bf16.msra.mxu0 %v1860
  %2678 = vmatprep.subr.bf16.mxu0 0
  %2679 = vmatpush2.bf16.msra.mxu0 %v1859
  %2680 = vmatprep.subr.bf16.mxu0 0
  %2681 = vmatpush2.bf16.msra.mxu0 %v1858
  %2682 = vmatprep.subr.bf16.mxu0 0
  %2683 = vmatpush2.bf16.msra.mxu0 %v1857
  %2684 = vmatprep.subr.bf16.mxu0 0
  %2685 = vmatpush2.bf16.msra.mxu0 %v1856
  %2686 = vmatprep.subr.bf16.mxu0 0
  %2687 = vmatpush2.bf16.msra.mxu0 %v1855
  %2688 = vmatprep.subr.bf16.mxu0 0
  %2689 = vmatpush2.bf16.msra.mxu0 %v1854
  %2690 = vmatprep.mubr.bf16.mxu0 %v104
  %2691 = vmatmul.mubr.bf16.gmra.mxu0 %v103
  %v2692 = vpop.f32.mrf.mxu0
  %v2693 = vadd.f32 %v2652, %v2692
  %v2694 = vpop.f32.mrf.mxu0
  %v2695 = vpop.f32.mrf.mxu0
  %v2696 = vadd.f32 %v2655, %v2695
  %v2697 = vpop.f32.mrf.mxu0
  %2698 = vdwg.mxu0
  %2699 = vmatprep.subr.bf16.mxu0 0
  %2700 = vmatpush1.bf16.msra.mxu0 %v1869
  %2701 = vmatprep.subr.bf16.mxu0 0
  %2702 = vmatpush1.bf16.msra.mxu0 %v1868
  %2703 = vmatprep.subr.bf16.mxu0 0
  %2704 = vmatpush1.bf16.msra.mxu0 %v1867
  %2705 = vmatprep.subr.bf16.mxu0 0
  %2706 = vmatpush1.bf16.msra.mxu0 %v1866
  %2707 = vmatprep.subr.bf16.mxu0 0
  %2708 = vmatpush1.bf16.msra.mxu0 %v1865
  %2709 = vmatprep.subr.bf16.mxu0 0
  %2710 = vmatpush1.bf16.msra.mxu0 %v1864
  %2711 = vmatprep.subr.bf16.mxu0 0
  %2712 = vmatpush1.bf16.msra.mxu0 %v1863
  %2713 = vmatprep.subr.bf16.mxu0 0
  %2714 = vmatpush1.bf16.msra.mxu0 %v1862
  %2715 = vmatprep.subr.bf16.mxu0 0
  %2716 = vmatpush2.bf16.msra.mxu0 %v1877
  %2717 = vmatprep.subr.bf16.mxu0 0
  %2718 = vmatpush2.bf16.msra.mxu0 %v1876
  %2719 = vmatprep.subr.bf16.mxu0 0
  %2720 = vmatpush2.bf16.msra.mxu0 %v1875
  %2721 = vmatprep.subr.bf16.mxu0 0
  %2722 = vmatpush2.bf16.msra.mxu0 %v1874
  %2723 = vmatprep.subr.bf16.mxu0 0
  %2724 = vmatpush2.bf16.msra.mxu0 %v1873
  %2725 = vmatprep.subr.bf16.mxu0 0
  %2726 = vmatpush2.bf16.msra.mxu0 %v1872
  %2727 = vmatprep.subr.bf16.mxu0 0
  %2728 = vmatpush2.bf16.msra.mxu0 %v1871
  %2729 = vmatprep.subr.bf16.mxu0 0
  %2730 = vmatpush2.bf16.msra.mxu0 %v1870
  %2731 = vmatprep.mubr.bf16.mxu0 %v106
  %2732 = vmatmul.mubr.bf16.gmra.mxu0 %v105
  %v2733 = vpop.f32.mrf.mxu0
  %v2734 = vadd.f32 %v2693, %v2733
  %v2735 = vpop.f32.mrf.mxu0
  %v2736 = vpop.f32.mrf.mxu0
  %v2737 = vadd.f32 %v2696, %v2736
  %v2738 = vpop.f32.mrf.mxu0
  %2739 = vdwg.mxu0
  %2740 = vmatprep.subr.bf16.mxu0 0
  %2741 = vmatpush1.bf16.msra.mxu0 %v1885
  %2742 = vmatprep.subr.bf16.mxu0 0
  %2743 = vmatpush1.bf16.msra.mxu0 %v1884
  %2744 = vmatprep.subr.bf16.mxu0 0
  %2745 = vmatpush1.bf16.msra.mxu0 %v1883
  %2746 = vmatprep.subr.bf16.mxu0 0
  %2747 = vmatpush1.bf16.msra.mxu0 %v1882
  %2748 = vmatprep.subr.bf16.mxu0 0
  %2749 = vmatpush1.bf16.msra.mxu0 %v1881
  %2750 = vmatprep.subr.bf16.mxu0 0
  %2751 = vmatpush1.bf16.msra.mxu0 %v1880
  %2752 = vmatprep.subr.bf16.mxu0 0
  %2753 = vmatpush1.bf16.msra.mxu0 %v1879
  %2754 = vmatprep.subr.bf16.mxu0 0
  %2755 = vmatpush1.bf16.msra.mxu0 %v1878
  %2756 = vmatprep.subr.bf16.mxu0 0
  %2757 = vmatpush2.bf16.msra.mxu0 %v1893
  %2758 = vmatprep.subr.bf16.mxu0 0
  %2759 = vmatpush2.bf16.msra.mxu0 %v1892
  %2760 = vmatprep.subr.bf16.mxu0 0
  %2761 = vmatpush2.bf16.msra.mxu0 %v1891
  %2762 = vmatprep.subr.bf16.mxu0 0
  %2763 = vmatpush2.bf16.msra.mxu0 %v1890
  %2764 = vmatprep.subr.bf16.mxu0 0
  %2765 = vmatpush2.bf16.msra.mxu0 %v1889
  %2766 = vmatprep.subr.bf16.mxu0 0
  %2767 = vmatpush2.bf16.msra.mxu0 %v1888
  %2768 = vmatprep.subr.bf16.mxu0 0
  %2769 = vmatpush2.bf16.msra.mxu0 %v1887
  %2770 = vmatprep.subr.bf16.mxu0 0
  %2771 = vmatpush2.bf16.msra.mxu0 %v1886
  %2772 = vmatprep.mubr.bf16.mxu0 %v108
  %2773 = vmatmul.mubr.bf16.gmra.mxu0 %v107
  %v2774 = vpop.f32.mrf.mxu0
  %v2775 = vadd.f32 %v2734, %v2774
  %v2776 = vpop.f32.mrf.mxu0
  %v2777 = vpop.f32.mrf.mxu0
  %v2778 = vadd.f32 %v2737, %v2777
  %v2779 = vpop.f32.mrf.mxu0
  %2780 = vdwg.mxu0
  %2781 = vmatprep.subr.bf16.mxu0 0
  %2782 = vmatpush1.bf16.msra.mxu0 %v1901
  %2783 = vmatprep.subr.bf16.mxu0 0
  %2784 = vmatpush1.bf16.msra.mxu0 %v1900
  %2785 = vmatprep.subr.bf16.mxu0 0
  %2786 = vmatpush1.bf16.msra.mxu0 %v1899
  %2787 = vmatprep.subr.bf16.mxu0 0
  %2788 = vmatpush1.bf16.msra.mxu0 %v1898
  %2789 = vmatprep.subr.bf16.mxu0 0
  %2790 = vmatpush1.bf16.msra.mxu0 %v1897
  %2791 = vmatprep.subr.bf16.mxu0 0
  %2792 = vmatpush1.bf16.msra.mxu0 %v1896
  %2793 = vmatprep.subr.bf16.mxu0 0
  %2794 = vmatpush1.bf16.msra.mxu0 %v1895
  %2795 = vmatprep.subr.bf16.mxu0 0
  %2796 = vmatpush1.bf16.msra.mxu0 %v1894
  %2797 = vmatprep.subr.bf16.mxu0 0
  %2798 = vmatpush2.bf16.msra.mxu0 %v1909
  %2799 = vmatprep.subr.bf16.mxu0 0
  %2800 = vmatpush2.bf16.msra.mxu0 %v1908
  %2801 = vmatprep.subr.bf16.mxu0 0
  %2802 = vmatpush2.bf16.msra.mxu0 %v1907
  %2803 = vmatprep.subr.bf16.mxu0 0
  %2804 = vmatpush2.bf16.msra.mxu0 %v1906
  %2805 = vmatprep.subr.bf16.mxu0 0
  %2806 = vmatpush2.bf16.msra.mxu0 %v1905
  %2807 = vmatprep.subr.bf16.mxu0 0
  %2808 = vmatpush2.bf16.msra.mxu0 %v1904
  %2809 = vmatprep.subr.bf16.mxu0 0
  %2810 = vmatpush2.bf16.msra.mxu0 %v1903
  %2811 = vmatprep.subr.bf16.mxu0 0
  %2812 = vmatpush2.bf16.msra.mxu0 %v1902
  %2813 = vmatprep.mubr.bf16.mxu0 %v110
  %2814 = vmatmul.mubr.bf16.gmra.mxu0 %v109
  %v2815 = vpop.f32.mrf.mxu0
  %v2816 = vadd.f32 %v2775, %v2815
  %v2817 = vpop.f32.mrf.mxu0
  %v2818 = vpop.f32.mrf.mxu0
  %v2819 = vadd.f32 %v2778, %v2818
  %v2820 = vpop.f32.mrf.mxu0
  %2821 = vdwg.mxu0
  %v2822 = vmax.f32 %v2816, 0.0
  %v2823 = vmax.f32 %v2819, 0.0
  %vm2824 = vcmask 523264
  %2825 = vst.msk [vmem:[%s3] sm:$0xff] %vm2824, %v2822
  %2826 = vst.msk [vmem:[%s3 + $0x8] sm:$0xff] %vm2824, %v2823
  // Predicated region
  $region14: #{dsa_rnn_forward.4} parent=0 // pred_check
    _
  $region15: #{dsa_rnn_forward.4} parent=0 // pred_check_branch
    %2828 = sbr.rel (0) target = $region17
  $region16: #{dsa_rnn_forward.4} parent=0 // pred_region
    _
  $region17: #{dsa_rnn_forward.4} parent=0 // pred_fallthru
    _
  // Predicated region
  $region18: #{dsa_rnn_forward.4} parent=0 // pred_check
    _
  $region19: #{dsa_rnn_forward.4} parent=0 // pred_check_branch
    %2830 = sbr.rel (0) target = $region21
  $region20: #{dsa_rnn_forward.4} parent=0 // pred_region
    _
  $region21: #{dsa_rnn_forward.4} parent=0 // pred_fallthru
    _

// kernel: dsa_rnn_forward.3
$region0: #{dsa_rnn_forward.3}
  #allocation0 [shape = 'u32[]', space=smem, size = 0x4, offset = 0x4, fixed_abs, tag = 'smem constant byte address 0x4 - core index']
  #allocation1 [shape = 'u32[144,128]{1,0:T(1,128)}', space=vmem, size = 0x12000, scoped, tag = 'internal scratch']
  %s0 = inlined_call_operand.vmem [shape: f32[128,4096], index: 0, kind: input, shape index: {}]
  %s1 = inlined_call_operand.vmem [shape: bf16[4096,64], index: 1, kind: input, shape index: {}]
  %s2 = inlined_call_operand.vmem [shape: f32[1,64], index: 2, kind: input, shape index: {}]
  %s3 = inlined_call_operand.vmem [shape: f32[128,64], index: 3, kind: output, shape index: {}]
  %s4 = sld [smem:[#allocation0]]
  $region22: #{dsa_rnn_forward.3} parent=0
    _
  %s6 = ssub.s32 1, %s4
  %s7 = scalar_select 0, %s6, %s4
  // Predicated region
  $region2: #{dsa_rnn_forward.3} parent=0 // pred_check
    _
  $region3: #{dsa_rnn_forward.3} parent=0 // pred_check_branch
    %9 = sbr.rel (0) target = $region5
  $region4: #{dsa_rnn_forward.3} parent=0 // pred_region
    _
  $region5: #{dsa_rnn_forward.3} parent=0 // pred_fallthru
    _
  // Predicated region
  $region6: #{dsa_rnn_forward.3} parent=0 // pred_check
    _
  $region7: #{dsa_rnn_forward.3} parent=0 // pred_check_branch
    %11 = sbr.rel (0) target = $region9
  $region8: #{dsa_rnn_forward.3} parent=0 // pred_region
    _
  $region9: #{dsa_rnn_forward.3} parent=0 // pred_fallthru
    _
  // Predicated region
  $region10: #{dsa_rnn_forward.3} parent=0 // pred_check
    _
  $region11: #{dsa_rnn_forward.3} parent=0 // pred_check_branch
    %13 = sbr.rel (0) target = $region13
  $region12: #{dsa_rnn_forward.3} parent=0 // pred_region
    _
  $region13: #{dsa_rnn_forward.3} parent=0 // pred_fallthru
    _
  %v15 = vld [vmem:[%s0] sm:$0xff]
  %v16 = vld [vmem:[%s0 + $0x8] sm:$0xff]
  %v17 = vld [vmem:[%s0 + $0x10] sm:$0xff]
  %v18 = vld [vmem:[%s0 + $0x18] sm:$0xff]
  %v19 = vld [vmem:[%s0 + $0x20] sm:$0xff]
  %v20 = vld [vmem:[%s0 + $0x28] sm:$0xff]
  %v21 = vld [vmem:[%s0 + $0x30] sm:$0xff]
  %v22 = vld [vmem:[%s0 + $0x38] sm:$0xff]
  %v23 = vld [vmem:[%s0 + $0x40] sm:$0xff]
  %v24 = vld [vmem:[%s0 + $0x48] sm:$0xff]
  %v25 = vld [vmem:[%s0 + $0x50] sm:$0xff]
  %v26 = vld [vmem:[%s0 + $0x58] sm:$0xff]
  %v27 = vld [vmem:[%s0 + $0x60] sm:$0xff]
  %v28 = vld [vmem:[%s0 + $0x68] sm:$0xff]
  %v29 = vld [vmem:[%s0 + $0x70] sm:$0xff]
  %v30 = vld [vmem:[%s0 + $0x78] sm:$0xff]
  %v31 = vld [vmem:[%s0 + $0x80] sm:$0xff]
  %v32 = vld [vmem:[%s0 + $0x88] sm:$0xff]
  %v33 = vld [vmem:[%s0 + $0x90] sm:$0xff]
  %v34 = vld [vmem:[%s0 + $0x98] sm:$0xff]
  %v35 = vld [vmem:[%s0 + $0xa0] sm:$0xff]
  %v36 = vld [vmem:[%s0 + $0xa8] sm:$0xff]
  %v37 = vld [vmem:[%s0 + $0xb0] sm:$0xff]
  %v38 = vld [vmem:[%s0 + $0xb8] sm:$0xff]
  %v39 = vld [vmem:[%s0 + $0xc0] sm:$0xff]
  %v40 = vld [vmem:[%s0 + $0xc8] sm:$0xff]
  %v41 = vld [vmem:[%s0 + $0xd0] sm:$0xff]
  %v42 = vld [vmem:[%s0 + $0xd8] sm:$0xff]
  %v43 = vld [vmem:[%s0 + $0xe0] sm:$0xff]
  %v44 = vld [vmem:[%s0 + $0xe8] sm:$0xff]
  %v45 = vld [vmem:[%s0 + $0xf0] sm:$0xff]
  %v46 = vld [vmem:[%s0 + $0xf8] sm:$0xff]
  %v47 = vld [vmem:[%s0 + $0x100] sm:$0xff]
  %v48 = vld [vmem:[%s0 + $0x108] sm:$0xff]
  %v49 = vld [vmem:[%s0 + $0x110] sm:$0xff]
  %v50 = vld [vmem:[%s0 + $0x118] sm:$0xff]
  %v51 = vld [vmem:[%s0 + $0x120] sm:$0xff]
  %v52 = vld [vmem:[%s0 + $0x128] sm:$0xff]
  %v53 = vld [vmem:[%s0 + $0x130] sm:$0xff]
  %v54 = vld [vmem:[%s0 + $0x138] sm:$0xff]
  %v55 = vld [vmem:[%s0 + $0x140] sm:$0xff]
  %v56 = vld [vmem:[%s0 + $0x148] sm:$0xff]
  %v57 = vld [vmem:[%s0 + $0x150] sm:$0xff]
  %v58 = vld [vmem:[%s0 + $0x158] sm:$0xff]
  %v59 = vld [vmem:[%s0 + $0x160] sm:$0xff]
  %v60 = vld [vmem:[%s0 + $0x168] sm:$0xff]
  %v61 = vld [vmem:[%s0 + $0x170] sm:$0xff]
  %v62 = vld [vmem:[%s0 + $0x178] sm:$0xff]
  %v63 = vld [vmem:[%s0 + $0x180] sm:$0xff]
  %v64 = vld [vmem:[%s0 + $0x188] sm:$0xff]
  %v65 = vld [vmem:[%s0 + $0x190] sm:$0xff]
  %v66 = vld [vmem:[%s0 + $0x198] sm:$0xff]
  %v67 = vld [vmem:[%s0 + $0x1a0] sm:$0xff]
  %v68 = vld [vmem:[%s0 + $0x1a8] sm:$0xff]
  %v69 = vld [vmem:[%s0 + $0x1b0] sm:$0xff]
  %v70 = vld [vmem:[%s0 + $0x1b8] sm:$0xff]
  %v71 = vld [vmem:[%s0 + $0x1c0] sm:$0xff]
  %v72 = vld [vmem:[%s0 + $0x1c8] sm:$0xff]
  %v73 = vld [vmem:[%s0 + $0x1d0] sm:$0xff]
  %v74 = vld [vmem:[%s0 + $0x1d8] sm:$0xff]
  %v75 = vld [vmem:[%s0 + $0x1e0] sm:$0xff]
  %v76 = vld [vmem:[%s0 + $0x1e8] sm:$0xff]
  %v77 = vld [vmem:[%s0 + $0x1f0] sm:$0xff]
  %v78 = vld [vmem:[%s0 + $0x1f8] sm:$0xff]
  %v79 = vld [vmem:[%s0 + $0x200] sm:$0xff]
  %v80 = vld [vmem:[%s0 + $0x208] sm:$0xff]
  %v81 = vld [vmem:[%s0 + $0x210] sm:$0xff]
  %v82 = vld [vmem:[%s0 + $0x218] sm:$0xff]
  %v83 = vld [vmem:[%s0 + $0x220] sm:$0xff]
  %v84 = vld [vmem:[%s0 + $0x228] sm:$0xff]
  %v85 = vld [vmem:[%s0 + $0x230] sm:$0xff]
  %v86 = vld [vmem:[%s0 + $0x238] sm:$0xff]
  %v87 = vld [vmem:[%s0 + $0x240] sm:$0xff]
  %v88 = vld [vmem:[%s0 + $0x248] sm:$0xff]
  %v89 = vld [vmem:[%s0 + $0x250] sm:$0xff]
  %v90 = vld [vmem:[%s0 + $0x258] sm:$0xff]
  %v91 = vld [vmem:[%s0 + $0x260] sm:$0xff]
  %v92 = vld [vmem:[%s0 + $0x268] sm:$0xff]
  %v93 = vld [vmem:[%s0 + $0x270] sm:$0xff]
  %v94 = vld [vmem:[%s0 + $0x278] sm:$0xff]
  %v95 = vld [vmem:[%s0 + $0x280] sm:$0xff]
  %v96 = vld [vmem:[%s0 + $0x288] sm:$0xff]
  %v97 = vld [vmem:[%s0 + $0x290] sm:$0xff]
  %v98 = vld [vmem:[%s0 + $0x298] sm:$0xff]
  %v99 = vld [vmem:[%s0 + $0x2a0] sm:$0xff]
  %v100 = vld [vmem:[%s0 + $0x2a8] sm:$0xff]
  %v101 = vld [vmem:[%s0 + $0x2b0] sm:$0xff]
  %v102 = vld [vmem:[%s0 + $0x2b8] sm:$0xff]
  %v103 = vld [vmem:[%s0 + $0x2c0] sm:$0xff]
  %v104 = vld [vmem:[%s0 + $0x2c8] sm:$0xff]
  %v105 = vld [vmem:[%s0 + $0x2d0] sm:$0xff]
  %v106 = vld [vmem:[%s0 + $0x2d8] sm:$0xff]
  %v107 = vld [vmem:[%s0 + $0x2e0] sm:$0xff]
  %v108 = vld [vmem:[%s0 + $0x2e8] sm:$0xff]
  %v109 = vld [vmem:[%s0 + $0x2f0] sm:$0xff]
  %v110 = vld [vmem:[%s0 + $0x2f8] sm:$0xff]
  %v111 = vld [vmem:[%s0 + $0x300] sm:$0xff]
  %v112 = vld [vmem:[%s0 + $0x308] sm:$0xff]
  %v113 = vld [vmem:[%s0 + $0x310] sm:$0xff]
  %v114 = vld [vmem:[%s0 + $0x318] sm:$0xff]
  %v115 = vld [vmem:[%s0 + $0x320] sm:$0xff]
  %v116 = vld [vmem:[%s0 + $0x328] sm:$0xff]
  %v117 = vld [vmem:[%s0 + $0x330] sm:$0xff]
  %v118 = vld [vmem:[%s0 + $0x338] sm:$0xff]
  %v119 = vld [vmem:[%s0 + $0x340] sm:$0xff]
  %v120 = vld [vmem:[%s0 + $0x348] sm:$0xff]
  %v121 = vld [vmem:[%s0 + $0x350] sm:$0xff]
  %v122 = vld [vmem:[%s0 + $0x358] sm:$0xff]
  %v123 = vld [vmem:[%s0 + $0x360] sm:$0xff]
  %v124 = vld [vmem:[%s0 + $0x368] sm:$0xff]
  %v125 = vld [vmem:[%s0 + $0x370] sm:$0xff]
  %v126 = vld [vmem:[%s0 + $0x378] sm:$0xff]
  %v127 = vld [vmem:[%s0 + $0x380] sm:$0xff]
  %v128 = vld [vmem:[%s0 + $0x388] sm:$0xff]
  %v129 = vld [vmem:[%s0 + $0x390] sm:$0xff]
  %v130 = vld [vmem:[%s0 + $0x398] sm:$0xff]
  %v131 = vld [vmem:[%s0 + $0x3a0] sm:$0xff]
  %v132 = vld [vmem:[%s0 + $0x3a8] sm:$0xff]
  %v133 = vld [vmem:[%s0 + $0x3b0] sm:$0xff]
  %v134 = vld [vmem:[%s0 + $0x3b8] sm:$0xff]
  %v135 = vld [vmem:[%s0 + $0x3c0] sm:$0xff]
  %v136 = vld [vmem:[%s0 + $0x3c8] sm:$0xff]
  %v137 = vld [vmem:[%s0 + $0x3d0] sm:$0xff]
  %v138 = vld [vmem:[%s0 + $0x3d8] sm:$0xff]
  %v139 = vld [vmem:[%s0 + $0x3e0] sm:$0xff]
  %v140 = vld [vmem:[%s0 + $0x3e8] sm:$0xff]
  %v141 = vld [vmem:[%s0 + $0x3f0] sm:$0xff]
  %v142 = vld [vmem:[%s0 + $0x3f8] sm:$0xff]
  %v143 = vld [vmem:[%s0 + $0x400] sm:$0xff]
  %v144 = vld [vmem:[%s0 + $0x408] sm:$0xff]
  %v145 = vld [vmem:[%s0 + $0x410] sm:$0xff]
  %v146 = vld [vmem:[%s0 + $0x418] sm:$0xff]
  %v147 = vld [vmem:[%s0 + $0x420] sm:$0xff]
  %v148 = vld [vmem:[%s0 + $0x428] sm:$0xff]
  %v149 = vld [vmem:[%s0 + $0x430] sm:$0xff]
  %v150 = vld [vmem:[%s0 + $0x438] sm:$0xff]
  %v151 = vld [vmem:[%s0 + $0x440] sm:$0xff]
  %v152 = vld [vmem:[%s0 + $0x448] sm:$0xff]
  %v153 = vld [vmem:[%s0 + $0x450] sm:$0xff]
  %v154 = vld [vmem:[%s0 + $0x458] sm:$0xff]
  %v155 = vld [vmem:[%s0 + $0x460] sm:$0xff]
  %v156 = vld [vmem:[%s0 + $0x468] sm:$0xff]
  %v157 = vld [vmem:[%s0 + $0x470] sm:$0xff]
  %v158 = vld [vmem:[%s0 + $0x478] sm:$0xff]
  %v159 = vld [vmem:[%s0 + $0x480] sm:$0xff]
  %v160 = vld [vmem:[%s0 + $0x488] sm:$0xff]
  %v161 = vld [vmem:[%s0 + $0x490] sm:$0xff]
  %v162 = vld [vmem:[%s0 + $0x498] sm:$0xff]
  %v163 = vld [vmem:[%s0 + $0x4a0] sm:$0xff]
  %v164 = vld [vmem:[%s0 + $0x4a8] sm:$0xff]
  %v165 = vld [vmem:[%s0 + $0x4b0] sm:$0xff]
  %v166 = vld [vmem:[%s0 + $0x4b8] sm:$0xff]
  %v167 = vld [vmem:[%s0 + $0x4c0] sm:$0xff]
  %v168 = vld [vmem:[%s0 + $0x4c8] sm:$0xff]
  %v169 = vld [vmem:[%s0 + $0x4d0] sm:$0xff]
  %v170 = vld [vmem:[%s0 + $0x4d8] sm:$0xff]
  %v171 = vld [vmem:[%s0 + $0x4e0] sm:$0xff]
  %v172 = vld [vmem:[%s0 + $0x4e8] sm:$0xff]
  %v173 = vld [vmem:[%s0 + $0x4f0] sm:$0xff]
  %v174 = vld [vmem:[%s0 + $0x4f8] sm:$0xff]
  %v175 = vld [vmem:[%s0 + $0x500] sm:$0xff]
  %v176 = vld [vmem:[%s0 + $0x508] sm:$0xff]
  %v177 = vld [vmem:[%s0 + $0x510] sm:$0xff]
  %v178 = vld [vmem:[%s0 + $0x518] sm:$0xff]
  %v179 = vld [vmem:[%s0 + $0x520] sm:$0xff]
  %v180 = vld [vmem:[%s0 + $0x528] sm:$0xff]
  %v181 = vld [vmem:[%s0 + $0x530] sm:$0xff]
  %v182 = vld [vmem:[%s0 + $0x538] sm:$0xff]
  %v183 = vld [vmem:[%s0 + $0x540] sm:$0xff]
  %v184 = vld [vmem:[%s0 + $0x548] sm:$0xff]
  %v185 = vld [vmem:[%s0 + $0x550] sm:$0xff]
  %v186 = vld [vmem:[%s0 + $0x558] sm:$0xff]
  %v187 = vld [vmem:[%s0 + $0x560] sm:$0xff]
  %v188 = vld [vmem:[%s0 + $0x568] sm:$0xff]
  %v189 = vld [vmem:[%s0 + $0x570] sm:$0xff]
  %v190 = vld [vmem:[%s0 + $0x578] sm:$0xff]
  %v191 = vld [vmem:[%s0 + $0x580] sm:$0xff]
  %v192 = vld [vmem:[%s0 + $0x588] sm:$0xff]
  %v193 = vld [vmem:[%s0 + $0x590] sm:$0xff]
  %v194 = vld [vmem:[%s0 + $0x598] sm:$0xff]
  %v195 = vld [vmem:[%s0 + $0x5a0] sm:$0xff]
  %v196 = vld [vmem:[%s0 + $0x5a8] sm:$0xff]
  %v197 = vld [vmem:[%s0 + $0x5b0] sm:$0xff]
  %v198 = vld [vmem:[%s0 + $0x5b8] sm:$0xff]
  %v199 = vld [vmem:[%s0 + $0x5c0] sm:$0xff]
  %v200 = vld [vmem:[%s0 + $0x5c8] sm:$0xff]
  %v201 = vld [vmem:[%s0 + $0x5d0] sm:$0xff]
  %v202 = vld [vmem:[%s0 + $0x5d8] sm:$0xff]
  %v203 = vld [vmem:[%s0 + $0x5e0] sm:$0xff]
  %v204 = vld [vmem:[%s0 + $0x5e8] sm:$0xff]
  %v205 = vld [vmem:[%s0 + $0x5f0] sm:$0xff]
  %v206 = vld [vmem:[%s0 + $0x5f8] sm:$0xff]
  %v207 = vld [vmem:[%s0 + $0x600] sm:$0xff]
  %v208 = vld [vmem:[%s0 + $0x608] sm:$0xff]
  %v209 = vld [vmem:[%s0 + $0x610] sm:$0xff]
  %v210 = vld [vmem:[%s0 + $0x618] sm:$0xff]
  %v211 = vld [vmem:[%s0 + $0x620] sm:$0xff]
  %v212 = vld [vmem:[%s0 + $0x628] sm:$0xff]
  %v213 = vld [vmem:[%s0 + $0x630] sm:$0xff]
  %v214 = vld [vmem:[%s0 + $0x638] sm:$0xff]
  %v215 = vld [vmem:[%s0 + $0x640] sm:$0xff]
  %v216 = vld [vmem:[%s0 + $0x648] sm:$0xff]
  %v217 = vld [vmem:[%s0 + $0x650] sm:$0xff]
  %v218 = vld [vmem:[%s0 + $0x658] sm:$0xff]
  %v219 = vld [vmem:[%s0 + $0x660] sm:$0xff]
  %v220 = vld [vmem:[%s0 + $0x668] sm:$0xff]
  %v221 = vld [vmem:[%s0 + $0x670] sm:$0xff]
  %v222 = vld [vmem:[%s0 + $0x678] sm:$0xff]
  %v223 = vld [vmem:[%s0 + $0x680] sm:$0xff]
  %v224 = vld [vmem:[%s0 + $0x688] sm:$0xff]
  %v225 = vld [vmem:[%s0 + $0x690] sm:$0xff]
  %v226 = vld [vmem:[%s0 + $0x698] sm:$0xff]
  %v227 = vld [vmem:[%s0 + $0x6a0] sm:$0xff]
  %v228 = vld [vmem:[%s0 + $0x6a8] sm:$0xff]
  %v229 = vld [vmem:[%s0 + $0x6b0] sm:$0xff]
  %v230 = vld [vmem:[%s0 + $0x6b8] sm:$0xff]
  %v231 = vld [vmem:[%s0 + $0x6c0] sm:$0xff]
  %v232 = vld [vmem:[%s0 + $0x6c8] sm:$0xff]
  %v233 = vld [vmem:[%s0 + $0x6d0] sm:$0xff]
  %v234 = vld [vmem:[%s0 + $0x6d8] sm:$0xff]
  %v235 = vld [vmem:[%s0 + $0x6e0] sm:$0xff]
  %v236 = vld [vmem:[%s0 + $0x6e8] sm:$0xff]
  %v237 = vld [vmem:[%s0 + $0x6f0] sm:$0xff]
  %v238 = vld [vmem:[%s0 + $0x6f8] sm:$0xff]
  %v239 = vld [vmem:[%s0 + $0x700] sm:$0xff]
  %v240 = vld [vmem:[%s0 + $0x708] sm:$0xff]
  %v241 = vld [vmem:[%s0 + $0x710] sm:$0xff]
  %v242 = vld [vmem:[%s0 + $0x718] sm:$0xff]
  %v243 = vld [vmem:[%s0 + $0x720] sm:$0xff]
  %v244 = vld [vmem:[%s0 + $0x728] sm:$0xff]
  %v245 = vld [vmem:[%s0 + $0x730] sm:$0xff]
  %v246 = vld [vmem:[%s0 + $0x738] sm:$0xff]
  %v247 = vld [vmem:[%s0 + $0x740] sm:$0xff]
  %v248 = vld [vmem:[%s0 + $0x748] sm:$0xff]
  %v249 = vld [vmem:[%s0 + $0x750] sm:$0xff]
  %v250 = vld [vmem:[%s0 + $0x758] sm:$0xff]
  %v251 = vld [vmem:[%s0 + $0x760] sm:$0xff]
  %v252 = vld [vmem:[%s0 + $0x768] sm:$0xff]
  %v253 = vld [vmem:[%s0 + $0x770] sm:$0xff]
  %v254 = vld [vmem:[%s0 + $0x778] sm:$0xff]
  %v255 = vld [vmem:[%s0 + $0x780] sm:$0xff]
  %v256 = vld [vmem:[%s0 + $0x788] sm:$0xff]
  %v257 = vld [vmem:[%s0 + $0x790] sm:$0xff]
  %v258 = vld [vmem:[%s0 + $0x798] sm:$0xff]
  %v259 = vld [vmem:[%s0 + $0x7a0] sm:$0xff]
  %v260 = vld [vmem:[%s0 + $0x7a8] sm:$0xff]
  %v261 = vld [vmem:[%s0 + $0x7b0] sm:$0xff]
  %v262 = vld [vmem:[%s0 + $0x7b8] sm:$0xff]
  %v263 = vld [vmem:[%s0 + $0x7c0] sm:$0xff]
  %v264 = vld [vmem:[%s0 + $0x7c8] sm:$0xff]
  %v265 = vld [vmem:[%s0 + $0x7d0] sm:$0xff]
  %v266 = vld [vmem:[%s0 + $0x7d8] sm:$0xff]
  %v267 = vld [vmem:[%s0 + $0x7e0] sm:$0xff]
  %v268 = vld [vmem:[%s0 + $0x7e8] sm:$0xff]
  %v269 = vld [vmem:[%s0 + $0x7f0] sm:$0xff]
  %v270 = vld [vmem:[%s0 + $0x7f8] sm:$0xff]
  %v271 = vld [vmem:[%s0 + $0x800] sm:$0xff]
  %v272 = vld [vmem:[%s0 + $0x808] sm:$0xff]
  %v273 = vld [vmem:[%s0 + $0x810] sm:$0xff]
  %v274 = vld [vmem:[%s0 + $0x818] sm:$0xff]
  %v275 = vld [vmem:[%s0 + $0x820] sm:$0xff]
  %v276 = vld [vmem:[%s0 + $0x828] sm:$0xff]
  %v277 = vld [vmem:[%s0 + $0x830] sm:$0xff]
  %v278 = vld [vmem:[%s0 + $0x838] sm:$0xff]
  %v279 = vld [vmem:[%s0 + $0x840] sm:$0xff]
  %v280 = vld [vmem:[%s0 + $0x848] sm:$0xff]
  %v281 = vld [vmem:[%s0 + $0x850] sm:$0xff]
  %v282 = vld [vmem:[%s0 + $0x858] sm:$0xff]
  %v283 = vld [vmem:[%s0 + $0x860] sm:$0xff]
  %v284 = vld [vmem:[%s0 + $0x868] sm:$0xff]
  %v285 = vld [vmem:[%s0 + $0x870] sm:$0xff]
  %v286 = vld [vmem:[%s0 + $0x878] sm:$0xff]
  %v287 = vld [vmem:[%s0 + $0x880] sm:$0xff]
  %v288 = vld [vmem:[%s0 + $0x888] sm:$0xff]
  %v289 = vld [vmem:[%s0 + $0x890] sm:$0xff]
  %v290 = vld [vmem:[%s0 + $0x898] sm:$0xff]
  %v291 = vld [vmem:[%s0 + $0x8a0] sm:$0xff]
  %v292 = vld [vmem:[%s0 + $0x8a8] sm:$0xff]
  %v293 = vld [vmem:[%s0 + $0x8b0] sm:$0xff]
  %v294 = vld [vmem:[%s0 + $0x8b8] sm:$0xff]
  %v295 = vld [vmem:[%s0 + $0x8c0] sm:$0xff]
  %v296 = vld [vmem:[%s0 + $0x8c8] sm:$0xff]
  %v297 = vld [vmem:[%s0 + $0x8d0] sm:$0xff]
  %v298 = vld [vmem:[%s0 + $0x8d8] sm:$0xff]
  %v299 = vld [vmem:[%s0 + $0x8e0] sm:$0xff]
  %v300 = vld [vmem:[%s0 + $0x8e8] sm:$0xff]
  %v301 = vld [vmem:[%s0 + $0x8f0] sm:$0xff]
  %v302 = vld [vmem:[%s0 + $0x8f8] sm:$0xff]
  %v303 = vld [vmem:[%s0 + $0x900] sm:$0xff]
  %v304 = vld [vmem:[%s0 + $0x908] sm:$0xff]
  %v305 = vld [vmem:[%s0 + $0x910] sm:$0xff]
  %v306 = vld [vmem:[%s0 + $0x918] sm:$0xff]
  %v307 = vld [vmem:[%s0 + $0x920] sm:$0xff]
  %v308 = vld [vmem:[%s0 + $0x928] sm:$0xff]
  %v309 = vld [vmem:[%s0 + $0x930] sm:$0xff]
  %v310 = vld [vmem:[%s0 + $0x938] sm:$0xff]
  %v311 = vld [vmem:[%s0 + $0x940] sm:$0xff]
  %v312 = vld [vmem:[%s0 + $0x948] sm:$0xff]
  %v313 = vld [vmem:[%s0 + $0x950] sm:$0xff]
  %v314 = vld [vmem:[%s0 + $0x958] sm:$0xff]
  %v315 = vld [vmem:[%s0 + $0x960] sm:$0xff]
  %v316 = vld [vmem:[%s0 + $0x968] sm:$0xff]
  %v317 = vld [vmem:[%s0 + $0x970] sm:$0xff]
  %v318 = vld [vmem:[%s0 + $0x978] sm:$0xff]
  %v319 = vld [vmem:[%s0 + $0x980] sm:$0xff]
  %v320 = vld [vmem:[%s0 + $0x988] sm:$0xff]
  %v321 = vld [vmem:[%s0 + $0x990] sm:$0xff]
  %v322 = vld [vmem:[%s0 + $0x998] sm:$0xff]
  %v323 = vld [vmem:[%s0 + $0x9a0] sm:$0xff]
  %v324 = vld [vmem:[%s0 + $0x9a8] sm:$0xff]
  %v325 = vld [vmem:[%s0 + $0x9b0] sm:$0xff]
  %v326 = vld [vmem:[%s0 + $0x9b8] sm:$0xff]
  %v327 = vld [vmem:[%s0 + $0x9c0] sm:$0xff]
  %v328 = vld [vmem:[%s0 + $0x9c8] sm:$0xff]
  %v329 = vld [vmem:[%s0 + $0x9d0] sm:$0xff]
  %v330 = vld [vmem:[%s0 + $0x9d8] sm:$0xff]
  %v331 = vld [vmem:[%s0 + $0x9e0] sm:$0xff]
  %v332 = vld [vmem:[%s0 + $0x9e8] sm:$0xff]
  %v333 = vld [vmem:[%s0 + $0x9f0] sm:$0xff]
  %v334 = vld [vmem:[%s0 + $0x9f8] sm:$0xff]
  %v335 = vld [vmem:[%s0 + $0xa00] sm:$0xff]
  %v336 = vld [vmem:[%s0 + $0xa08] sm:$0xff]
  %v337 = vld [vmem:[%s0 + $0xa10] sm:$0xff]
  %v338 = vld [vmem:[%s0 + $0xa18] sm:$0xff]
  %v339 = vld [vmem:[%s0 + $0xa20] sm:$0xff]
  %v340 = vld [vmem:[%s0 + $0xa28] sm:$0xff]
  %v341 = vld [vmem:[%s0 + $0xa30] sm:$0xff]
  %v342 = vld [vmem:[%s0 + $0xa38] sm:$0xff]
  %v343 = vld [vmem:[%s0 + $0xa40] sm:$0xff]
  %v344 = vld [vmem:[%s0 + $0xa48] sm:$0xff]
  %v345 = vld [vmem:[%s0 + $0xa50] sm:$0xff]
  %v346 = vld [vmem:[%s0 + $0xa58] sm:$0xff]
  %v347 = vld [vmem:[%s0 + $0xa60] sm:$0xff]
  %v348 = vld [vmem:[%s0 + $0xa68] sm:$0xff]
  %v349 = vld [vmem:[%s0 + $0xa70] sm:$0xff]
  %v350 = vld [vmem:[%s0 + $0xa78] sm:$0xff]
  %v351 = vld [vmem:[%s0 + $0xa80] sm:$0xff]
  %v352 = vld [vmem:[%s0 + $0xa88] sm:$0xff]
  %v353 = vld [vmem:[%s0 + $0xa90] sm:$0xff]
  %v354 = vld [vmem:[%s0 + $0xa98] sm:$0xff]
  %v355 = vld [vmem:[%s0 + $0xaa0] sm:$0xff]
  %v356 = vld [vmem:[%s0 + $0xaa8] sm:$0xff]
  %v357 = vld [vmem:[%s0 + $0xab0] sm:$0xff]
  %v358 = vld [vmem:[%s0 + $0xab8] sm:$0xff]
  %v359 = vld [vmem:[%s0 + $0xac0] sm:$0xff]
  %v360 = vld [vmem:[%s0 + $0xac8] sm:$0xff]
  %v361 = vld [vmem:[%s0 + $0xad0] sm:$0xff]
  %v362 = vld [vmem:[%s0 + $0xad8] sm:$0xff]
  %v363 = vld [vmem:[%s0 + $0xae0] sm:$0xff]
  %v364 = vld [vmem:[%s0 + $0xae8] sm:$0xff]
  %v365 = vld [vmem:[%s0 + $0xaf0] sm:$0xff]
  %v366 = vld [vmem:[%s0 + $0xaf8] sm:$0xff]
  %v367 = vld [vmem:[%s0 + $0xb00] sm:$0xff]
  %v368 = vld [vmem:[%s0 + $0xb08] sm:$0xff]
  %v369 = vld [vmem:[%s0 + $0xb10] sm:$0xff]
  %v370 = vld [vmem:[%s0 + $0xb18] sm:$0xff]
  %v371 = vld [vmem:[%s0 + $0xb20] sm:$0xff]
  %v372 = vld [vmem:[%s0 + $0xb28] sm:$0xff]
  %v373 = vld [vmem:[%s0 + $0xb30] sm:$0xff]
  %v374 = vld [vmem:[%s0 + $0xb38] sm:$0xff]
  %v375 = vld [vmem:[%s0 + $0xb40] sm:$0xff]
  %v376 = vld [vmem:[%s0 + $0xb48] sm:$0xff]
  %v377 = vld [vmem:[%s0 + $0xb50] sm:$0xff]
  %v378 = vld [vmem:[%s0 + $0xb58] sm:$0xff]
  %v379 = vld [vmem:[%s0 + $0xb60] sm:$0xff]
  %v380 = vld [vmem:[%s0 + $0xb68] sm:$0xff]
  %v381 = vld [vmem:[%s0 + $0xb70] sm:$0xff]
  %v382 = vld [vmem:[%s0 + $0xb78] sm:$0xff]
  %v383 = vld [vmem:[%s0 + $0xb80] sm:$0xff]
  %v384 = vld [vmem:[%s0 + $0xb88] sm:$0xff]
  %v385 = vld [vmem:[%s0 + $0xb90] sm:$0xff]
  %v386 = vld [vmem:[%s0 + $0xb98] sm:$0xff]
  %v387 = vld [vmem:[%s0 + $0xba0] sm:$0xff]
  %v388 = vld [vmem:[%s0 + $0xba8] sm:$0xff]
  %v389 = vld [vmem:[%s0 + $0xbb0] sm:$0xff]
  %v390 = vld [vmem:[%s0 + $0xbb8] sm:$0xff]
  %v391 = vld [vmem:[%s0 + $0xbc0] sm:$0xff]
  %v392 = vld [vmem:[%s0 + $0xbc8] sm:$0xff]
  %v393 = vld [vmem:[%s0 + $0xbd0] sm:$0xff]
  %v394 = vld [vmem:[%s0 + $0xbd8] sm:$0xff]
  %v395 = vld [vmem:[%s0 + $0xbe0] sm:$0xff]
  %v396 = vld [vmem:[%s0 + $0xbe8] sm:$0xff]
  %v397 = vld [vmem:[%s0 + $0xbf0] sm:$0xff]
  %v398 = vld [vmem:[%s0 + $0xbf8] sm:$0xff]
  %v399 = vld [vmem:[%s0 + $0xc00] sm:$0xff]
  %v400 = vld [vmem:[%s0 + $0xc08] sm:$0xff]
  %v401 = vld [vmem:[%s0 + $0xc10] sm:$0xff]
  %v402 = vld [vmem:[%s0 + $0xc18] sm:$0xff]
  %v403 = vld [vmem:[%s0 + $0xc20] sm:$0xff]
  %v404 = vld [vmem:[%s0 + $0xc28] sm:$0xff]
  %v405 = vld [vmem:[%s0 + $0xc30] sm:$0xff]
  %v406 = vld [vmem:[%s0 + $0xc38] sm:$0xff]
  %v407 = vld [vmem:[%s0 + $0xc40] sm:$0xff]
  %v408 = vld [vmem:[%s0 + $0xc48] sm:$0xff]
  %v409 = vld [vmem:[%s0 + $0xc50] sm:$0xff]
  %v410 = vld [vmem:[%s0 + $0xc58] sm:$0xff]
  %v411 = vld [vmem:[%s0 + $0xc60] sm:$0xff]
  %v412 = vld [vmem:[%s0 + $0xc68] sm:$0xff]
  %v413 = vld [vmem:[%s0 + $0xc70] sm:$0xff]
  %v414 = vld [vmem:[%s0 + $0xc78] sm:$0xff]
  %v415 = vld [vmem:[%s0 + $0xc80] sm:$0xff]
  %v416 = vld [vmem:[%s0 + $0xc88] sm:$0xff]
  %v417 = vld [vmem:[%s0 + $0xc90] sm:$0xff]
  %v418 = vld [vmem:[%s0 + $0xc98] sm:$0xff]
  %v419 = vld [vmem:[%s0 + $0xca0] sm:$0xff]
  %v420 = vld [vmem:[%s0 + $0xca8] sm:$0xff]
  %v421 = vld [vmem:[%s0 + $0xcb0] sm:$0xff]
  %v422 = vld [vmem:[%s0 + $0xcb8] sm:$0xff]
  %v423 = vld [vmem:[%s0 + $0xcc0] sm:$0xff]
  %v424 = vld [vmem:[%s0 + $0xcc8] sm:$0xff]
  %v425 = vld [vmem:[%s0 + $0xcd0] sm:$0xff]
  %v426 = vld [vmem:[%s0 + $0xcd8] sm:$0xff]
  %v427 = vld [vmem:[%s0 + $0xce0] sm:$0xff]
  %v428 = vld [vmem:[%s0 + $0xce8] sm:$0xff]
  %v429 = vld [vmem:[%s0 + $0xcf0] sm:$0xff]
  %v430 = vld [vmem:[%s0 + $0xcf8] sm:$0xff]
  %v431 = vld [vmem:[%s0 + $0xd00] sm:$0xff]
  %v432 = vld [vmem:[%s0 + $0xd08] sm:$0xff]
  %v433 = vld [vmem:[%s0 + $0xd10] sm:$0xff]
  %v434 = vld [vmem:[%s0 + $0xd18] sm:$0xff]
  %v435 = vld [vmem:[%s0 + $0xd20] sm:$0xff]
  %v436 = vld [vmem:[%s0 + $0xd28] sm:$0xff]
  %v437 = vld [vmem:[%s0 + $0xd30] sm:$0xff]
  %v438 = vld [vmem:[%s0 + $0xd38] sm:$0xff]
  %v439 = vld [vmem:[%s0 + $0xd40] sm:$0xff]
  %v440 = vld [vmem:[%s0 + $0xd48] sm:$0xff]
  %v441 = vld [vmem:[%s0 + $0xd50] sm:$0xff]
  %v442 = vld [vmem:[%s0 + $0xd58] sm:$0xff]
  %v443 = vld [vmem:[%s0 + $0xd60] sm:$0xff]
  %v444 = vld [vmem:[%s0 + $0xd68] sm:$0xff]
  %v445 = vld [vmem:[%s0 + $0xd70] sm:$0xff]
  %v446 = vld [vmem:[%s0 + $0xd78] sm:$0xff]
  %v447 = vld [vmem:[%s0 + $0xd80] sm:$0xff]
  %v448 = vld [vmem:[%s0 + $0xd88] sm:$0xff]
  %v449 = vld [vmem:[%s0 + $0xd90] sm:$0xff]
  %v450 = vld [vmem:[%s0 + $0xd98] sm:$0xff]
  %v451 = vld [vmem:[%s0 + $0xda0] sm:$0xff]
  %v452 = vld [vmem:[%s0 + $0xda8] sm:$0xff]
  %v453 = vld [vmem:[%s0 + $0xdb0] sm:$0xff]
  %v454 = vld [vmem:[%s0 + $0xdb8] sm:$0xff]
  %v455 = vld [vmem:[%s0 + $0xdc0] sm:$0xff]
  %v456 = vld [vmem:[%s0 + $0xdc8] sm:$0xff]
  %v457 = vld [vmem:[%s0 + $0xdd0] sm:$0xff]
  %v458 = vld [vmem:[%s0 + $0xdd8] sm:$0xff]
  %v459 = vld [vmem:[%s0 + $0xde0] sm:$0xff]
  %v460 = vld [vmem:[%s0 + $0xde8] sm:$0xff]
  %v461 = vld [vmem:[%s0 + $0xdf0] sm:$0xff]
  %v462 = vld [vmem:[%s0 + $0xdf8] sm:$0xff]
  %v463 = vld [vmem:[%s0 + $0xe00] sm:$0xff]
  %v464 = vld [vmem:[%s0 + $0xe08] sm:$0xff]
  %v465 = vld [vmem:[%s0 + $0xe10] sm:$0xff]
  %v466 = vld [vmem:[%s0 + $0xe18] sm:$0xff]
  %v467 = vld [vmem:[%s0 + $0xe20] sm:$0xff]
  %v468 = vld [vmem:[%s0 + $0xe28] sm:$0xff]
  %v469 = vld [vmem:[%s0 + $0xe30] sm:$0xff]
  %v470 = vld [vmem:[%s0 + $0xe38] sm:$0xff]
  %v471 = vld [vmem:[%s0 + $0xe40] sm:$0xff]
  %v472 = vld [vmem:[%s0 + $0xe48] sm:$0xff]
  %v473 = vld [vmem:[%s0 + $0xe50] sm:$0xff]
  %v474 = vld [vmem:[%s0 + $0xe58] sm:$0xff]
  %v475 = vld [vmem:[%s0 + $0xe60] sm:$0xff]
  %v476 = vld [vmem:[%s0 + $0xe68] sm:$0xff]
  %v477 = vld [vmem:[%s0 + $0xe70] sm:$0xff]
  %v478 = vld [vmem:[%s0 + $0xe78] sm:$0xff]
  %v479 = vld [vmem:[%s0 + $0xe80] sm:$0xff]
  %v480 = vld [vmem:[%s0 + $0xe88] sm:$0xff]
  %v481 = vld [vmem:[%s0 + $0xe90] sm:$0xff]
  %v482 = vld [vmem:[%s0 + $0xe98] sm:$0xff]
  %v483 = vld [vmem:[%s0 + $0xea0] sm:$0xff]
  %v484 = vld [vmem:[%s0 + $0xea8] sm:$0xff]
  %v485 = vld [vmem:[%s0 + $0xeb0] sm:$0xff]
  %v486 = vld [vmem:[%s0 + $0xeb8] sm:$0xff]
  %v487 = vld [vmem:[%s0 + $0xec0] sm:$0xff]
  %v488 = vld [vmem:[%s0 + $0xec8] sm:$0xff]
  %v489 = vld [vmem:[%s0 + $0xed0] sm:$0xff]
  %v490 = vld [vmem:[%s0 + $0xed8] sm:$0xff]
  %v491 = vld [vmem:[%s0 + $0xee0] sm:$0xff]
  %v492 = vld [vmem:[%s0 + $0xee8] sm:$0xff]
  %v493 = vld [vmem:[%s0 + $0xef0] sm:$0xff]
  %v494 = vld [vmem:[%s0 + $0xef8] sm:$0xff]
  %v495 = vld [vmem:[%s0 + $0xf00] sm:$0xff]
  %v496 = vld [vmem:[%s0 + $0xf08] sm:$0xff]
  %v497 = vld [vmem:[%s0 + $0xf10] sm:$0xff]
  %v498 = vld [vmem:[%s0 + $0xf18] sm:$0xff]
  %v499 = vld [vmem:[%s0 + $0xf20] sm:$0xff]
  %v500 = vld [vmem:[%s0 + $0xf28] sm:$0xff]
  %v501 = vld [vmem:[%s0 + $0xf30] sm:$0xff]
  %v502 = vld [vmem:[%s0 + $0xf38] sm:$0xff]
  %v503 = vld [vmem:[%s0 + $0xf40] sm:$0xff]
  %v504 = vld [vmem:[%s0 + $0xf48] sm:$0xff]
  %v505 = vld [vmem:[%s0 + $0xf50] sm:$0xff]
  %v506 = vld [vmem:[%s0 + $0xf58] sm:$0xff]
  %v507 = vld [vmem:[%s0 + $0xf60] sm:$0xff]
  %v508 = vld [vmem:[%s0 + $0xf68] sm:$0xff]
  %v509 = vld [vmem:[%s0 + $0xf70] sm:$0xff]
  %v510 = vld [vmem:[%s0 + $0xf78] sm:$0xff]
  %v511 = vld [vmem:[%s0 + $0xf80] sm:$0xff]
  %v512 = vld [vmem:[%s0 + $0xf88] sm:$0xff]
  %v513 = vld [vmem:[%s0 + $0xf90] sm:$0xff]
  %v514 = vld [vmem:[%s0 + $0xf98] sm:$0xff]
  %v515 = vld [vmem:[%s0 + $0xfa0] sm:$0xff]
  %v516 = vld [vmem:[%s0 + $0xfa8] sm:$0xff]
  %v517 = vld [vmem:[%s0 + $0xfb0] sm:$0xff]
  %v518 = vld [vmem:[%s0 + $0xfb8] sm:$0xff]
  %v519 = vld [vmem:[%s0 + $0xfc0] sm:$0xff]
  %v520 = vld [vmem:[%s0 + $0xfc8] sm:$0xff]
  %v521 = vld [vmem:[%s0 + $0xfd0] sm:$0xff]
  %v522 = vld [vmem:[%s0 + $0xfd8] sm:$0xff]
  %v523 = vld [vmem:[%s0 + $0xfe0] sm:$0xff]
  %v524 = vld [vmem:[%s0 + $0xfe8] sm:$0xff]
  %v525 = vld [vmem:[%s0 + $0xff0] sm:$0xff]
  %v526 = vld [vmem:[%s0 + $0xff8] sm:$0xff]
  %v527 = vpack.c.bf16 %v47, %v15
  %v528 = vpack.c.bf16 %v48, %v16
  %v529 = vpack.c.bf16 %v49, %v17
  %v530 = vpack.c.bf16 %v50, %v18
  %v531 = vpack.c.bf16 %v51, %v19
  %v532 = vpack.c.bf16 %v52, %v20
  %v533 = vpack.c.bf16 %v53, %v21
  %v534 = vpack.c.bf16 %v54, %v22
  %v535 = vpack.c.bf16 %v55, %v23
  %v536 = vpack.c.bf16 %v56, %v24
  %v537 = vpack.c.bf16 %v57, %v25
  %v538 = vpack.c.bf16 %v58, %v26
  %v539 = vpack.c.bf16 %v59, %v27
  %v540 = vpack.c.bf16 %v60, %v28
  %v541 = vpack.c.bf16 %v61, %v29
  %v542 = vpack.c.bf16 %v62, %v30
  %v543 = vpack.c.bf16 %v63, %v31
  %v544 = vpack.c.bf16 %v64, %v32
  %v545 = vpack.c.bf16 %v65, %v33
  %v546 = vpack.c.bf16 %v66, %v34
  %v547 = vpack.c.bf16 %v67, %v35
  %v548 = vpack.c.bf16 %v68, %v36
  %v549 = vpack.c.bf16 %v69, %v37
  %v550 = vpack.c.bf16 %v70, %v38
  %v551 = vpack.c.bf16 %v71, %v39
  %v552 = vpack.c.bf16 %v72, %v40
  %v553 = vpack.c.bf16 %v73, %v41
  %v554 = vpack.c.bf16 %v74, %v42
  %v555 = vpack.c.bf16 %v75, %v43
  %v556 = vpack.c.bf16 %v76, %v44
  %v557 = vpack.c.bf16 %v77, %v45
  %v558 = vpack.c.bf16 %v78, %v46
  %v559 = vpack.c.bf16 %v111, %v79
  %v560 = vpack.c.bf16 %v112, %v80
  %v561 = vpack.c.bf16 %v113, %v81
  %v562 = vpack.c.bf16 %v114, %v82
  %v563 = vpack.c.bf16 %v115, %v83
  %v564 = vpack.c.bf16 %v116, %v84
  %v565 = vpack.c.bf16 %v117, %v85
  %v566 = vpack.c.bf16 %v118, %v86
  %v567 = vpack.c.bf16 %v119, %v87
  %v568 = vpack.c.bf16 %v120, %v88
  %v569 = vpack.c.bf16 %v121, %v89
  %v570 = vpack.c.bf16 %v122, %v90
  %v571 = vpack.c.bf16 %v123, %v91
  %v572 = vpack.c.bf16 %v124, %v92
  %v573 = vpack.c.bf16 %v125, %v93
  %v574 = vpack.c.bf16 %v126, %v94
  %v575 = vpack.c.bf16 %v127, %v95
  %v576 = vpack.c.bf16 %v128, %v96
  %v577 = vpack.c.bf16 %v129, %v97
  %v578 = vpack.c.bf16 %v130, %v98
  %v579 = vpack.c.bf16 %v131, %v99
  %v580 = vpack.c.bf16 %v132, %v100
  %v581 = vpack.c.bf16 %v133, %v101
  %v582 = vpack.c.bf16 %v134, %v102
  %v583 = vpack.c.bf16 %v135, %v103
  %v584 = vpack.c.bf16 %v136, %v104
  %v585 = vpack.c.bf16 %v137, %v105
  %v586 = vpack.c.bf16 %v138, %v106
  %v587 = vpack.c.bf16 %v139, %v107
  %v588 = vpack.c.bf16 %v140, %v108
  %v589 = vpack.c.bf16 %v141, %v109
  %v590 = vpack.c.bf16 %v142, %v110
  %v591 = vpack.c.bf16 %v175, %v143
  %v592 = vpack.c.bf16 %v176, %v144
  %v593 = vpack.c.bf16 %v177, %v145
  %v594 = vpack.c.bf16 %v178, %v146
  %v595 = vpack.c.bf16 %v179, %v147
  %v596 = vpack.c.bf16 %v180, %v148
  %v597 = vpack.c.bf16 %v181, %v149
  %v598 = vpack.c.bf16 %v182, %v150
  %v599 = vpack.c.bf16 %v183, %v151
  %v600 = vpack.c.bf16 %v184, %v152
  %v601 = vpack.c.bf16 %v185, %v153
  %v602 = vpack.c.bf16 %v186, %v154
  %v603 = vpack.c.bf16 %v187, %v155
  %v604 = vpack.c.bf16 %v188, %v156
  %v605 = vpack.c.bf16 %v189, %v157
  %v606 = vpack.c.bf16 %v190, %v158
  %v607 = vpack.c.bf16 %v191, %v159
  %v608 = vpack.c.bf16 %v192, %v160
  %v609 = vpack.c.bf16 %v193, %v161
  %v610 = vpack.c.bf16 %v194, %v162
  %v611 = vpack.c.bf16 %v195, %v163
  %v612 = vpack.c.bf16 %v196, %v164
  %v613 = vpack.c.bf16 %v197, %v165
  %v614 = vpack.c.bf16 %v198, %v166
  %v615 = vpack.c.bf16 %v199, %v167
  %v616 = vpack.c.bf16 %v200, %v168
  %v617 = vpack.c.bf16 %v201, %v169
  %v618 = vpack.c.bf16 %v202, %v170
  %v619 = vpack.c.bf16 %v203, %v171
  %v620 = vpack.c.bf16 %v204, %v172
  %v621 = vpack.c.bf16 %v205, %v173
  %v622 = vpack.c.bf16 %v206, %v174
  %v623 = vpack.c.bf16 %v239, %v207
  %v624 = vpack.c.bf16 %v240, %v208
  %v625 = vpack.c.bf16 %v241, %v209
  %v626 = vpack.c.bf16 %v242, %v210
  %v627 = vpack.c.bf16 %v243, %v211
  %v628 = vpack.c.bf16 %v244, %v212
  %v629 = vpack.c.bf16 %v245, %v213
  %v630 = vpack.c.bf16 %v246, %v214
  %v631 = vpack.c.bf16 %v247, %v215
  %v632 = vpack.c.bf16 %v248, %v216
  %v633 = vpack.c.bf16 %v249, %v217
  %v634 = vpack.c.bf16 %v250, %v218
  %v635 = vpack.c.bf16 %v251, %v219
  %v636 = vpack.c.bf16 %v252, %v220
  %v637 = vpack.c.bf16 %v253, %v221
  %v638 = vpack.c.bf16 %v254, %v222
  %v639 = vpack.c.bf16 %v255, %v223
  %v640 = vpack.c.bf16 %v256, %v224
  %v641 = vpack.c.bf16 %v257, %v225
  %v642 = vpack.c.bf16 %v258, %v226
  %v643 = vpack.c.bf16 %v259, %v227
  %v644 = vpack.c.bf16 %v260, %v228
  %v645 = vpack.c.bf16 %v261, %v229
  %v646 = vpack.c.bf16 %v262, %v230
  %v647 = vpack.c.bf16 %v263, %v231
  %v648 = vpack.c.bf16 %v264, %v232
  %v649 = vpack.c.bf16 %v265, %v233
  %v650 = vpack.c.bf16 %v266, %v234
  %v651 = vpack.c.bf16 %v267, %v235
  %v652 = vpack.c.bf16 %v268, %v236
  %v653 = vpack.c.bf16 %v269, %v237
  %v654 = vpack.c.bf16 %v270, %v238
  %v655 = vpack.c.bf16 %v303, %v271
  %v656 = vpack.c.bf16 %v304, %v272
  %v657 = vpack.c.bf16 %v305, %v273
  %v658 = vpack.c.bf16 %v306, %v274
  %v659 = vpack.c.bf16 %v307, %v275
  %v660 = vpack.c.bf16 %v308, %v276
  %v661 = vpack.c.bf16 %v309, %v277
  %v662 = vpack.c.bf16 %v310, %v278
  %v663 = vpack.c.bf16 %v311, %v279
  %v664 = vpack.c.bf16 %v312, %v280
  %v665 = vpack.c.bf16 %v313, %v281
  %v666 = vpack.c.bf16 %v314, %v282
  %v667 = vpack.c.bf16 %v315, %v283
  %v668 = vpack.c.bf16 %v316, %v284
  %v669 = vpack.c.bf16 %v317, %v285
  %v670 = vpack.c.bf16 %v318, %v286
  %v671 = vpack.c.bf16 %v319, %v287
  %v672 = vpack.c.bf16 %v320, %v288
  %v673 = vpack.c.bf16 %v321, %v289
  %v674 = vpack.c.bf16 %v322, %v290
  %v675 = vpack.c.bf16 %v323, %v291
  %v676 = vpack.c.bf16 %v324, %v292
  %v677 = vpack.c.bf16 %v325, %v293
  %v678 = vpack.c.bf16 %v326, %v294
  %v679 = vpack.c.bf16 %v327, %v295
  %v680 = vpack.c.bf16 %v328, %v296
  %v681 = vpack.c.bf16 %v329, %v297
  %v682 = vpack.c.bf16 %v330, %v298
  %v683 = vpack.c.bf16 %v331, %v299
  %v684 = vpack.c.bf16 %v332, %v300
  %v685 = vpack.c.bf16 %v333, %v301
  %v686 = vpack.c.bf16 %v334, %v302
  %v687 = vpack.c.bf16 %v367, %v335
  %v688 = vpack.c.bf16 %v368, %v336
  %v689 = vpack.c.bf16 %v369, %v337
  %v690 = vpack.c.bf16 %v370, %v338
  %v691 = vpack.c.bf16 %v371, %v339
  %v692 = vpack.c.bf16 %v372, %v340
  %v693 = vpack.c.bf16 %v373, %v341
  %v694 = vpack.c.bf16 %v374, %v342
  %v695 = vpack.c.bf16 %v375, %v343
  %v696 = vpack.c.bf16 %v376, %v344
  %v697 = vpack.c.bf16 %v377, %v345
  %v698 = vpack.c.bf16 %v378, %v346
  %v699 = vpack.c.bf16 %v379, %v347
  %v700 = vpack.c.bf16 %v380, %v348
  %v701 = vpack.c.bf16 %v381, %v349
  %v702 = vpack.c.bf16 %v382, %v350
  %v703 = vpack.c.bf16 %v383, %v351
  %v704 = vpack.c.bf16 %v384, %v352
  %v705 = vpack.c.bf16 %v385, %v353
  %v706 = vpack.c.bf16 %v386, %v354
  %v707 = vpack.c.bf16 %v387, %v355
  %v708 = vpack.c.bf16 %v388, %v356
  %v709 = vpack.c.bf16 %v389, %v357
  %v710 = vpack.c.bf16 %v390, %v358
  %v711 = vpack.c.bf16 %v391, %v359
  %v712 = vpack.c.bf16 %v392, %v360
  %v713 = vpack.c.bf16 %v393, %v361
  %v714 = vpack.c.bf16 %v394, %v362
  %v715 = vpack.c.bf16 %v395, %v363
  %v716 = vpack.c.bf16 %v396, %v364
  %v717 = vpack.c.bf16 %v397, %v365
  %v718 = vpack.c.bf16 %v398, %v366
  %v719 = vpack.c.bf16 %v431, %v399
  %v720 = vpack.c.bf16 %v432, %v400
  %v721 = vpack.c.bf16 %v433, %v401
  %v722 = vpack.c.bf16 %v434, %v402
  %v723 = vpack.c.bf16 %v435, %v403
  %v724 = vpack.c.bf16 %v436, %v404
  %v725 = vpack.c.bf16 %v437, %v405
  %v726 = vpack.c.bf16 %v438, %v406
  %v727 = vpack.c.bf16 %v439, %v407
  %v728 = vpack.c.bf16 %v440, %v408
  %v729 = vpack.c.bf16 %v441, %v409
  %v730 = vpack.c.bf16 %v442, %v410
  %v731 = vpack.c.bf16 %v443, %v411
  %v732 = vpack.c.bf16 %v444, %v412
  %v733 = vpack.c.bf16 %v445, %v413
  %v734 = vpack.c.bf16 %v446, %v414
  %v735 = vpack.c.bf16 %v447, %v415
  %v736 = vpack.c.bf16 %v448, %v416
  %v737 = vpack.c.bf16 %v449, %v417
  %v738 = vpack.c.bf16 %v450, %v418
  %v739 = vpack.c.bf16 %v451, %v419
  %v740 = vpack.c.bf16 %v452, %v420
  %v741 = vpack.c.bf16 %v453, %v421
  %v742 = vpack.c.bf16 %v454, %v422
  %v743 = vpack.c.bf16 %v455, %v423
  %v744 = vpack.c.bf16 %v456, %v424
  %v745 = vpack.c.bf16 %v457, %v425
  %v746 = vpack.c.bf16 %v458, %v426
  %v747 = vpack.c.bf16 %v459, %v427
  %v748 = vpack.c.bf16 %v460, %v428
  %v749 = vpack.c.bf16 %v461, %v429
  %v750 = vpack.c.bf16 %v462, %v430
  %v751 = vpack.c.bf16 %v495, %v463
  %v752 = vpack.c.bf16 %v496, %v464
  %v753 = vpack.c.bf16 %v497, %v465
  %v754 = vpack.c.bf16 %v498, %v466
  %v755 = vpack.c.bf16 %v499, %v467
  %v756 = vpack.c.bf16 %v500, %v468
  %v757 = vpack.c.bf16 %v501, %v469
  %v758 = vpack.c.bf16 %v502, %v470
  %v759 = vpack.c.bf16 %v503, %v471
  %v760 = vpack.c.bf16 %v504, %v472
  %v761 = vpack.c.bf16 %v505, %v473
  %v762 = vpack.c.bf16 %v506, %v474
  %v763 = vpack.c.bf16 %v507, %v475
  %v764 = vpack.c.bf16 %v508, %v476
  %v765 = vpack.c.bf16 %v509, %v477
  %v766 = vpack.c.bf16 %v510, %v478
  %v767 = vpack.c.bf16 %v511, %v479
  %v768 = vpack.c.bf16 %v512, %v480
  %v769 = vpack.c.bf16 %v513, %v481
  %v770 = vpack.c.bf16 %v514, %v482
  %v771 = vpack.c.bf16 %v515, %v483
  %v772 = vpack.c.bf16 %v516, %v484
  %v773 = vpack.c.bf16 %v517, %v485
  %v774 = vpack.c.bf16 %v518, %v486
  %v775 = vpack.c.bf16 %v519, %v487
  %v776 = vpack.c.bf16 %v520, %v488
  %v777 = vpack.c.bf16 %v521, %v489
  %v778 = vpack.c.bf16 %v522, %v490
  %v779 = vpack.c.bf16 %v523, %v491
  %v780 = vpack.c.bf16 %v524, %v492
  %v781 = vpack.c.bf16 %v525, %v493
  %v782 = vpack.c.bf16 %v526, %v494
  %v783 = vld [vmem:[%s1] sm:$0xf]
  %v784 = vld [vmem:[%s1 + $0x4] sm:$0xf]
  %v785 = vld [vmem:[%s1 + $0x8] sm:$0xf]
  %v786 = vld [vmem:[%s1 + $0xc] sm:$0xf]
  %v787 = vld [vmem:[%s1 + $0x10] sm:$0xf]
  %v788 = vld [vmem:[%s1 + $0x14] sm:$0xf]
  %v789 = vld [vmem:[%s1 + $0x18] sm:$0xf]
  %v790 = vld [vmem:[%s1 + $0x1c] sm:$0xf]
  %v791 = vld [vmem:[%s1 + $0x20] sm:$0xf]
  %v792 = vld [vmem:[%s1 + $0x24] sm:$0xf]
  %v793 = vld [vmem:[%s1 + $0x28] sm:$0xf]
  %v794 = vld [vmem:[%s1 + $0x2c] sm:$0xf]
  %v795 = vld [vmem:[%s1 + $0x30] sm:$0xf]
  %v796 = vld [vmem:[%s1 + $0x34] sm:$0xf]
  %v797 = vld [vmem:[%s1 + $0x38] sm:$0xf]
  %v798 = vld [vmem:[%s1 + $0x3c] sm:$0xf]
  %v799 = vld [vmem:[%s1 + $0x40] sm:$0xf]
  %v800 = vld [vmem:[%s1 + $0x44] sm:$0xf]
  %v801 = vld [vmem:[%s1 + $0x48] sm:$0xf]
  %v802 = vld [vmem:[%s1 + $0x4c] sm:$0xf]
  %v803 = vld [vmem:[%s1 + $0x50] sm:$0xf]
  %v804 = vld [vmem:[%s1 + $0x54] sm:$0xf]
  %v805 = vld [vmem:[%s1 + $0x58] sm:$0xf]
  %v806 = vld [vmem:[%s1 + $0x5c] sm:$0xf]
  %v807 = vld [vmem:[%s1 + $0x60] sm:$0xf]
  %v808 = vld [vmem:[%s1 + $0x64] sm:$0xf]
  %v809 = vld [vmem:[%s1 + $0x68] sm:$0xf]
  %v810 = vld [vmem:[%s1 + $0x6c] sm:$0xf]
  %v811 = vld [vmem:[%s1 + $0x70] sm:$0xf]
  %v812 = vld [vmem:[%s1 + $0x74] sm:$0xf]
  %v813 = vld [vmem:[%s1 + $0x78] sm:$0xf]
  %v814 = vld [vmem:[%s1 + $0x7c] sm:$0xf]
  %v815 = vld [vmem:[%s1 + $0x80] sm:$0xf]
  %v816 = vld [vmem:[%s1 + $0x84] sm:$0xf]
  %v817 = vld [vmem:[%s1 + $0x88] sm:$0xf]
  %v818 = vld [vmem:[%s1 + $0x8c] sm:$0xf]
  %v819 = vld [vmem:[%s1 + $0x90] sm:$0xf]
  %v820 = vld [vmem:[%s1 + $0x94] sm:$0xf]
  %v821 = vld [vmem:[%s1 + $0x98] sm:$0xf]
  %v822 = vld [vmem:[%s1 + $0x9c] sm:$0xf]
  %v823 = vld [vmem:[%s1 + $0xa0] sm:$0xf]
  %v824 = vld [vmem:[%s1 + $0xa4] sm:$0xf]
  %v825 = vld [vmem:[%s1 + $0xa8] sm:$0xf]
  %v826 = vld [vmem:[%s1 + $0xac] sm:$0xf]
  %v827 = vld [vmem:[%s1 + $0xb0] sm:$0xf]
  %v828 = vld [vmem:[%s1 + $0xb4] sm:$0xf]
  %v829 = vld [vmem:[%s1 + $0xb8] sm:$0xf]
  %v830 = vld [vmem:[%s1 + $0xbc] sm:$0xf]
  %v831 = vld [vmem:[%s1 + $0xc0] sm:$0xf]
  %v832 = vld [vmem:[%s1 + $0xc4] sm:$0xf]
  %v833 = vld [vmem:[%s1 + $0xc8] sm:$0xf]
  %v834 = vld [vmem:[%s1 + $0xcc] sm:$0xf]
  %v835 = vld [vmem:[%s1 + $0xd0] sm:$0xf]
  %v836 = vld [vmem:[%s1 + $0xd4] sm:$0xf]
  %v837 = vld [vmem:[%s1 + $0xd8] sm:$0xf]
  %v838 = vld [vmem:[%s1 + $0xdc] sm:$0xf]
  %v839 = vld [vmem:[%s1 + $0xe0] sm:$0xf]
  %v840 = vld [vmem:[%s1 + $0xe4] sm:$0xf]
  %v841 = vld [vmem:[%s1 + $0xe8] sm:$0xf]
  %v842 = vld [vmem:[%s1 + $0xec] sm:$0xf]
  %v843 = vld [vmem:[%s1 + $0xf0] sm:$0xf]
  %v844 = vld [vmem:[%s1 + $0xf4] sm:$0xf]
  %v845 = vld [vmem:[%s1 + $0xf8] sm:$0xf]
  %v846 = vld [vmem:[%s1 + $0xfc] sm:$0xf]
  %v847 = vld [vmem:[%s1 + $0x100] sm:$0xf]
  %v848 = vld [vmem:[%s1 + $0x104] sm:$0xf]
  %v849 = vld [vmem:[%s1 + $0x108] sm:$0xf]
  %v850 = vld [vmem:[%s1 + $0x10c] sm:$0xf]
  %v851 = vld [vmem:[%s1 + $0x110] sm:$0xf]
  %v852 = vld [vmem:[%s1 + $0x114] sm:$0xf]
  %v853 = vld [vmem:[%s1 + $0x118] sm:$0xf]
  %v854 = vld [vmem:[%s1 + $0x11c] sm:$0xf]
  %v855 = vld [vmem:[%s1 + $0x120] sm:$0xf]
  %v856 = vld [vmem:[%s1 + $0x124] sm:$0xf]
  %v857 = vld [vmem:[%s1 + $0x128] sm:$0xf]
  %v858 = vld [vmem:[%s1 + $0x12c] sm:$0xf]
  %v859 = vld [vmem:[%s1 + $0x130] sm:$0xf]
  %v860 = vld [vmem:[%s1 + $0x134] sm:$0xf]
  %v861 = vld [vmem:[%s1 + $0x138] sm:$0xf]
  %v862 = vld [vmem:[%s1 + $0x13c] sm:$0xf]
  %v863 = vld [vmem:[%s1 + $0x140] sm:$0xf]
  %v864 = vld [vmem:[%s1 + $0x144] sm:$0xf]
  %v865 = vld [vmem:[%s1 + $0x148] sm:$0xf]
  %v866 = vld [vmem:[%s1 + $0x14c] sm:$0xf]
  %v867 = vld [vmem:[%s1 + $0x150] sm:$0xf]
  %v868 = vld [vmem:[%s1 + $0x154] sm:$0xf]
  %v869 = vld [vmem:[%s1 + $0x158] sm:$0xf]
  %v870 = vld [vmem:[%s1 + $0x15c] sm:$0xf]
  %v871 = vld [vmem:[%s1 + $0x160] sm:$0xf]
  %v872 = vld [vmem:[%s1 + $0x164] sm:$0xf]
  %v873 = vld [vmem:[%s1 + $0x168] sm:$0xf]
  %v874 = vld [vmem:[%s1 + $0x16c] sm:$0xf]
  %v875 = vld [vmem:[%s1 + $0x170] sm:$0xf]
  %v876 = vld [vmem:[%s1 + $0x174] sm:$0xf]
  %v877 = vld [vmem:[%s1 + $0x178] sm:$0xf]
  %v878 = vld [vmem:[%s1 + $0x17c] sm:$0xf]
  %v879 = vld [vmem:[%s1 + $0x180] sm:$0xf]
  %v880 = vld [vmem:[%s1 + $0x184] sm:$0xf]
  %v881 = vld [vmem:[%s1 + $0x188] sm:$0xf]
  %v882 = vld [vmem:[%s1 + $0x18c] sm:$0xf]
  %v883 = vld [vmem:[%s1 + $0x190] sm:$0xf]
  %v884 = vld [vmem:[%s1 + $0x194] sm:$0xf]
  %v885 = vld [vmem:[%s1 + $0x198] sm:$0xf]
  %v886 = vld [vmem:[%s1 + $0x19c] sm:$0xf]
  %v887 = vld [vmem:[%s1 + $0x1a0] sm:$0xf]
  %v888 = vld [vmem:[%s1 + $0x1a4] sm:$0xf]
  %v889 = vld [vmem:[%s1 + $0x1a8] sm:$0xf]
  %v890 = vld [vmem:[%s1 + $0x1ac] sm:$0xf]
  %v891 = vld [vmem:[%s1 + $0x1b0] sm:$0xf]
  %v892 = vld [vmem:[%s1 + $0x1b4] sm:$0xf]
  %v893 = vld [vmem:[%s1 + $0x1b8] sm:$0xf]
  %v894 = vld [vmem:[%s1 + $0x1bc] sm:$0xf]
  %v895 = vld [vmem:[%s1 + $0x1c0] sm:$0xf]
  %v896 = vld [vmem:[%s1 + $0x1c4] sm:$0xf]
  %v897 = vld [vmem:[%s1 + $0x1c8] sm:$0xf]
  %v898 = vld [vmem:[%s1 + $0x1cc] sm:$0xf]
  %v899 = vld [vmem:[%s1 + $0x1d0] sm:$0xf]
  %v900 = vld [vmem:[%s1 + $0x1d4] sm:$0xf]
  %v901 = vld [vmem:[%s1 + $0x1d8] sm:$0xf]
  %v902 = vld [vmem:[%s1 + $0x1dc] sm:$0xf]
  %v903 = vld [vmem:[%s1 + $0x1e0] sm:$0xf]
  %v904 = vld [vmem:[%s1 + $0x1e4] sm:$0xf]
  %v905 = vld [vmem:[%s1 + $0x1e8] sm:$0xf]
  %v906 = vld [vmem:[%s1 + $0x1ec] sm:$0xf]
  %v907 = vld [vmem:[%s1 + $0x1f0] sm:$0xf]
  %v908 = vld [vmem:[%s1 + $0x1f4] sm:$0xf]
  %v909 = vld [vmem:[%s1 + $0x1f8] sm:$0xf]
  %v910 = vld [vmem:[%s1 + $0x1fc] sm:$0xf]
  %v911 = vld [vmem:[%s1 + $0x200] sm:$0xf]
  %v912 = vld [vmem:[%s1 + $0x204] sm:$0xf]
  %v913 = vld [vmem:[%s1 + $0x208] sm:$0xf]
  %v914 = vld [vmem:[%s1 + $0x20c] sm:$0xf]
  %v915 = vld [vmem:[%s1 + $0x210] sm:$0xf]
  %v916 = vld [vmem:[%s1 + $0x214] sm:$0xf]
  %v917 = vld [vmem:[%s1 + $0x218] sm:$0xf]
  %v918 = vld [vmem:[%s1 + $0x21c] sm:$0xf]
  %v919 = vld [vmem:[%s1 + $0x220] sm:$0xf]
  %v920 = vld [vmem:[%s1 + $0x224] sm:$0xf]
  %v921 = vld [vmem:[%s1 + $0x228] sm:$0xf]
  %v922 = vld [vmem:[%s1 + $0x22c] sm:$0xf]
  %v923 = vld [vmem:[%s1 + $0x230] sm:$0xf]
  %v924 = vld [vmem:[%s1 + $0x234] sm:$0xf]
  %v925 = vld [vmem:[%s1 + $0x238] sm:$0xf]
  %v926 = vld [vmem:[%s1 + $0x23c] sm:$0xf]
  %v927 = vld [vmem:[%s1 + $0x240] sm:$0xf]
  %v928 = vld [vmem:[%s1 + $0x244] sm:$0xf]
  %v929 = vld [vmem:[%s1 + $0x248] sm:$0xf]
  %v930 = vld [vmem:[%s1 + $0x24c] sm:$0xf]
  %v931 = vld [vmem:[%s1 + $0x250] sm:$0xf]
  %v932 = vld [vmem:[%s1 + $0x254] sm:$0xf]
  %v933 = vld [vmem:[%s1 + $0x258] sm:$0xf]
  %v934 = vld [vmem:[%s1 + $0x25c] sm:$0xf]
  %v935 = vld [vmem:[%s1 + $0x260] sm:$0xf]
  %v936 = vld [vmem:[%s1 + $0x264] sm:$0xf]
  %v937 = vld [vmem:[%s1 + $0x268] sm:$0xf]
  %v938 = vld [vmem:[%s1 + $0x26c] sm:$0xf]
  %v939 = vld [vmem:[%s1 + $0x270] sm:$0xf]
  %v940 = vld [vmem:[%s1 + $0x274] sm:$0xf]
  %v941 = vld [vmem:[%s1 + $0x278] sm:$0xf]
  %v942 = vld [vmem:[%s1 + $0x27c] sm:$0xf]
  %v943 = vld [vmem:[%s1 + $0x280] sm:$0xf]
  %v944 = vld [vmem:[%s1 + $0x284] sm:$0xf]
  %v945 = vld [vmem:[%s1 + $0x288] sm:$0xf]
  %v946 = vld [vmem:[%s1 + $0x28c] sm:$0xf]
  %v947 = vld [vmem:[%s1 + $0x290] sm:$0xf]
  %v948 = vld [vmem:[%s1 + $0x294] sm:$0xf]
  %v949 = vld [vmem:[%s1 + $0x298] sm:$0xf]
  %v950 = vld [vmem:[%s1 + $0x29c] sm:$0xf]
  %v951 = vld [vmem:[%s1 + $0x2a0] sm:$0xf]
  %v952 = vld [vmem:[%s1 + $0x2a4] sm:$0xf]
  %v953 = vld [vmem:[%s1 + $0x2a8] sm:$0xf]
  %v954 = vld [vmem:[%s1 + $0x2ac] sm:$0xf]
  %v955 = vld [vmem:[%s1 + $0x2b0] sm:$0xf]
  %v956 = vld [vmem:[%s1 + $0x2b4] sm:$0xf]
  %v957 = vld [vmem:[%s1 + $0x2b8] sm:$0xf]
  %v958 = vld [vmem:[%s1 + $0x2bc] sm:$0xf]
  %v959 = vld [vmem:[%s1 + $0x2c0] sm:$0xf]
  %v960 = vld [vmem:[%s1 + $0x2c4] sm:$0xf]
  %v961 = vld [vmem:[%s1 + $0x2c8] sm:$0xf]
  %v962 = vld [vmem:[%s1 + $0x2cc] sm:$0xf]
  %v963 = vld [vmem:[%s1 + $0x2d0] sm:$0xf]
  %v964 = vld [vmem:[%s1 + $0x2d4] sm:$0xf]
  %v965 = vld [vmem:[%s1 + $0x2d8] sm:$0xf]
  %v966 = vld [vmem:[%s1 + $0x2dc] sm:$0xf]
  %v967 = vld [vmem:[%s1 + $0x2e0] sm:$0xf]
  %v968 = vld [vmem:[%s1 + $0x2e4] sm:$0xf]
  %v969 = vld [vmem:[%s1 + $0x2e8] sm:$0xf]
  %v970 = vld [vmem:[%s1 + $0x2ec] sm:$0xf]
  %v971 = vld [vmem:[%s1 + $0x2f0] sm:$0xf]
  %v972 = vld [vmem:[%s1 + $0x2f4] sm:$0xf]
  %v973 = vld [vmem:[%s1 + $0x2f8] sm:$0xf]
  %v974 = vld [vmem:[%s1 + $0x2fc] sm:$0xf]
  %v975 = vld [vmem:[%s1 + $0x300] sm:$0xf]
  %v976 = vld [vmem:[%s1 + $0x304] sm:$0xf]
  %v977 = vld [vmem:[%s1 + $0x308] sm:$0xf]
  %v978 = vld [vmem:[%s1 + $0x30c] sm:$0xf]
  %v979 = vld [vmem:[%s1 + $0x310] sm:$0xf]
  %v980 = vld [vmem:[%s1 + $0x314] sm:$0xf]
  %v981 = vld [vmem:[%s1 + $0x318] sm:$0xf]
  %v982 = vld [vmem:[%s1 + $0x31c] sm:$0xf]
  %v983 = vld [vmem:[%s1 + $0x320] sm:$0xf]
  %v984 = vld [vmem:[%s1 + $0x324] sm:$0xf]
  %v985 = vld [vmem:[%s1 + $0x328] sm:$0xf]
  %v986 = vld [vmem:[%s1 + $0x32c] sm:$0xf]
  %v987 = vld [vmem:[%s1 + $0x330] sm:$0xf]
  %v988 = vld [vmem:[%s1 + $0x334] sm:$0xf]
  %v989 = vld [vmem:[%s1 + $0x338] sm:$0xf]
  %v990 = vld [vmem:[%s1 + $0x33c] sm:$0xf]
  %v991 = vld [vmem:[%s1 + $0x340] sm:$0xf]
  %v992 = vld [vmem:[%s1 + $0x344] sm:$0xf]
  %v993 = vld [vmem:[%s1 + $0x348] sm:$0xf]
  %v994 = vld [vmem:[%s1 + $0x34c] sm:$0xf]
  %v995 = vld [vmem:[%s1 + $0x350] sm:$0xf]
  %v996 = vld [vmem:[%s1 + $0x354] sm:$0xf]
  %v997 = vld [vmem:[%s1 + $0x358] sm:$0xf]
  %v998 = vld [vmem:[%s1 + $0x35c] sm:$0xf]
  %v999 = vld [vmem:[%s1 + $0x360] sm:$0xf]
  %v1000 = vld [vmem:[%s1 + $0x364] sm:$0xf]
  %v1001 = vld [vmem:[%s1 + $0x368] sm:$0xf]
  %v1002 = vld [vmem:[%s1 + $0x36c] sm:$0xf]
  %v1003 = vld [vmem:[%s1 + $0x370] sm:$0xf]
  %v1004 = vld [vmem:[%s1 + $0x374] sm:$0xf]
  %v1005 = vld [vmem:[%s1 + $0x378] sm:$0xf]
  %v1006 = vld [vmem:[%s1 + $0x37c] sm:$0xf]
  %v1007 = vld [vmem:[%s1 + $0x380] sm:$0xf]
  %v1008 = vld [vmem:[%s1 + $0x384] sm:$0xf]
  %v1009 = vld [vmem:[%s1 + $0x388] sm:$0xf]
  %v1010 = vld [vmem:[%s1 + $0x38c] sm:$0xf]
  %v1011 = vld [vmem:[%s1 + $0x390] sm:$0xf]
  %v1012 = vld [vmem:[%s1 + $0x394] sm:$0xf]
  %v1013 = vld [vmem:[%s1 + $0x398] sm:$0xf]
  %v1014 = vld [vmem:[%s1 + $0x39c] sm:$0xf]
  %v1015 = vld [vmem:[%s1 + $0x3a0] sm:$0xf]
  %v1016 = vld [vmem:[%s1 + $0x3a4] sm:$0xf]
  %v1017 = vld [vmem:[%s1 + $0x3a8] sm:$0xf]
  %v1018 = vld [vmem:[%s1 + $0x3ac] sm:$0xf]
  %v1019 = vld [vmem:[%s1 + $0x3b0] sm:$0xf]
  %v1020 = vld [vmem:[%s1 + $0x3b4] sm:$0xf]
  %v1021 = vld [vmem:[%s1 + $0x3b8] sm:$0xf]
  %v1022 = vld [vmem:[%s1 + $0x3bc] sm:$0xf]
  %v1023 = vld [vmem:[%s1 + $0x3c0] sm:$0xf]
  %v1024 = vld [vmem:[%s1 + $0x3c4] sm:$0xf]
  %v1025 = vld [vmem:[%s1 + $0x3c8] sm:$0xf]
  %v1026 = vld [vmem:[%s1 + $0x3cc] sm:$0xf]
  %v1027 = vld [vmem:[%s1 + $0x3d0] sm:$0xf]
  %v1028 = vld [vmem:[%s1 + $0x3d4] sm:$0xf]
  %v1029 = vld [vmem:[%s1 + $0x3d8] sm:$0xf]
  %v1030 = vld [vmem:[%s1 + $0x3dc] sm:$0xf]
  %v1031 = vld [vmem:[%s1 + $0x3e0] sm:$0xf]
  %v1032 = vld [vmem:[%s1 + $0x3e4] sm:$0xf]
  %v1033 = vld [vmem:[%s1 + $0x3e8] sm:$0xf]
  %v1034 = vld [vmem:[%s1 + $0x3ec] sm:$0xf]
  %v1035 = vld [vmem:[%s1 + $0x3f0] sm:$0xf]
  %v1036 = vld [vmem:[%s1 + $0x3f4] sm:$0xf]
  %v1037 = vld [vmem:[%s1 + $0x3f8] sm:$0xf]
  %v1038 = vld [vmem:[%s1 + $0x3fc] sm:$0xf]
  %v1039 = vld [vmem:[%s1 + $0x400] sm:$0xf]
  %v1040 = vld [vmem:[%s1 + $0x404] sm:$0xf]
  %v1041 = vld [vmem:[%s1 + $0x408] sm:$0xf]
  %v1042 = vld [vmem:[%s1 + $0x40c] sm:$0xf]
  %v1043 = vld [vmem:[%s1 + $0x410] sm:$0xf]
  %v1044 = vld [vmem:[%s1 + $0x414] sm:$0xf]
  %v1045 = vld [vmem:[%s1 + $0x418] sm:$0xf]
  %v1046 = vld [vmem:[%s1 + $0x41c] sm:$0xf]
  %v1047 = vld [vmem:[%s1 + $0x420] sm:$0xf]
  %v1048 = vld [vmem:[%s1 + $0x424] sm:$0xf]
  %v1049 = vld [vmem:[%s1 + $0x428] sm:$0xf]
  %v1050 = vld [vmem:[%s1 + $0x42c] sm:$0xf]
  %v1051 = vld [vmem:[%s1 + $0x430] sm:$0xf]
  %v1052 = vld [vmem:[%s1 + $0x434] sm:$0xf]
  %v1053 = vld [vmem:[%s1 + $0x438] sm:$0xf]
  %v1054 = vld [vmem:[%s1 + $0x43c] sm:$0xf]
  %v1055 = vld [vmem:[%s1 + $0x440] sm:$0xf]
  %v1056 = vld [vmem:[%s1 + $0x444] sm:$0xf]
  %v1057 = vld [vmem:[%s1 + $0x448] sm:$0xf]
  %v1058 = vld [vmem:[%s1 + $0x44c] sm:$0xf]
  %v1059 = vld [vmem:[%s1 + $0x450] sm:$0xf]
  %v1060 = vld [vmem:[%s1 + $0x454] sm:$0xf]
  %v1061 = vld [vmem:[%s1 + $0x458] sm:$0xf]
  %v1062 = vld [vmem:[%s1 + $0x45c] sm:$0xf]
  %v1063 = vld [vmem:[%s1 + $0x460] sm:$0xf]
  %v1064 = vld [vmem:[%s1 + $0x464] sm:$0xf]
  %v1065 = vld [vmem:[%s1 + $0x468] sm:$0xf]
  %v1066 = vld [vmem:[%s1 + $0x46c] sm:$0xf]
  %v1067 = vld [vmem:[%s1 + $0x470] sm:$0xf]
  %v1068 = vld [vmem:[%s1 + $0x474] sm:$0xf]
  %v1069 = vld [vmem:[%s1 + $0x478] sm:$0xf]
  %v1070 = vld [vmem:[%s1 + $0x47c] sm:$0xf]
  %v1071 = vld [vmem:[%s1 + $0x480] sm:$0xf]
  %v1072 = vld [vmem:[%s1 + $0x484] sm:$0xf]
  %v1073 = vld [vmem:[%s1 + $0x488] sm:$0xf]
  %v1074 = vld [vmem:[%s1 + $0x48c] sm:$0xf]
  %v1075 = vld [vmem:[%s1 + $0x490] sm:$0xf]
  %v1076 = vld [vmem:[%s1 + $0x494] sm:$0xf]
  %v1077 = vld [vmem:[%s1 + $0x498] sm:$0xf]
  %v1078 = vld [vmem:[%s1 + $0x49c] sm:$0xf]
  %v1079 = vld [vmem:[%s1 + $0x4a0] sm:$0xf]
  %v1080 = vld [vmem:[%s1 + $0x4a4] sm:$0xf]
  %v1081 = vld [vmem:[%s1 + $0x4a8] sm:$0xf]
  %v1082 = vld [vmem:[%s1 + $0x4ac] sm:$0xf]
  %v1083 = vld [vmem:[%s1 + $0x4b0] sm:$0xf]
  %v1084 = vld [vmem:[%s1 + $0x4b4] sm:$0xf]
  %v1085 = vld [vmem:[%s1 + $0x4b8] sm:$0xf]
  %v1086 = vld [vmem:[%s1 + $0x4bc] sm:$0xf]
  %v1087 = vld [vmem:[%s1 + $0x4c0] sm:$0xf]
  %v1088 = vld [vmem:[%s1 + $0x4c4] sm:$0xf]
  %v1089 = vld [vmem:[%s1 + $0x4c8] sm:$0xf]
  %v1090 = vld [vmem:[%s1 + $0x4cc] sm:$0xf]
  %v1091 = vld [vmem:[%s1 + $0x4d0] sm:$0xf]
  %v1092 = vld [vmem:[%s1 + $0x4d4] sm:$0xf]
  %v1093 = vld [vmem:[%s1 + $0x4d8] sm:$0xf]
  %v1094 = vld [vmem:[%s1 + $0x4dc] sm:$0xf]
  %v1095 = vld [vmem:[%s1 + $0x4e0] sm:$0xf]
  %v1096 = vld [vmem:[%s1 + $0x4e4] sm:$0xf]
  %v1097 = vld [vmem:[%s1 + $0x4e8] sm:$0xf]
  %v1098 = vld [vmem:[%s1 + $0x4ec] sm:$0xf]
  %v1099 = vld [vmem:[%s1 + $0x4f0] sm:$0xf]
  %v1100 = vld [vmem:[%s1 + $0x4f4] sm:$0xf]
  %v1101 = vld [vmem:[%s1 + $0x4f8] sm:$0xf]
  %v1102 = vld [vmem:[%s1 + $0x4fc] sm:$0xf]
  %v1103 = vld [vmem:[%s1 + $0x500] sm:$0xf]
  %v1104 = vld [vmem:[%s1 + $0x504] sm:$0xf]
  %v1105 = vld [vmem:[%s1 + $0x508] sm:$0xf]
  %v1106 = vld [vmem:[%s1 + $0x50c] sm:$0xf]
  %v1107 = vld [vmem:[%s1 + $0x510] sm:$0xf]
  %v1108 = vld [vmem:[%s1 + $0x514] sm:$0xf]
  %v1109 = vld [vmem:[%s1 + $0x518] sm:$0xf]
  %v1110 = vld [vmem:[%s1 + $0x51c] sm:$0xf]
  %v1111 = vld [vmem:[%s1 + $0x520] sm:$0xf]
  %v1112 = vld [vmem:[%s1 + $0x524] sm:$0xf]
  %v1113 = vld [vmem:[%s1 + $0x528] sm:$0xf]
  %v1114 = vld [vmem:[%s1 + $0x52c] sm:$0xf]
  %v1115 = vld [vmem:[%s1 + $0x530] sm:$0xf]
  %v1116 = vld [vmem:[%s1 + $0x534] sm:$0xf]
  %v1117 = vld [vmem:[%s1 + $0x538] sm:$0xf]
  %v1118 = vld [vmem:[%s1 + $0x53c] sm:$0xf]
  %v1119 = vld [vmem:[%s1 + $0x540] sm:$0xf]
  %v1120 = vld [vmem:[%s1 + $0x544] sm:$0xf]
  %v1121 = vld [vmem:[%s1 + $0x548] sm:$0xf]
  %v1122 = vld [vmem:[%s1 + $0x54c] sm:$0xf]
  %v1123 = vld [vmem:[%s1 + $0x550] sm:$0xf]
  %v1124 = vld [vmem:[%s1 + $0x554] sm:$0xf]
  %v1125 = vld [vmem:[%s1 + $0x558] sm:$0xf]
  %v1126 = vld [vmem:[%s1 + $0x55c] sm:$0xf]
  %v1127 = vld [vmem:[%s1 + $0x560] sm:$0xf]
  %v1128 = vld [vmem:[%s1 + $0x564] sm:$0xf]
  %v1129 = vld [vmem:[%s1 + $0x568] sm:$0xf]
  %v1130 = vld [vmem:[%s1 + $0x56c] sm:$0xf]
  %v1131 = vld [vmem:[%s1 + $0x570] sm:$0xf]
  %v1132 = vld [vmem:[%s1 + $0x574] sm:$0xf]
  %v1133 = vld [vmem:[%s1 + $0x578] sm:$0xf]
  %v1134 = vld [vmem:[%s1 + $0x57c] sm:$0xf]
  %v1135 = vld [vmem:[%s1 + $0x580] sm:$0xf]
  %v1136 = vld [vmem:[%s1 + $0x584] sm:$0xf]
  %v1137 = vld [vmem:[%s1 + $0x588] sm:$0xf]
  %v1138 = vld [vmem:[%s1 + $0x58c] sm:$0xf]
  %v1139 = vld [vmem:[%s1 + $0x590] sm:$0xf]
  %v1140 = vld [vmem:[%s1 + $0x594] sm:$0xf]
  %v1141 = vld [vmem:[%s1 + $0x598] sm:$0xf]
  %v1142 = vld [vmem:[%s1 + $0x59c] sm:$0xf]
  %v1143 = vld [vmem:[%s1 + $0x5a0] sm:$0xf]
  %v1144 = vld [vmem:[%s1 + $0x5a4] sm:$0xf]
  %v1145 = vld [vmem:[%s1 + $0x5a8] sm:$0xf]
  %v1146 = vld [vmem:[%s1 + $0x5ac] sm:$0xf]
  %v1147 = vld [vmem:[%s1 + $0x5b0] sm:$0xf]
  %v1148 = vld [vmem:[%s1 + $0x5b4] sm:$0xf]
  %v1149 = vld [vmem:[%s1 + $0x5b8] sm:$0xf]
  %v1150 = vld [vmem:[%s1 + $0x5bc] sm:$0xf]
  %v1151 = vld [vmem:[%s1 + $0x5c0] sm:$0xf]
  %v1152 = vld [vmem:[%s1 + $0x5c4] sm:$0xf]
  %v1153 = vld [vmem:[%s1 + $0x5c8] sm:$0xf]
  %v1154 = vld [vmem:[%s1 + $0x5cc] sm:$0xf]
  %v1155 = vld [vmem:[%s1 + $0x5d0] sm:$0xf]
  %v1156 = vld [vmem:[%s1 + $0x5d4] sm:$0xf]
  %v1157 = vld [vmem:[%s1 + $0x5d8] sm:$0xf]
  %v1158 = vld [vmem:[%s1 + $0x5dc] sm:$0xf]
  %v1159 = vld [vmem:[%s1 + $0x5e0] sm:$0xf]
  %v1160 = vld [vmem:[%s1 + $0x5e4] sm:$0xf]
  %v1161 = vld [vmem:[%s1 + $0x5e8] sm:$0xf]
  %v1162 = vld [vmem:[%s1 + $0x5ec] sm:$0xf]
  %v1163 = vld [vmem:[%s1 + $0x5f0] sm:$0xf]
  %v1164 = vld [vmem:[%s1 + $0x5f4] sm:$0xf]
  %v1165 = vld [vmem:[%s1 + $0x5f8] sm:$0xf]
  %v1166 = vld [vmem:[%s1 + $0x5fc] sm:$0xf]
  %v1167 = vld [vmem:[%s1 + $0x600] sm:$0xf]
  %v1168 = vld [vmem:[%s1 + $0x604] sm:$0xf]
  %v1169 = vld [vmem:[%s1 + $0x608] sm:$0xf]
  %v1170 = vld [vmem:[%s1 + $0x60c] sm:$0xf]
  %v1171 = vld [vmem:[%s1 + $0x610] sm:$0xf]
  %v1172 = vld [vmem:[%s1 + $0x614] sm:$0xf]
  %v1173 = vld [vmem:[%s1 + $0x618] sm:$0xf]
  %v1174 = vld [vmem:[%s1 + $0x61c] sm:$0xf]
  %v1175 = vld [vmem:[%s1 + $0x620] sm:$0xf]
  %v1176 = vld [vmem:[%s1 + $0x624] sm:$0xf]
  %v1177 = vld [vmem:[%s1 + $0x628] sm:$0xf]
  %v1178 = vld [vmem:[%s1 + $0x62c] sm:$0xf]
  %v1179 = vld [vmem:[%s1 + $0x630] sm:$0xf]
  %v1180 = vld [vmem:[%s1 + $0x634] sm:$0xf]
  %v1181 = vld [vmem:[%s1 + $0x638] sm:$0xf]
  %v1182 = vld [vmem:[%s1 + $0x63c] sm:$0xf]
  %v1183 = vld [vmem:[%s1 + $0x640] sm:$0xf]
  %v1184 = vld [vmem:[%s1 + $0x644] sm:$0xf]
  %v1185 = vld [vmem:[%s1 + $0x648] sm:$0xf]
  %v1186 = vld [vmem:[%s1 + $0x64c] sm:$0xf]
  %v1187 = vld [vmem:[%s1 + $0x650] sm:$0xf]
  %v1188 = vld [vmem:[%s1 + $0x654] sm:$0xf]
  %v1189 = vld [vmem:[%s1 + $0x658] sm:$0xf]
  %v1190 = vld [vmem:[%s1 + $0x65c] sm:$0xf]
  %v1191 = vld [vmem:[%s1 + $0x660] sm:$0xf]
  %v1192 = vld [vmem:[%s1 + $0x664] sm:$0xf]
  %v1193 = vld [vmem:[%s1 + $0x668] sm:$0xf]
  %v1194 = vld [vmem:[%s1 + $0x66c] sm:$0xf]
  %v1195 = vld [vmem:[%s1 + $0x670] sm:$0xf]
  %v1196 = vld [vmem:[%s1 + $0x674] sm:$0xf]
  %v1197 = vld [vmem:[%s1 + $0x678] sm:$0xf]
  %v1198 = vld [vmem:[%s1 + $0x67c] sm:$0xf]
  %v1199 = vld [vmem:[%s1 + $0x680] sm:$0xf]
  %v1200 = vld [vmem:[%s1 + $0x684] sm:$0xf]
  %v1201 = vld [vmem:[%s1 + $0x688] sm:$0xf]
  %v1202 = vld [vmem:[%s1 + $0x68c] sm:$0xf]
  %v1203 = vld [vmem:[%s1 + $0x690] sm:$0xf]
  %v1204 = vld [vmem:[%s1 + $0x694] sm:$0xf]
  %v1205 = vld [vmem:[%s1 + $0x698] sm:$0xf]
  %v1206 = vld [vmem:[%s1 + $0x69c] sm:$0xf]
  %v1207 = vld [vmem:[%s1 + $0x6a0] sm:$0xf]
  %v1208 = vld [vmem:[%s1 + $0x6a4] sm:$0xf]
  %v1209 = vld [vmem:[%s1 + $0x6a8] sm:$0xf]
  %v1210 = vld [vmem:[%s1 + $0x6ac] sm:$0xf]
  %v1211 = vld [vmem:[%s1 + $0x6b0] sm:$0xf]
  %v1212 = vld [vmem:[%s1 + $0x6b4] sm:$0xf]
  %v1213 = vld [vmem:[%s1 + $0x6b8] sm:$0xf]
  %v1214 = vld [vmem:[%s1 + $0x6bc] sm:$0xf]
  %v1215 = vld [vmem:[%s1 + $0x6c0] sm:$0xf]
  %v1216 = vld [vmem:[%s1 + $0x6c4] sm:$0xf]
  %v1217 = vld [vmem:[%s1 + $0x6c8] sm:$0xf]
  %v1218 = vld [vmem:[%s1 + $0x6cc] sm:$0xf]
  %v1219 = vld [vmem:[%s1 + $0x6d0] sm:$0xf]
  %v1220 = vld [vmem:[%s1 + $0x6d4] sm:$0xf]
  %v1221 = vld [vmem:[%s1 + $0x6d8] sm:$0xf]
  %v1222 = vld [vmem:[%s1 + $0x6dc] sm:$0xf]
  %v1223 = vld [vmem:[%s1 + $0x6e0] sm:$0xf]
  %v1224 = vld [vmem:[%s1 + $0x6e4] sm:$0xf]
  %v1225 = vld [vmem:[%s1 + $0x6e8] sm:$0xf]
  %v1226 = vld [vmem:[%s1 + $0x6ec] sm:$0xf]
  %v1227 = vld [vmem:[%s1 + $0x6f0] sm:$0xf]
  %v1228 = vld [vmem:[%s1 + $0x6f4] sm:$0xf]
  %v1229 = vld [vmem:[%s1 + $0x6f8] sm:$0xf]
  %v1230 = vld [vmem:[%s1 + $0x6fc] sm:$0xf]
  %v1231 = vld [vmem:[%s1 + $0x700] sm:$0xf]
  %v1232 = vld [vmem:[%s1 + $0x704] sm:$0xf]
  %v1233 = vld [vmem:[%s1 + $0x708] sm:$0xf]
  %v1234 = vld [vmem:[%s1 + $0x70c] sm:$0xf]
  %v1235 = vld [vmem:[%s1 + $0x710] sm:$0xf]
  %v1236 = vld [vmem:[%s1 + $0x714] sm:$0xf]
  %v1237 = vld [vmem:[%s1 + $0x718] sm:$0xf]
  %v1238 = vld [vmem:[%s1 + $0x71c] sm:$0xf]
  %v1239 = vld [vmem:[%s1 + $0x720] sm:$0xf]
  %v1240 = vld [vmem:[%s1 + $0x724] sm:$0xf]
  %v1241 = vld [vmem:[%s1 + $0x728] sm:$0xf]
  %v1242 = vld [vmem:[%s1 + $0x72c] sm:$0xf]
  %v1243 = vld [vmem:[%s1 + $0x730] sm:$0xf]
  %v1244 = vld [vmem:[%s1 + $0x734] sm:$0xf]
  %v1245 = vld [vmem:[%s1 + $0x738] sm:$0xf]
  %v1246 = vld [vmem:[%s1 + $0x73c] sm:$0xf]
  %v1247 = vld [vmem:[%s1 + $0x740] sm:$0xf]
  %v1248 = vld [vmem:[%s1 + $0x744] sm:$0xf]
  %v1249 = vld [vmem:[%s1 + $0x748] sm:$0xf]
  %v1250 = vld [vmem:[%s1 + $0x74c] sm:$0xf]
  %v1251 = vld [vmem:[%s1 + $0x750] sm:$0xf]
  %v1252 = vld [vmem:[%s1 + $0x754] sm:$0xf]
  %v1253 = vld [vmem:[%s1 + $0x758] sm:$0xf]
  %v1254 = vld [vmem:[%s1 + $0x75c] sm:$0xf]
  %v1255 = vld [vmem:[%s1 + $0x760] sm:$0xf]
  %v1256 = vld [vmem:[%s1 + $0x764] sm:$0xf]
  %v1257 = vld [vmem:[%s1 + $0x768] sm:$0xf]
  %v1258 = vld [vmem:[%s1 + $0x76c] sm:$0xf]
  %v1259 = vld [vmem:[%s1 + $0x770] sm:$0xf]
  %v1260 = vld [vmem:[%s1 + $0x774] sm:$0xf]
  %v1261 = vld [vmem:[%s1 + $0x778] sm:$0xf]
  %v1262 = vld [vmem:[%s1 + $0x77c] sm:$0xf]
  %v1263 = vld [vmem:[%s1 + $0x780] sm:$0xf]
  %v1264 = vld [vmem:[%s1 + $0x784] sm:$0xf]
  %v1265 = vld [vmem:[%s1 + $0x788] sm:$0xf]
  %v1266 = vld [vmem:[%s1 + $0x78c] sm:$0xf]
  %v1267 = vld [vmem:[%s1 + $0x790] sm:$0xf]
  %v1268 = vld [vmem:[%s1 + $0x794] sm:$0xf]
  %v1269 = vld [vmem:[%s1 + $0x798] sm:$0xf]
  %v1270 = vld [vmem:[%s1 + $0x79c] sm:$0xf]
  %v1271 = vld [vmem:[%s1 + $0x7a0] sm:$0xf]
  %v1272 = vld [vmem:[%s1 + $0x7a4] sm:$0xf]
  %v1273 = vld [vmem:[%s1 + $0x7a8] sm:$0xf]
  %v1274 = vld [vmem:[%s1 + $0x7ac] sm:$0xf]
  %v1275 = vld [vmem:[%s1 + $0x7b0] sm:$0xf]
  %v1276 = vld [vmem:[%s1 + $0x7b4] sm:$0xf]
  %v1277 = vld [vmem:[%s1 + $0x7b8] sm:$0xf]
  %v1278 = vld [vmem:[%s1 + $0x7bc] sm:$0xf]
  %v1279 = vld [vmem:[%s1 + $0x7c0] sm:$0xf]
  %v1280 = vld [vmem:[%s1 + $0x7c4] sm:$0xf]
  %v1281 = vld [vmem:[%s1 + $0x7c8] sm:$0xf]
  %v1282 = vld [vmem:[%s1 + $0x7cc] sm:$0xf]
  %v1283 = vld [vmem:[%s1 + $0x7d0] sm:$0xf]
  %v1284 = vld [vmem:[%s1 + $0x7d4] sm:$0xf]
  %v1285 = vld [vmem:[%s1 + $0x7d8] sm:$0xf]
  %v1286 = vld [vmem:[%s1 + $0x7dc] sm:$0xf]
  %v1287 = vld [vmem:[%s1 + $0x7e0] sm:$0xf]
  %v1288 = vld [vmem:[%s1 + $0x7e4] sm:$0xf]
  %v1289 = vld [vmem:[%s1 + $0x7e8] sm:$0xf]
  %v1290 = vld [vmem:[%s1 + $0x7ec] sm:$0xf]
  %v1291 = vld [vmem:[%s1 + $0x7f0] sm:$0xf]
  %v1292 = vld [vmem:[%s1 + $0x7f4] sm:$0xf]
  %v1293 = vld [vmem:[%s1 + $0x7f8] sm:$0xf]
  %v1294 = vld [vmem:[%s1 + $0x7fc] sm:$0xf]
  %v1295 = vld [vmem:[%s2] sm:$0x1]
  %v1297 = vlaneseq
  %v1298 = vshrl.u32 %v1297, 7
  %v1299 = vsub.s32 0, %v1298
  %v1300 = vrot.slane %v1295, %v1299
  %v1814 = vunpack.c.l.b16 %v783
  %v1815 = vunpack.c.l.b16 %v784
  %v1816 = vunpack.c.l.b16 %v785
  %v1817 = vunpack.c.l.b16 %v786
  %v1818 = vunpack.c.l.b16 %v787
  %v1819 = vunpack.c.l.b16 %v788
  %v1820 = vunpack.c.l.b16 %v789
  %v1821 = vunpack.c.l.b16 %v790
  %v1822 = vunpack.c.l.b16 %v791
  %v1823 = vunpack.c.l.b16 %v792
  %v1824 = vunpack.c.l.b16 %v793
  %v1825 = vunpack.c.l.b16 %v794
  %v1826 = vunpack.c.l.b16 %v795
  %v1827 = vunpack.c.l.b16 %v796
  %v1828 = vunpack.c.l.b16 %v797
  %v1829 = vunpack.c.l.b16 %v798
  %v1830 = vunpack.c.l.b16 %v799
  %v1831 = vunpack.c.l.b16 %v800
  %v1832 = vunpack.c.l.b16 %v801
  %v1833 = vunpack.c.l.b16 %v802
  %v1834 = vunpack.c.l.b16 %v803
  %v1835 = vunpack.c.l.b16 %v804
  %v1836 = vunpack.c.l.b16 %v805
  %v1837 = vunpack.c.l.b16 %v806
  %v1838 = vunpack.c.l.b16 %v807
  %v1839 = vunpack.c.l.b16 %v808
  %v1840 = vunpack.c.l.b16 %v809
  %v1841 = vunpack.c.l.b16 %v810
  %v1842 = vunpack.c.l.b16 %v811
  %v1843 = vunpack.c.l.b16 %v812
  %v1844 = vunpack.c.l.b16 %v813
  %v1845 = vunpack.c.l.b16 %v814
  %v1846 = vunpack.c.l.b16 %v815
  %v1847 = vunpack.c.l.b16 %v816
  %v1848 = vunpack.c.l.b16 %v817
  %v1849 = vunpack.c.l.b16 %v818
  %v1850 = vunpack.c.l.b16 %v819
  %v1851 = vunpack.c.l.b16 %v820
  %v1852 = vunpack.c.l.b16 %v821
  %v1853 = vunpack.c.l.b16 %v822
  %v1854 = vunpack.c.l.b16 %v823
  %v1855 = vunpack.c.l.b16 %v824
  %v1856 = vunpack.c.l.b16 %v825
  %v1857 = vunpack.c.l.b16 %v826
  %v1858 = vunpack.c.l.b16 %v827
  %v1859 = vunpack.c.l.b16 %v828
  %v1860 = vunpack.c.l.b16 %v829
  %v1861 = vunpack.c.l.b16 %v830
  %v1862 = vunpack.c.l.b16 %v831
  %v1863 = vunpack.c.l.b16 %v832
  %v1864 = vunpack.c.l.b16 %v833
  %v1865 = vunpack.c.l.b16 %v834
  %v1866 = vunpack.c.l.b16 %v835
  %v1867 = vunpack.c.l.b16 %v836
  %v1868 = vunpack.c.l.b16 %v837
  %v1869 = vunpack.c.l.b16 %v838
  %v1870 = vunpack.c.l.b16 %v839
  %v1871 = vunpack.c.l.b16 %v840
  %v1872 = vunpack.c.l.b16 %v841
  %v1873 = vunpack.c.l.b16 %v842
  %v1874 = vunpack.c.l.b16 %v843
  %v1875 = vunpack.c.l.b16 %v844
  %v1876 = vunpack.c.l.b16 %v845
  %v1877 = vunpack.c.l.b16 %v846
  %v1878 = vunpack.c.l.b16 %v847
  %v1879 = vunpack.c.l.b16 %v848
  %v1880 = vunpack.c.l.b16 %v849
  %v1881 = vunpack.c.l.b16 %v850
  %v1882 = vunpack.c.l.b16 %v851
  %v1883 = vunpack.c.l.b16 %v852
  %v1884 = vunpack.c.l.b16 %v853
  %v1885 = vunpack.c.l.b16 %v854
  %v1886 = vunpack.c.l.b16 %v855
  %v1887 = vunpack.c.l.b16 %v856
  %v1888 = vunpack.c.l.b16 %v857
  %v1889 = vunpack.c.l.b16 %v858
  %v1890 = vunpack.c.l.b16 %v859
  %v1891 = vunpack.c.l.b16 %v860
  %v1892 = vunpack.c.l.b16 %v861
  %v1893 = vunpack.c.l.b16 %v862
  %v1894 = vunpack.c.l.b16 %v863
  %v1895 = vunpack.c.l.b16 %v864
  %v1896 = vunpack.c.l.b16 %v865
  %v1897 = vunpack.c.l.b16 %v866
  %v1898 = vunpack.c.l.b16 %v867
  %v1899 = vunpack.c.l.b16 %v868
  %v1900 = vunpack.c.l.b16 %v869
  %v1901 = vunpack.c.l.b16 %v870
  %v1902 = vunpack.c.l.b16 %v871
  %v1903 = vunpack.c.l.b16 %v872
  %v1904 = vunpack.c.l.b16 %v873
  %v1905 = vunpack.c.l.b16 %v874
  %v1906 = vunpack.c.l.b16 %v875
  %v1907 = vunpack.c.l.b16 %v876
  %v1908 = vunpack.c.l.b16 %v877
  %v1909 = vunpack.c.l.b16 %v878
  %v1910 = vunpack.c.l.b16 %v879
  %v1911 = vunpack.c.l.b16 %v880
  %v1912 = vunpack.c.l.b16 %v881
  %v1913 = vunpack.c.l.b16 %v882
  %v1914 = vunpack.c.l.b16 %v883
  %v1915 = vunpack.c.l.b16 %v884
  %v1916 = vunpack.c.l.b16 %v885
  %v1917 = vunpack.c.l.b16 %v886
  %v1918 = vunpack.c.l.b16 %v887
  %v1919 = vunpack.c.l.b16 %v888
  %v1920 = vunpack.c.l.b16 %v889
  %v1921 = vunpack.c.l.b16 %v890
  %v1922 = vunpack.c.l.b16 %v891
  %v1923 = vunpack.c.l.b16 %v892
  %v1924 = vunpack.c.l.b16 %v893
  %v1925 = vunpack.c.l.b16 %v894
  %v1926 = vunpack.c.l.b16 %v895
  %v1927 = vunpack.c.l.b16 %v896
  %v1928 = vunpack.c.l.b16 %v897
  %v1929 = vunpack.c.l.b16 %v898
  %v1930 = vunpack.c.l.b16 %v899
  %v1931 = vunpack.c.l.b16 %v900
  %v1932 = vunpack.c.l.b16 %v901
  %v1933 = vunpack.c.l.b16 %v902
  %v1934 = vunpack.c.l.b16 %v903
  %v1935 = vunpack.c.l.b16 %v904
  %v1936 = vunpack.c.l.b16 %v905
  %v1937 = vunpack.c.l.b16 %v906
  %v1938 = vunpack.c.l.b16 %v907
  %v1939 = vunpack.c.l.b16 %v908
  %v1940 = vunpack.c.l.b16 %v909
  %v1941 = vunpack.c.l.b16 %v910
  %v1942 = vunpack.c.l.b16 %v911
  %v1943 = vunpack.c.l.b16 %v912
  %v1944 = vunpack.c.l.b16 %v913
  %v1945 = vunpack.c.l.b16 %v914
  %v1946 = vunpack.c.l.b16 %v915
  %v1947 = vunpack.c.l.b16 %v916
  %v1948 = vunpack.c.l.b16 %v917
  %v1949 = vunpack.c.l.b16 %v918
  %v1950 = vunpack.c.l.b16 %v919
  %v1951 = vunpack.c.l.b16 %v920
  %v1952 = vunpack.c.l.b16 %v921
  %v1953 = vunpack.c.l.b16 %v922
  %v1954 = vunpack.c.l.b16 %v923
  %v1955 = vunpack.c.l.b16 %v924
  %v1956 = vunpack.c.l.b16 %v925
  %v1957 = vunpack.c.l.b16 %v926
  %v1958 = vunpack.c.l.b16 %v927
  %v1959 = vunpack.c.l.b16 %v928
  %v1960 = vunpack.c.l.b16 %v929
  %v1961 = vunpack.c.l.b16 %v930
  %v1962 = vunpack.c.l.b16 %v931
  %v1963 = vunpack.c.l.b16 %v932
  %v1964 = vunpack.c.l.b16 %v933
  %v1965 = vunpack.c.l.b16 %v934
  %v1966 = vunpack.c.l.b16 %v935
  %v1967 = vunpack.c.l.b16 %v936
  %v1968 = vunpack.c.l.b16 %v937
  %v1969 = vunpack.c.l.b16 %v938
  %v1970 = vunpack.c.l.b16 %v939
  %v1971 = vunpack.c.l.b16 %v940
  %v1972 = vunpack.c.l.b16 %v941
  %v1973 = vunpack.c.l.b16 %v942
  %v1974 = vunpack.c.l.b16 %v943
  %v1975 = vunpack.c.l.b16 %v944
  %v1976 = vunpack.c.l.b16 %v945
  %v1977 = vunpack.c.l.b16 %v946
  %v1978 = vunpack.c.l.b16 %v947
  %v1979 = vunpack.c.l.b16 %v948
  %v1980 = vunpack.c.l.b16 %v949
  %v1981 = vunpack.c.l.b16 %v950
  %v1982 = vunpack.c.l.b16 %v951
  %v1983 = vunpack.c.l.b16 %v952
  %v1984 = vunpack.c.l.b16 %v953
  %v1985 = vunpack.c.l.b16 %v954
  %v1986 = vunpack.c.l.b16 %v955
  %v1987 = vunpack.c.l.b16 %v956
  %v1988 = vunpack.c.l.b16 %v957
  %v1989 = vunpack.c.l.b16 %v958
  %v1990 = vunpack.c.l.b16 %v959
  %v1991 = vunpack.c.l.b16 %v960
  %v1992 = vunpack.c.l.b16 %v961
  %v1993 = vunpack.c.l.b16 %v962
  %v1994 = vunpack.c.l.b16 %v963
  %v1995 = vunpack.c.l.b16 %v964
  %v1996 = vunpack.c.l.b16 %v965
  %v1997 = vunpack.c.l.b16 %v966
  %v1998 = vunpack.c.l.b16 %v967
  %v1999 = vunpack.c.l.b16 %v968
  %v2000 = vunpack.c.l.b16 %v969
  %v2001 = vunpack.c.l.b16 %v970
  %v2002 = vunpack.c.l.b16 %v971
  %v2003 = vunpack.c.l.b16 %v972
  %v2004 = vunpack.c.l.b16 %v973
  %v2005 = vunpack.c.l.b16 %v974
  %v2006 = vunpack.c.l.b16 %v975
  %v2007 = vunpack.c.l.b16 %v976
  %v2008 = vunpack.c.l.b16 %v977
  %v2009 = vunpack.c.l.b16 %v978
  %v2010 = vunpack.c.l.b16 %v979
  %v2011 = vunpack.c.l.b16 %v980
  %v2012 = vunpack.c.l.b16 %v981
  %v2013 = vunpack.c.l.b16 %v982
  %v2014 = vunpack.c.l.b16 %v983
  %v2015 = vunpack.c.l.b16 %v984
  %v2016 = vunpack.c.l.b16 %v985
  %v2017 = vunpack.c.l.b16 %v986
  %v2018 = vunpack.c.l.b16 %v987
  %v2019 = vunpack.c.l.b16 %v988
  %v2020 = vunpack.c.l.b16 %v989
  %v2021 = vunpack.c.l.b16 %v990
  %v2022 = vunpack.c.l.b16 %v991
  %v2023 = vunpack.c.l.b16 %v992
  %v2024 = vunpack.c.l.b16 %v993
  %v2025 = vunpack.c.l.b16 %v994
  %v2026 = vunpack.c.l.b16 %v995
  %v2027 = vunpack.c.l.b16 %v996
  %v2028 = vunpack.c.l.b16 %v997
  %v2029 = vunpack.c.l.b16 %v998
  %v2030 = vunpack.c.l.b16 %v999
  %v2031 = vunpack.c.l.b16 %v1000
  %v2032 = vunpack.c.l.b16 %v1001
  %v2033 = vunpack.c.l.b16 %v1002
  %v2034 = vunpack.c.l.b16 %v1003
  %v2035 = vunpack.c.l.b16 %v1004
  %v2036 = vunpack.c.l.b16 %v1005
  %v2037 = vunpack.c.l.b16 %v1006
  %v2038 = vunpack.c.l.b16 %v1007
  %v2039 = vunpack.c.l.b16 %v1008
  %v2040 = vunpack.c.l.b16 %v1009
  %v2041 = vunpack.c.l.b16 %v1010
  %v2042 = vunpack.c.l.b16 %v1011
  %v2043 = vunpack.c.l.b16 %v1012
  %v2044 = vunpack.c.l.b16 %v1013
  %v2045 = vunpack.c.l.b16 %v1014
  %v2046 = vunpack.c.l.b16 %v1015
  %v2047 = vunpack.c.l.b16 %v1016
  %v2048 = vunpack.c.l.b16 %v1017
  %v2049 = vunpack.c.l.b16 %v1018
  %v2050 = vunpack.c.l.b16 %v1019
  %v2051 = vunpack.c.l.b16 %v1020
  %v2052 = vunpack.c.l.b16 %v1021
  %v2053 = vunpack.c.l.b16 %v1022
  %v2054 = vunpack.c.l.b16 %v1023
  %v2055 = vunpack.c.l.b16 %v1024
  %v2056 = vunpack.c.l.b16 %v1025
  %v2057 = vunpack.c.l.b16 %v1026
  %v2058 = vunpack.c.l.b16 %v1027
  %v2059 = vunpack.c.l.b16 %v1028
  %v2060 = vunpack.c.l.b16 %v1029
  %v2061 = vunpack.c.l.b16 %v1030
  %v2062 = vunpack.c.l.b16 %v1031
  %v2063 = vunpack.c.l.b16 %v1032
  %v2064 = vunpack.c.l.b16 %v1033
  %v2065 = vunpack.c.l.b16 %v1034
  %v2066 = vunpack.c.l.b16 %v1035
  %v2067 = vunpack.c.l.b16 %v1036
  %v2068 = vunpack.c.l.b16 %v1037
  %v2069 = vunpack.c.l.b16 %v1038
  %v2070 = vunpack.c.l.b16 %v1039
  %v2071 = vunpack.c.l.b16 %v1040
  %v2072 = vunpack.c.l.b16 %v1041
  %v2073 = vunpack.c.l.b16 %v1042
  %v2074 = vunpack.c.l.b16 %v1043
  %v2075 = vunpack.c.l.b16 %v1044
  %v2076 = vunpack.c.l.b16 %v1045
  %v2077 = vunpack.c.l.b16 %v1046
  %v2078 = vunpack.c.l.b16 %v1047
  %v2079 = vunpack.c.l.b16 %v1048
  %v2080 = vunpack.c.l.b16 %v1049
  %v2081 = vunpack.c.l.b16 %v1050
  %v2082 = vunpack.c.l.b16 %v1051
  %v2083 = vunpack.c.l.b16 %v1052
  %v2084 = vunpack.c.l.b16 %v1053
  %v2085 = vunpack.c.l.b16 %v1054
  %v2086 = vunpack.c.l.b16 %v1055
  %v2087 = vunpack.c.l.b16 %v1056
  %v2088 = vunpack.c.l.b16 %v1057
  %v2089 = vunpack.c.l.b16 %v1058
  %v2090 = vunpack.c.l.b16 %v1059
  %v2091 = vunpack.c.l.b16 %v1060
  %v2092 = vunpack.c.l.b16 %v1061
  %v2093 = vunpack.c.l.b16 %v1062
  %v2094 = vunpack.c.l.b16 %v1063
  %v2095 = vunpack.c.l.b16 %v1064
  %v2096 = vunpack.c.l.b16 %v1065
  %v2097 = vunpack.c.l.b16 %v1066
  %v2098 = vunpack.c.l.b16 %v1067
  %v2099 = vunpack.c.l.b16 %v1068
  %v2100 = vunpack.c.l.b16 %v1069
  %v2101 = vunpack.c.l.b16 %v1070
  %v2102 = vunpack.c.l.b16 %v1071
  %v2103 = vunpack.c.l.b16 %v1072
  %v2104 = vunpack.c.l.b16 %v1073
  %v2105 = vunpack.c.l.b16 %v1074
  %v2106 = vunpack.c.l.b16 %v1075
  %v2107 = vunpack.c.l.b16 %v1076
  %v2108 = vunpack.c.l.b16 %v1077
  %v2109 = vunpack.c.l.b16 %v1078
  %v2110 = vunpack.c.l.b16 %v1079
  %v2111 = vunpack.c.l.b16 %v1080
  %v2112 = vunpack.c.l.b16 %v1081
  %v2113 = vunpack.c.l.b16 %v1082
  %v2114 = vunpack.c.l.b16 %v1083
  %v2115 = vunpack.c.l.b16 %v1084
  %v2116 = vunpack.c.l.b16 %v1085
  %v2117 = vunpack.c.l.b16 %v1086
  %v2118 = vunpack.c.l.b16 %v1087
  %v2119 = vunpack.c.l.b16 %v1088
  %v2120 = vunpack.c.l.b16 %v1089
  %v2121 = vunpack.c.l.b16 %v1090
  %v2122 = vunpack.c.l.b16 %v1091
  %v2123 = vunpack.c.l.b16 %v1092
  %v2124 = vunpack.c.l.b16 %v1093
  %v2125 = vunpack.c.l.b16 %v1094
  %v2126 = vunpack.c.l.b16 %v1095
  %v2127 = vunpack.c.l.b16 %v1096
  %v2128 = vunpack.c.l.b16 %v1097
  %v2129 = vunpack.c.l.b16 %v1098
  %v2130 = vunpack.c.l.b16 %v1099
  %v2131 = vunpack.c.l.b16 %v1100
  %v2132 = vunpack.c.l.b16 %v1101
  %v2133 = vunpack.c.l.b16 %v1102
  %v2134 = vunpack.c.l.b16 %v1103
  %v2135 = vunpack.c.l.b16 %v1104
  %v2136 = vunpack.c.l.b16 %v1105
  %v2137 = vunpack.c.l.b16 %v1106
  %v2138 = vunpack.c.l.b16 %v1107
  %v2139 = vunpack.c.l.b16 %v1108
  %v2140 = vunpack.c.l.b16 %v1109
  %v2141 = vunpack.c.l.b16 %v1110
  %v2142 = vunpack.c.l.b16 %v1111
  %v2143 = vunpack.c.l.b16 %v1112
  %v2144 = vunpack.c.l.b16 %v1113
  %v2145 = vunpack.c.l.b16 %v1114
  %v2146 = vunpack.c.l.b16 %v1115
  %v2147 = vunpack.c.l.b16 %v1116
  %v2148 = vunpack.c.l.b16 %v1117
  %v2149 = vunpack.c.l.b16 %v1118
  %v2150 = vunpack.c.l.b16 %v1119
  %v2151 = vunpack.c.l.b16 %v1120
  %v2152 = vunpack.c.l.b16 %v1121
  %v2153 = vunpack.c.l.b16 %v1122
  %v2154 = vunpack.c.l.b16 %v1123
  %v2155 = vunpack.c.l.b16 %v1124
  %v2156 = vunpack.c.l.b16 %v1125
  %v2157 = vunpack.c.l.b16 %v1126
  %v2158 = vunpack.c.l.b16 %v1127
  %v2159 = vunpack.c.l.b16 %v1128
  %v2160 = vunpack.c.l.b16 %v1129
  %v2161 = vunpack.c.l.b16 %v1130
  %v2162 = vunpack.c.l.b16 %v1131
  %v2163 = vunpack.c.l.b16 %v1132
  %v2164 = vunpack.c.l.b16 %v1133
  %v2165 = vunpack.c.l.b16 %v1134
  %v2166 = vunpack.c.l.b16 %v1135
  %v2167 = vunpack.c.l.b16 %v1136
  %v2168 = vunpack.c.l.b16 %v1137
  %v2169 = vunpack.c.l.b16 %v1138
  %v2170 = vunpack.c.l.b16 %v1139
  %v2171 = vunpack.c.l.b16 %v1140
  %v2172 = vunpack.c.l.b16 %v1141
  %v2173 = vunpack.c.l.b16 %v1142
  %v2174 = vunpack.c.l.b16 %v1143
  %v2175 = vunpack.c.l.b16 %v1144
  %v2176 = vunpack.c.l.b16 %v1145
  %v2177 = vunpack.c.l.b16 %v1146
  %v2178 = vunpack.c.l.b16 %v1147
  %v2179 = vunpack.c.l.b16 %v1148
  %v2180 = vunpack.c.l.b16 %v1149
  %v2181 = vunpack.c.l.b16 %v1150
  %v2182 = vunpack.c.l.b16 %v1151
  %v2183 = vunpack.c.l.b16 %v1152
  %v2184 = vunpack.c.l.b16 %v1153
  %v2185 = vunpack.c.l.b16 %v1154
  %v2186 = vunpack.c.l.b16 %v1155
  %v2187 = vunpack.c.l.b16 %v1156
  %v2188 = vunpack.c.l.b16 %v1157
  %v2189 = vunpack.c.l.b16 %v1158
  %v2190 = vunpack.c.l.b16 %v1159
  %v2191 = vunpack.c.l.b16 %v1160
  %v2192 = vunpack.c.l.b16 %v1161
  %v2193 = vunpack.c.l.b16 %v1162
  %v2194 = vunpack.c.l.b16 %v1163
  %v2195 = vunpack.c.l.b16 %v1164
  %v2196 = vunpack.c.l.b16 %v1165
  %v2197 = vunpack.c.l.b16 %v1166
  %v2198 = vunpack.c.l.b16 %v1167
  %v2199 = vunpack.c.l.b16 %v1168
  %v2200 = vunpack.c.l.b16 %v1169
  %v2201 = vunpack.c.l.b16 %v1170
  %v2202 = vunpack.c.l.b16 %v1171
  %v2203 = vunpack.c.l.b16 %v1172
  %v2204 = vunpack.c.l.b16 %v1173
  %v2205 = vunpack.c.l.b16 %v1174
  %v2206 = vunpack.c.l.b16 %v1175
  %v2207 = vunpack.c.l.b16 %v1176
  %v2208 = vunpack.c.l.b16 %v1177
  %v2209 = vunpack.c.l.b16 %v1178
  %v2210 = vunpack.c.l.b16 %v1179
  %v2211 = vunpack.c.l.b16 %v1180
  %v2212 = vunpack.c.l.b16 %v1181
  %v2213 = vunpack.c.l.b16 %v1182
  %v2214 = vunpack.c.l.b16 %v1183
  %v2215 = vunpack.c.l.b16 %v1184
  %v2216 = vunpack.c.l.b16 %v1185
  %v2217 = vunpack.c.l.b16 %v1186
  %v2218 = vunpack.c.l.b16 %v1187
  %v2219 = vunpack.c.l.b16 %v1188
  %v2220 = vunpack.c.l.b16 %v1189
  %v2221 = vunpack.c.l.b16 %v1190
  %v2222 = vunpack.c.l.b16 %v1191
  %v2223 = vunpack.c.l.b16 %v1192
  %v2224 = vunpack.c.l.b16 %v1193
  %v2225 = vunpack.c.l.b16 %v1194
  %v2226 = vunpack.c.l.b16 %v1195
  %v2227 = vunpack.c.l.b16 %v1196
  %v2228 = vunpack.c.l.b16 %v1197
  %v2229 = vunpack.c.l.b16 %v1198
  %v2230 = vunpack.c.l.b16 %v1199
  %v2231 = vunpack.c.l.b16 %v1200
  %v2232 = vunpack.c.l.b16 %v1201
  %v2233 = vunpack.c.l.b16 %v1202
  %v2234 = vunpack.c.l.b16 %v1203
  %v2235 = vunpack.c.l.b16 %v1204
  %v2236 = vunpack.c.l.b16 %v1205
  %v2237 = vunpack.c.l.b16 %v1206
  %v2238 = vunpack.c.l.b16 %v1207
  %v2239 = vunpack.c.l.b16 %v1208
  %v2240 = vunpack.c.l.b16 %v1209
  %v2241 = vunpack.c.l.b16 %v1210
  %v2242 = vunpack.c.l.b16 %v1211
  %v2243 = vunpack.c.l.b16 %v1212
  %v2244 = vunpack.c.l.b16 %v1213
  %v2245 = vunpack.c.l.b16 %v1214
  %v2246 = vunpack.c.l.b16 %v1215
  %v2247 = vunpack.c.l.b16 %v1216
  %v2248 = vunpack.c.l.b16 %v1217
  %v2249 = vunpack.c.l.b16 %v1218
  %v2250 = vunpack.c.l.b16 %v1219
  %v2251 = vunpack.c.l.b16 %v1220
  %v2252 = vunpack.c.l.b16 %v1221
  %v2253 = vunpack.c.l.b16 %v1222
  %v2254 = vunpack.c.l.b16 %v1223
  %v2255 = vunpack.c.l.b16 %v1224
  %v2256 = vunpack.c.l.b16 %v1225
  %v2257 = vunpack.c.l.b16 %v1226
  %v2258 = vunpack.c.l.b16 %v1227
  %v2259 = vunpack.c.l.b16 %v1228
  %v2260 = vunpack.c.l.b16 %v1229
  %v2261 = vunpack.c.l.b16 %v1230
  %v2262 = vunpack.c.l.b16 %v1231
  %v2263 = vunpack.c.l.b16 %v1232
  %v2264 = vunpack.c.l.b16 %v1233
  %v2265 = vunpack.c.l.b16 %v1234
  %v2266 = vunpack.c.l.b16 %v1235
  %v2267 = vunpack.c.l.b16 %v1236
  %v2268 = vunpack.c.l.b16 %v1237
  %v2269 = vunpack.c.l.b16 %v1238
  %v2270 = vunpack.c.l.b16 %v1239
  %v2271 = vunpack.c.l.b16 %v1240
  %v2272 = vunpack.c.l.b16 %v1241
  %v2273 = vunpack.c.l.b16 %v1242
  %v2274 = vunpack.c.l.b16 %v1243
  %v2275 = vunpack.c.l.b16 %v1244
  %v2276 = vunpack.c.l.b16 %v1245
  %v2277 = vunpack.c.l.b16 %v1246
  %v2278 = vunpack.c.l.b16 %v1247
  %v2279 = vunpack.c.l.b16 %v1248
  %v2280 = vunpack.c.l.b16 %v1249
  %v2281 = vunpack.c.l.b16 %v1250
  %v2282 = vunpack.c.l.b16 %v1251
  %v2283 = vunpack.c.l.b16 %v1252
  %v2284 = vunpack.c.l.b16 %v1253
  %v2285 = vunpack.c.l.b16 %v1254
  %v2286 = vunpack.c.l.b16 %v1255
  %v2287 = vunpack.c.l.b16 %v1256
  %v2288 = vunpack.c.l.b16 %v1257
  %v2289 = vunpack.c.l.b16 %v1258
  %v2290 = vunpack.c.l.b16 %v1259
  %v2291 = vunpack.c.l.b16 %v1260
  %v2292 = vunpack.c.l.b16 %v1261
  %v2293 = vunpack.c.l.b16 %v1262
  %v2294 = vunpack.c.l.b16 %v1263
  %v2295 = vunpack.c.l.b16 %v1264
  %v2296 = vunpack.c.l.b16 %v1265
  %v2297 = vunpack.c.l.b16 %v1266
  %v2298 = vunpack.c.l.b16 %v1267
  %v2299 = vunpack.c.l.b16 %v1268
  %v2300 = vunpack.c.l.b16 %v1269
  %v2301 = vunpack.c.l.b16 %v1270
  %v2302 = vunpack.c.l.b16 %v1271
  %v2303 = vunpack.c.l.b16 %v1272
  %v2304 = vunpack.c.l.b16 %v1273
  %v2305 = vunpack.c.l.b16 %v1274
  %v2306 = vunpack.c.l.b16 %v1275
  %v2307 = vunpack.c.l.b16 %v1276
  %v2308 = vunpack.c.l.b16 %v1277
  %v2309 = vunpack.c.l.b16 %v1278
  %v2310 = vunpack.c.l.b16 %v1279
  %v2311 = vunpack.c.l.b16 %v1280
  %v2312 = vunpack.c.l.b16 %v1281
  %v2313 = vunpack.c.l.b16 %v1282
  %v2314 = vunpack.c.l.b16 %v1283
  %v2315 = vunpack.c.l.b16 %v1284
  %v2316 = vunpack.c.l.b16 %v1285
  %v2317 = vunpack.c.l.b16 %v1286
  %v2318 = vunpack.c.l.b16 %v1287
  %v2319 = vunpack.c.l.b16 %v1288
  %v2320 = vunpack.c.l.b16 %v1289
  %v2321 = vunpack.c.l.b16 %v1290
  %v2322 = vunpack.c.l.b16 %v1291
  %v2323 = vunpack.c.l.b16 %v1292
  %v2324 = vunpack.c.l.b16 %v1293
  %v2325 = vunpack.c.l.b16 %v1294
  %v2326 = vpack.c.b16 %v1815, %v1814
  %v2327 = vpack.c.b16 %v1817, %v1816
  %v2328 = vpack.c.b16 %v1819, %v1818
  %v2329 = vpack.c.b16 %v1821, %v1820
  %v2330 = vpack.c.b16 %v1823, %v1822
  %v2331 = vpack.c.b16 %v1825, %v1824
  %v2332 = vpack.c.b16 %v1827, %v1826
  %v2333 = vpack.c.b16 %v1829, %v1828
  %v2334 = vpack.c.b16 %v1831, %v1830
  %v2335 = vpack.c.b16 %v1833, %v1832
  %v2336 = vpack.c.b16 %v1835, %v1834
  %v2337 = vpack.c.b16 %v1837, %v1836
  %v2338 = vpack.c.b16 %v1839, %v1838
  %v2339 = vpack.c.b16 %v1841, %v1840
  %v2340 = vpack.c.b16 %v1843, %v1842
  %v2341 = vpack.c.b16 %v1845, %v1844
  %v2342 = vpack.c.b16 %v1847, %v1846
  %v2343 = vpack.c.b16 %v1849, %v1848
  %v2344 = vpack.c.b16 %v1851, %v1850
  %v2345 = vpack.c.b16 %v1853, %v1852
  %v2346 = vpack.c.b16 %v1855, %v1854
  %v2347 = vpack.c.b16 %v1857, %v1856
  %v2348 = vpack.c.b16 %v1859, %v1858
  %v2349 = vpack.c.b16 %v1861, %v1860
  %v2350 = vpack.c.b16 %v1863, %v1862
  %v2351 = vpack.c.b16 %v1865, %v1864
  %v2352 = vpack.c.b16 %v1867, %v1866
  %v2353 = vpack.c.b16 %v1869, %v1868
  %v2354 = vpack.c.b16 %v1871, %v1870
  %v2355 = vpack.c.b16 %v1873, %v1872
  %v2356 = vpack.c.b16 %v1875, %v1874
  %v2357 = vpack.c.b16 %v1877, %v1876
  %v2358 = vpack.c.b16 %v1879, %v1878
  %v2359 = vpack.c.b16 %v1881, %v1880
  %v2360 = vpack.c.b16 %v1883, %v1882
  %v2361 = vpack.c.b16 %v1885, %v1884
  %v2362 = vpack.c.b16 %v1887, %v1886
  %v2363 = vpack.c.b16 %v1889, %v1888
  %v2364 = vpack.c.b16 %v1891, %v1890
  %v2365 = vpack.c.b16 %v1893, %v1892
  %v2366 = vpack.c.b16 %v1895, %v1894
  %v2367 = vpack.c.b16 %v1897, %v1896
  %v2368 = vpack.c.b16 %v1899, %v1898
  %v2369 = vpack.c.b16 %v1901, %v1900
  %v2370 = vpack.c.b16 %v1903, %v1902
  %v2371 = vpack.c.b16 %v1905, %v1904
  %v2372 = vpack.c.b16 %v1907, %v1906
  %v2373 = vpack.c.b16 %v1909, %v1908
  %v2374 = vpack.c.b16 %v1911, %v1910
  %v2375 = vpack.c.b16 %v1913, %v1912
  %v2376 = vpack.c.b16 %v1915, %v1914
  %v2377 = vpack.c.b16 %v1917, %v1916
  %v2378 = vpack.c.b16 %v1919, %v1918
  %v2379 = vpack.c.b16 %v1921, %v1920
  %v2380 = vpack.c.b16 %v1923, %v1922
  %v2381 = vpack.c.b16 %v1925, %v1924
  %v2382 = vpack.c.b16 %v1927, %v1926
  %v2383 = vpack.c.b16 %v1929, %v1928
  %v2384 = vpack.c.b16 %v1931, %v1930
  %v2385 = vpack.c.b16 %v1933, %v1932
  %v2386 = vpack.c.b16 %v1935, %v1934
  %v2387 = vpack.c.b16 %v1937, %v1936
  %v2388 = vpack.c.b16 %v1939, %v1938
  %v2389 = vpack.c.b16 %v1941, %v1940
  %v2390 = vpack.c.b16 %v1943, %v1942
  %v2391 = vpack.c.b16 %v1945, %v1944
  %v2392 = vpack.c.b16 %v1947, %v1946
  %v2393 = vpack.c.b16 %v1949, %v1948
  %v2394 = vpack.c.b16 %v1951, %v1950
  %v2395 = vpack.c.b16 %v1953, %v1952
  %v2396 = vpack.c.b16 %v1955, %v1954
  %v2397 = vpack.c.b16 %v1957, %v1956
  %v2398 = vpack.c.b16 %v1959, %v1958
  %v2399 = vpack.c.b16 %v1961, %v1960
  %v2400 = vpack.c.b16 %v1963, %v1962
  %v2401 = vpack.c.b16 %v1965, %v1964
  %v2402 = vpack.c.b16 %v1967, %v1966
  %v2403 = vpack.c.b16 %v1969, %v1968
  %v2404 = vpack.c.b16 %v1971, %v1970
  %v2405 = vpack.c.b16 %v1973, %v1972
  %v2406 = vpack.c.b16 %v1975, %v1974
  %v2407 = vpack.c.b16 %v1977, %v1976
  %v2408 = vpack.c.b16 %v1979, %v1978
  %v2409 = vpack.c.b16 %v1981, %v1980
  %v2410 = vpack.c.b16 %v1983, %v1982
  %v2411 = vpack.c.b16 %v1985, %v1984
  %v2412 = vpack.c.b16 %v1987, %v1986
  %v2413 = vpack.c.b16 %v1989, %v1988
  %v2414 = vpack.c.b16 %v1991, %v1990
  %v2415 = vpack.c.b16 %v1993, %v1992
  %v2416 = vpack.c.b16 %v1995, %v1994
  %v2417 = vpack.c.b16 %v1997, %v1996
  %v2418 = vpack.c.b16 %v1999, %v1998
  %v2419 = vpack.c.b16 %v2001, %v2000
  %v2420 = vpack.c.b16 %v2003, %v2002
  %v2421 = vpack.c.b16 %v2005, %v2004
  %v2422 = vpack.c.b16 %v2007, %v2006
  %v2423 = vpack.c.b16 %v2009, %v2008
  %v2424 = vpack.c.b16 %v2011, %v2010
  %v2425 = vpack.c.b16 %v2013, %v2012
  %v2426 = vpack.c.b16 %v2015, %v2014
  %v2427 = vpack.c.b16 %v2017, %v2016
  %v2428 = vpack.c.b16 %v2019, %v2018
  %v2429 = vpack.c.b16 %v2021, %v2020
  %v2430 = vpack.c.b16 %v2023, %v2022
  %v2431 = vpack.c.b16 %v2025, %v2024
  %v2432 = vpack.c.b16 %v2027, %v2026
  %v2433 = vpack.c.b16 %v2029, %v2028
  %v2434 = vpack.c.b16 %v2031, %v2030
  %v2435 = vpack.c.b16 %v2033, %v2032
  %v2436 = vpack.c.b16 %v2035, %v2034
  %v2437 = vpack.c.b16 %v2037, %v2036
  %v2438 = vpack.c.b16 %v2039, %v2038
  %v2439 = vpack.c.b16 %v2041, %v2040
  %v2440 = vpack.c.b16 %v2043, %v2042
  %v2441 = vpack.c.b16 %v2045, %v2044
  %v2442 = vpack.c.b16 %v2047, %v2046
  %v2443 = vpack.c.b16 %v2049, %v2048
  %v2444 = vpack.c.b16 %v2051, %v2050
  %v2445 = vpack.c.b16 %v2053, %v2052
  %v2446 = vpack.c.b16 %v2055, %v2054
  %v2447 = vpack.c.b16 %v2057, %v2056
  %v2448 = vpack.c.b16 %v2059, %v2058
  %v2449 = vpack.c.b16 %v2061, %v2060
  %v2450 = vpack.c.b16 %v2063, %v2062
  %v2451 = vpack.c.b16 %v2065, %v2064
  %v2452 = vpack.c.b16 %v2067, %v2066
  %v2453 = vpack.c.b16 %v2069, %v2068
  %v2454 = vpack.c.b16 %v2071, %v2070
  %v2455 = vpack.c.b16 %v2073, %v2072
  %v2456 = vpack.c.b16 %v2075, %v2074
  %v2457 = vpack.c.b16 %v2077, %v2076
  %v2458 = vpack.c.b16 %v2079, %v2078
  %v2459 = vpack.c.b16 %v2081, %v2080
  %v2460 = vpack.c.b16 %v2083, %v2082
  %v2461 = vpack.c.b16 %v2085, %v2084
  %v2462 = vpack.c.b16 %v2087, %v2086
  %v2463 = vpack.c.b16 %v2089, %v2088
  %v2464 = vpack.c.b16 %v2091, %v2090
  %v2465 = vpack.c.b16 %v2093, %v2092
  %v2466 = vpack.c.b16 %v2095, %v2094
  %v2467 = vpack.c.b16 %v2097, %v2096
  %v2468 = vpack.c.b16 %v2099, %v2098
  %v2469 = vpack.c.b16 %v2101, %v2100
  %v2470 = vpack.c.b16 %v2103, %v2102
  %v2471 = vpack.c.b16 %v2105, %v2104
  %v2472 = vpack.c.b16 %v2107, %v2106
  %v2473 = vpack.c.b16 %v2109, %v2108
  %v2474 = vpack.c.b16 %v2111, %v2110
  %v2475 = vpack.c.b16 %v2113, %v2112
  %v2476 = vpack.c.b16 %v2115, %v2114
  %v2477 = vpack.c.b16 %v2117, %v2116
  %v2478 = vpack.c.b16 %v2119, %v2118
  %v2479 = vpack.c.b16 %v2121, %v2120
  %v2480 = vpack.c.b16 %v2123, %v2122
  %v2481 = vpack.c.b16 %v2125, %v2124
  %v2482 = vpack.c.b16 %v2127, %v2126
  %v2483 = vpack.c.b16 %v2129, %v2128
  %v2484 = vpack.c.b16 %v2131, %v2130
  %v2485 = vpack.c.b16 %v2133, %v2132
  %v2486 = vpack.c.b16 %v2135, %v2134
  %v2487 = vpack.c.b16 %v2137, %v2136
  %v2488 = vpack.c.b16 %v2139, %v2138
  %v2489 = vpack.c.b16 %v2141, %v2140
  %v2490 = vpack.c.b16 %v2143, %v2142
  %v2491 = vpack.c.b16 %v2145, %v2144
  %v2492 = vpack.c.b16 %v2147, %v2146
  %v2493 = vpack.c.b16 %v2149, %v2148
  %v2494 = vpack.c.b16 %v2151, %v2150
  %v2495 = vpack.c.b16 %v2153, %v2152
  %v2496 = vpack.c.b16 %v2155, %v2154
  %v2497 = vpack.c.b16 %v2157, %v2156
  %v2498 = vpack.c.b16 %v2159, %v2158
  %v2499 = vpack.c.b16 %v2161, %v2160
  %v2500 = vpack.c.b16 %v2163, %v2162
  %v2501 = vpack.c.b16 %v2165, %v2164
  %v2502 = vpack.c.b16 %v2167, %v2166
  %v2503 = vpack.c.b16 %v2169, %v2168
  %v2504 = vpack.c.b16 %v2171, %v2170
  %v2505 = vpack.c.b16 %v2173, %v2172
  %v2506 = vpack.c.b16 %v2175, %v2174
  %v2507 = vpack.c.b16 %v2177, %v2176
  %v2508 = vpack.c.b16 %v2179, %v2178
  %v2509 = vpack.c.b16 %v2181, %v2180
  %v2510 = vpack.c.b16 %v2183, %v2182
  %v2511 = vpack.c.b16 %v2185, %v2184
  %v2512 = vpack.c.b16 %v2187, %v2186
  %v2513 = vpack.c.b16 %v2189, %v2188
  %v2514 = vpack.c.b16 %v2191, %v2190
  %v2515 = vpack.c.b16 %v2193, %v2192
  %v2516 = vpack.c.b16 %v2195, %v2194
  %v2517 = vpack.c.b16 %v2197, %v2196
  %v2518 = vpack.c.b16 %v2199, %v2198
  %v2519 = vpack.c.b16 %v2201, %v2200
  %v2520 = vpack.c.b16 %v2203, %v2202
  %v2521 = vpack.c.b16 %v2205, %v2204
  %v2522 = vpack.c.b16 %v2207, %v2206
  %v2523 = vpack.c.b16 %v2209, %v2208
  %v2524 = vpack.c.b16 %v2211, %v2210
  %v2525 = vpack.c.b16 %v2213, %v2212
  %v2526 = vpack.c.b16 %v2215, %v2214
  %v2527 = vpack.c.b16 %v2217, %v2216
  %v2528 = vpack.c.b16 %v2219, %v2218
  %v2529 = vpack.c.b16 %v2221, %v2220
  %v2530 = vpack.c.b16 %v2223, %v2222
  %v2531 = vpack.c.b16 %v2225, %v2224
  %v2532 = vpack.c.b16 %v2227, %v2226
  %v2533 = vpack.c.b16 %v2229, %v2228
  %v2534 = vpack.c.b16 %v2231, %v2230
  %v2535 = vpack.c.b16 %v2233, %v2232
  %v2536 = vpack.c.b16 %v2235, %v2234
  %v2537 = vpack.c.b16 %v2237, %v2236
  %v2538 = vpack.c.b16 %v2239, %v2238
  %v2539 = vpack.c.b16 %v2241, %v2240
  %v2540 = vpack.c.b16 %v2243, %v2242
  %v2541 = vpack.c.b16 %v2245, %v2244
  %v2542 = vpack.c.b16 %v2247, %v2246
  %v2543 = vpack.c.b16 %v2249, %v2248
  %v2544 = vpack.c.b16 %v2251, %v2250
  %v2545 = vpack.c.b16 %v2253, %v2252
  %v2546 = vpack.c.b16 %v2255, %v2254
  %v2547 = vpack.c.b16 %v2257, %v2256
  %v2548 = vpack.c.b16 %v2259, %v2258
  %v2549 = vpack.c.b16 %v2261, %v2260
  %v2550 = vpack.c.b16 %v2263, %v2262
  %v2551 = vpack.c.b16 %v2265, %v2264
  %v2552 = vpack.c.b16 %v2267, %v2266
  %v2553 = vpack.c.b16 %v2269, %v2268
  %v2554 = vpack.c.b16 %v2271, %v2270
  %v2555 = vpack.c.b16 %v2273, %v2272
  %v2556 = vpack.c.b16 %v2275, %v2274
  %v2557 = vpack.c.b16 %v2277, %v2276
  %v2558 = vpack.c.b16 %v2279, %v2278
  %v2559 = vpack.c.b16 %v2281, %v2280
  %v2560 = vpack.c.b16 %v2283, %v2282
  %v2561 = vpack.c.b16 %v2285, %v2284
  %v2562 = vpack.c.b16 %v2287, %v2286
  %v2563 = vpack.c.b16 %v2289, %v2288
  %v2564 = vpack.c.b16 %v2291, %v2290
  %v2565 = vpack.c.b16 %v2293, %v2292
  %v2566 = vpack.c.b16 %v2295, %v2294
  %v2567 = vpack.c.b16 %v2297, %v2296
  %v2568 = vpack.c.b16 %v2299, %v2298
  %v2569 = vpack.c.b16 %v2301, %v2300
  %v2570 = vpack.c.b16 %v2303, %v2302
  %v2571 = vpack.c.b16 %v2305, %v2304
  %v2572 = vpack.c.b16 %v2307, %v2306
  %v2573 = vpack.c.b16 %v2309, %v2308
  %v2574 = vpack.c.b16 %v2311, %v2310
  %v2575 = vpack.c.b16 %v2313, %v2312
  %v2576 = vpack.c.b16 %v2315, %v2314
  %v2577 = vpack.c.b16 %v2317, %v2316
  %v2578 = vpack.c.b16 %v2319, %v2318
  %v2579 = vpack.c.b16 %v2321, %v2320
  %v2580 = vpack.c.b16 %v2323, %v2322
  %v2581 = vpack.c.b16 %v2325, %v2324
  %2838 = vmatprep.subr.bf16.mxu0 0
  %2839 = vmatpush1.bf16.msra.mxu0 %v2333
  %2840 = vmatprep.subr.bf16.mxu0 0
  %2841 = vmatpush1.bf16.msra.mxu0 %v2332
  %2842 = vmatprep.subr.bf16.mxu0 0
  %2843 = vmatpush1.bf16.msra.mxu0 %v2331
  %2844 = vmatprep.subr.bf16.mxu0 0
  %2845 = vmatpush1.bf16.msra.mxu0 %v2330
  %2846 = vmatprep.subr.bf16.mxu0 0
  %2847 = vmatpush1.bf16.msra.mxu0 %v2329
  %2848 = vmatprep.subr.bf16.mxu0 0
  %2849 = vmatpush1.bf16.msra.mxu0 %v2328
  %2850 = vmatprep.subr.bf16.mxu0 0
  %2851 = vmatpush1.bf16.msra.mxu0 %v2327
  %2852 = vmatprep.subr.bf16.mxu0 0
  %2853 = vmatpush1.bf16.msra.mxu0 %v2326
  %2854 = vmatprep.subr.bf16.mxu0 0
  %2855 = vmatpush2.bf16.msra.mxu0 %v2341
  %2856 = vmatprep.subr.bf16.mxu0 0
  %2857 = vmatpush2.bf16.msra.mxu0 %v2340
  %2858 = vmatprep.subr.bf16.mxu0 0
  %2859 = vmatpush2.bf16.msra.mxu0 %v2339
  %2860 = vmatprep.subr.bf16.mxu0 0
  %2861 = vmatpush2.bf16.msra.mxu0 %v2338
  %2862 = vmatprep.subr.bf16.mxu0 0
  %2863 = vmatpush2.bf16.msra.mxu0 %v2337
  %2864 = vmatprep.subr.bf16.mxu0 0
  %2865 = vmatpush2.bf16.msra.mxu0 %v2336
  %2866 = vmatprep.subr.bf16.mxu0 0
  %2867 = vmatpush2.bf16.msra.mxu0 %v2335
  %2868 = vmatprep.subr.bf16.mxu0 0
  %2869 = vmatpush2.bf16.msra.mxu0 %v2334
  %2870 = vmatprep.mubr.bf16.mxu0 %v528
  %2871 = vmatmul.mubr.bf16.gmra.mxu0 %v527
  %v2872 = vpop.f32.mrf.mxu0
  %v2873 = vadd.f32 %v1300, %v2872
  %v2874 = vpop.f32.mrf.mxu0
  %v2875 = vpop.f32.mrf.mxu0
  %v2876 = vadd.f32 %v1300, %v2875
  %v2877 = vpop.f32.mrf.mxu0
  %2878 = vmatprep.mubr.bf16.mxu0 %v560
  %2879 = vmatmul.mubr.bf16.gmra.mxu0 %v559
  %v2880 = vpop.f32.mrf.mxu0
  %v2881 = vadd.f32 %v1300, %v2880
  %v2882 = vpop.f32.mrf.mxu0
  %v2883 = vpop.f32.mrf.mxu0
  %v2884 = vadd.f32 %v1300, %v2883
  %v2885 = vpop.f32.mrf.mxu0
  %2886 = vmatprep.mubr.bf16.mxu0 %v592
  %2887 = vmatmul.mubr.bf16.gmra.mxu0 %v591
  %v2888 = vpop.f32.mrf.mxu0
  %v2889 = vadd.f32 %v1300, %v2888
  %v2890 = vpop.f32.mrf.mxu0
  %v2891 = vpop.f32.mrf.mxu0
  %v2892 = vadd.f32 %v1300, %v2891
  %v2893 = vpop.f32.mrf.mxu0
  %2894 = vmatprep.mubr.bf16.mxu0 %v624
  %2895 = vmatmul.mubr.bf16.gmra.mxu0 %v623
  %v2896 = vpop.f32.mrf.mxu0
  %v2897 = vadd.f32 %v1300, %v2896
  %v2898 = vpop.f32.mrf.mxu0
  %v2899 = vpop.f32.mrf.mxu0
  %v2900 = vadd.f32 %v1300, %v2899
  %v2901 = vpop.f32.mrf.mxu0
  %2902 = vmatprep.mubr.bf16.mxu0 %v656
  %2903 = vmatmul.mubr.bf16.gmra.mxu0 %v655
  %v2904 = vpop.f32.mrf.mxu0
  %v2905 = vadd.f32 %v1300, %v2904
  %v2906 = vpop.f32.mrf.mxu0
  %v2907 = vpop.f32.mrf.mxu0
  %v2908 = vadd.f32 %v1300, %v2907
  %v2909 = vpop.f32.mrf.mxu0
  %2910 = vmatprep.mubr.bf16.mxu0 %v688
  %2911 = vmatmul.mubr.bf16.gmra.mxu0 %v687
  %v2912 = vpop.f32.mrf.mxu0
  %v2913 = vadd.f32 %v1300, %v2912
  %v2914 = vpop.f32.mrf.mxu0
  %v2915 = vpop.f32.mrf.mxu0
  %v2916 = vadd.f32 %v1300, %v2915
  %v2917 = vpop.f32.mrf.mxu0
  %2918 = vmatprep.mubr.bf16.mxu0 %v720
  %2919 = vmatmul.mubr.bf16.gmra.mxu0 %v719
  %v2920 = vpop.f32.mrf.mxu0
  %v2921 = vadd.f32 %v1300, %v2920
  %v2922 = vpop.f32.mrf.mxu0
  %v2923 = vpop.f32.mrf.mxu0
  %v2924 = vadd.f32 %v1300, %v2923
  %v2925 = vpop.f32.mrf.mxu0
  %2926 = vmatprep.mubr.bf16.mxu0 %v752
  %2927 = vmatmul.mubr.bf16.gmra.mxu0 %v751
  %v2928 = vpop.f32.mrf.mxu0
  %v2929 = vadd.f32 %v1300, %v2928
  %v2930 = vpop.f32.mrf.mxu0
  %v2931 = vpop.f32.mrf.mxu0
  %v2932 = vadd.f32 %v1300, %v2931
  %v2933 = vpop.f32.mrf.mxu0
  %2934 = vdwg.mxu0
  %2935 = vmatprep.subr.bf16.mxu0 0
  %2936 = vmatpush1.bf16.msra.mxu0 %v2349
  %2937 = vmatprep.subr.bf16.mxu0 0
  %2938 = vmatpush1.bf16.msra.mxu0 %v2348
  %2939 = vmatprep.subr.bf16.mxu0 0
  %2940 = vmatpush1.bf16.msra.mxu0 %v2347
  %2941 = vmatprep.subr.bf16.mxu0 0
  %2942 = vmatpush1.bf16.msra.mxu0 %v2346
  %2943 = vmatprep.subr.bf16.mxu0 0
  %2944 = vmatpush1.bf16.msra.mxu0 %v2345
  %2945 = vmatprep.subr.bf16.mxu0 0
  %2946 = vmatpush1.bf16.msra.mxu0 %v2344
  %2947 = vmatprep.subr.bf16.mxu0 0
  %2948 = vmatpush1.bf16.msra.mxu0 %v2343
  %2949 = vmatprep.subr.bf16.mxu0 0
  %2950 = vmatpush1.bf16.msra.mxu0 %v2342
  %2951 = vmatprep.subr.bf16.mxu0 0
  %2952 = vmatpush2.bf16.msra.mxu0 %v2357
  %2953 = vmatprep.subr.bf16.mxu0 0
  %2954 = vmatpush2.bf16.msra.mxu0 %v2356
  %2955 = vmatprep.subr.bf16.mxu0 0
  %2956 = vmatpush2.bf16.msra.mxu0 %v2355
  %2957 = vmatprep.subr.bf16.mxu0 0
  %2958 = vmatpush2.bf16.msra.mxu0 %v2354
  %2959 = vmatprep.subr.bf16.mxu0 0
  %2960 = vmatpush2.bf16.msra.mxu0 %v2353
  %2961 = vmatprep.subr.bf16.mxu0 0
  %2962 = vmatpush2.bf16.msra.mxu0 %v2352
  %2963 = vmatprep.subr.bf16.mxu0 0
  %2964 = vmatpush2.bf16.msra.mxu0 %v2351
  %2965 = vmatprep.subr.bf16.mxu0 0
  %2966 = vmatpush2.bf16.msra.mxu0 %v2350
  %2967 = vmatprep.mubr.bf16.mxu0 %v530
  %2968 = vmatmul.mubr.bf16.gmra.mxu0 %v529
  %v2969 = vpop.f32.mrf.mxu0
  %v2970 = vadd.f32 %v2873, %v2969
  %v2971 = vpop.f32.mrf.mxu0
  %v2972 = vpop.f32.mrf.mxu0
  %v2973 = vadd.f32 %v2876, %v2972
  %v2974 = vpop.f32.mrf.mxu0
  %2975 = vmatprep.mubr.bf16.mxu0 %v562
  %2976 = vmatmul.mubr.bf16.gmra.mxu0 %v561
  %v2977 = vpop.f32.mrf.mxu0
  %v2978 = vadd.f32 %v2881, %v2977
  %v2979 = vpop.f32.mrf.mxu0
  %v2980 = vpop.f32.mrf.mxu0
  %v2981 = vadd.f32 %v2884, %v2980
  %v2982 = vpop.f32.mrf.mxu0
  %2983 = vmatprep.mubr.bf16.mxu0 %v594
  %2984 = vmatmul.mubr.bf16.gmra.mxu0 %v593
  %v2985 = vpop.f32.mrf.mxu0
  %v2986 = vadd.f32 %v2889, %v2985
  %v2987 = vpop.f32.mrf.mxu0
  %v2988 = vpop.f32.mrf.mxu0
  %v2989 = vadd.f32 %v2892, %v2988
  %v2990 = vpop.f32.mrf.mxu0
  %2991 = vmatprep.mubr.bf16.mxu0 %v626
  %2992 = vmatmul.mubr.bf16.gmra.mxu0 %v625
  %v2993 = vpop.f32.mrf.mxu0
  %v2994 = vadd.f32 %v2897, %v2993
  %v2995 = vpop.f32.mrf.mxu0
  %v2996 = vpop.f32.mrf.mxu0
  %v2997 = vadd.f32 %v2900, %v2996
  %v2998 = vpop.f32.mrf.mxu0
  %2999 = vmatprep.mubr.bf16.mxu0 %v658
  %3000 = vmatmul.mubr.bf16.gmra.mxu0 %v657
  %v3001 = vpop.f32.mrf.mxu0
  %v3002 = vadd.f32 %v2905, %v3001
  %v3003 = vpop.f32.mrf.mxu0
  %v3004 = vpop.f32.mrf.mxu0
  %v3005 = vadd.f32 %v2908, %v3004
  %v3006 = vpop.f32.mrf.mxu0
  %3007 = vmatprep.mubr.bf16.mxu0 %v690
  %3008 = vmatmul.mubr.bf16.gmra.mxu0 %v689
  %v3009 = vpop.f32.mrf.mxu0
  %v3010 = vadd.f32 %v2913, %v3009
  %v3011 = vpop.f32.mrf.mxu0
  %v3012 = vpop.f32.mrf.mxu0
  %v3013 = vadd.f32 %v2916, %v3012
  %v3014 = vpop.f32.mrf.mxu0
  %3015 = vmatprep.mubr.bf16.mxu0 %v722
  %3016 = vmatmul.mubr.bf16.gmra.mxu0 %v721
  %v3017 = vpop.f32.mrf.mxu0
  %v3018 = vadd.f32 %v2921, %v3017
  %v3019 = vpop.f32.mrf.mxu0
  %v3020 = vpop.f32.mrf.mxu0
  %v3021 = vadd.f32 %v2924, %v3020
  %v3022 = vpop.f32.mrf.mxu0
  %3023 = vmatprep.mubr.bf16.mxu0 %v754
  %3024 = vmatmul.mubr.bf16.gmra.mxu0 %v753
  %v3025 = vpop.f32.mrf.mxu0
  %v3026 = vadd.f32 %v2929, %v3025
  %v3027 = vpop.f32.mrf.mxu0
  %v3028 = vpop.f32.mrf.mxu0
  %v3029 = vadd.f32 %v2932, %v3028
  %v3030 = vpop.f32.mrf.mxu0
  %3031 = vdwg.mxu0
  %3032 = vmatprep.subr.bf16.mxu0 0
  %3033 = vmatpush1.bf16.msra.mxu0 %v2365
  %3034 = vmatprep.subr.bf16.mxu0 0
  %3035 = vmatpush1.bf16.msra.mxu0 %v2364
  %3036 = vmatprep.subr.bf16.mxu0 0
  %3037 = vmatpush1.bf16.msra.mxu0 %v2363
  %3038 = vmatprep.subr.bf16.mxu0 0
  %3039 = vmatpush1.bf16.msra.mxu0 %v2362
  %3040 = vmatprep.subr.bf16.mxu0 0
  %3041 = vmatpush1.bf16.msra.mxu0 %v2361
  %3042 = vmatprep.subr.bf16.mxu0 0
  %3043 = vmatpush1.bf16.msra.mxu0 %v2360
  %3044 = vmatprep.subr.bf16.mxu0 0
  %3045 = vmatpush1.bf16.msra.mxu0 %v2359
  %3046 = vmatprep.subr.bf16.mxu0 0
  %3047 = vmatpush1.bf16.msra.mxu0 %v2358
  %3048 = vmatprep.subr.bf16.mxu0 0
  %3049 = vmatpush2.bf16.msra.mxu0 %v2373
  %3050 = vmatprep.subr.bf16.mxu0 0
  %3051 = vmatpush2.bf16.msra.mxu0 %v2372
  %3052 = vmatprep.subr.bf16.mxu0 0
  %3053 = vmatpush2.bf16.msra.mxu0 %v2371
  %3054 = vmatprep.subr.bf16.mxu0 0
  %3055 = vmatpush2.bf16.msra.mxu0 %v2370
  %3056 = vmatprep.subr.bf16.mxu0 0
  %3057 = vmatpush2.bf16.msra.mxu0 %v2369
  %3058 = vmatprep.subr.bf16.mxu0 0
  %3059 = vmatpush2.bf16.msra.mxu0 %v2368
  %3060 = vmatprep.subr.bf16.mxu0 0
  %3061 = vmatpush2.bf16.msra.mxu0 %v2367
  %3062 = vmatprep.subr.bf16.mxu0 0
  %3063 = vmatpush2.bf16.msra.mxu0 %v2366
  %3064 = vmatprep.mubr.bf16.mxu0 %v532
  %3065 = vmatmul.mubr.bf16.gmra.mxu0 %v531
  %v3066 = vpop.f32.mrf.mxu0
  %v3067 = vadd.f32 %v2970, %v3066
  %v3068 = vpop.f32.mrf.mxu0
  %v3069 = vpop.f32.mrf.mxu0
  %v3070 = vadd.f32 %v2973, %v3069
  %v3071 = vpop.f32.mrf.mxu0
  %3072 = vmatprep.mubr.bf16.mxu0 %v564
  %3073 = vmatmul.mubr.bf16.gmra.mxu0 %v563
  %v3074 = vpop.f32.mrf.mxu0
  %v3075 = vadd.f32 %v2978, %v3074
  %v3076 = vpop.f32.mrf.mxu0
  %v3077 = vpop.f32.mrf.mxu0
  %v3078 = vadd.f32 %v2981, %v3077
  %v3079 = vpop.f32.mrf.mxu0
  %3080 = vmatprep.mubr.bf16.mxu0 %v596
  %3081 = vmatmul.mubr.bf16.gmra.mxu0 %v595
  %v3082 = vpop.f32.mrf.mxu0
  %v3083 = vadd.f32 %v2986, %v3082
  %v3084 = vpop.f32.mrf.mxu0
  %v3085 = vpop.f32.mrf.mxu0
  %v3086 = vadd.f32 %v2989, %v3085
  %v3087 = vpop.f32.mrf.mxu0
  %3088 = vmatprep.mubr.bf16.mxu0 %v628
  %3089 = vmatmul.mubr.bf16.gmra.mxu0 %v627
  %v3090 = vpop.f32.mrf.mxu0
  %v3091 = vadd.f32 %v2994, %v3090
  %v3092 = vpop.f32.mrf.mxu0
  %v3093 = vpop.f32.mrf.mxu0
  %v3094 = vadd.f32 %v2997, %v3093
  %v3095 = vpop.f32.mrf.mxu0
  %3096 = vmatprep.mubr.bf16.mxu0 %v660
  %3097 = vmatmul.mubr.bf16.gmra.mxu0 %v659
  %v3098 = vpop.f32.mrf.mxu0
  %v3099 = vadd.f32 %v3002, %v3098
  %v3100 = vpop.f32.mrf.mxu0
  %v3101 = vpop.f32.mrf.mxu0
  %v3102 = vadd.f32 %v3005, %v3101
  %v3103 = vpop.f32.mrf.mxu0
  %3104 = vmatprep.mubr.bf16.mxu0 %v692
  %3105 = vmatmul.mubr.bf16.gmra.mxu0 %v691
  %v3106 = vpop.f32.mrf.mxu0
  %v3107 = vadd.f32 %v3010, %v3106
  %v3108 = vpop.f32.mrf.mxu0
  %v3109 = vpop.f32.mrf.mxu0
  %v3110 = vadd.f32 %v3013, %v3109
  %v3111 = vpop.f32.mrf.mxu0
  %3112 = vmatprep.mubr.bf16.mxu0 %v724
  %3113 = vmatmul.mubr.bf16.gmra.mxu0 %v723
  %v3114 = vpop.f32.mrf.mxu0
  %v3115 = vadd.f32 %v3018, %v3114
  %v3116 = vpop.f32.mrf.mxu0
  %v3117 = vpop.f32.mrf.mxu0
  %v3118 = vadd.f32 %v3021, %v3117
  %v3119 = vpop.f32.mrf.mxu0
  %3120 = vmatprep.mubr.bf16.mxu0 %v756
  %3121 = vmatmul.mubr.bf16.gmra.mxu0 %v755
  %v3122 = vpop.f32.mrf.mxu0
  %v3123 = vadd.f32 %v3026, %v3122
  %v3124 = vpop.f32.mrf.mxu0
  %v3125 = vpop.f32.mrf.mxu0
  %v3126 = vadd.f32 %v3029, %v3125
  %v3127 = vpop.f32.mrf.mxu0
  %3128 = vdwg.mxu0
  %3129 = vmatprep.subr.bf16.mxu0 0
  %3130 = vmatpush1.bf16.msra.mxu0 %v2381
  %3131 = vmatprep.subr.bf16.mxu0 0
  %3132 = vmatpush1.bf16.msra.mxu0 %v2380
  %3133 = vmatprep.subr.bf16.mxu0 0
  %3134 = vmatpush1.bf16.msra.mxu0 %v2379
  %3135 = vmatprep.subr.bf16.mxu0 0
  %3136 = vmatpush1.bf16.msra.mxu0 %v2378
  %3137 = vmatprep.subr.bf16.mxu0 0
  %3138 = vmatpush1.bf16.msra.mxu0 %v2377
  %3139 = vmatprep.subr.bf16.mxu0 0
  %3140 = vmatpush1.bf16.msra.mxu0 %v2376
  %3141 = vmatprep.subr.bf16.mxu0 0
  %3142 = vmatpush1.bf16.msra.mxu0 %v2375
  %3143 = vmatprep.subr.bf16.mxu0 0
  %3144 = vmatpush1.bf16.msra.mxu0 %v2374
  %3145 = vmatprep.subr.bf16.mxu0 0
  %3146 = vmatpush2.bf16.msra.mxu0 %v2389
  %3147 = vmatprep.subr.bf16.mxu0 0
  %3148 = vmatpush2.bf16.msra.mxu0 %v2388
  %3149 = vmatprep.subr.bf16.mxu0 0
  %3150 = vmatpush2.bf16.msra.mxu0 %v2387
  %3151 = vmatprep.subr.bf16.mxu0 0
  %3152 = vmatpush2.bf16.msra.mxu0 %v2386
  %3153 = vmatprep.subr.bf16.mxu0 0
  %3154 = vmatpush2.bf16.msra.mxu0 %v2385
  %3155 = vmatprep.subr.bf16.mxu0 0
  %3156 = vmatpush2.bf16.msra.mxu0 %v2384
  %3157 = vmatprep.subr.bf16.mxu0 0
  %3158 = vmatpush2.bf16.msra.mxu0 %v2383
  %3159 = vmatprep.subr.bf16.mxu0 0
  %3160 = vmatpush2.bf16.msra.mxu0 %v2382
  %3161 = vmatprep.mubr.bf16.mxu0 %v534
  %3162 = vmatmul.mubr.bf16.gmra.mxu0 %v533
  %v3163 = vpop.f32.mrf.mxu0
  %v3164 = vadd.f32 %v3067, %v3163
  %v3165 = vpop.f32.mrf.mxu0
  %v3166 = vpop.f32.mrf.mxu0
  %v3167 = vadd.f32 %v3070, %v3166
  %v3168 = vpop.f32.mrf.mxu0
  %3169 = vmatprep.mubr.bf16.mxu0 %v566
  %3170 = vmatmul.mubr.bf16.gmra.mxu0 %v565
  %v3171 = vpop.f32.mrf.mxu0
  %v3172 = vadd.f32 %v3075, %v3171
  %v3173 = vpop.f32.mrf.mxu0
  %v3174 = vpop.f32.mrf.mxu0
  %v3175 = vadd.f32 %v3078, %v3174
  %v3176 = vpop.f32.mrf.mxu0
  %3177 = vmatprep.mubr.bf16.mxu0 %v598
  %3178 = vmatmul.mubr.bf16.gmra.mxu0 %v597
  %v3179 = vpop.f32.mrf.mxu0
  %v3180 = vadd.f32 %v3083, %v3179
  %v3181 = vpop.f32.mrf.mxu0
  %v3182 = vpop.f32.mrf.mxu0
  %v3183 = vadd.f32 %v3086, %v3182
  %v3184 = vpop.f32.mrf.mxu0
  %3185 = vmatprep.mubr.bf16.mxu0 %v630
  %3186 = vmatmul.mubr.bf16.gmra.mxu0 %v629
  %v3187 = vpop.f32.mrf.mxu0
  %v3188 = vadd.f32 %v3091, %v3187
  %v3189 = vpop.f32.mrf.mxu0
  %v3190 = vpop.f32.mrf.mxu0
  %v3191 = vadd.f32 %v3094, %v3190
  %v3192 = vpop.f32.mrf.mxu0
  %3193 = vmatprep.mubr.bf16.mxu0 %v662
  %3194 = vmatmul.mubr.bf16.gmra.mxu0 %v661
  %v3195 = vpop.f32.mrf.mxu0
  %v3196 = vadd.f32 %v3099, %v3195
  %v3197 = vpop.f32.mrf.mxu0
  %v3198 = vpop.f32.mrf.mxu0
  %v3199 = vadd.f32 %v3102, %v3198
  %v3200 = vpop.f32.mrf.mxu0
  %3201 = vmatprep.mubr.bf16.mxu0 %v694
  %3202 = vmatmul.mubr.bf16.gmra.mxu0 %v693
  %v3203 = vpop.f32.mrf.mxu0
  %v3204 = vadd.f32 %v3107, %v3203
  %v3205 = vpop.f32.mrf.mxu0
  %v3206 = vpop.f32.mrf.mxu0
  %v3207 = vadd.f32 %v3110, %v3206
  %v3208 = vpop.f32.mrf.mxu0
  %3209 = vmatprep.mubr.bf16.mxu0 %v726
  %3210 = vmatmul.mubr.bf16.gmra.mxu0 %v725
  %v3211 = vpop.f32.mrf.mxu0
  %v3212 = vadd.f32 %v3115, %v3211
  %v3213 = vpop.f32.mrf.mxu0
  %v3214 = vpop.f32.mrf.mxu0
  %v3215 = vadd.f32 %v3118, %v3214
  %v3216 = vpop.f32.mrf.mxu0
  %3217 = vmatprep.mubr.bf16.mxu0 %v758
  %3218 = vmatmul.mubr.bf16.gmra.mxu0 %v757
  %v3219 = vpop.f32.mrf.mxu0
  %v3220 = vadd.f32 %v3123, %v3219
  %v3221 = vpop.f32.mrf.mxu0
  %v3222 = vpop.f32.mrf.mxu0
  %v3223 = vadd.f32 %v3126, %v3222
  %v3224 = vpop.f32.mrf.mxu0
  %3225 = vdwg.mxu0
  %3226 = vmatprep.subr.bf16.mxu0 0
  %3227 = vmatpush1.bf16.msra.mxu0 %v2397
  %3228 = vmatprep.subr.bf16.mxu0 0
  %3229 = vmatpush1.bf16.msra.mxu0 %v2396
  %3230 = vmatprep.subr.bf16.mxu0 0
  %3231 = vmatpush1.bf16.msra.mxu0 %v2395
  %3232 = vmatprep.subr.bf16.mxu0 0
  %3233 = vmatpush1.bf16.msra.mxu0 %v2394
  %3234 = vmatprep.subr.bf16.mxu0 0
  %3235 = vmatpush1.bf16.msra.mxu0 %v2393
  %3236 = vmatprep.subr.bf16.mxu0 0
  %3237 = vmatpush1.bf16.msra.mxu0 %v2392
  %3238 = vmatprep.subr.bf16.mxu0 0
  %3239 = vmatpush1.bf16.msra.mxu0 %v2391
  %3240 = vmatprep.subr.bf16.mxu0 0
  %3241 = vmatpush1.bf16.msra.mxu0 %v2390
  %3242 = vmatprep.subr.bf16.mxu0 0
  %3243 = vmatpush2.bf16.msra.mxu0 %v2405
  %3244 = vmatprep.subr.bf16.mxu0 0
  %3245 = vmatpush2.bf16.msra.mxu0 %v2404
  %3246 = vmatprep.subr.bf16.mxu0 0
  %3247 = vmatpush2.bf16.msra.mxu0 %v2403
  %3248 = vmatprep.subr.bf16.mxu0 0
  %3249 = vmatpush2.bf16.msra.mxu0 %v2402
  %3250 = vmatprep.subr.bf16.mxu0 0
  %3251 = vmatpush2.bf16.msra.mxu0 %v2401
  %3252 = vmatprep.subr.bf16.mxu0 0
  %3253 = vmatpush2.bf16.msra.mxu0 %v2400
  %3254 = vmatprep.subr.bf16.mxu0 0
  %3255 = vmatpush2.bf16.msra.mxu0 %v2399
  %3256 = vmatprep.subr.bf16.mxu0 0
  %3257 = vmatpush2.bf16.msra.mxu0 %v2398
  %3258 = vmatprep.mubr.bf16.mxu0 %v536
  %3259 = vmatmul.mubr.bf16.gmra.mxu0 %v535
  %v3260 = vpop.f32.mrf.mxu0
  %v3261 = vadd.f32 %v3164, %v3260
  %v3262 = vpop.f32.mrf.mxu0
  %v3263 = vpop.f32.mrf.mxu0
  %v3264 = vadd.f32 %v3167, %v3263
  %v3265 = vpop.f32.mrf.mxu0
  %3266 = vmatprep.mubr.bf16.mxu0 %v568
  %3267 = vmatmul.mubr.bf16.gmra.mxu0 %v567
  %v3268 = vpop.f32.mrf.mxu0
  %v3269 = vadd.f32 %v3172, %v3268
  %v3270 = vpop.f32.mrf.mxu0
  %v3271 = vpop.f32.mrf.mxu0
  %v3272 = vadd.f32 %v3175, %v3271
  %v3273 = vpop.f32.mrf.mxu0
  %3274 = vmatprep.mubr.bf16.mxu0 %v600
  %3275 = vmatmul.mubr.bf16.gmra.mxu0 %v599
  %v3276 = vpop.f32.mrf.mxu0
  %v3277 = vadd.f32 %v3180, %v3276
  %v3278 = vpop.f32.mrf.mxu0
  %v3279 = vpop.f32.mrf.mxu0
  %v3280 = vadd.f32 %v3183, %v3279
  %v3281 = vpop.f32.mrf.mxu0
  %3282 = vmatprep.mubr.bf16.mxu0 %v632
  %3283 = vmatmul.mubr.bf16.gmra.mxu0 %v631
  %v3284 = vpop.f32.mrf.mxu0
  %v3285 = vadd.f32 %v3188, %v3284
  %v3286 = vpop.f32.mrf.mxu0
  %v3287 = vpop.f32.mrf.mxu0
  %v3288 = vadd.f32 %v3191, %v3287
  %v3289 = vpop.f32.mrf.mxu0
  %3290 = vmatprep.mubr.bf16.mxu0 %v664
  %3291 = vmatmul.mubr.bf16.gmra.mxu0 %v663
  %v3292 = vpop.f32.mrf.mxu0
  %v3293 = vadd.f32 %v3196, %v3292
  %v3294 = vpop.f32.mrf.mxu0
  %v3295 = vpop.f32.mrf.mxu0
  %v3296 = vadd.f32 %v3199, %v3295
  %v3297 = vpop.f32.mrf.mxu0
  %3298 = vmatprep.mubr.bf16.mxu0 %v696
  %3299 = vmatmul.mubr.bf16.gmra.mxu0 %v695
  %v3300 = vpop.f32.mrf.mxu0
  %v3301 = vadd.f32 %v3204, %v3300
  %v3302 = vpop.f32.mrf.mxu0
  %v3303 = vpop.f32.mrf.mxu0
  %v3304 = vadd.f32 %v3207, %v3303
  %v3305 = vpop.f32.mrf.mxu0
  %3306 = vmatprep.mubr.bf16.mxu0 %v728
  %3307 = vmatmul.mubr.bf16.gmra.mxu0 %v727
  %v3308 = vpop.f32.mrf.mxu0
  %v3309 = vadd.f32 %v3212, %v3308
  %v3310 = vpop.f32.mrf.mxu0
  %v3311 = vpop.f32.mrf.mxu0
  %v3312 = vadd.f32 %v3215, %v3311
  %v3313 = vpop.f32.mrf.mxu0
  %3314 = vmatprep.mubr.bf16.mxu0 %v760
  %3315 = vmatmul.mubr.bf16.gmra.mxu0 %v759
  %v3316 = vpop.f32.mrf.mxu0
  %v3317 = vadd.f32 %v3220, %v3316
  %v3318 = vpop.f32.mrf.mxu0
  %v3319 = vpop.f32.mrf.mxu0
  %v3320 = vadd.f32 %v3223, %v3319
  %v3321 = vpop.f32.mrf.mxu0
  %3322 = vdwg.mxu0
  %3323 = vmatprep.subr.bf16.mxu0 0
  %3324 = vmatpush1.bf16.msra.mxu0 %v2413
  %3325 = vmatprep.subr.bf16.mxu0 0
  %3326 = vmatpush1.bf16.msra.mxu0 %v2412
  %3327 = vmatprep.subr.bf16.mxu0 0
  %3328 = vmatpush1.bf16.msra.mxu0 %v2411
  %3329 = vmatprep.subr.bf16.mxu0 0
  %3330 = vmatpush1.bf16.msra.mxu0 %v2410
  %3331 = vmatprep.subr.bf16.mxu0 0
  %3332 = vmatpush1.bf16.msra.mxu0 %v2409
  %3333 = vmatprep.subr.bf16.mxu0 0
  %3334 = vmatpush1.bf16.msra.mxu0 %v2408
  %3335 = vmatprep.subr.bf16.mxu0 0
  %3336 = vmatpush1.bf16.msra.mxu0 %v2407
  %3337 = vmatprep.subr.bf16.mxu0 0
  %3338 = vmatpush1.bf16.msra.mxu0 %v2406
  %3339 = vmatprep.subr.bf16.mxu0 0
  %3340 = vmatpush2.bf16.msra.mxu0 %v2421
  %3341 = vmatprep.subr.bf16.mxu0 0
  %3342 = vmatpush2.bf16.msra.mxu0 %v2420
  %3343 = vmatprep.subr.bf16.mxu0 0
  %3344 = vmatpush2.bf16.msra.mxu0 %v2419
  %3345 = vmatprep.subr.bf16.mxu0 0
  %3346 = vmatpush2.bf16.msra.mxu0 %v2418
  %3347 = vmatprep.subr.bf16.mxu0 0
  %3348 = vmatpush2.bf16.msra.mxu0 %v2417
  %3349 = vmatprep.subr.bf16.mxu0 0
  %3350 = vmatpush2.bf16.msra.mxu0 %v2416
  %3351 = vmatprep.subr.bf16.mxu0 0
  %3352 = vmatpush2.bf16.msra.mxu0 %v2415
  %3353 = vmatprep.subr.bf16.mxu0 0
  %3354 = vmatpush2.bf16.msra.mxu0 %v2414
  %3355 = vmatprep.mubr.bf16.mxu0 %v538
  %3356 = vmatmul.mubr.bf16.gmra.mxu0 %v537
  %v3357 = vpop.f32.mrf.mxu0
  %v3358 = vadd.f32 %v3261, %v3357
  %v3359 = vpop.f32.mrf.mxu0
  %v3360 = vpop.f32.mrf.mxu0
  %v3361 = vadd.f32 %v3264, %v3360
  %v3362 = vpop.f32.mrf.mxu0
  %3363 = vmatprep.mubr.bf16.mxu0 %v570
  %3364 = vmatmul.mubr.bf16.gmra.mxu0 %v569
  %v3365 = vpop.f32.mrf.mxu0
  %v3366 = vadd.f32 %v3269, %v3365
  %v3367 = vpop.f32.mrf.mxu0
  %v3368 = vpop.f32.mrf.mxu0
  %v3369 = vadd.f32 %v3272, %v3368
  %v3370 = vpop.f32.mrf.mxu0
  %3371 = vmatprep.mubr.bf16.mxu0 %v602
  %3372 = vmatmul.mubr.bf16.gmra.mxu0 %v601
  %v3373 = vpop.f32.mrf.mxu0
  %v3374 = vadd.f32 %v3277, %v3373
  %v3375 = vpop.f32.mrf.mxu0
  %v3376 = vpop.f32.mrf.mxu0
  %v3377 = vadd.f32 %v3280, %v3376
  %v3378 = vpop.f32.mrf.mxu0
  %3379 = vmatprep.mubr.bf16.mxu0 %v634
  %3380 = vmatmul.mubr.bf16.gmra.mxu0 %v633
  %v3381 = vpop.f32.mrf.mxu0
  %v3382 = vadd.f32 %v3285, %v3381
  %v3383 = vpop.f32.mrf.mxu0
  %v3384 = vpop.f32.mrf.mxu0
  %v3385 = vadd.f32 %v3288, %v3384
  %v3386 = vpop.f32.mrf.mxu0
  %3387 = vmatprep.mubr.bf16.mxu0 %v666
  %3388 = vmatmul.mubr.bf16.gmra.mxu0 %v665
  %v3389 = vpop.f32.mrf.mxu0
  %v3390 = vadd.f32 %v3293, %v3389
  %v3391 = vpop.f32.mrf.mxu0
  %v3392 = vpop.f32.mrf.mxu0
  %v3393 = vadd.f32 %v3296, %v3392
  %v3394 = vpop.f32.mrf.mxu0
  %3395 = vmatprep.mubr.bf16.mxu0 %v698
  %3396 = vmatmul.mubr.bf16.gmra.mxu0 %v697
  %v3397 = vpop.f32.mrf.mxu0
  %v3398 = vadd.f32 %v3301, %v3397
  %v3399 = vpop.f32.mrf.mxu0
  %v3400 = vpop.f32.mrf.mxu0
  %v3401 = vadd.f32 %v3304, %v3400
  %v3402 = vpop.f32.mrf.mxu0
  %3403 = vmatprep.mubr.bf16.mxu0 %v730
  %3404 = vmatmul.mubr.bf16.gmra.mxu0 %v729
  %v3405 = vpop.f32.mrf.mxu0
  %v3406 = vadd.f32 %v3309, %v3405
  %v3407 = vpop.f32.mrf.mxu0
  %v3408 = vpop.f32.mrf.mxu0
  %v3409 = vadd.f32 %v3312, %v3408
  %v3410 = vpop.f32.mrf.mxu0
  %3411 = vmatprep.mubr.bf16.mxu0 %v762
  %3412 = vmatmul.mubr.bf16.gmra.mxu0 %v761
  %v3413 = vpop.f32.mrf.mxu0
  %v3414 = vadd.f32 %v3317, %v3413
  %v3415 = vpop.f32.mrf.mxu0
  %v3416 = vpop.f32.mrf.mxu0
  %v3417 = vadd.f32 %v3320, %v3416
  %v3418 = vpop.f32.mrf.mxu0
  %3419 = vdwg.mxu0
  %3420 = vmatprep.subr.bf16.mxu0 0
  %3421 = vmatpush1.bf16.msra.mxu0 %v2429
  %3422 = vmatprep.subr.bf16.mxu0 0
  %3423 = vmatpush1.bf16.msra.mxu0 %v2428
  %3424 = vmatprep.subr.bf16.mxu0 0
  %3425 = vmatpush1.bf16.msra.mxu0 %v2427
  %3426 = vmatprep.subr.bf16.mxu0 0
  %3427 = vmatpush1.bf16.msra.mxu0 %v2426
  %3428 = vmatprep.subr.bf16.mxu0 0
  %3429 = vmatpush1.bf16.msra.mxu0 %v2425
  %3430 = vmatprep.subr.bf16.mxu0 0
  %3431 = vmatpush1.bf16.msra.mxu0 %v2424
  %3432 = vmatprep.subr.bf16.mxu0 0
  %3433 = vmatpush1.bf16.msra.mxu0 %v2423
  %3434 = vmatprep.subr.bf16.mxu0 0
  %3435 = vmatpush1.bf16.msra.mxu0 %v2422
  %3436 = vmatprep.subr.bf16.mxu0 0
  %3437 = vmatpush2.bf16.msra.mxu0 %v2437
  %3438 = vmatprep.subr.bf16.mxu0 0
  %3439 = vmatpush2.bf16.msra.mxu0 %v2436
  %3440 = vmatprep.subr.bf16.mxu0 0
  %3441 = vmatpush2.bf16.msra.mxu0 %v2435
  %3442 = vmatprep.subr.bf16.mxu0 0
  %3443 = vmatpush2.bf16.msra.mxu0 %v2434
  %3444 = vmatprep.subr.bf16.mxu0 0
  %3445 = vmatpush2.bf16.msra.mxu0 %v2433
  %3446 = vmatprep.subr.bf16.mxu0 0
  %3447 = vmatpush2.bf16.msra.mxu0 %v2432
  %3448 = vmatprep.subr.bf16.mxu0 0
  %3449 = vmatpush2.bf16.msra.mxu0 %v2431
  %3450 = vmatprep.subr.bf16.mxu0 0
  %3451 = vmatpush2.bf16.msra.mxu0 %v2430
  %3452 = vmatprep.mubr.bf16.mxu0 %v540
  %3453 = vmatmul.mubr.bf16.gmra.mxu0 %v539
  %v3454 = vpop.f32.mrf.mxu0
  %v3455 = vadd.f32 %v3358, %v3454
  %v3456 = vpop.f32.mrf.mxu0
  %v3457 = vpop.f32.mrf.mxu0
  %v3458 = vadd.f32 %v3361, %v3457
  %v3459 = vpop.f32.mrf.mxu0
  %3460 = vmatprep.mubr.bf16.mxu0 %v572
  %3461 = vmatmul.mubr.bf16.gmra.mxu0 %v571
  %v3462 = vpop.f32.mrf.mxu0
  %v3463 = vadd.f32 %v3366, %v3462
  %v3464 = vpop.f32.mrf.mxu0
  %v3465 = vpop.f32.mrf.mxu0
  %v3466 = vadd.f32 %v3369, %v3465
  %v3467 = vpop.f32.mrf.mxu0
  %3468 = vmatprep.mubr.bf16.mxu0 %v604
  %3469 = vmatmul.mubr.bf16.gmra.mxu0 %v603
  %v3470 = vpop.f32.mrf.mxu0
  %v3471 = vadd.f32 %v3374, %v3470
  %v3472 = vpop.f32.mrf.mxu0
  %v3473 = vpop.f32.mrf.mxu0
  %v3474 = vadd.f32 %v3377, %v3473
  %v3475 = vpop.f32.mrf.mxu0
  %3476 = vmatprep.mubr.bf16.mxu0 %v636
  %3477 = vmatmul.mubr.bf16.gmra.mxu0 %v635
  %v3478 = vpop.f32.mrf.mxu0
  %v3479 = vadd.f32 %v3382, %v3478
  %v3480 = vpop.f32.mrf.mxu0
  %v3481 = vpop.f32.mrf.mxu0
  %v3482 = vadd.f32 %v3385, %v3481
  %v3483 = vpop.f32.mrf.mxu0
  %3484 = vmatprep.mubr.bf16.mxu0 %v668
  %3485 = vmatmul.mubr.bf16.gmra.mxu0 %v667
  %v3486 = vpop.f32.mrf.mxu0
  %v3487 = vadd.f32 %v3390, %v3486
  %v3488 = vpop.f32.mrf.mxu0
  %v3489 = vpop.f32.mrf.mxu0
  %v3490 = vadd.f32 %v3393, %v3489
  %v3491 = vpop.f32.mrf.mxu0
  %3492 = vmatprep.mubr.bf16.mxu0 %v700
  %3493 = vmatmul.mubr.bf16.gmra.mxu0 %v699
  %v3494 = vpop.f32.mrf.mxu0
  %v3495 = vadd.f32 %v3398, %v3494
  %v3496 = vpop.f32.mrf.mxu0
  %v3497 = vpop.f32.mrf.mxu0
  %v3498 = vadd.f32 %v3401, %v3497
  %v3499 = vpop.f32.mrf.mxu0
  %3500 = vmatprep.mubr.bf16.mxu0 %v732
  %3501 = vmatmul.mubr.bf16.gmra.mxu0 %v731
  %v3502 = vpop.f32.mrf.mxu0
  %v3503 = vadd.f32 %v3406, %v3502
  %v3504 = vpop.f32.mrf.mxu0
  %v3505 = vpop.f32.mrf.mxu0
  %v3506 = vadd.f32 %v3409, %v3505
  %v3507 = vpop.f32.mrf.mxu0
  %3508 = vmatprep.mubr.bf16.mxu0 %v764
  %3509 = vmatmul.mubr.bf16.gmra.mxu0 %v763
  %v3510 = vpop.f32.mrf.mxu0
  %v3511 = vadd.f32 %v3414, %v3510
  %v3512 = vpop.f32.mrf.mxu0
  %v3513 = vpop.f32.mrf.mxu0
  %v3514 = vadd.f32 %v3417, %v3513
  %v3515 = vpop.f32.mrf.mxu0
  %3516 = vdwg.mxu0
  %3517 = vmatprep.subr.bf16.mxu0 0
  %3518 = vmatpush1.bf16.msra.mxu0 %v2445
  %3519 = vmatprep.subr.bf16.mxu0 0
  %3520 = vmatpush1.bf16.msra.mxu0 %v2444
  %3521 = vmatprep.subr.bf16.mxu0 0
  %3522 = vmatpush1.bf16.msra.mxu0 %v2443
  %3523 = vmatprep.subr.bf16.mxu0 0
  %3524 = vmatpush1.bf16.msra.mxu0 %v2442
  %3525 = vmatprep.subr.bf16.mxu0 0
  %3526 = vmatpush1.bf16.msra.mxu0 %v2441
  %3527 = vmatprep.subr.bf16.mxu0 0
  %3528 = vmatpush1.bf16.msra.mxu0 %v2440
  %3529 = vmatprep.subr.bf16.mxu0 0
  %3530 = vmatpush1.bf16.msra.mxu0 %v2439
  %3531 = vmatprep.subr.bf16.mxu0 0
  %3532 = vmatpush1.bf16.msra.mxu0 %v2438
  %3533 = vmatprep.subr.bf16.mxu0 0
  %3534 = vmatpush2.bf16.msra.mxu0 %v2453
  %3535 = vmatprep.subr.bf16.mxu0 0
  %3536 = vmatpush2.bf16.msra.mxu0 %v2452
  %3537 = vmatprep.subr.bf16.mxu0 0
  %3538 = vmatpush2.bf16.msra.mxu0 %v2451
  %3539 = vmatprep.subr.bf16.mxu0 0
  %3540 = vmatpush2.bf16.msra.mxu0 %v2450
  %3541 = vmatprep.subr.bf16.mxu0 0
  %3542 = vmatpush2.bf16.msra.mxu0 %v2449
  %3543 = vmatprep.subr.bf16.mxu0 0
  %3544 = vmatpush2.bf16.msra.mxu0 %v2448
  %3545 = vmatprep.subr.bf16.mxu0 0
  %3546 = vmatpush2.bf16.msra.mxu0 %v2447
  %3547 = vmatprep.subr.bf16.mxu0 0
  %3548 = vmatpush2.bf16.msra.mxu0 %v2446
  %3549 = vmatprep.mubr.bf16.mxu0 %v542
  %3550 = vmatmul.mubr.bf16.gmra.mxu0 %v541
  %v3551 = vpop.f32.mrf.mxu0
  %v3552 = vadd.f32 %v3455, %v3551
  %v3553 = vpop.f32.mrf.mxu0
  %v3554 = vpop.f32.mrf.mxu0
  %v3555 = vadd.f32 %v3458, %v3554
  %v3556 = vpop.f32.mrf.mxu0
  %3557 = vmatprep.mubr.bf16.mxu0 %v574
  %3558 = vmatmul.mubr.bf16.gmra.mxu0 %v573
  %v3559 = vpop.f32.mrf.mxu0
  %v3560 = vadd.f32 %v3463, %v3559
  %v3561 = vpop.f32.mrf.mxu0
  %v3562 = vpop.f32.mrf.mxu0
  %v3563 = vadd.f32 %v3466, %v3562
  %v3564 = vpop.f32.mrf.mxu0
  %3565 = vmatprep.mubr.bf16.mxu0 %v606
  %3566 = vmatmul.mubr.bf16.gmra.mxu0 %v605
  %v3567 = vpop.f32.mrf.mxu0
  %v3568 = vadd.f32 %v3471, %v3567
  %v3569 = vpop.f32.mrf.mxu0
  %v3570 = vpop.f32.mrf.mxu0
  %v3571 = vadd.f32 %v3474, %v3570
  %v3572 = vpop.f32.mrf.mxu0
  %3573 = vmatprep.mubr.bf16.mxu0 %v638
  %3574 = vmatmul.mubr.bf16.gmra.mxu0 %v637
  %v3575 = vpop.f32.mrf.mxu0
  %v3576 = vadd.f32 %v3479, %v3575
  %v3577 = vpop.f32.mrf.mxu0
  %v3578 = vpop.f32.mrf.mxu0
  %v3579 = vadd.f32 %v3482, %v3578
  %v3580 = vpop.f32.mrf.mxu0
  %3581 = vmatprep.mubr.bf16.mxu0 %v670
  %3582 = vmatmul.mubr.bf16.gmra.mxu0 %v669
  %v3583 = vpop.f32.mrf.mxu0
  %v3584 = vadd.f32 %v3487, %v3583
  %v3585 = vpop.f32.mrf.mxu0
  %v3586 = vpop.f32.mrf.mxu0
  %v3587 = vadd.f32 %v3490, %v3586
  %v3588 = vpop.f32.mrf.mxu0
  %3589 = vmatprep.mubr.bf16.mxu0 %v702
  %3590 = vmatmul.mubr.bf16.gmra.mxu0 %v701
  %v3591 = vpop.f32.mrf.mxu0
  %v3592 = vadd.f32 %v3495, %v3591
  %v3593 = vpop.f32.mrf.mxu0
  %v3594 = vpop.f32.mrf.mxu0
  %v3595 = vadd.f32 %v3498, %v3594
  %v3596 = vpop.f32.mrf.mxu0
  %3597 = vmatprep.mubr.bf16.mxu0 %v734
  %3598 = vmatmul.mubr.bf16.gmra.mxu0 %v733
  %v3599 = vpop.f32.mrf.mxu0
  %v3600 = vadd.f32 %v3503, %v3599
  %v3601 = vpop.f32.mrf.mxu0
  %v3602 = vpop.f32.mrf.mxu0
  %v3603 = vadd.f32 %v3506, %v3602
  %v3604 = vpop.f32.mrf.mxu0
  %3605 = vmatprep.mubr.bf16.mxu0 %v766
  %3606 = vmatmul.mubr.bf16.gmra.mxu0 %v765
  %v3607 = vpop.f32.mrf.mxu0
  %v3608 = vadd.f32 %v3511, %v3607
  %v3609 = vpop.f32.mrf.mxu0
  %v3610 = vpop.f32.mrf.mxu0
  %v3611 = vadd.f32 %v3514, %v3610
  %v3612 = vpop.f32.mrf.mxu0
  %3613 = vdwg.mxu0
  %3614 = vmatprep.subr.bf16.mxu0 0
  %3615 = vmatpush1.bf16.msra.mxu0 %v2461
  %3616 = vmatprep.subr.bf16.mxu0 0
  %3617 = vmatpush1.bf16.msra.mxu0 %v2460
  %3618 = vmatprep.subr.bf16.mxu0 0
  %3619 = vmatpush1.bf16.msra.mxu0 %v2459
  %3620 = vmatprep.subr.bf16.mxu0 0
  %3621 = vmatpush1.bf16.msra.mxu0 %v2458
  %3622 = vmatprep.subr.bf16.mxu0 0
  %3623 = vmatpush1.bf16.msra.mxu0 %v2457
  %3624 = vmatprep.subr.bf16.mxu0 0
  %3625 = vmatpush1.bf16.msra.mxu0 %v2456
  %3626 = vmatprep.subr.bf16.mxu0 0
  %3627 = vmatpush1.bf16.msra.mxu0 %v2455
  %3628 = vmatprep.subr.bf16.mxu0 0
  %3629 = vmatpush1.bf16.msra.mxu0 %v2454
  %3630 = vmatprep.subr.bf16.mxu0 0
  %3631 = vmatpush2.bf16.msra.mxu0 %v2469
  %3632 = vmatprep.subr.bf16.mxu0 0
  %3633 = vmatpush2.bf16.msra.mxu0 %v2468
  %3634 = vmatprep.subr.bf16.mxu0 0
  %3635 = vmatpush2.bf16.msra.mxu0 %v2467
  %3636 = vmatprep.subr.bf16.mxu0 0
  %3637 = vmatpush2.bf16.msra.mxu0 %v2466
  %3638 = vmatprep.subr.bf16.mxu0 0
  %3639 = vmatpush2.bf16.msra.mxu0 %v2465
  %3640 = vmatprep.subr.bf16.mxu0 0
  %3641 = vmatpush2.bf16.msra.mxu0 %v2464
  %3642 = vmatprep.subr.bf16.mxu0 0
  %3643 = vmatpush2.bf16.msra.mxu0 %v2463
  %3644 = vmatprep.subr.bf16.mxu0 0
  %3645 = vmatpush2.bf16.msra.mxu0 %v2462
  %3646 = vmatprep.mubr.bf16.mxu0 %v544
  %3647 = vmatmul.mubr.bf16.gmra.mxu0 %v543
  %v3648 = vpop.f32.mrf.mxu0
  %v3649 = vadd.f32 %v3552, %v3648
  %v3650 = vpop.f32.mrf.mxu0
  %v3651 = vpop.f32.mrf.mxu0
  %v3652 = vadd.f32 %v3555, %v3651
  %v3653 = vpop.f32.mrf.mxu0
  %3654 = vmatprep.mubr.bf16.mxu0 %v576
  %3655 = vmatmul.mubr.bf16.gmra.mxu0 %v575
  %v3656 = vpop.f32.mrf.mxu0
  %v3657 = vadd.f32 %v3560, %v3656
  %v3658 = vpop.f32.mrf.mxu0
  %v3659 = vpop.f32.mrf.mxu0
  %v3660 = vadd.f32 %v3563, %v3659
  %v3661 = vpop.f32.mrf.mxu0
  %3662 = vmatprep.mubr.bf16.mxu0 %v608
  %3663 = vmatmul.mubr.bf16.gmra.mxu0 %v607
  %v3664 = vpop.f32.mrf.mxu0
  %v3665 = vadd.f32 %v3568, %v3664
  %v3666 = vpop.f32.mrf.mxu0
  %v3667 = vpop.f32.mrf.mxu0
  %v3668 = vadd.f32 %v3571, %v3667
  %v3669 = vpop.f32.mrf.mxu0
  %3670 = vmatprep.mubr.bf16.mxu0 %v640
  %3671 = vmatmul.mubr.bf16.gmra.mxu0 %v639
  %v3672 = vpop.f32.mrf.mxu0
  %v3673 = vadd.f32 %v3576, %v3672
  %v3674 = vpop.f32.mrf.mxu0
  %v3675 = vpop.f32.mrf.mxu0
  %v3676 = vadd.f32 %v3579, %v3675
  %v3677 = vpop.f32.mrf.mxu0
  %3678 = vmatprep.mubr.bf16.mxu0 %v672
  %3679 = vmatmul.mubr.bf16.gmra.mxu0 %v671
  %v3680 = vpop.f32.mrf.mxu0
  %v3681 = vadd.f32 %v3584, %v3680
  %v3682 = vpop.f32.mrf.mxu0
  %v3683 = vpop.f32.mrf.mxu0
  %v3684 = vadd.f32 %v3587, %v3683
  %v3685 = vpop.f32.mrf.mxu0
  %3686 = vmatprep.mubr.bf16.mxu0 %v704
  %3687 = vmatmul.mubr.bf16.gmra.mxu0 %v703
  %v3688 = vpop.f32.mrf.mxu0
  %v3689 = vadd.f32 %v3592, %v3688
  %v3690 = vpop.f32.mrf.mxu0
  %v3691 = vpop.f32.mrf.mxu0
  %v3692 = vadd.f32 %v3595, %v3691
  %v3693 = vpop.f32.mrf.mxu0
  %3694 = vmatprep.mubr.bf16.mxu0 %v736
  %3695 = vmatmul.mubr.bf16.gmra.mxu0 %v735
  %v3696 = vpop.f32.mrf.mxu0
  %v3697 = vadd.f32 %v3600, %v3696
  %v3698 = vpop.f32.mrf.mxu0
  %v3699 = vpop.f32.mrf.mxu0
  %v3700 = vadd.f32 %v3603, %v3699
  %v3701 = vpop.f32.mrf.mxu0
  %3702 = vmatprep.mubr.bf16.mxu0 %v768
  %3703 = vmatmul.mubr.bf16.gmra.mxu0 %v767
  %v3704 = vpop.f32.mrf.mxu0
  %v3705 = vadd.f32 %v3608, %v3704
  %v3706 = vpop.f32.mrf.mxu0
  %v3707 = vpop.f32.mrf.mxu0
  %v3708 = vadd.f32 %v3611, %v3707
  %v3709 = vpop.f32.mrf.mxu0
  %3710 = vdwg.mxu0
  %3711 = vmatprep.subr.bf16.mxu0 0
  %3712 = vmatpush1.bf16.msra.mxu0 %v2477
  %3713 = vmatprep.subr.bf16.mxu0 0
  %3714 = vmatpush1.bf16.msra.mxu0 %v2476
  %3715 = vmatprep.subr.bf16.mxu0 0
  %3716 = vmatpush1.bf16.msra.mxu0 %v2475
  %3717 = vmatprep.subr.bf16.mxu0 0
  %3718 = vmatpush1.bf16.msra.mxu0 %v2474
  %3719 = vmatprep.subr.bf16.mxu0 0
  %3720 = vmatpush1.bf16.msra.mxu0 %v2473
  %3721 = vmatprep.subr.bf16.mxu0 0
  %3722 = vmatpush1.bf16.msra.mxu0 %v2472
  %3723 = vmatprep.subr.bf16.mxu0 0
  %3724 = vmatpush1.bf16.msra.mxu0 %v2471
  %3725 = vmatprep.subr.bf16.mxu0 0
  %3726 = vmatpush1.bf16.msra.mxu0 %v2470
  %3727 = vmatprep.subr.bf16.mxu0 0
  %3728 = vmatpush2.bf16.msra.mxu0 %v2485
  %3729 = vmatprep.subr.bf16.mxu0 0
  %3730 = vmatpush2.bf16.msra.mxu0 %v2484
  %3731 = vmatprep.subr.bf16.mxu0 0
  %3732 = vmatpush2.bf16.msra.mxu0 %v2483
  %3733 = vmatprep.subr.bf16.mxu0 0
  %3734 = vmatpush2.bf16.msra.mxu0 %v2482
  %3735 = vmatprep.subr.bf16.mxu0 0
  %3736 = vmatpush2.bf16.msra.mxu0 %v2481
  %3737 = vmatprep.subr.bf16.mxu0 0
  %3738 = vmatpush2.bf16.msra.mxu0 %v2480
  %3739 = vmatprep.subr.bf16.mxu0 0
  %3740 = vmatpush2.bf16.msra.mxu0 %v2479
  %3741 = vmatprep.subr.bf16.mxu0 0
  %3742 = vmatpush2.bf16.msra.mxu0 %v2478
  %3743 = vmatprep.mubr.bf16.mxu0 %v546
  %3744 = vmatmul.mubr.bf16.gmra.mxu0 %v545
  %v3745 = vpop.f32.mrf.mxu0
  %v3746 = vadd.f32 %v3649, %v3745
  %v3747 = vpop.f32.mrf.mxu0
  %v3748 = vpop.f32.mrf.mxu0
  %v3749 = vadd.f32 %v3652, %v3748
  %v3750 = vpop.f32.mrf.mxu0
  %3751 = vmatprep.mubr.bf16.mxu0 %v578
  %3752 = vmatmul.mubr.bf16.gmra.mxu0 %v577
  %v3753 = vpop.f32.mrf.mxu0
  %v3754 = vadd.f32 %v3657, %v3753
  %v3755 = vpop.f32.mrf.mxu0
  %v3756 = vpop.f32.mrf.mxu0
  %v3757 = vadd.f32 %v3660, %v3756
  %v3758 = vpop.f32.mrf.mxu0
  %3759 = vmatprep.mubr.bf16.mxu0 %v610
  %3760 = vmatmul.mubr.bf16.gmra.mxu0 %v609
  %v3761 = vpop.f32.mrf.mxu0
  %v3762 = vadd.f32 %v3665, %v3761
  %v3763 = vpop.f32.mrf.mxu0
  %v3764 = vpop.f32.mrf.mxu0
  %v3765 = vadd.f32 %v3668, %v3764
  %v3766 = vpop.f32.mrf.mxu0
  %3767 = vmatprep.mubr.bf16.mxu0 %v642
  %3768 = vmatmul.mubr.bf16.gmra.mxu0 %v641
  %v3769 = vpop.f32.mrf.mxu0
  %v3770 = vadd.f32 %v3673, %v3769
  %v3771 = vpop.f32.mrf.mxu0
  %v3772 = vpop.f32.mrf.mxu0
  %v3773 = vadd.f32 %v3676, %v3772
  %v3774 = vpop.f32.mrf.mxu0
  %3775 = vmatprep.mubr.bf16.mxu0 %v674
  %3776 = vmatmul.mubr.bf16.gmra.mxu0 %v673
  %v3777 = vpop.f32.mrf.mxu0
  %v3778 = vadd.f32 %v3681, %v3777
  %v3779 = vpop.f32.mrf.mxu0
  %v3780 = vpop.f32.mrf.mxu0
  %v3781 = vadd.f32 %v3684, %v3780
  %v3782 = vpop.f32.mrf.mxu0
  %3783 = vmatprep.mubr.bf16.mxu0 %v706
  %3784 = vmatmul.mubr.bf16.gmra.mxu0 %v705
  %v3785 = vpop.f32.mrf.mxu0
  %v3786 = vadd.f32 %v3689, %v3785
  %v3787 = vpop.f32.mrf.mxu0
  %v3788 = vpop.f32.mrf.mxu0
  %v3789 = vadd.f32 %v3692, %v3788
  %v3790 = vpop.f32.mrf.mxu0
  %3791 = vmatprep.mubr.bf16.mxu0 %v738
  %3792 = vmatmul.mubr.bf16.gmra.mxu0 %v737
  %v3793 = vpop.f32.mrf.mxu0
  %v3794 = vadd.f32 %v3697, %v3793
  %v3795 = vpop.f32.mrf.mxu0
  %v3796 = vpop.f32.mrf.mxu0
  %v3797 = vadd.f32 %v3700, %v3796
  %v3798 = vpop.f32.mrf.mxu0
  %3799 = vmatprep.mubr.bf16.mxu0 %v770
  %3800 = vmatmul.mubr.bf16.gmra.mxu0 %v769
  %v3801 = vpop.f32.mrf.mxu0
  %v3802 = vadd.f32 %v3705, %v3801
  %v3803 = vpop.f32.mrf.mxu0
  %v3804 = vpop.f32.mrf.mxu0
  %v3805 = vadd.f32 %v3708, %v3804
  %v3806 = vpop.f32.mrf.mxu0
  %3807 = vdwg.mxu0
  %3808 = vmatprep.subr.bf16.mxu0 0
  %3809 = vmatpush1.bf16.msra.mxu0 %v2493
  %3810 = vmatprep.subr.bf16.mxu0 0
  %3811 = vmatpush1.bf16.msra.mxu0 %v2492
  %3812 = vmatprep.subr.bf16.mxu0 0
  %3813 = vmatpush1.bf16.msra.mxu0 %v2491
  %3814 = vmatprep.subr.bf16.mxu0 0
  %3815 = vmatpush1.bf16.msra.mxu0 %v2490
  %3816 = vmatprep.subr.bf16.mxu0 0
  %3817 = vmatpush1.bf16.msra.mxu0 %v2489
  %3818 = vmatprep.subr.bf16.mxu0 0
  %3819 = vmatpush1.bf16.msra.mxu0 %v2488
  %3820 = vmatprep.subr.bf16.mxu0 0
  %3821 = vmatpush1.bf16.msra.mxu0 %v2487
  %3822 = vmatprep.subr.bf16.mxu0 0
  %3823 = vmatpush1.bf16.msra.mxu0 %v2486
  %3824 = vmatprep.subr.bf16.mxu0 0
  %3825 = vmatpush2.bf16.msra.mxu0 %v2501
  %3826 = vmatprep.subr.bf16.mxu0 0
  %3827 = vmatpush2.bf16.msra.mxu0 %v2500
  %3828 = vmatprep.subr.bf16.mxu0 0
  %3829 = vmatpush2.bf16.msra.mxu0 %v2499
  %3830 = vmatprep.subr.bf16.mxu0 0
  %3831 = vmatpush2.bf16.msra.mxu0 %v2498
  %3832 = vmatprep.subr.bf16.mxu0 0
  %3833 = vmatpush2.bf16.msra.mxu0 %v2497
  %3834 = vmatprep.subr.bf16.mxu0 0
  %3835 = vmatpush2.bf16.msra.mxu0 %v2496
  %3836 = vmatprep.subr.bf16.mxu0 0
  %3837 = vmatpush2.bf16.msra.mxu0 %v2495
  %3838 = vmatprep.subr.bf16.mxu0 0
  %3839 = vmatpush2.bf16.msra.mxu0 %v2494
  %3840 = vmatprep.mubr.bf16.mxu0 %v548
  %3841 = vmatmul.mubr.bf16.gmra.mxu0 %v547
  %v3842 = vpop.f32.mrf.mxu0
  %v3843 = vadd.f32 %v3746, %v3842
  %v3844 = vpop.f32.mrf.mxu0
  %v3845 = vpop.f32.mrf.mxu0
  %v3846 = vadd.f32 %v3749, %v3845
  %v3847 = vpop.f32.mrf.mxu0
  %3848 = vmatprep.mubr.bf16.mxu0 %v580
  %3849 = vmatmul.mubr.bf16.gmra.mxu0 %v579
  %v3850 = vpop.f32.mrf.mxu0
  %v3851 = vadd.f32 %v3754, %v3850
  %v3852 = vpop.f32.mrf.mxu0
  %v3853 = vpop.f32.mrf.mxu0
  %v3854 = vadd.f32 %v3757, %v3853
  %v3855 = vpop.f32.mrf.mxu0
  %3856 = vmatprep.mubr.bf16.mxu0 %v612
  %3857 = vmatmul.mubr.bf16.gmra.mxu0 %v611
  %v3858 = vpop.f32.mrf.mxu0
  %v3859 = vadd.f32 %v3762, %v3858
  %v3860 = vpop.f32.mrf.mxu0
  %v3861 = vpop.f32.mrf.mxu0
  %v3862 = vadd.f32 %v3765, %v3861
  %v3863 = vpop.f32.mrf.mxu0
  %3864 = vmatprep.mubr.bf16.mxu0 %v644
  %3865 = vmatmul.mubr.bf16.gmra.mxu0 %v643
  %v3866 = vpop.f32.mrf.mxu0
  %v3867 = vadd.f32 %v3770, %v3866
  %v3868 = vpop.f32.mrf.mxu0
  %v3869 = vpop.f32.mrf.mxu0
  %v3870 = vadd.f32 %v3773, %v3869
  %v3871 = vpop.f32.mrf.mxu0
  %3872 = vmatprep.mubr.bf16.mxu0 %v676
  %3873 = vmatmul.mubr.bf16.gmra.mxu0 %v675
  %v3874 = vpop.f32.mrf.mxu0
  %v3875 = vadd.f32 %v3778, %v3874
  %v3876 = vpop.f32.mrf.mxu0
  %v3877 = vpop.f32.mrf.mxu0
  %v3878 = vadd.f32 %v3781, %v3877
  %v3879 = vpop.f32.mrf.mxu0
  %3880 = vmatprep.mubr.bf16.mxu0 %v708
  %3881 = vmatmul.mubr.bf16.gmra.mxu0 %v707
  %v3882 = vpop.f32.mrf.mxu0
  %v3883 = vadd.f32 %v3786, %v3882
  %v3884 = vpop.f32.mrf.mxu0
  %v3885 = vpop.f32.mrf.mxu0
  %v3886 = vadd.f32 %v3789, %v3885
  %v3887 = vpop.f32.mrf.mxu0
  %3888 = vmatprep.mubr.bf16.mxu0 %v740
  %3889 = vmatmul.mubr.bf16.gmra.mxu0 %v739
  %v3890 = vpop.f32.mrf.mxu0
  %v3891 = vadd.f32 %v3794, %v3890
  %v3892 = vpop.f32.mrf.mxu0
  %v3893 = vpop.f32.mrf.mxu0
  %v3894 = vadd.f32 %v3797, %v3893
  %v3895 = vpop.f32.mrf.mxu0
  %3896 = vmatprep.mubr.bf16.mxu0 %v772
  %3897 = vmatmul.mubr.bf16.gmra.mxu0 %v771
  %v3898 = vpop.f32.mrf.mxu0
  %v3899 = vadd.f32 %v3802, %v3898
  %v3900 = vpop.f32.mrf.mxu0
  %v3901 = vpop.f32.mrf.mxu0
  %v3902 = vadd.f32 %v3805, %v3901
  %v3903 = vpop.f32.mrf.mxu0
  %3904 = vdwg.mxu0
  %3905 = vmatprep.subr.bf16.mxu0 0
  %3906 = vmatpush1.bf16.msra.mxu0 %v2509
  %3907 = vmatprep.subr.bf16.mxu0 0
  %3908 = vmatpush1.bf16.msra.mxu0 %v2508
  %3909 = vmatprep.subr.bf16.mxu0 0
  %3910 = vmatpush1.bf16.msra.mxu0 %v2507
  %3911 = vmatprep.subr.bf16.mxu0 0
  %3912 = vmatpush1.bf16.msra.mxu0 %v2506
  %3913 = vmatprep.subr.bf16.mxu0 0
  %3914 = vmatpush1.bf16.msra.mxu0 %v2505
  %3915 = vmatprep.subr.bf16.mxu0 0
  %3916 = vmatpush1.bf16.msra.mxu0 %v2504
  %3917 = vmatprep.subr.bf16.mxu0 0
  %3918 = vmatpush1.bf16.msra.mxu0 %v2503
  %3919 = vmatprep.subr.bf16.mxu0 0
  %3920 = vmatpush1.bf16.msra.mxu0 %v2502
  %3921 = vmatprep.subr.bf16.mxu0 0
  %3922 = vmatpush2.bf16.msra.mxu0 %v2517
  %3923 = vmatprep.subr.bf16.mxu0 0
  %3924 = vmatpush2.bf16.msra.mxu0 %v2516
  %3925 = vmatprep.subr.bf16.mxu0 0
  %3926 = vmatpush2.bf16.msra.mxu0 %v2515
  %3927 = vmatprep.subr.bf16.mxu0 0
  %3928 = vmatpush2.bf16.msra.mxu0 %v2514
  %3929 = vmatprep.subr.bf16.mxu0 0
  %3930 = vmatpush2.bf16.msra.mxu0 %v2513
  %3931 = vmatprep.subr.bf16.mxu0 0
  %3932 = vmatpush2.bf16.msra.mxu0 %v2512
  %3933 = vmatprep.subr.bf16.mxu0 0
  %3934 = vmatpush2.bf16.msra.mxu0 %v2511
  %3935 = vmatprep.subr.bf16.mxu0 0
  %3936 = vmatpush2.bf16.msra.mxu0 %v2510
  %3937 = vmatprep.mubr.bf16.mxu0 %v550
  %3938 = vmatmul.mubr.bf16.gmra.mxu0 %v549
  %v3939 = vpop.f32.mrf.mxu0
  %v3940 = vadd.f32 %v3843, %v3939
  %v3941 = vpop.f32.mrf.mxu0
  %v3942 = vpop.f32.mrf.mxu0
  %v3943 = vadd.f32 %v3846, %v3942
  %v3944 = vpop.f32.mrf.mxu0
  %3945 = vmatprep.mubr.bf16.mxu0 %v582
  %3946 = vmatmul.mubr.bf16.gmra.mxu0 %v581
  %v3947 = vpop.f32.mrf.mxu0
  %v3948 = vadd.f32 %v3851, %v3947
  %v3949 = vpop.f32.mrf.mxu0
  %v3950 = vpop.f32.mrf.mxu0
  %v3951 = vadd.f32 %v3854, %v3950
  %v3952 = vpop.f32.mrf.mxu0
  %3953 = vmatprep.mubr.bf16.mxu0 %v614
  %3954 = vmatmul.mubr.bf16.gmra.mxu0 %v613
  %v3955 = vpop.f32.mrf.mxu0
  %v3956 = vadd.f32 %v3859, %v3955
  %v3957 = vpop.f32.mrf.mxu0
  %v3958 = vpop.f32.mrf.mxu0
  %v3959 = vadd.f32 %v3862, %v3958
  %v3960 = vpop.f32.mrf.mxu0
  %3961 = vmatprep.mubr.bf16.mxu0 %v646
  %3962 = vmatmul.mubr.bf16.gmra.mxu0 %v645
  %v3963 = vpop.f32.mrf.mxu0
  %v3964 = vadd.f32 %v3867, %v3963
  %v3965 = vpop.f32.mrf.mxu0
  %v3966 = vpop.f32.mrf.mxu0
  %v3967 = vadd.f32 %v3870, %v3966
  %v3968 = vpop.f32.mrf.mxu0
  %3969 = vmatprep.mubr.bf16.mxu0 %v678
  %3970 = vmatmul.mubr.bf16.gmra.mxu0 %v677
  %v3971 = vpop.f32.mrf.mxu0
  %v3972 = vadd.f32 %v3875, %v3971
  %v3973 = vpop.f32.mrf.mxu0
  %v3974 = vpop.f32.mrf.mxu0
  %v3975 = vadd.f32 %v3878, %v3974
  %v3976 = vpop.f32.mrf.mxu0
  %3977 = vmatprep.mubr.bf16.mxu0 %v710
  %3978 = vmatmul.mubr.bf16.gmra.mxu0 %v709
  %v3979 = vpop.f32.mrf.mxu0
  %v3980 = vadd.f32 %v3883, %v3979
  %v3981 = vpop.f32.mrf.mxu0
  %v3982 = vpop.f32.mrf.mxu0
  %v3983 = vadd.f32 %v3886, %v3982
  %v3984 = vpop.f32.mrf.mxu0
  %3985 = vmatprep.mubr.bf16.mxu0 %v742
  %3986 = vmatmul.mubr.bf16.gmra.mxu0 %v741
  %v3987 = vpop.f32.mrf.mxu0
  %v3988 = vadd.f32 %v3891, %v3987
  %v3989 = vpop.f32.mrf.mxu0
  %v3990 = vpop.f32.mrf.mxu0
  %v3991 = vadd.f32 %v3894, %v3990
  %v3992 = vpop.f32.mrf.mxu0
  %3993 = vmatprep.mubr.bf16.mxu0 %v774
  %3994 = vmatmul.mubr.bf16.gmra.mxu0 %v773
  %v3995 = vpop.f32.mrf.mxu0
  %v3996 = vadd.f32 %v3899, %v3995
  %v3997 = vpop.f32.mrf.mxu0
  %v3998 = vpop.f32.mrf.mxu0
  %v3999 = vadd.f32 %v3902, %v3998
  %v4000 = vpop.f32.mrf.mxu0
  %4001 = vdwg.mxu0
  %4002 = vmatprep.subr.bf16.mxu0 0
  %4003 = vmatpush1.bf16.msra.mxu0 %v2525
  %4004 = vmatprep.subr.bf16.mxu0 0
  %4005 = vmatpush1.bf16.msra.mxu0 %v2524
  %4006 = vmatprep.subr.bf16.mxu0 0
  %4007 = vmatpush1.bf16.msra.mxu0 %v2523
  %4008 = vmatprep.subr.bf16.mxu0 0
  %4009 = vmatpush1.bf16.msra.mxu0 %v2522
  %4010 = vmatprep.subr.bf16.mxu0 0
  %4011 = vmatpush1.bf16.msra.mxu0 %v2521
  %4012 = vmatprep.subr.bf16.mxu0 0
  %4013 = vmatpush1.bf16.msra.mxu0 %v2520
  %4014 = vmatprep.subr.bf16.mxu0 0
  %4015 = vmatpush1.bf16.msra.mxu0 %v2519
  %4016 = vmatprep.subr.bf16.mxu0 0
  %4017 = vmatpush1.bf16.msra.mxu0 %v2518
  %4018 = vmatprep.subr.bf16.mxu0 0
  %4019 = vmatpush2.bf16.msra.mxu0 %v2533
  %4020 = vmatprep.subr.bf16.mxu0 0
  %4021 = vmatpush2.bf16.msra.mxu0 %v2532
  %4022 = vmatprep.subr.bf16.mxu0 0
  %4023 = vmatpush2.bf16.msra.mxu0 %v2531
  %4024 = vmatprep.subr.bf16.mxu0 0
  %4025 = vmatpush2.bf16.msra.mxu0 %v2530
  %4026 = vmatprep.subr.bf16.mxu0 0
  %4027 = vmatpush2.bf16.msra.mxu0 %v2529
  %4028 = vmatprep.subr.bf16.mxu0 0
  %4029 = vmatpush2.bf16.msra.mxu0 %v2528
  %4030 = vmatprep.subr.bf16.mxu0 0
  %4031 = vmatpush2.bf16.msra.mxu0 %v2527
  %4032 = vmatprep.subr.bf16.mxu0 0
  %4033 = vmatpush2.bf16.msra.mxu0 %v2526
  %4034 = vmatprep.mubr.bf16.mxu0 %v552
  %4035 = vmatmul.mubr.bf16.gmra.mxu0 %v551
  %v4036 = vpop.f32.mrf.mxu0
  %v4037 = vadd.f32 %v3940, %v4036
  %v4038 = vpop.f32.mrf.mxu0
  %v4039 = vpop.f32.mrf.mxu0
  %v4040 = vadd.f32 %v3943, %v4039
  %v4041 = vpop.f32.mrf.mxu0
  %4042 = vmatprep.mubr.bf16.mxu0 %v584
  %4043 = vmatmul.mubr.bf16.gmra.mxu0 %v583
  %v4044 = vpop.f32.mrf.mxu0
  %v4045 = vadd.f32 %v3948, %v4044
  %v4046 = vpop.f32.mrf.mxu0
  %v4047 = vpop.f32.mrf.mxu0
  %v4048 = vadd.f32 %v3951, %v4047
  %v4049 = vpop.f32.mrf.mxu0
  %4050 = vmatprep.mubr.bf16.mxu0 %v616
  %4051 = vmatmul.mubr.bf16.gmra.mxu0 %v615
  %v4052 = vpop.f32.mrf.mxu0
  %v4053 = vadd.f32 %v3956, %v4052
  %v4054 = vpop.f32.mrf.mxu0
  %v4055 = vpop.f32.mrf.mxu0
  %v4056 = vadd.f32 %v3959, %v4055
  %v4057 = vpop.f32.mrf.mxu0
  %4058 = vmatprep.mubr.bf16.mxu0 %v648
  %4059 = vmatmul.mubr.bf16.gmra.mxu0 %v647
  %v4060 = vpop.f32.mrf.mxu0
  %v4061 = vadd.f32 %v3964, %v4060
  %v4062 = vpop.f32.mrf.mxu0
  %v4063 = vpop.f32.mrf.mxu0
  %v4064 = vadd.f32 %v3967, %v4063
  %v4065 = vpop.f32.mrf.mxu0
  %4066 = vmatprep.mubr.bf16.mxu0 %v680
  %4067 = vmatmul.mubr.bf16.gmra.mxu0 %v679
  %v4068 = vpop.f32.mrf.mxu0
  %v4069 = vadd.f32 %v3972, %v4068
  %v4070 = vpop.f32.mrf.mxu0
  %v4071 = vpop.f32.mrf.mxu0
  %v4072 = vadd.f32 %v3975, %v4071
  %v4073 = vpop.f32.mrf.mxu0
  %4074 = vmatprep.mubr.bf16.mxu0 %v712
  %4075 = vmatmul.mubr.bf16.gmra.mxu0 %v711
  %v4076 = vpop.f32.mrf.mxu0
  %v4077 = vadd.f32 %v3980, %v4076
  %v4078 = vpop.f32.mrf.mxu0
  %v4079 = vpop.f32.mrf.mxu0
  %v4080 = vadd.f32 %v3983, %v4079
  %v4081 = vpop.f32.mrf.mxu0
  %4082 = vmatprep.mubr.bf16.mxu0 %v744
  %4083 = vmatmul.mubr.bf16.gmra.mxu0 %v743
  %v4084 = vpop.f32.mrf.mxu0
  %v4085 = vadd.f32 %v3988, %v4084
  %v4086 = vpop.f32.mrf.mxu0
  %v4087 = vpop.f32.mrf.mxu0
  %v4088 = vadd.f32 %v3991, %v4087
  %v4089 = vpop.f32.mrf.mxu0
  %4090 = vmatprep.mubr.bf16.mxu0 %v776
  %4091 = vmatmul.mubr.bf16.gmra.mxu0 %v775
  %v4092 = vpop.f32.mrf.mxu0
  %v4093 = vadd.f32 %v3996, %v4092
  %v4094 = vpop.f32.mrf.mxu0
  %v4095 = vpop.f32.mrf.mxu0
  %v4096 = vadd.f32 %v3999, %v4095
  %v4097 = vpop.f32.mrf.mxu0
  %4098 = vdwg.mxu0
  %4099 = vmatprep.subr.bf16.mxu0 0
  %4100 = vmatpush1.bf16.msra.mxu0 %v2541
  %4101 = vmatprep.subr.bf16.mxu0 0
  %4102 = vmatpush1.bf16.msra.mxu0 %v2540
  %4103 = vmatprep.subr.bf16.mxu0 0
  %4104 = vmatpush1.bf16.msra.mxu0 %v2539
  %4105 = vmatprep.subr.bf16.mxu0 0
  %4106 = vmatpush1.bf16.msra.mxu0 %v2538
  %4107 = vmatprep.subr.bf16.mxu0 0
  %4108 = vmatpush1.bf16.msra.mxu0 %v2537
  %4109 = vmatprep.subr.bf16.mxu0 0
  %4110 = vmatpush1.bf16.msra.mxu0 %v2536
  %4111 = vmatprep.subr.bf16.mxu0 0
  %4112 = vmatpush1.bf16.msra.mxu0 %v2535
  %4113 = vmatprep.subr.bf16.mxu0 0
  %4114 = vmatpush1.bf16.msra.mxu0 %v2534
  %4115 = vmatprep.subr.bf16.mxu0 0
  %4116 = vmatpush2.bf16.msra.mxu0 %v2549
  %4117 = vmatprep.subr.bf16.mxu0 0
  %4118 = vmatpush2.bf16.msra.mxu0 %v2548
  %4119 = vmatprep.subr.bf16.mxu0 0
  %4120 = vmatpush2.bf16.msra.mxu0 %v2547
  %4121 = vmatprep.subr.bf16.mxu0 0
  %4122 = vmatpush2.bf16.msra.mxu0 %v2546
  %4123 = vmatprep.subr.bf16.mxu0 0
  %4124 = vmatpush2.bf16.msra.mxu0 %v2545
  %4125 = vmatprep.subr.bf16.mxu0 0
  %4126 = vmatpush2.bf16.msra.mxu0 %v2544
  %4127 = vmatprep.subr.bf16.mxu0 0
  %4128 = vmatpush2.bf16.msra.mxu0 %v2543
  %4129 = vmatprep.subr.bf16.mxu0 0
  %4130 = vmatpush2.bf16.msra.mxu0 %v2542
  %4131 = vmatprep.mubr.bf16.mxu0 %v554
  %4132 = vmatmul.mubr.bf16.gmra.mxu0 %v553
  %v4133 = vpop.f32.mrf.mxu0
  %v4134 = vadd.f32 %v4037, %v4133
  %v4135 = vpop.f32.mrf.mxu0
  %v4136 = vpop.f32.mrf.mxu0
  %v4137 = vadd.f32 %v4040, %v4136
  %v4138 = vpop.f32.mrf.mxu0
  %4139 = vmatprep.mubr.bf16.mxu0 %v586
  %4140 = vmatmul.mubr.bf16.gmra.mxu0 %v585
  %v4141 = vpop.f32.mrf.mxu0
  %v4142 = vadd.f32 %v4045, %v4141
  %v4143 = vpop.f32.mrf.mxu0
  %v4144 = vpop.f32.mrf.mxu0
  %v4145 = vadd.f32 %v4048, %v4144
  %v4146 = vpop.f32.mrf.mxu0
  %4147 = vmatprep.mubr.bf16.mxu0 %v618
  %4148 = vmatmul.mubr.bf16.gmra.mxu0 %v617
  %v4149 = vpop.f32.mrf.mxu0
  %v4150 = vadd.f32 %v4053, %v4149
  %v4151 = vpop.f32.mrf.mxu0
  %v4152 = vpop.f32.mrf.mxu0
  %v4153 = vadd.f32 %v4056, %v4152
  %v4154 = vpop.f32.mrf.mxu0
  %4155 = vmatprep.mubr.bf16.mxu0 %v650
  %4156 = vmatmul.mubr.bf16.gmra.mxu0 %v649
  %v4157 = vpop.f32.mrf.mxu0
  %v4158 = vadd.f32 %v4061, %v4157
  %v4159 = vpop.f32.mrf.mxu0
  %v4160 = vpop.f32.mrf.mxu0
  %v4161 = vadd.f32 %v4064, %v4160
  %v4162 = vpop.f32.mrf.mxu0
  %4163 = vmatprep.mubr.bf16.mxu0 %v682
  %4164 = vmatmul.mubr.bf16.gmra.mxu0 %v681
  %v4165 = vpop.f32.mrf.mxu0
  %v4166 = vadd.f32 %v4069, %v4165
  %v4167 = vpop.f32.mrf.mxu0
  %v4168 = vpop.f32.mrf.mxu0
  %v4169 = vadd.f32 %v4072, %v4168
  %v4170 = vpop.f32.mrf.mxu0
  %4171 = vmatprep.mubr.bf16.mxu0 %v714
  %4172 = vmatmul.mubr.bf16.gmra.mxu0 %v713
  %v4173 = vpop.f32.mrf.mxu0
  %v4174 = vadd.f32 %v4077, %v4173
  %v4175 = vpop.f32.mrf.mxu0
  %v4176 = vpop.f32.mrf.mxu0
  %v4177 = vadd.f32 %v4080, %v4176
  %v4178 = vpop.f32.mrf.mxu0
  %4179 = vmatprep.mubr.bf16.mxu0 %v746
  %4180 = vmatmul.mubr.bf16.gmra.mxu0 %v745
  %v4181 = vpop.f32.mrf.mxu0
  %v4182 = vadd.f32 %v4085, %v4181
  %v4183 = vpop.f32.mrf.mxu0
  %v4184 = vpop.f32.mrf.mxu0
  %v4185 = vadd.f32 %v4088, %v4184
  %v4186 = vpop.f32.mrf.mxu0
  %4187 = vmatprep.mubr.bf16.mxu0 %v778
  %4188 = vmatmul.mubr.bf16.gmra.mxu0 %v777
  %v4189 = vpop.f32.mrf.mxu0
  %v4190 = vadd.f32 %v4093, %v4189
  %v4191 = vpop.f32.mrf.mxu0
  %v4192 = vpop.f32.mrf.mxu0
  %v4193 = vadd.f32 %v4096, %v4192
  %v4194 = vpop.f32.mrf.mxu0
  %4195 = vdwg.mxu0
  %4196 = vmatprep.subr.bf16.mxu0 0
  %4197 = vmatpush1.bf16.msra.mxu0 %v2557
  %4198 = vmatprep.subr.bf16.mxu0 0
  %4199 = vmatpush1.bf16.msra.mxu0 %v2556
  %4200 = vmatprep.subr.bf16.mxu0 0
  %4201 = vmatpush1.bf16.msra.mxu0 %v2555
  %4202 = vmatprep.subr.bf16.mxu0 0
  %4203 = vmatpush1.bf16.msra.mxu0 %v2554
  %4204 = vmatprep.subr.bf16.mxu0 0
  %4205 = vmatpush1.bf16.msra.mxu0 %v2553
  %4206 = vmatprep.subr.bf16.mxu0 0
  %4207 = vmatpush1.bf16.msra.mxu0 %v2552
  %4208 = vmatprep.subr.bf16.mxu0 0
  %4209 = vmatpush1.bf16.msra.mxu0 %v2551
  %4210 = vmatprep.subr.bf16.mxu0 0
  %4211 = vmatpush1.bf16.msra.mxu0 %v2550
  %4212 = vmatprep.subr.bf16.mxu0 0
  %4213 = vmatpush2.bf16.msra.mxu0 %v2565
  %4214 = vmatprep.subr.bf16.mxu0 0
  %4215 = vmatpush2.bf16.msra.mxu0 %v2564
  %4216 = vmatprep.subr.bf16.mxu0 0
  %4217 = vmatpush2.bf16.msra.mxu0 %v2563
  %4218 = vmatprep.subr.bf16.mxu0 0
  %4219 = vmatpush2.bf16.msra.mxu0 %v2562
  %4220 = vmatprep.subr.bf16.mxu0 0
  %4221 = vmatpush2.bf16.msra.mxu0 %v2561
  %4222 = vmatprep.subr.bf16.mxu0 0
  %4223 = vmatpush2.bf16.msra.mxu0 %v2560
  %4224 = vmatprep.subr.bf16.mxu0 0
  %4225 = vmatpush2.bf16.msra.mxu0 %v2559
  %4226 = vmatprep.subr.bf16.mxu0 0
  %4227 = vmatpush2.bf16.msra.mxu0 %v2558
  %4228 = vmatprep.mubr.bf16.mxu0 %v556
  %4229 = vmatmul.mubr.bf16.gmra.mxu0 %v555
  %v4230 = vpop.f32.mrf.mxu0
  %v4231 = vadd.f32 %v4134, %v4230
  %v4232 = vpop.f32.mrf.mxu0
  %v4233 = vpop.f32.mrf.mxu0
  %v4234 = vadd.f32 %v4137, %v4233
  %v4235 = vpop.f32.mrf.mxu0
  %4236 = vmatprep.mubr.bf16.mxu0 %v588
  %4237 = vmatmul.mubr.bf16.gmra.mxu0 %v587
  %v4238 = vpop.f32.mrf.mxu0
  %v4239 = vadd.f32 %v4142, %v4238
  %v4240 = vpop.f32.mrf.mxu0
  %v4241 = vpop.f32.mrf.mxu0
  %v4242 = vadd.f32 %v4145, %v4241
  %v4243 = vpop.f32.mrf.mxu0
  %4244 = vmatprep.mubr.bf16.mxu0 %v620
  %4245 = vmatmul.mubr.bf16.gmra.mxu0 %v619
  %v4246 = vpop.f32.mrf.mxu0
  %v4247 = vadd.f32 %v4150, %v4246
  %v4248 = vpop.f32.mrf.mxu0
  %v4249 = vpop.f32.mrf.mxu0
  %v4250 = vadd.f32 %v4153, %v4249
  %v4251 = vpop.f32.mrf.mxu0
  %4252 = vmatprep.mubr.bf16.mxu0 %v652
  %4253 = vmatmul.mubr.bf16.gmra.mxu0 %v651
  %v4254 = vpop.f32.mrf.mxu0
  %v4255 = vadd.f32 %v4158, %v4254
  %v4256 = vpop.f32.mrf.mxu0
  %v4257 = vpop.f32.mrf.mxu0
  %v4258 = vadd.f32 %v4161, %v4257
  %v4259 = vpop.f32.mrf.mxu0
  %4260 = vmatprep.mubr.bf16.mxu0 %v684
  %4261 = vmatmul.mubr.bf16.gmra.mxu0 %v683
  %v4262 = vpop.f32.mrf.mxu0
  %v4263 = vadd.f32 %v4166, %v4262
  %v4264 = vpop.f32.mrf.mxu0
  %v4265 = vpop.f32.mrf.mxu0
  %v4266 = vadd.f32 %v4169, %v4265
  %v4267 = vpop.f32.mrf.mxu0
  %4268 = vmatprep.mubr.bf16.mxu0 %v716
  %4269 = vmatmul.mubr.bf16.gmra.mxu0 %v715
  %v4270 = vpop.f32.mrf.mxu0
  %v4271 = vadd.f32 %v4174, %v4270
  %v4272 = vpop.f32.mrf.mxu0
  %v4273 = vpop.f32.mrf.mxu0
  %v4274 = vadd.f32 %v4177, %v4273
  %v4275 = vpop.f32.mrf.mxu0
  %4276 = vmatprep.mubr.bf16.mxu0 %v748
  %4277 = vmatmul.mubr.bf16.gmra.mxu0 %v747
  %v4278 = vpop.f32.mrf.mxu0
  %v4279 = vadd.f32 %v4182, %v4278
  %v4280 = vpop.f32.mrf.mxu0
  %v4281 = vpop.f32.mrf.mxu0
  %v4282 = vadd.f32 %v4185, %v4281
  %v4283 = vpop.f32.mrf.mxu0
  %4284 = vmatprep.mubr.bf16.mxu0 %v780
  %4285 = vmatmul.mubr.bf16.gmra.mxu0 %v779
  %v4286 = vpop.f32.mrf.mxu0
  %v4287 = vadd.f32 %v4190, %v4286
  %v4288 = vpop.f32.mrf.mxu0
  %v4289 = vpop.f32.mrf.mxu0
  %v4290 = vadd.f32 %v4193, %v4289
  %v4291 = vpop.f32.mrf.mxu0
  %4292 = vdwg.mxu0
  %4293 = vmatprep.subr.bf16.mxu0 0
  %4294 = vmatpush1.bf16.msra.mxu0 %v2573
  %4295 = vmatprep.subr.bf16.mxu0 0
  %4296 = vmatpush1.bf16.msra.mxu0 %v2572
  %4297 = vmatprep.subr.bf16.mxu0 0
  %4298 = vmatpush1.bf16.msra.mxu0 %v2571
  %4299 = vmatprep.subr.bf16.mxu0 0
  %4300 = vmatpush1.bf16.msra.mxu0 %v2570
  %4301 = vmatprep.subr.bf16.mxu0 0
  %4302 = vmatpush1.bf16.msra.mxu0 %v2569
  %4303 = vmatprep.subr.bf16.mxu0 0
  %4304 = vmatpush1.bf16.msra.mxu0 %v2568
  %4305 = vmatprep.subr.bf16.mxu0 0
  %4306 = vmatpush1.bf16.msra.mxu0 %v2567
  %4307 = vmatprep.subr.bf16.mxu0 0
  %4308 = vmatpush1.bf16.msra.mxu0 %v2566
  %4309 = vmatprep.subr.bf16.mxu0 0
  %4310 = vmatpush2.bf16.msra.mxu0 %v2581
  %4311 = vmatprep.subr.bf16.mxu0 0
  %4312 = vmatpush2.bf16.msra.mxu0 %v2580
  %4313 = vmatprep.subr.bf16.mxu0 0
  %4314 = vmatpush2.bf16.msra.mxu0 %v2579
  %4315 = vmatprep.subr.bf16.mxu0 0
  %4316 = vmatpush2.bf16.msra.mxu0 %v2578
  %4317 = vmatprep.subr.bf16.mxu0 0
  %4318 = vmatpush2.bf16.msra.mxu0 %v2577
  %4319 = vmatprep.subr.bf16.mxu0 0
  %4320 = vmatpush2.bf16.msra.mxu0 %v2576
  %4321 = vmatprep.subr.bf16.mxu0 0
  %4322 = vmatpush2.bf16.msra.mxu0 %v2575
  %4323 = vmatprep.subr.bf16.mxu0 0
  %4324 = vmatpush2.bf16.msra.mxu0 %v2574
  %4325 = vmatprep.mubr.bf16.mxu0 %v558
  %4326 = vmatmul.mubr.bf16.gmra.mxu0 %v557
  %v4327 = vpop.f32.mrf.mxu0
  %v4328 = vadd.f32 %v4231, %v4327
  %v4329 = vpop.f32.mrf.mxu0
  %v4330 = vpop.f32.mrf.mxu0
  %v4331 = vadd.f32 %v4234, %v4330
  %v4332 = vpop.f32.mrf.mxu0
  %4333 = vmatprep.mubr.bf16.mxu0 %v590
  %4334 = vmatmul.mubr.bf16.gmra.mxu0 %v589
  %v4335 = vpop.f32.mrf.mxu0
  %v4336 = vadd.f32 %v4239, %v4335
  %v4337 = vpop.f32.mrf.mxu0
  %v4338 = vpop.f32.mrf.mxu0
  %v4339 = vadd.f32 %v4242, %v4338
  %v4340 = vpop.f32.mrf.mxu0
  %4341 = vmatprep.mubr.bf16.mxu0 %v622
  %4342 = vmatmul.mubr.bf16.gmra.mxu0 %v621
  %v4343 = vpop.f32.mrf.mxu0
  %v4344 = vadd.f32 %v4247, %v4343
  %v4345 = vpop.f32.mrf.mxu0
  %v4346 = vpop.f32.mrf.mxu0
  %v4347 = vadd.f32 %v4250, %v4346
  %v4348 = vpop.f32.mrf.mxu0
  %4349 = vmatprep.mubr.bf16.mxu0 %v654
  %4350 = vmatmul.mubr.bf16.gmra.mxu0 %v653
  %v4351 = vpop.f32.mrf.mxu0
  %v4352 = vadd.f32 %v4255, %v4351
  %v4353 = vpop.f32.mrf.mxu0
  %v4354 = vpop.f32.mrf.mxu0
  %v4355 = vadd.f32 %v4258, %v4354
  %v4356 = vpop.f32.mrf.mxu0
  %4357 = vmatprep.mubr.bf16.mxu0 %v686
  %4358 = vmatmul.mubr.bf16.gmra.mxu0 %v685
  %v4359 = vpop.f32.mrf.mxu0
  %v4360 = vadd.f32 %v4263, %v4359
  %v4361 = vpop.f32.mrf.mxu0
  %v4362 = vpop.f32.mrf.mxu0
  %v4363 = vadd.f32 %v4266, %v4362
  %v4364 = vpop.f32.mrf.mxu0
  %4365 = vmatprep.mubr.bf16.mxu0 %v718
  %4366 = vmatmul.mubr.bf16.gmra.mxu0 %v717
  %v4367 = vpop.f32.mrf.mxu0
  %v4368 = vadd.f32 %v4271, %v4367
  %v4369 = vpop.f32.mrf.mxu0
  %v4370 = vpop.f32.mrf.mxu0
  %v4371 = vadd.f32 %v4274, %v4370
  %v4372 = vpop.f32.mrf.mxu0
  %4373 = vmatprep.mubr.bf16.mxu0 %v750
  %4374 = vmatmul.mubr.bf16.gmra.mxu0 %v749
  %v4375 = vpop.f32.mrf.mxu0
  %v4376 = vadd.f32 %v4279, %v4375
  %v4377 = vpop.f32.mrf.mxu0
  %v4378 = vpop.f32.mrf.mxu0
  %v4379 = vadd.f32 %v4282, %v4378
  %v4380 = vpop.f32.mrf.mxu0
  %4381 = vmatprep.mubr.bf16.mxu0 %v782
  %4382 = vmatmul.mubr.bf16.gmra.mxu0 %v781
  %v4383 = vpop.f32.mrf.mxu0
  %v4384 = vadd.f32 %v4287, %v4383
  %v4385 = vpop.f32.mrf.mxu0
  %v4386 = vpop.f32.mrf.mxu0
  %v4387 = vadd.f32 %v4290, %v4386
  %v4388 = vpop.f32.mrf.mxu0
  %4389 = vdwg.mxu0
  %v4390 = vmax.f32 %v4328, 0.0
  %v4391 = vmax.f32 %v4331, 0.0
  %v4392 = vmax.f32 %v4336, 0.0
  %v4393 = vmax.f32 %v4339, 0.0
  %v4394 = vmax.f32 %v4344, 0.0
  %v4395 = vmax.f32 %v4347, 0.0
  %v4396 = vmax.f32 %v4352, 0.0
  %v4397 = vmax.f32 %v4355, 0.0
  %v4398 = vmax.f32 %v4360, 0.0
  %v4399 = vmax.f32 %v4363, 0.0
  %v4400 = vmax.f32 %v4368, 0.0
  %v4401 = vmax.f32 %v4371, 0.0
  %v4402 = vmax.f32 %v4376, 0.0
  %v4403 = vmax.f32 %v4379, 0.0
  %v4404 = vmax.f32 %v4384, 0.0
  %v4405 = vmax.f32 %v4387, 0.0
  %vm4406 = vcmask 523264
  %4407 = vst.msk [vmem:[%s3] sm:$0xff] %vm4406, %v4390
  %4408 = vst.msk [vmem:[%s3 + $0x8] sm:$0xff] %vm4406, %v4391
  %4409 = vst.msk [vmem:[%s3 + $0x10] sm:$0xff] %vm4406, %v4392
  %4410 = vst.msk [vmem:[%s3 + $0x18] sm:$0xff] %vm4406, %v4393
  %4411 = vst.msk [vmem:[%s3 + $0x20] sm:$0xff] %vm4406, %v4394
  %4412 = vst.msk [vmem:[%s3 + $0x28] sm:$0xff] %vm4406, %v4395
  %4413 = vst.msk [vmem:[%s3 + $0x30] sm:$0xff] %vm4406, %v4396
  %4414 = vst.msk [vmem:[%s3 + $0x38] sm:$0xff] %vm4406, %v4397
  %4415 = vst.msk [vmem:[%s3 + $0x40] sm:$0xff] %vm4406, %v4398
  %4416 = vst.msk [vmem:[%s3 + $0x48] sm:$0xff] %vm4406, %v4399
  %4417 = vst.msk [vmem:[%s3 + $0x50] sm:$0xff] %vm4406, %v4400
  %4418 = vst.msk [vmem:[%s3 + $0x58] sm:$0xff] %vm4406, %v4401
  %4419 = vst.msk [vmem:[%s3 + $0x60] sm:$0xff] %vm4406, %v4402
  %4420 = vst.msk [vmem:[%s3 + $0x68] sm:$0xff] %vm4406, %v4403
  %4421 = vst.msk [vmem:[%s3 + $0x70] sm:$0xff] %vm4406, %v4404
  %4422 = vst.msk [vmem:[%s3 + $0x78] sm:$0xff] %vm4406, %v4405
  // Predicated region
  $region14: #{dsa_rnn_forward.3} parent=0 // pred_check
    _
  $region15: #{dsa_rnn_forward.3} parent=0 // pred_check_branch
    %4424 = sbr.rel (0) target = $region17
  $region16: #{dsa_rnn_forward.3} parent=0 // pred_region
    _
  $region17: #{dsa_rnn_forward.3} parent=0 // pred_fallthru
    _
  // Predicated region
  $region18: #{dsa_rnn_forward.3} parent=0 // pred_check
    _
  $region19: #{dsa_rnn_forward.3} parent=0 // pred_check_branch
    %4426 = sbr.rel (0) target = $region21
  $region20: #{dsa_rnn_forward.3} parent=0 // pred_region
    _
  $region21: #{dsa_rnn_forward.3} parent=0 // pred_fallthru
    _

// kernel: dsa_rnn_forward.5
$region0: #{dsa_rnn_forward.5}
  #allocation0 [shape = 'u32[]', space=smem, size = 0x4, offset = 0x4, fixed_abs, tag = 'smem constant byte address 0x4 - core index']
  #allocation1 [shape = 'u32[144,128]{1,0:T(1,128)}', space=vmem, size = 0x12000, scoped, tag = 'internal scratch']
  #allocation2 [shape = 'f32[2,128]{1,0:T(2,128)}', space=vmem, size = 0x400, scoped, tag = 'scratch operand']
  #allocation3 [shape = 'f32[2,128]{1,0:T(2,128)}', space=vmem, size = 0x400, scoped, tag = 'scratch operand']
  %s0 = inlined_call_operand.vmem [shape: f32[2,8,8,64], index: 0, kind: input, shape index: {}]
  %s1 = inlined_call_operand.vmem [shape: f32[8,2,8], index: 1, kind: input, shape index: {}]
  %s2 = inlined_call_operand.vmem [shape: f32[8,2,64], index: 2, kind: input, shape index: {}]
  %s3 = inlined_call_operand.vmem [shape: f32[2,128], index: 3, kind: input, shape index: {}, may-alias: {3,4}]
  %s4 = inlined_call_operand.vmem [shape: f32[2,128], index: 4, kind: input, shape index: {}, may-alias: {3,4}]
  %s5 = inlined_call_operand.vmem [shape: f32[64,64], index: 5, kind: input, shape index: {}]
  %s6 = inlined_call_operand.vmem [shape: f32[1,64], index: 6, kind: input, shape index: {}]
  %s7 = inlined_call_operand.vmem [shape: f32[128,64], index: 7, kind: input, shape index: {}]
  %s8 = inlined_call_operand.vmem [shape: f32[1,64], index: 8, kind: input, shape index: {}]
  %s9 = inlined_call_operand.vmem [shape: bf16[64,512], index: 9, kind: input, shape index: {}]
  %s10 = inlined_call_operand.vmem [shape: bf16[64,512], index: 10, kind: input, shape index: {}]
  %s11 = inlined_call_operand.vmem [shape: bf16[128,512], index: 11, kind: input, shape index: {}]
  %s12 = inlined_call_operand.vmem [shape: bf16[128,512], index: 12, kind: input, shape index: {}]
  %s13 = inlined_call_operand.vmem [shape: f32[1,512], index: 13, kind: input, shape index: {}]
  %s14 = inlined_call_operand.vmem [shape: f32[8,2,128], index: 14, kind: output, shape index: {0}]
  %s15 = inlined_call_operand.hbm [shape: f32[2,128], index: 15, kind: output, shape index: {1}]
  %s16 = inlined_call_operand.hbm [shape: f32[2,128], index: 16, kind: output, shape index: {2}]
  %17 = xla_tuple %s14, %s15, %s16
  %s18 = sld [smem:[#allocation0]]
  $region147: #{dsa_rnn_forward.5} parent=0
    _
  %s20 = ssub.s32 1, %s18
  %s21 = scalar_select 0, %s20, %s18
  $region1: #{dsa_rnn_forward.5} parent=0
    #allocation4 [shape = 'u8[65536]{0}', space=vmem, size = 0x10000, scoped, tag = 'input window, operand 0']
    #allocation5 [shape = 'u8[1024]{0}', space=vmem, size = 0x400, scoped, tag = 'output window, operand 1, single buffered']
    #allocation6 [shape = 's32[2]{0}', space=sflag, size = 0x8, scoped, tag = 'scoped memory for dsa_rnn_forward.5']
    #allocation7 [shape = 'u8[1024]{0}', space=vmem, size = 0x400, scoped, tag = 'output window, operand 2, single buffered']
    #allocation8 [shape = 's32[1]{0}', space=sflag, size = 0x4, scoped, tag = 'scoped memory for dsa_rnn_forward.5']
    %22 = vsyncpa [#allocation6], 0
    %23 = vsyncpa [#allocation8], 0
    loop: start=0, step=1, limit=4
    $region2: #{dsa_rnn_forward.5} parent=1 // loop_pre_header
      _
    $region3: #{dsa_rnn_forward.5} parent=1 // loop_header
      %s25 = sphi 0, %s29
      %p26 = scmp.ge.s32.totalorder %s25, 4
      %s35 = sphi 0, %s37
      %s38 = sphi 0, %s35
      %s39 = sphi 0, %s38
      %s55 = sphi 0, %s39
      %s61 = sphi 0, %s63
      %s64 = sphi 0, %s61
      %s65 = sphi 0, %s64
      %s81 = sphi 0, %s65
      %s87 = sphi 0, %s89
      %s90 = sphi 0, %s87
      %s91 = sphi 0, %s90
      %s107 = sphi 0, %s91
      %s111 = sphi 0, %s111
      %s113 = sphi 0, %s111
      %s114 = sphi 0, %s113
      %s128 = sphi 0, %s114
      %s132 = sphi 0, %s132
      %s134 = sphi 0, %s132
      %s135 = sphi 0, %s134
      %s149 = sphi 0, %s135
      %s153 = sphi 0, %s153
      %s155 = sphi 0, %s153
      %s156 = sphi 0, %s155
      %s170 = sphi 0, %s156
      %s174 = sphi 0, %s174
      %s176 = sphi 0, %s174
      %s177 = sphi 0, %s176
      %s191 = sphi 0, %s177
      %s195 = sphi 0, %s195
      %s197 = sphi 0, %s195
      %s198 = sphi 0, %s197
      %s212 = sphi 0, %s198
      %s216 = sphi 0, %s216
      %s218 = sphi 0, %s216
      %s219 = sphi 0, %s218
      %s233 = sphi 0, %s219
      %s237 = sphi 0, %s237
      %s239 = sphi 0, %s237
      %s240 = sphi 0, %s239
      %s254 = sphi 0, %s240
      %s258 = sphi 0, %s258
      %s260 = sphi 0, %s258
      %s261 = sphi 0, %s260
      %s275 = sphi 0, %s261
      %s279 = sphi 0, %s279
      %s281 = sphi 0, %s279
      %s282 = sphi 0, %s281
      %s296 = sphi 0, %s282
      %s300 = sphi 0, %s300
      %s302 = sphi 0, %s300
      %s303 = sphi 0, %s302
      %s317 = sphi 0, %s303
      %s321 = sphi 0, %s321
      %s323 = sphi 0, %s321
      %s324 = sphi 0, %s323
      %s338 = sphi 0, %s324
      %s344 = sphi 0, %s346
      %s347 = sphi 0, %s344
      %s348 = sphi 0, %s347
      %s364 = sphi 0, %s348
      %s368 = sphi 0, %s368
      %s370 = sphi 0, %s368
      %s371 = sphi 0, %s370
      %s385 = sphi 0, %s371
      %s389 = sphi 0, %s389
      %s391 = sphi 0, %s389
      %s392 = sphi 0, %s391
      %s406 = sphi 0, %s392
    $region4: #{dsa_rnn_forward.5} parent=1 // loop_header_branch
      %28 = sbr.rel (%p26) target = $region8
    $region5: #{dsa_rnn_forward.5} parent=1 // loop_body
      %s30 = ssub.s32 %s25, 1
      %s31 = ssub.s32 %s25, 2
      %s32 = sadd.s32 %s25, 1
      %s33 = ssub.s32 %s25, %s32
      %p34 = scmp.eq.s32.totalorder %s33, 0
      %s36 = sadd.s32 %s35, 1
      %s37 = scalar_select %p34, %s35, %s36
      %p40 = pneg %p34
      %p41 = scmp.eq.s32.totalorder %s25, 1
      %p42 = por %p40, %p41
      %p43 = scmp.ne.s32.totalorder %s35, %s38
      %p44 = scmp.eq.s32.totalorder %s25, 0
      %p45 = por %p43, %p44
      %p46 = scmp.ne.s32.totalorder %s35, %s38
      %p47 = scmp.eq.s32.totalorder %s30, 1
      %p48 = por %p46, %p47
      %p49 = scmp.ne.s32.totalorder %s38, %s39
      %p50 = scmp.eq.s32.totalorder %s30, 0
      %p51 = por %p49, %p50
      %p52 = scmp.ne.s32.totalorder %s38, %s39
      %p53 = scmp.eq.s32.totalorder %s31, 1
      %p54 = por %p52, %p53
      %p56 = scmp.ne.s32.totalorder %s39, %s55
      %p57 = scmp.eq.s32.totalorder %s31, 0
      %p58 = por %p56, %p57
      %s59 = ssub.s32 %s25, %s32
      %p60 = scmp.eq.s32.totalorder %s59, 0
      %s62 = sadd.s32 %s61, 1
      %s63 = scalar_select %p60, %s61, %s62
      %p66 = pneg %p60
      %p67 = scmp.eq.s32.totalorder %s25, 1
      %p68 = por %p66, %p67
      %p69 = scmp.ne.s32.totalorder %s61, %s64
      %p70 = scmp.eq.s32.totalorder %s25, 0
      %p71 = por %p69, %p70
      %p72 = scmp.ne.s32.totalorder %s61, %s64
      %p73 = scmp.eq.s32.totalorder %s30, 1
      %p74 = por %p72, %p73
      %p75 = scmp.ne.s32.totalorder %s64, %s65
      %p76 = scmp.eq.s32.totalorder %s30, 0
      %p77 = por %p75, %p76
      %p78 = scmp.ne.s32.totalorder %s64, %s65
      %p79 = scmp.eq.s32.totalorder %s31, 1
      %p80 = por %p78, %p79
      %p82 = scmp.ne.s32.totalorder %s65, %s81
      %p83 = scmp.eq.s32.totalorder %s31, 0
      %p84 = por %p82, %p83
      %s85 = ssub.s32 %s25, %s32
      %p86 = scmp.eq.s32.totalorder %s85, 0
      %s88 = sadd.s32 %s87, 1
      %s89 = scalar_select %p86, %s87, %s88
      %p92 = pneg %p86
      %p93 = scmp.eq.s32.totalorder %s25, 1
      %p94 = por %p92, %p93
      %p95 = scmp.ne.s32.totalorder %s87, %s90
      %p96 = scmp.eq.s32.totalorder %s25, 0
      %p97 = por %p95, %p96
      %p98 = scmp.ne.s32.totalorder %s87, %s90
      %p99 = scmp.eq.s32.totalorder %s30, 1
      %p100 = por %p98, %p99
      %p101 = scmp.ne.s32.totalorder %s90, %s91
      %p102 = scmp.eq.s32.totalorder %s30, 0
      %p103 = por %p101, %p102
      %p104 = scmp.ne.s32.totalorder %s90, %s91
      %p105 = scmp.eq.s32.totalorder %s31, 1
      %p106 = por %p104, %p105
      %p108 = scmp.ne.s32.totalorder %s91, %s107
      %p109 = scmp.eq.s32.totalorder %s31, 0
      %p110 = por %p108, %p109
      %s112 = sadd.s32 %s111, 1
      %p115 = scmp.eq.s32.totalorder %s25, 1
      %p116 = scmp.ne.s32.totalorder %s111, %s113
      %p117 = scmp.eq.s32.totalorder %s25, 0
      %p118 = por %p116, %p117
      %p119 = scmp.ne.s32.totalorder %s111, %s113
      %p120 = scmp.eq.s32.totalorder %s30, 1
      %p121 = por %p119, %p120
      %p122 = scmp.ne.s32.totalorder %s113, %s114
      %p123 = scmp.eq.s32.totalorder %s30, 0
      %p124 = por %p122, %p123
      %p125 = scmp.ne.s32.totalorder %s113, %s114
      %p126 = scmp.eq.s32.totalorder %s31, 1
      %p127 = por %p125, %p126
      %p129 = scmp.ne.s32.totalorder %s114, %s128
      %p130 = scmp.eq.s32.totalorder %s31, 0
      %p131 = por %p129, %p130
      %s133 = sadd.s32 %s132, 1
      %p136 = scmp.eq.s32.totalorder %s25, 1
      %p137 = scmp.ne.s32.totalorder %s132, %s134
      %p138 = scmp.eq.s32.totalorder %s25, 0
      %p139 = por %p137, %p138
      %p140 = scmp.ne.s32.totalorder %s132, %s134
      %p141 = scmp.eq.s32.totalorder %s30, 1
      %p142 = por %p140, %p141
      %p143 = scmp.ne.s32.totalorder %s134, %s135
      %p144 = scmp.eq.s32.totalorder %s30, 0
      %p145 = por %p143, %p144
      %p146 = scmp.ne.s32.totalorder %s134, %s135
      %p147 = scmp.eq.s32.totalorder %s31, 1
      %p148 = por %p146, %p147
      %p150 = scmp.ne.s32.totalorder %s135, %s149
      %p151 = scmp.eq.s32.totalorder %s31, 0
      %p152 = por %p150, %p151
      %s154 = sadd.s32 %s153, 1
      %p157 = scmp.eq.s32.totalorder %s25, 1
      %p158 = scmp.ne.s32.totalorder %s153, %s155
      %p159 = scmp.eq.s32.totalorder %s25, 0
      %p160 = por %p158, %p159
      %p161 = scmp.ne.s32.totalorder %s153, %s155
      %p162 = scmp.eq.s32.totalorder %s30, 1
      %p163 = por %p161, %p162
      %p164 = scmp.ne.s32.totalorder %s155, %s156
      %p165 = scmp.eq.s32.totalorder %s30, 0
      %p166 = por %p164, %p165
      %p167 = scmp.ne.s32.totalorder %s155, %s156
      %p168 = scmp.eq.s32.totalorder %s31, 1
      %p169 = por %p167, %p168
      %p171 = scmp.ne.s32.totalorder %s156, %s170
      %p172 = scmp.eq.s32.totalorder %s31, 0
      %p173 = por %p171, %p172
      %s175 = sadd.s32 %s174, 1
      %p178 = scmp.eq.s32.totalorder %s25, 1
      %p179 = scmp.ne.s32.totalorder %s174, %s176
      %p180 = scmp.eq.s32.totalorder %s25, 0
      %p181 = por %p179, %p180
      %p182 = scmp.ne.s32.totalorder %s174, %s176
      %p183 = scmp.eq.s32.totalorder %s30, 1
      %p184 = por %p182, %p183
      %p185 = scmp.ne.s32.totalorder %s176, %s177
      %p186 = scmp.eq.s32.totalorder %s30, 0
      %p187 = por %p185, %p186
      %p188 = scmp.ne.s32.totalorder %s176, %s177
      %p189 = scmp.eq.s32.totalorder %s31, 1
      %p190 = por %p188, %p189
      %p192 = scmp.ne.s32.totalorder %s177, %s191
      %p193 = scmp.eq.s32.totalorder %s31, 0
      %p194 = por %p192, %p193
      %s196 = sadd.s32 %s195, 1
      %p199 = scmp.eq.s32.totalorder %s25, 1
      %p200 = scmp.ne.s32.totalorder %s195, %s197
      %p201 = scmp.eq.s32.totalorder %s25, 0
      %p202 = por %p200, %p201
      %p203 = scmp.ne.s32.totalorder %s195, %s197
      %p204 = scmp.eq.s32.totalorder %s30, 1
      %p205 = por %p203, %p204
      %p206 = scmp.ne.s32.totalorder %s197, %s198
      %p207 = scmp.eq.s32.totalorder %s30, 0
      %p208 = por %p206, %p207
      %p209 = scmp.ne.s32.totalorder %s197, %s198
      %p210 = scmp.eq.s32.totalorder %s31, 1
      %p211 = por %p209, %p210
      %p213 = scmp.ne.s32.totalorder %s198, %s212
      %p214 = scmp.eq.s32.totalorder %s31, 0
      %p215 = por %p213, %p214
      %s217 = sadd.s32 %s216, 1
      %p220 = scmp.eq.s32.totalorder %s25, 1
      %p221 = scmp.ne.s32.totalorder %s216, %s218
      %p222 = scmp.eq.s32.totalorder %s25, 0
      %p223 = por %p221, %p222
      %p224 = scmp.ne.s32.totalorder %s216, %s218
      %p225 = scmp.eq.s32.totalorder %s30, 1
      %p226 = por %p224, %p225
      %p227 = scmp.ne.s32.totalorder %s218, %s219
      %p228 = scmp.eq.s32.totalorder %s30, 0
      %p229 = por %p227, %p228
      %p230 = scmp.ne.s32.totalorder %s218, %s219
      %p231 = scmp.eq.s32.totalorder %s31, 1
      %p232 = por %p230, %p231
      %p234 = scmp.ne.s32.totalorder %s219, %s233
      %p235 = scmp.eq.s32.totalorder %s31, 0
      %p236 = por %p234, %p235
      %s238 = sadd.s32 %s237, 1
      %p241 = scmp.eq.s32.totalorder %s25, 1
      %p242 = scmp.ne.s32.totalorder %s237, %s239
      %p243 = scmp.eq.s32.totalorder %s25, 0
      %p244 = por %p242, %p243
      %p245 = scmp.ne.s32.totalorder %s237, %s239
      %p246 = scmp.eq.s32.totalorder %s30, 1
      %p247 = por %p245, %p246
      %p248 = scmp.ne.s32.totalorder %s239, %s240
      %p249 = scmp.eq.s32.totalorder %s30, 0
      %p250 = por %p248, %p249
      %p251 = scmp.ne.s32.totalorder %s239, %s240
      %p252 = scmp.eq.s32.totalorder %s31, 1
      %p253 = por %p251, %p252
      %p255 = scmp.ne.s32.totalorder %s240, %s254
      %p256 = scmp.eq.s32.totalorder %s31, 0
      %p257 = por %p255, %p256
      %s259 = sadd.s32 %s258, 1
      %p262 = scmp.eq.s32.totalorder %s25, 1
      %p263 = scmp.ne.s32.totalorder %s258, %s260
      %p264 = scmp.eq.s32.totalorder %s25, 0
      %p265 = por %p263, %p264
      %p266 = scmp.ne.s32.totalorder %s258, %s260
      %p267 = scmp.eq.s32.totalorder %s30, 1
      %p268 = por %p266, %p267
      %p269 = scmp.ne.s32.totalorder %s260, %s261
      %p270 = scmp.eq.s32.totalorder %s30, 0
      %p271 = por %p269, %p270
      %p272 = scmp.ne.s32.totalorder %s260, %s261
      %p273 = scmp.eq.s32.totalorder %s31, 1
      %p274 = por %p272, %p273
      %p276 = scmp.ne.s32.totalorder %s261, %s275
      %p277 = scmp.eq.s32.totalorder %s31, 0
      %p278 = por %p276, %p277
      %s280 = sadd.s32 %s279, 1
      %p283 = scmp.eq.s32.totalorder %s25, 1
      %p284 = scmp.ne.s32.totalorder %s279, %s281
      %p285 = scmp.eq.s32.totalorder %s25, 0
      %p286 = por %p284, %p285
      %p287 = scmp.ne.s32.totalorder %s279, %s281
      %p288 = scmp.eq.s32.totalorder %s30, 1
      %p289 = por %p287, %p288
      %p290 = scmp.ne.s32.totalorder %s281, %s282
      %p291 = scmp.eq.s32.totalorder %s30, 0
      %p292 = por %p290, %p291
      %p293 = scmp.ne.s32.totalorder %s281, %s282
      %p294 = scmp.eq.s32.totalorder %s31, 1
      %p295 = por %p293, %p294
      %p297 = scmp.ne.s32.totalorder %s282, %s296
      %p298 = scmp.eq.s32.totalorder %s31, 0
      %p299 = por %p297, %p298
      %s301 = sadd.s32 %s300, 1
      %p304 = scmp.eq.s32.totalorder %s25, 1
      %p305 = scmp.ne.s32.totalorder %s300, %s302
      %p306 = scmp.eq.s32.totalorder %s25, 0
      %p307 = por %p305, %p306
      %p308 = scmp.ne.s32.totalorder %s300, %s302
      %p309 = scmp.eq.s32.totalorder %s30, 1
      %p310 = por %p308, %p309
      %p311 = scmp.ne.s32.totalorder %s302, %s303
      %p312 = scmp.eq.s32.totalorder %s30, 0
      %p313 = por %p311, %p312
      %p314 = scmp.ne.s32.totalorder %s302, %s303
      %p315 = scmp.eq.s32.totalorder %s31, 1
      %p316 = por %p314, %p315
      %p318 = scmp.ne.s32.totalorder %s303, %s317
      %p319 = scmp.eq.s32.totalorder %s31, 0
      %p320 = por %p318, %p319
      %s322 = sadd.s32 %s321, 1
      %p325 = scmp.eq.s32.totalorder %s25, 1
      %p326 = scmp.ne.s32.totalorder %s321, %s323
      %p327 = scmp.eq.s32.totalorder %s25, 0
      %p328 = por %p326, %p327
      %p329 = scmp.ne.s32.totalorder %s321, %s323
      %p330 = scmp.eq.s32.totalorder %s30, 1
      %p331 = por %p329, %p330
      %p332 = scmp.ne.s32.totalorder %s323, %s324
      %p333 = scmp.eq.s32.totalorder %s30, 0
      %p334 = por %p332, %p333
      %p335 = scmp.ne.s32.totalorder %s323, %s324
      %p336 = scmp.eq.s32.totalorder %s31, 1
      %p337 = por %p335, %p336
      %p339 = scmp.ne.s32.totalorder %s324, %s338
      %p340 = scmp.eq.s32.totalorder %s31, 0
      %p341 = por %p339, %p340
      %s342 = ssub.s32 %s25, %s32
      %p343 = scmp.eq.s32.totalorder %s342, 0
      %s345 = sadd.s32 %s344, 1
      %s346 = scalar_select %p343, %s344, %s345
      %p349 = pneg %p343
      %p350 = scmp.eq.s32.totalorder %s25, 1
      %p351 = por %p349, %p350
      %p352 = scmp.ne.s32.totalorder %s344, %s347
      %p353 = scmp.eq.s32.totalorder %s25, 0
      %p354 = por %p352, %p353
      %p355 = scmp.ne.s32.totalorder %s344, %s347
      %p356 = scmp.eq.s32.totalorder %s30, 1
      %p357 = por %p355, %p356
      %p358 = scmp.ne.s32.totalorder %s347, %s348
      %p359 = scmp.eq.s32.totalorder %s30, 0
      %p360 = por %p358, %p359
      %p361 = scmp.ne.s32.totalorder %s347, %s348
      %p362 = scmp.eq.s32.totalorder %s31, 1
      %p363 = por %p361, %p362
      %p365 = scmp.ne.s32.totalorder %s348, %s364
      %p366 = scmp.eq.s32.totalorder %s31, 0
      %p367 = por %p365, %p366
      %s369 = sadd.s32 %s368, 1
      %p372 = scmp.eq.s32.totalorder %s25, 1
      %p373 = scmp.ne.s32.totalorder %s368, %s370
      %p374 = scmp.eq.s32.totalorder %s25, 0
      %p375 = por %p373, %p374
      %p376 = scmp.ne.s32.totalorder %s368, %s370
      %p377 = scmp.eq.s32.totalorder %s30, 1
      %p378 = por %p376, %p377
      %p379 = scmp.ne.s32.totalorder %s370, %s371
      %p380 = scmp.eq.s32.totalorder %s30, 0
      %p381 = por %p379, %p380
      %p382 = scmp.ne.s32.totalorder %s370, %s371
      %p383 = scmp.eq.s32.totalorder %s31, 1
      %p384 = por %p382, %p383
      %p386 = scmp.ne.s32.totalorder %s371, %s385
      %p387 = scmp.eq.s32.totalorder %s31, 0
      %p388 = por %p386, %p387
      %s390 = sadd.s32 %s389, 1
      %p393 = scmp.eq.s32.totalorder %s25, 1
      %p394 = scmp.ne.s32.totalorder %s389, %s391
      %p395 = scmp.eq.s32.totalorder %s25, 0
      %p396 = por %p394, %p395
      %p397 = scmp.ne.s32.totalorder %s389, %s391
      %p398 = scmp.eq.s32.totalorder %s30, 1
      %p399 = por %p397, %p398
      %p400 = scmp.ne.s32.totalorder %s391, %s392
      %p401 = scmp.eq.s32.totalorder %s30, 0
      %p402 = por %p400, %p401
      %p403 = scmp.ne.s32.totalorder %s391, %s392
      %p404 = scmp.eq.s32.totalorder %s31, 1
      %p405 = por %p403, %p404
      %p407 = scmp.ne.s32.totalorder %s392, %s406
      %p408 = scmp.eq.s32.totalorder %s31, 0
      %p409 = por %p407, %p408
      %p410 = scmp.le.s32.totalorder 1, %s25
      %p411 = scmp.lt.s32.totalorder %s25, 3
      %p412 = pnand %p410, %p411
      %p413 = pneg %p412
      // Predicated region
      $region9: #{dsa_rnn_forward.5} parent=5 // pred_check
        _
      $region10: #{dsa_rnn_forward.5} parent=5 // pred_check_branch
        %415 = sbr.rel (%p412) target = $region12
      $region11: #{dsa_rnn_forward.5} parent=5 // pred_region
        %s416 = ssub.s32 %s25, 1
        // Predicated region
        $region13: #{dsa_rnn_forward.5} parent=11 // pred_check
          %p417 = pneg %p124
        $region14: #{dsa_rnn_forward.5} parent=11 // pred_check_branch
          %419 = sbr.rel (%p417) target = $region16
        $region15: #{dsa_rnn_forward.5} parent=11 // pred_region
          _
        $region16: #{dsa_rnn_forward.5} parent=11 // pred_fallthru
          _
        // Predicated region
        $region17: #{dsa_rnn_forward.5} parent=11 // pred_check
          %p420 = pneg %p145
        $region18: #{dsa_rnn_forward.5} parent=11 // pred_check_branch
          %422 = sbr.rel (%p420) target = $region20
        $region19: #{dsa_rnn_forward.5} parent=11 // pred_region
          _
        $region20: #{dsa_rnn_forward.5} parent=11 // pred_fallthru
          _
        // Predicated region
        $region21: #{dsa_rnn_forward.5} parent=11 // pred_check
          %p423 = pneg %p166
        $region22: #{dsa_rnn_forward.5} parent=11 // pred_check_branch
          %425 = sbr.rel (%p423) target = $region24
        $region23: #{dsa_rnn_forward.5} parent=11 // pred_region
          _
        $region24: #{dsa_rnn_forward.5} parent=11 // pred_fallthru
          _
        // Predicated region
        $region25: #{dsa_rnn_forward.5} parent=11 // pred_check
          %p426 = pneg %p187
        $region26: #{dsa_rnn_forward.5} parent=11 // pred_check_branch
          %428 = sbr.rel (%p426) target = $region28
        $region27: #{dsa_rnn_forward.5} parent=11 // pred_region
          _
        $region28: #{dsa_rnn_forward.5} parent=11 // pred_fallthru
          _
        // Predicated region
        $region29: #{dsa_rnn_forward.5} parent=11 // pred_check
          %p429 = pneg %p208
        $region30: #{dsa_rnn_forward.5} parent=11 // pred_check_branch
          %431 = sbr.rel (%p429) target = $region32
        $region31: #{dsa_rnn_forward.5} parent=11 // pred_region
          _
        $region32: #{dsa_rnn_forward.5} parent=11 // pred_fallthru
          _
        // Predicated region
        $region33: #{dsa_rnn_forward.5} parent=11 // pred_check
          %p432 = pneg %p229
        $region34: #{dsa_rnn_forward.5} parent=11 // pred_check_branch
          %434 = sbr.rel (%p432) target = $region36
        $region35: #{dsa_rnn_forward.5} parent=11 // pred_region
          _
        $region36: #{dsa_rnn_forward.5} parent=11 // pred_fallthru
          _
        // Predicated region
        $region37: #{dsa_rnn_forward.5} parent=11 // pred_check
          %p435 = pneg %p250
        $region38: #{dsa_rnn_forward.5} parent=11 // pred_check_branch
          %437 = sbr.rel (%p435) target = $region40
        $region39: #{dsa_rnn_forward.5} parent=11 // pred_region
          _
        $region40: #{dsa_rnn_forward.5} parent=11 // pred_fallthru
          _
        // Predicated region
        $region41: #{dsa_rnn_forward.5} parent=11 // pred_check
          %p438 = pneg %p271
        $region42: #{dsa_rnn_forward.5} parent=11 // pred_check_branch
          %440 = sbr.rel (%p438) target = $region44
        $region43: #{dsa_rnn_forward.5} parent=11 // pred_region
          _
        $region44: #{dsa_rnn_forward.5} parent=11 // pred_fallthru
          _
        // Predicated region
        $region45: #{dsa_rnn_forward.5} parent=11 // pred_check
          %p441 = pneg %p292
        $region46: #{dsa_rnn_forward.5} parent=11 // pred_check_branch
          %443 = sbr.rel (%p441) target = $region48
        $region47: #{dsa_rnn_forward.5} parent=11 // pred_region
          _
        $region48: #{dsa_rnn_forward.5} parent=11 // pred_fallthru
          _
        // Predicated region
        $region49: #{dsa_rnn_forward.5} parent=11 // pred_check
          %p444 = pneg %p313
        $region50: #{dsa_rnn_forward.5} parent=11 // pred_check_branch
          %446 = sbr.rel (%p444) target = $region52
        $region51: #{dsa_rnn_forward.5} parent=11 // pred_region
          _
        $region52: #{dsa_rnn_forward.5} parent=11 // pred_fallthru
          _
        // Predicated region
        $region53: #{dsa_rnn_forward.5} parent=11 // pred_check
          %p447 = pneg %p334
        $region54: #{dsa_rnn_forward.5} parent=11 // pred_check_branch
          %449 = sbr.rel (%p447) target = $region56
        $region55: #{dsa_rnn_forward.5} parent=11 // pred_region
          _
        $region56: #{dsa_rnn_forward.5} parent=11 // pred_fallthru
          _
      $region12: #{dsa_rnn_forward.5} parent=5 // pred_fallthru
        _
      %p450 = scmp.lt.s32.totalorder %s25, 2
      // Predicated region
      $region57: #{dsa_rnn_forward.5} parent=5 // pred_check
        %p451 = pneg %p450
      $region58: #{dsa_rnn_forward.5} parent=5 // pred_check_branch
        %453 = sbr.rel (%p451) target = $region60
      $region59: #{dsa_rnn_forward.5} parent=5 // pred_region
        // Predicated region
        $region61: #{dsa_rnn_forward.5} parent=59 // pred_check
          %p454 = pneg %p45
        $region62: #{dsa_rnn_forward.5} parent=59 // pred_check_branch
          %456 = sbr.rel (%p454) target = $region64
        $region63: #{dsa_rnn_forward.5} parent=59 // pred_region
          %s457 = sand.u32 %s35, 1
          %s458 = sand.u32 %s35, 1
          %s459 = smul.addr %s458, 64
          %s460 = scalar_lea.vmem [#allocation4], %s459
          %s461 = smul.u32 4, %s25
          %s462 = smul.addr %s461, 8
          %s463 = scalar_lea.vmem %s0, %s462
          // Predicated region
          $region65: #{dsa_rnn_forward.5} parent=63 // pred_check
            _
          $region66: #{dsa_rnn_forward.5} parent=63 // pred_check_branch
            %465 = sbr.rel (0) target = $region68
          $region67: #{dsa_rnn_forward.5} parent=63 // pred_region
            // Predicated region
            $region69: #{dsa_rnn_forward.5} parent=67 // pred_check
              _
            $region70: #{dsa_rnn_forward.5} parent=67 // pred_check_branch
              %467 = sbr.rel (0) target = $region72
            $region71: #{dsa_rnn_forward.5} parent=67 // pred_region
              // Predicated region
              $region84: #{dsa_rnn_forward.5} parent=71 // pred_check
                _
              $region85: #{dsa_rnn_forward.5} parent=71 // pred_check_branch
                %497 = sbr.rel (0) target = $region87
              $region86: #{dsa_rnn_forward.5} parent=71 // pred_region
                loop: start=0, step=1, limit=1
                $region88: #{dsa_rnn_forward.5} parent=86 // loop_pre_header
                  _
                $region89: #{dsa_rnn_forward.5} parent=86 // loop_header
                  %s499 = sphi 0, %s503
                  %p500 = scmp.ge.s32.totalorder %s499, 1
                  %s504 = sphi %s463, %s463
                  %s505 = sphi %s460, %s460
                $region90: #{dsa_rnn_forward.5} parent=86 // loop_header_branch
                  %502 = sbr.rel (%p500) target = $region94
                $region91: #{dsa_rnn_forward.5} parent=86 // loop_body
                  %v506 = vld [vmem:[%s504] sm:$0xff]
                  %507 = vst [vmem:[%s505] sm:$0xff] %v506
                  %v508 = vld [vmem:[%s504 + $0x8] sm:$0xff]
                  %509 = vst [vmem:[%s505 + $0x8] sm:$0xff] %v508
                  %v510 = vld [vmem:[%s504 + $0x10] sm:$0xff]
                  %511 = vst [vmem:[%s505 + $0x10] sm:$0xff] %v510
                  %v512 = vld [vmem:[%s504 + $0x18] sm:$0xff]
                  %513 = vst [vmem:[%s505 + $0x18] sm:$0xff] %v512
                  %v514 = vld [vmem:[%s504 + $0x40] sm:$0xff]
                  %515 = vst [vmem:[%s505 + $0x20] sm:$0xff] %v514
                  %v516 = vld [vmem:[%s504 + $0x48] sm:$0xff]
                  %517 = vst [vmem:[%s505 + $0x28] sm:$0xff] %v516
                  %v518 = vld [vmem:[%s504 + $0x50] sm:$0xff]
                  %519 = vst [vmem:[%s505 + $0x30] sm:$0xff] %v518
                  %v520 = vld [vmem:[%s504 + $0x58] sm:$0xff]
                  %521 = vst [vmem:[%s505 + $0x38] sm:$0xff] %v520
                $region92: #{dsa_rnn_forward.5} parent=86 // loop_footer
                  %s503 = sadd.s32 1, %s499
                $region93: #{dsa_rnn_forward.5} parent=86 // loop_footer_branch
                  %498 = sbr.rel target = $region89
                $region94: #{dsa_rnn_forward.5} parent=86 // loop_exit
                  _
              $region87: #{dsa_rnn_forward.5} parent=71 // pred_fallthru
                _
              // Predicated region
              $region95: #{dsa_rnn_forward.5} parent=71 // pred_check
                _
              $region96: #{dsa_rnn_forward.5} parent=71 // pred_check_branch
                %523 = sbr.rel target = $region98
              $region97: #{dsa_rnn_forward.5} parent=71 // pred_region
                _
              $region98: #{dsa_rnn_forward.5} parent=71 // pred_fallthru
                _
            $region72: #{dsa_rnn_forward.5} parent=67 // pred_fallthru
              _
            // Predicated region
            $region73: #{dsa_rnn_forward.5} parent=67 // pred_check
              _
            $region74: #{dsa_rnn_forward.5} parent=67 // pred_check_branch
              %469 = sbr.rel target = $region76
            $region75: #{dsa_rnn_forward.5} parent=67 // pred_region
              %s471 = ssub.s32 256, 1
              loop: start=0, step=1, limit=1
              $region77: #{dsa_rnn_forward.5} parent=75 // loop_pre_header
                _
              $region78: #{dsa_rnn_forward.5} parent=75 // loop_header
                %s473 = sphi 0, %s477
                %p474 = scmp.ge.s32.totalorder %s473, 1
                %s478 = sphi %s463, %s463
                %s479 = sphi %s460, %s460
              $region79: #{dsa_rnn_forward.5} parent=75 // loop_header_branch
                %476 = sbr.rel (%p474) target = $region83
              $region80: #{dsa_rnn_forward.5} parent=75 // loop_body
                %v480 = vld [vmem:[%s478] sm:%s471]
                %481 = vst [vmem:[%s479] sm:%s471] %v480
                %v482 = vld [vmem:[%s478 + $0x8] sm:%s471]
                %483 = vst [vmem:[%s479 + $0x8] sm:%s471] %v482
                %v484 = vld [vmem:[%s478 + $0x10] sm:%s471]
                %485 = vst [vmem:[%s479 + $0x10] sm:%s471] %v484
                %v486 = vld [vmem:[%s478 + $0x18] sm:%s471]
                %487 = vst [vmem:[%s479 + $0x18] sm:%s471] %v486
                %v488 = vld [vmem:[%s478 + $0x40] sm:%s471]
                %489 = vst [vmem:[%s479 + $0x20] sm:%s471] %v488
                %v490 = vld [vmem:[%s478 + $0x48] sm:%s471]
                %491 = vst [vmem:[%s479 + $0x28] sm:%s471] %v490
                %v492 = vld [vmem:[%s478 + $0x50] sm:%s471]
                %493 = vst [vmem:[%s479 + $0x30] sm:%s471] %v492
                %v494 = vld [vmem:[%s478 + $0x58] sm:%s471]
                %495 = vst [vmem:[%s479 + $0x38] sm:%s471] %v494
              $region81: #{dsa_rnn_forward.5} parent=75 // loop_footer
                %s477 = sadd.s32 1, %s473
              $region82: #{dsa_rnn_forward.5} parent=75 // loop_footer_branch
                %472 = sbr.rel target = $region78
              $region83: #{dsa_rnn_forward.5} parent=75 // loop_exit
                _
            $region76: #{dsa_rnn_forward.5} parent=67 // pred_fallthru
              _
          $region68: #{dsa_rnn_forward.5} parent=63 // pred_fallthru
            _
          %524 = vnop
        $region64: #{dsa_rnn_forward.5} parent=59 // pred_fallthru
          _
        // Predicated region
        $region99: #{dsa_rnn_forward.5} parent=59 // pred_check
          %p525 = pneg %p71
        $region100: #{dsa_rnn_forward.5} parent=59 // pred_check_branch
          %527 = sbr.rel (%p525) target = $region102
        $region101: #{dsa_rnn_forward.5} parent=59 // pred_region
          %s528 = smul.u32 4, %s25
          %p529 = scmp.lt.s32.totalorder %s528, 7
          %s530 = scalar_select %p529, %s528, 7
          %s531 = smul.addr %s530, 2
          %s532 = scalar_lea.vmem %s1, %s531
          %s533 = smul.u32 4, %s25
        $region102: #{dsa_rnn_forward.5} parent=59 // pred_fallthru
          _
        // Predicated region
        $region103: #{dsa_rnn_forward.5} parent=59 // pred_check
          %p534 = pneg %p97
        $region104: #{dsa_rnn_forward.5} parent=59 // pred_check_branch
          %536 = sbr.rel (%p534) target = $region106
        $region105: #{dsa_rnn_forward.5} parent=59 // pred_region
          %s537 = smul.u32 4, %s25
          %p538 = scmp.lt.s32.totalorder %s537, 7
          %s539 = scalar_select %p538, %s537, 7
          %s540 = smul.addr %s539, 2
          %s541 = scalar_lea.vmem %s2, %s540
          %s542 = smul.u32 4, %s25
        $region106: #{dsa_rnn_forward.5} parent=59 // pred_fallthru
          _
      $region60: #{dsa_rnn_forward.5} parent=5 // pred_fallthru
        _
      %p543 = scmp.le.s32.totalorder 1, %s25
      %p544 = scmp.lt.s32.totalorder %s25, 3
      %p545 = pnand %p543, %p544
      %p546 = pneg %p545
      // Predicated region
      $region107: #{dsa_rnn_forward.5} parent=5 // pred_check
        _
      $region108: #{dsa_rnn_forward.5} parent=5 // pred_check_branch
        %548 = sbr.rel (%p545) target = $region110
      $region109: #{dsa_rnn_forward.5} parent=5 // pred_region
        %s549 = ssub.s32 %s25, 1
        %s550 = sand.u32 %s38, 1
        %s551 = sand.u32 %s38, 1
        %s552 = smul.addr %s551, 64
        %s553 = scalar_lea.vmem [#allocation4], %s552
        // Predicated region
        $region111: #{dsa_rnn_forward.5} parent=109 // pred_check
          %p554 = pneg %p51
        $region112: #{dsa_rnn_forward.5} parent=109 // pred_check_branch
          %556 = sbr.rel (%p554) target = $region114
        $region113: #{dsa_rnn_forward.5} parent=109 // pred_region
          _
        $region114: #{dsa_rnn_forward.5} parent=109 // pred_fallthru
          _
        %s557 = sand.u32 %s38, 1
        %s558 = sand.u32 %s38, 1
        %s559 = smul.addr %s558, 64
        %s560 = scalar_lea.vmem [#allocation4], %s559
        %p561 = pneg %p51
        %p562 = pneg %p48
        %s563 = smul.u32 4, %s30
        %p564 = scmp.lt.s32.totalorder %s563, 7
        %s565 = scalar_select %p564, %s563, 7
        %s566 = smul.addr %s565, 2
        %s567 = scalar_lea.vmem %s1, %s566
        %p568 = pneg %p77
        %p569 = pneg %p74
        %s570 = smul.u32 4, %s30
        %p571 = scmp.lt.s32.totalorder %s570, 7
        %s572 = scalar_select %p571, %s570, 7
        %s573 = smul.addr %s572, 2
        %s574 = scalar_lea.vmem %s2, %s573
        %p575 = pneg %p103
        %p576 = pneg %p100
        %p577 = pneg %p124
        %p578 = pneg %p121
        %p579 = pneg %p145
        %p580 = pneg %p142
        %p581 = pneg %p166
        %p582 = pneg %p163
        %p583 = pneg %p187
        %p584 = pneg %p184
        %p585 = pneg %p208
        %p586 = pneg %p205
        %p587 = pneg %p229
        %p588 = pneg %p226
        %p589 = pneg %p250
        %p590 = pneg %p247
        %p591 = pneg %p271
        %p592 = pneg %p268
        %p593 = pneg %p292
        %p594 = pneg %p289
        %p595 = pneg %p313
        %p596 = pneg %p310
        %p597 = pneg %p334
        %p598 = pneg %p331
        %p599 = pneg %p360
        %p600 = pneg %p357
        %s601 = smul.u32 4, %s30
        %p602 = scmp.lt.s32.totalorder %s601, 7
        %s603 = scalar_select %p602, %s601, 7
        %s604 = smul.addr %s603, 2
        %s605 = scalar_lea.vmem %s14, %s604
        %p606 = pneg %p381
        %p607 = pneg %p378
        %p608 = pneg %p402
        %p609 = pneg %p399
        %s610 = smul.u32 4, %s30
        %s611 = smul.u32 4, %s30
        %p612 = scmp.lt.s32.totalorder %s611, 7
        %s613 = scalar_select %p612, %s611, 7
        %s614 = smul.addr %s613, 2
        %s615 = scalar_lea.vmem %s1, %s614
        %s616 = smul.u32 4, %s30
        %s617 = smul.u32 4, %s30
        %p618 = scmp.lt.s32.totalorder %s617, 7
        %s619 = scalar_select %p618, %s617, 7
        %s620 = smul.addr %s619, 2
        %s621 = scalar_lea.vmem %s2, %s620
        %s622 = smul.u32 4, %s30
        %s623 = smul.u32 4, %s30
        %p624 = scmp.lt.s32.totalorder %s623, 7
        %s625 = scalar_select %p624, %s623, 7
        %s626 = smul.addr %s625, 2
        %s627 = scalar_lea.vmem %s14, %s626
        %s628 = smul.u32 4, %s30
        %p630 = scmp.eq.s32.totalorder %s30, 0
        // Predicated region
        $region115: #{dsa_rnn_forward.5} parent=109 // pred_check
          %p631 = pneg %p630
        $region116: #{dsa_rnn_forward.5} parent=109 // pred_check_branch
          %633 = sbr.rel (%p631) target = $region118
        $region117: #{dsa_rnn_forward.5} parent=109 // pred_region
          %v634 = vld [vmem:[%s3] sm:$0x3]
          %635 = vst [vmem:[#allocation2] sm:$0x3] %v634
          %v636 = vld [vmem:[%s4] sm:$0x3]
          %637 = vst [vmem:[#allocation3] sm:$0x3] %v636
        $region118: #{dsa_rnn_forward.5} parent=109 // pred_fallthru
          _
        %v638 = vld [vmem:[%s5] sm:$0xff]
        %v639 = vld [vmem:[%s5 + $0x8] sm:$0xff]
        %v640 = vld [vmem:[%s5 + $0x10] sm:$0xff]
        %v641 = vld [vmem:[%s5 + $0x18] sm:$0xff]
        %v642 = vld [vmem:[%s5 + $0x20] sm:$0xff]
        %v643 = vld [vmem:[%s5 + $0x28] sm:$0xff]
        %v644 = vld [vmem:[%s5 + $0x30] sm:$0xff]
        %v645 = vld [vmem:[%s5 + $0x38] sm:$0xff]
        %v646 = vld [vmem:[%s6] sm:$0x1]
        %v647 = vld [vmem:[%s7] sm:$0xff]
        %v648 = vld [vmem:[%s7 + $0x8] sm:$0xff]
        %v649 = vld [vmem:[%s7 + $0x10] sm:$0xff]
        %v650 = vld [vmem:[%s7 + $0x18] sm:$0xff]
        %v651 = vld [vmem:[%s7 + $0x20] sm:$0xff]
        %v652 = vld [vmem:[%s7 + $0x28] sm:$0xff]
        %v653 = vld [vmem:[%s7 + $0x30] sm:$0xff]
        %v654 = vld [vmem:[%s7 + $0x38] sm:$0xff]
        %v655 = vld [vmem:[%s7 + $0x40] sm:$0xff]
        %v656 = vld [vmem:[%s7 + $0x48] sm:$0xff]
        %v657 = vld [vmem:[%s7 + $0x50] sm:$0xff]
        %v658 = vld [vmem:[%s7 + $0x58] sm:$0xff]
        %v659 = vld [vmem:[%s7 + $0x60] sm:$0xff]
        %v660 = vld [vmem:[%s7 + $0x68] sm:$0xff]
        %v661 = vld [vmem:[%s7 + $0x70] sm:$0xff]
        %v662 = vld [vmem:[%s7 + $0x78] sm:$0xff]
        %v663 = vld [vmem:[%s8] sm:$0x1]
        %v664 = vld [vmem:[%s9] sm:$0xff]
        %v665 = vld [vmem:[%s9 + $0x8] sm:$0xff]
        %v666 = vld [vmem:[%s9 + $0x10] sm:$0xff]
        %v667 = vld [vmem:[%s9 + $0x18] sm:$0xff]
        %v668 = vld [vmem:[%s9 + $0x20] sm:$0xff]
        %v669 = vld [vmem:[%s9 + $0x28] sm:$0xff]
        %v670 = vld [vmem:[%s9 + $0x30] sm:$0xff]
        %v671 = vld [vmem:[%s9 + $0x38] sm:$0xff]
        %v672 = vld [vmem:[%s9 + $0x40] sm:$0xff]
        %v673 = vld [vmem:[%s9 + $0x48] sm:$0xff]
        %v674 = vld [vmem:[%s9 + $0x50] sm:$0xff]
        %v675 = vld [vmem:[%s9 + $0x58] sm:$0xff]
        %v676 = vld [vmem:[%s9 + $0x60] sm:$0xff]
        %v677 = vld [vmem:[%s9 + $0x68] sm:$0xff]
        %v678 = vld [vmem:[%s9 + $0x70] sm:$0xff]
        %v679 = vld [vmem:[%s9 + $0x78] sm:$0xff]
        %v680 = vld [vmem:[%s10] sm:$0xff]
        %v681 = vld [vmem:[%s10 + $0x8] sm:$0xff]
        %v682 = vld [vmem:[%s10 + $0x10] sm:$0xff]
        %v683 = vld [vmem:[%s10 + $0x18] sm:$0xff]
        %v684 = vld [vmem:[%s10 + $0x20] sm:$0xff]
        %v685 = vld [vmem:[%s10 + $0x28] sm:$0xff]
        %v686 = vld [vmem:[%s10 + $0x30] sm:$0xff]
        %v687 = vld [vmem:[%s10 + $0x38] sm:$0xff]
        %v688 = vld [vmem:[%s10 + $0x40] sm:$0xff]
        %v689 = vld [vmem:[%s10 + $0x48] sm:$0xff]
        %v690 = vld [vmem:[%s10 + $0x50] sm:$0xff]
        %v691 = vld [vmem:[%s10 + $0x58] sm:$0xff]
        %v692 = vld [vmem:[%s10 + $0x60] sm:$0xff]
        %v693 = vld [vmem:[%s10 + $0x68] sm:$0xff]
        %v694 = vld [vmem:[%s10 + $0x70] sm:$0xff]
        %v695 = vld [vmem:[%s10 + $0x78] sm:$0xff]
        %v696 = vld [vmem:[%s11] sm:$0xff]
        %v697 = vld [vmem:[%s11 + $0x8] sm:$0xff]
        %v698 = vld [vmem:[%s11 + $0x10] sm:$0xff]
        %v699 = vld [vmem:[%s11 + $0x18] sm:$0xff]
        %v700 = vld [vmem:[%s11 + $0x20] sm:$0xff]
        %v701 = vld [vmem:[%s11 + $0x28] sm:$0xff]
        %v702 = vld [vmem:[%s11 + $0x30] sm:$0xff]
        %v703 = vld [vmem:[%s11 + $0x38] sm:$0xff]
        %v704 = vld [vmem:[%s11 + $0x40] sm:$0xff]
        %v705 = vld [vmem:[%s11 + $0x48] sm:$0xff]
        %v706 = vld [vmem:[%s11 + $0x50] sm:$0xff]
        %v707 = vld [vmem:[%s11 + $0x58] sm:$0xff]
        %v708 = vld [vmem:[%s11 + $0x60] sm:$0xff]
        %v709 = vld [vmem:[%s11 + $0x68] sm:$0xff]
        %v710 = vld [vmem:[%s11 + $0x70] sm:$0xff]
        %v711 = vld [vmem:[%s11 + $0x78] sm:$0xff]
        %v712 = vld [vmem:[%s11 + $0x80] sm:$0xff]
        %v713 = vld [vmem:[%s11 + $0x88] sm:$0xff]
        %v714 = vld [vmem:[%s11 + $0x90] sm:$0xff]
        %v715 = vld [vmem:[%s11 + $0x98] sm:$0xff]
        %v716 = vld [vmem:[%s11 + $0xa0] sm:$0xff]
        %v717 = vld [vmem:[%s11 + $0xa8] sm:$0xff]
        %v718 = vld [vmem:[%s11 + $0xb0] sm:$0xff]
        %v719 = vld [vmem:[%s11 + $0xb8] sm:$0xff]
        %v720 = vld [vmem:[%s11 + $0xc0] sm:$0xff]
        %v721 = vld [vmem:[%s11 + $0xc8] sm:$0xff]
        %v722 = vld [vmem:[%s11 + $0xd0] sm:$0xff]
        %v723 = vld [vmem:[%s11 + $0xd8] sm:$0xff]
        %v724 = vld [vmem:[%s11 + $0xe0] sm:$0xff]
        %v725 = vld [vmem:[%s11 + $0xe8] sm:$0xff]
        %v726 = vld [vmem:[%s11 + $0xf0] sm:$0xff]
        %v727 = vld [vmem:[%s11 + $0xf8] sm:$0xff]
        %v728 = vld [vmem:[%s12] sm:$0xff]
        %v729 = vld [vmem:[%s12 + $0x8] sm:$0xff]
        %v730 = vld [vmem:[%s12 + $0x10] sm:$0xff]
        %v731 = vld [vmem:[%s12 + $0x18] sm:$0xff]
        %v732 = vld [vmem:[%s12 + $0x20] sm:$0xff]
        %v733 = vld [vmem:[%s12 + $0x28] sm:$0xff]
        %v734 = vld [vmem:[%s12 + $0x30] sm:$0xff]
        %v735 = vld [vmem:[%s12 + $0x38] sm:$0xff]
        %v736 = vld [vmem:[%s12 + $0x40] sm:$0xff]
        %v737 = vld [vmem:[%s12 + $0x48] sm:$0xff]
        %v738 = vld [vmem:[%s12 + $0x50] sm:$0xff]
        %v739 = vld [vmem:[%s12 + $0x58] sm:$0xff]
        %v740 = vld [vmem:[%s12 + $0x60] sm:$0xff]
        %v741 = vld [vmem:[%s12 + $0x68] sm:$0xff]
        %v742 = vld [vmem:[%s12 + $0x70] sm:$0xff]
        %v743 = vld [vmem:[%s12 + $0x78] sm:$0xff]
        %v744 = vld [vmem:[%s12 + $0x80] sm:$0xff]
        %v745 = vld [vmem:[%s12 + $0x88] sm:$0xff]
        %v746 = vld [vmem:[%s12 + $0x90] sm:$0xff]
        %v747 = vld [vmem:[%s12 + $0x98] sm:$0xff]
        %v748 = vld [vmem:[%s12 + $0xa0] sm:$0xff]
        %v749 = vld [vmem:[%s12 + $0xa8] sm:$0xff]
        %v750 = vld [vmem:[%s12 + $0xb0] sm:$0xff]
        %v751 = vld [vmem:[%s12 + $0xb8] sm:$0xff]
        %v752 = vld [vmem:[%s12 + $0xc0] sm:$0xff]
        %v753 = vld [vmem:[%s12 + $0xc8] sm:$0xff]
        %v754 = vld [vmem:[%s12 + $0xd0] sm:$0xff]
        %v755 = vld [vmem:[%s12 + $0xd8] sm:$0xff]
        %v756 = vld [vmem:[%s12 + $0xe0] sm:$0xff]
        %v757 = vld [vmem:[%s12 + $0xe8] sm:$0xff]
        %v758 = vld [vmem:[%s12 + $0xf0] sm:$0xff]
        %v759 = vld [vmem:[%s12 + $0xf8] sm:$0xff]
        %v760 = vld [vmem:[%s13] sm:$0xf]
        %v761 = vld [vmem:[#allocation2] sm:$0x3]
        %v762 = vld [vmem:[#allocation3] sm:$0x3]
        %v763 = vld [vmem:[%s553] sm:$0xff]
        %v764 = vld [vmem:[%s553 + $0x20] sm:$0xff]
        %v765 = vld [vmem:[%s615] sm:$0x3]
        %v766 = vld [vmem:[%s621] sm:$0x3]
        %vm767 = vcmask 523264
        %v769 = vsel %vm767, %v763, 0
        %v772 = vsel %vm767, %v764, 0
        %774 = vmatprep.subr.mxu0 0.0
        %775 = vmatpush1.msra.mxu0 0.0
        %776 = vmatprep.subr.mxu0 0.0
        %777 = vmatpush1.msra.mxu0 0.0
        %778 = vmatprep.subr.mxu0 0.0
        %779 = vmatpush1.msra.mxu0 0.0
        %780 = vmatprep.subr.mxu0 0.0
        %781 = vmatpush1.msra.mxu0 0.0
        %782 = vmatprep.subr.mxu0 0.0
        %783 = vmatpush1.msra.mxu0 0.0
        %784 = vmatprep.subr.mxu0 0.0
        %785 = vmatpush1.msra.mxu0 0.0
        %786 = vmatprep.subr.mxu0 0.0
        %787 = vmatpush1.msra.mxu0 0.0
        %788 = vmatprep.subr.mxu0 0.0
        %789 = vmatpush1.msra.mxu0 0.0
        %790 = vmatprep.subr.mxu0 0.0
        %791 = vmatpush1.msra.mxu0 %v645
        %792 = vmatprep.subr.mxu0 0.0
        %793 = vmatpush1.msra.mxu0 %v644
        %794 = vmatprep.subr.mxu0 0.0
        %795 = vmatpush1.msra.mxu0 %v643
        %796 = vmatprep.subr.mxu0 0.0
        %797 = vmatpush1.msra.mxu0 %v642
        %798 = vmatprep.subr.mxu0 0.0
        %799 = vmatpush1.msra.mxu0 %v641
        %800 = vmatprep.subr.mxu0 0.0
        %801 = vmatpush1.msra.mxu0 %v640
        %802 = vmatprep.subr.mxu0 0.0
        %803 = vmatpush1.msra.mxu0 %v639
        %804 = vmatprep.subr.mxu0 0.0
        %805 = vmatpush1.msra.mxu0 %v638
        %806 = vmatprep.subr.mxu0 0.0
        %807 = vmatpush2.msra.mxu0 0.0
        %808 = vmatprep.subr.mxu0 0.0
        %809 = vmatpush2.msra.mxu0 0.0
        %810 = vmatprep.subr.mxu0 0.0
        %811 = vmatpush2.msra.mxu0 0.0
        %812 = vmatprep.subr.mxu0 0.0
        %813 = vmatpush2.msra.mxu0 0.0
        %814 = vmatprep.subr.mxu0 0.0
        %815 = vmatpush2.msra.mxu0 0.0
        %816 = vmatprep.subr.mxu0 0.0
        %817 = vmatpush2.msra.mxu0 0.0
        %818 = vmatprep.subr.mxu0 0.0
        %819 = vmatpush2.msra.mxu0 0.0
        %820 = vmatprep.subr.mxu0 0.0
        %821 = vmatpush2.msra.mxu0 0.0
        %822 = vmatprep.subr.mxu0 0.0
        %823 = vmatpush2.msra.mxu0 0.0
        %824 = vmatprep.subr.mxu0 0.0
        %825 = vmatpush2.msra.mxu0 0.0
        %826 = vmatprep.subr.mxu0 0.0
        %827 = vmatpush2.msra.mxu0 0.0
        %828 = vmatprep.subr.mxu0 0.0
        %829 = vmatpush2.msra.mxu0 0.0
        %830 = vmatprep.subr.mxu0 0.0
        %831 = vmatpush2.msra.mxu0 0.0
        %832 = vmatprep.subr.mxu0 0.0
        %833 = vmatpush2.msra.mxu0 0.0
        %834 = vmatprep.subr.mxu0 0.0
        %835 = vmatpush2.msra.mxu0 0.0
        %836 = vmatprep.subr.mxu0 0.0
        %837 = vmatpush2.msra.mxu0 0.0
        %838 = vmatprep.mubr.f32.mxu0 0.0
        %839 = vmatmul.mubr.f32.gmra.mxu0 %v769
        %v840 = vpop.f32.mrf.mxu0
        %v841 = vadd.f32 0.0, %v840
        %v842 = vpop.f32.mrf.mxu0
        %843 = vmatprep.mubr.f32.mxu0 0.0
        %844 = vmatmul.mubr.f32.gmra.mxu0 %v772
        %v845 = vpop.f32.mrf.mxu0
        %v846 = vadd.f32 0.0, %v845
        %v847 = vpop.f32.mrf.mxu0
        %848 = vdwg.mxu0
        %849 = vmatprep.subr.mxu0 0.0
        %850 = vmatpush1.msra.mxu0 %v662
        %851 = vmatprep.subr.mxu0 0.0
        %852 = vmatpush1.msra.mxu0 %v661
        %853 = vmatprep.subr.mxu0 0.0
        %854 = vmatpush1.msra.mxu0 %v660
        %855 = vmatprep.subr.mxu0 0.0
        %856 = vmatpush1.msra.mxu0 %v659
        %857 = vmatprep.subr.mxu0 0.0
        %858 = vmatpush1.msra.mxu0 %v658
        %859 = vmatprep.subr.mxu0 0.0
        %860 = vmatpush1.msra.mxu0 %v657
        %861 = vmatprep.subr.mxu0 0.0
        %862 = vmatpush1.msra.mxu0 %v656
        %863 = vmatprep.subr.mxu0 0.0
        %864 = vmatpush1.msra.mxu0 %v655
        %865 = vmatprep.subr.mxu0 0.0
        %866 = vmatpush1.msra.mxu0 %v654
        %867 = vmatprep.subr.mxu0 0.0
        %868 = vmatpush1.msra.mxu0 %v653
        %869 = vmatprep.subr.mxu0 0.0
        %870 = vmatpush1.msra.mxu0 %v652
        %871 = vmatprep.subr.mxu0 0.0
        %872 = vmatpush1.msra.mxu0 %v651
        %873 = vmatprep.subr.mxu0 0.0
        %874 = vmatpush1.msra.mxu0 %v650
        %875 = vmatprep.subr.mxu0 0.0
        %876 = vmatpush1.msra.mxu0 %v649
        %877 = vmatprep.subr.mxu0 0.0
        %878 = vmatpush1.msra.mxu0 %v648
        %879 = vmatprep.subr.mxu0 0.0
        %880 = vmatpush1.msra.mxu0 %v647
        %881 = vmatprep.subr.mxu0 0.0
        %882 = vmatpush2.msra.mxu0 0.0
        %883 = vmatprep.subr.mxu0 0.0
        %884 = vmatpush2.msra.mxu0 0.0
        %885 = vmatprep.subr.mxu0 0.0
        %886 = vmatpush2.msra.mxu0 0.0
        %887 = vmatprep.subr.mxu0 0.0
        %888 = vmatpush2.msra.mxu0 0.0
        %889 = vmatprep.subr.mxu0 0.0
        %890 = vmatpush2.msra.mxu0 0.0
        %891 = vmatprep.subr.mxu0 0.0
        %892 = vmatpush2.msra.mxu0 0.0
        %893 = vmatprep.subr.mxu0 0.0
        %894 = vmatpush2.msra.mxu0 0.0
        %895 = vmatprep.subr.mxu0 0.0
        %896 = vmatpush2.msra.mxu0 0.0
        %897 = vmatprep.subr.mxu0 0.0
        %898 = vmatpush2.msra.mxu0 0.0
        %899 = vmatprep.subr.mxu0 0.0
        %900 = vmatpush2.msra.mxu0 0.0
        %901 = vmatprep.subr.mxu0 0.0
        %902 = vmatpush2.msra.mxu0 0.0
        %903 = vmatprep.subr.mxu0 0.0
        %904 = vmatpush2.msra.mxu0 0.0
        %905 = vmatprep.subr.mxu0 0.0
        %906 = vmatpush2.msra.mxu0 0.0
        %907 = vmatprep.subr.mxu0 0.0
        %908 = vmatpush2.msra.mxu0 0.0
        %909 = vmatprep.subr.mxu0 0.0
        %910 = vmatpush2.msra.mxu0 0.0
        %911 = vmatprep.subr.mxu0 0.0
        %912 = vmatpush2.msra.mxu0 0.0
        %913 = vmatprep.mubr.f32.mxu0 0.0
        %914 = vmatmul.mubr.f32.gmra.mxu0 %v761
        %v915 = vpop.f32.mrf.mxu0
        %v916 = vadd.f32 0.0, %v915
        %v917 = vpop.f32.mrf.mxu0
        %918 = vdwg.mxu0
        %v921 = vunpack.c.l.s4 1966171168
        %v922 = vunpack.c.0.s8 %v921
        %v923 = vlaneseq
        %v924 = vshrl.u32 %v923, 7
        %v925 = vsub.s32 %v922, %v924
        %v926 = vrot.slane %v916, %v925
        %v927 = vcombine.high %v926, %v926
        %v929 = vunpack.c.l.s4 1966171168
        %v930 = vunpack.c.0.s8 %v929
        %v931 = vlaneseq
        %v932 = vshrl.u32 %v931, 7
        %v933 = vsub.s32 %v930, %v932
        %v934 = vrot.slane %v926, %v933
        %v936 = vunpack.c.l.s4 1966171168
        %v937 = vunpack.c.0.s8 %v936
        %v938 = vlaneseq
        %v939 = vshrl.u32 %v938, 7
        %v940 = vsub.s32 %v937, %v939
        %v941 = vrot.slane %v927, %v940
        %v942 = vlaneseq
        %v943 = vshrl.u32 %v942, 7
        %v944 = vsub.s32 0, %v943
        %v945 = vrot.slane %v934, %v944
        %v946 = vlaneseq
        %v947 = vshrl.u32 %v946, 7
        %v948 = vsub.s32 0, %v947
        %v949 = vrot.slane %v941, %v948
        %v952 = vadd.f32 %v945, %v841
        %v953 = vadd.f32 %v949, %v846
        %v955 = vlaneseq
        %v956 = vshrl.u32 %v955, 7
        %v957 = vsub.s32 0, %v956
        %v958 = vrot.slane %v646, %v957
        %v960 = vadd.f32 %v952, %v958
        %v961 = vadd.f32 %v953, %v958
        %v962 = vtanh.pop %v960
        %v963 = vtanh.pop %v961
        %v965 = vlaneseq
        %v966 = vshrl.u32 %v965, 7
        %v967 = vsub.s32 0, %v966
        %v968 = vrot.slane %v663, %v967
        %v970 = vmul.f32 %v962, %v968
        %v971 = vmul.f32 %v963, %v968
        %v972 = vsel %vm767, %v970, 0.0
        %973 = vadd.xlane.f32.xlu0 %v972
        %v974 = vpop.xlane.xlu0 %973
        %v975 = vsel %vm767, %v971, 0.0
        %976 = vadd.xlane.f32.xlu0 %v975
        %v977 = vpop.xlane.xlu0 %976
        %vm978 = vcmp.gt.f32.partialorder %v765, 0.5
        %v981 = vlaneseq
        %v982 = vand.u32 %v981, 127
        %v983 = vlaneseq
        %v984 = vshrl.u32 %v983, 7
        %v985 = vsub.s32 %v982, %v984
        %v986 = vrot.slane %v974, %v985
        %v987 = vlaneseq
        %v988 = vshrl.u32 %v987, 7
        %v989 = vsub.s32 %v982, %v988
        %v990 = vrot.slane %v977, %v989
        %vm991 = vcmask 1041409
        %v992 = vsel %vm991, %v990, %v986
        %v994 = vsel %vm978, %v992, -1e+09
        %vm995 = vcmask 58368
        %v996 = vsel %vm995, %v994, -inf
        %997 = vmax.xlane.f32.xlu0 %v996
        %v998 = vpop.xlane.xlu0 %997
        %v999 = vsub.f32 %v994, %v998
        %v1000 = vmul.f32 %v999, 1.442695
        %v1001 = vpow.pop %v1000
        %v1002 = vsel %vm995, %v1001, 0.0
        %1003 = vadd.xlane.f32.xlu0 %v1002
        %v1004 = vpop.xlane.xlu0 %1003
        %v1005 = vrcp.pop %v1004
        %v1006 = vmul.f32 %v1001, %v1005
        %v1007 = vlaneseq
        %v1008 = vshrl.u32 %v1007, 7
        %v1009 = vsub.s32 0, %v1008
        %v1010 = vrot.slane %v1006, %v1009
        %1012 = vbcast.lane.b32.xlu0 %v1010, 256
        %v1013 = vpop.permute.xlu0 %1012
        %v1014 = vlaneseq
        %v1015 = vshrl.u32 %v1014, 7
        %v1016 = vsub.s32 1, %v1015
        %v1017 = vrot.slane %v1006, %v1016
        %1019 = vbcast.lane.b32.xlu0 %v1017, 256
        %v1020 = vpop.permute.xlu0 %1019
        %v1021 = vmul.f32 %v1013, %v763
        %v1022 = vmul.f32 %v1020, %v764
        %v1023 = vsel %vm767, %v1021, 0.0
        %v1024 = vrot.slane %v1023, 4
        %v1025 = vadd.f32 %v1023, %v1024
        %v1026 = vrot.slane %v1025, 2
        %v1027 = vadd.f32 %v1025, %v1026
        %v1028 = vrot.slane %v1027, 1
        %v1029 = vadd.f32 %v1027, %v1028
        %v1030 = vsel %vm767, %v1022, 0.0
        %v1031 = vrot.slane %v1030, 4
        %v1032 = vadd.f32 %v1030, %v1031
        %v1033 = vrot.slane %v1032, 2
        %v1034 = vadd.f32 %v1032, %v1033
        %v1035 = vrot.slane %v1034, 1
        %v1036 = vadd.f32 %v1034, %v1035
        %v1037 = vpack.c.bf16 %v1029, %v1029
        %v1038 = vpack.c.bf16 %v1036, %v1036
        %v1039 = vpack.c.bf16 %v766, %v766
        %v1056 = vunpack.c.l.b16 %v680
        %v1057 = vunpack.c.h.b16 %v680
        %v1058 = vunpack.c.l.b16 %v681
        %v1059 = vunpack.c.h.b16 %v681
        %v1060 = vunpack.c.l.b16 %v682
        %v1061 = vunpack.c.h.b16 %v682
        %v1062 = vunpack.c.l.b16 %v683
        %v1063 = vunpack.c.h.b16 %v683
        %v1064 = vunpack.c.l.b16 %v684
        %v1065 = vunpack.c.h.b16 %v684
        %v1066 = vunpack.c.l.b16 %v685
        %v1067 = vunpack.c.h.b16 %v685
        %v1068 = vunpack.c.l.b16 %v686
        %v1069 = vunpack.c.h.b16 %v686
        %v1070 = vunpack.c.l.b16 %v687
        %v1071 = vunpack.c.h.b16 %v687
        %v1072 = vunpack.c.l.b16 %v688
        %v1073 = vunpack.c.h.b16 %v688
        %v1074 = vunpack.c.l.b16 %v689
        %v1075 = vunpack.c.h.b16 %v689
        %v1076 = vunpack.c.l.b16 %v690
        %v1077 = vunpack.c.h.b16 %v690
        %v1078 = vunpack.c.l.b16 %v691
        %v1079 = vunpack.c.h.b16 %v691
        %v1080 = vunpack.c.l.b16 %v692
        %v1081 = vunpack.c.h.b16 %v692
        %v1082 = vunpack.c.l.b16 %v693
        %v1083 = vunpack.c.h.b16 %v693
        %v1084 = vunpack.c.l.b16 %v694
        %v1085 = vunpack.c.h.b16 %v694
        %v1086 = vunpack.c.l.b16 %v695
        %v1087 = vunpack.c.h.b16 %v695
        %v1088 = vpack.c.b16 %v1060, %v1056
        %v1089 = vpack.c.b16 %v1061, %v1057
        %v1090 = vpack.c.b16 %v1062, %v1058
        %v1091 = vpack.c.b16 %v1063, %v1059
        %v1092 = vpack.c.b16 %v1068, %v1064
        %v1093 = vpack.c.b16 %v1069, %v1065
        %v1094 = vpack.c.b16 %v1070, %v1066
        %v1095 = vpack.c.b16 %v1071, %v1067
        %v1096 = vpack.c.b16 %v1076, %v1072
        %v1097 = vpack.c.b16 %v1077, %v1073
        %v1098 = vpack.c.b16 %v1078, %v1074
        %v1099 = vpack.c.b16 %v1079, %v1075
        %v1100 = vpack.c.b16 %v1084, %v1080
        %v1101 = vpack.c.b16 %v1085, %v1081
        %v1102 = vpack.c.b16 %v1086, %v1082
        %v1103 = vpack.c.b16 %v1087, %v1083
        %v1121 = vsel %vm767, %v1039, 0
        %1123 = vmatprep.subr.bf16.mxu0 0
        %1124 = vmatpush1.bf16.msra.mxu0 0
        %1125 = vmatprep.subr.bf16.mxu0 0
        %1126 = vmatpush1.bf16.msra.mxu0 0
        %1127 = vmatprep.subr.bf16.mxu0 0
        %1128 = vmatpush1.bf16.msra.mxu0 0
        %1129 = vmatprep.subr.bf16.mxu0 0
        %1130 = vmatpush1.bf16.msra.mxu0 0
        %1131 = vmatprep.subr.bf16.mxu0 %v1101
        %1132 = vmatpush1.bf16.msra.mxu0 %v1100
        %1133 = vmatprep.subr.bf16.mxu0 %v1097
        %1134 = vmatpush1.bf16.msra.mxu0 %v1096
        %1135 = vmatprep.subr.bf16.mxu0 %v1093
        %1136 = vmatpush1.bf16.msra.mxu0 %v1092
        %1137 = vmatprep.subr.bf16.mxu0 %v1089
        %1138 = vmatpush1.bf16.msra.mxu0 %v1088
        %1139 = vmatprep.subr.bf16.mxu0 0
        %1140 = vmatpush2.bf16.msra.mxu0 0
        %1141 = vmatprep.subr.bf16.mxu0 0
        %1142 = vmatpush2.bf16.msra.mxu0 0
        %1143 = vmatprep.subr.bf16.mxu0 0
        %1144 = vmatpush2.bf16.msra.mxu0 0
        %1145 = vmatprep.subr.bf16.mxu0 0
        %1146 = vmatpush2.bf16.msra.mxu0 0
        %1147 = vmatprep.subr.bf16.mxu0 0
        %1148 = vmatpush2.bf16.msra.mxu0 0
        %1149 = vmatprep.subr.bf16.mxu0 0
        %1150 = vmatpush2.bf16.msra.mxu0 0
        %1151 = vmatprep.subr.bf16.mxu0 0
        %1152 = vmatpush2.bf16.msra.mxu0 0
        %1153 = vmatprep.subr.bf16.mxu0 0
        %1154 = vmatpush2.bf16.msra.mxu0 0
        %1155 = vmatprep.mubr.bf16.mxu0 0
        %1156 = vmatmul.mubr.bf16.gmra.mxu0 %v1121
        %v1157 = vpop.f32.mrf.mxu0
        %v1158 = vadd.f32 0.0, %v1157
        %v1159 = vpop.f32.mrf.mxu0
        %v1160 = vadd.f32 0.0, %v1159
        %v1161 = vpop.f32.mrf.mxu0
        %v1162 = vpop.f32.mrf.mxu0
        %1163 = vdwg.mxu0
        %1164 = vmatprep.subr.bf16.mxu0 0
        %1165 = vmatpush1.bf16.msra.mxu0 0
        %1166 = vmatprep.subr.bf16.mxu0 0
        %1167 = vmatpush1.bf16.msra.mxu0 0
        %1168 = vmatprep.subr.bf16.mxu0 0
        %1169 = vmatpush1.bf16.msra.mxu0 0
        %1170 = vmatprep.subr.bf16.mxu0 0
        %1171 = vmatpush1.bf16.msra.mxu0 0
        %1172 = vmatprep.subr.bf16.mxu0 %v1103
        %1173 = vmatpush1.bf16.msra.mxu0 %v1102
        %1174 = vmatprep.subr.bf16.mxu0 %v1099
        %1175 = vmatpush1.bf16.msra.mxu0 %v1098
        %1176 = vmatprep.subr.bf16.mxu0 %v1095
        %1177 = vmatpush1.bf16.msra.mxu0 %v1094
        %1178 = vmatprep.subr.bf16.mxu0 %v1091
        %1179 = vmatpush1.bf16.msra.mxu0 %v1090
        %1180 = vmatprep.subr.bf16.mxu0 0
        %1181 = vmatpush2.bf16.msra.mxu0 0
        %1182 = vmatprep.subr.bf16.mxu0 0
        %1183 = vmatpush2.bf16.msra.mxu0 0
        %1184 = vmatprep.subr.bf16.mxu0 0
        %1185 = vmatpush2.bf16.msra.mxu0 0
        %1186 = vmatprep.subr.bf16.mxu0 0
        %1187 = vmatpush2.bf16.msra.mxu0 0
        %1188 = vmatprep.subr.bf16.mxu0 0
        %1189 = vmatpush2.bf16.msra.mxu0 0
        %1190 = vmatprep.subr.bf16.mxu0 0
        %1191 = vmatpush2.bf16.msra.mxu0 0
        %1192 = vmatprep.subr.bf16.mxu0 0
        %1193 = vmatpush2.bf16.msra.mxu0 0
        %1194 = vmatprep.subr.bf16.mxu0 0
        %1195 = vmatpush2.bf16.msra.mxu0 0
        %1196 = vmatprep.mubr.bf16.mxu0 0
        %1197 = vmatmul.mubr.bf16.gmra.mxu0 %v1121
        %v1198 = vpop.f32.mrf.mxu0
        %v1199 = vadd.f32 0.0, %v1198
        %v1200 = vpop.f32.mrf.mxu0
        %v1201 = vadd.f32 0.0, %v1200
        %v1202 = vpop.f32.mrf.mxu0
        %v1203 = vpop.f32.mrf.mxu0
        %1204 = vdwg.mxu0
        %v1207 = vunpack.c.l.b16 %v1037
        %v1208 = vunpack.c.l.b16 %v1038
        %v1209 = vsel %vm991, %v1208, %v1207
        %v1210 = vpack.c.b16 %v1209, %v1209
        %v1227 = vunpack.c.l.b16 %v664
        %v1228 = vunpack.c.h.b16 %v664
        %v1229 = vunpack.c.l.b16 %v665
        %v1230 = vunpack.c.h.b16 %v665
        %v1231 = vunpack.c.l.b16 %v666
        %v1232 = vunpack.c.h.b16 %v666
        %v1233 = vunpack.c.l.b16 %v667
        %v1234 = vunpack.c.h.b16 %v667
        %v1235 = vunpack.c.l.b16 %v668
        %v1236 = vunpack.c.h.b16 %v668
        %v1237 = vunpack.c.l.b16 %v669
        %v1238 = vunpack.c.h.b16 %v669
        %v1239 = vunpack.c.l.b16 %v670
        %v1240 = vunpack.c.h.b16 %v670
        %v1241 = vunpack.c.l.b16 %v671
        %v1242 = vunpack.c.h.b16 %v671
        %v1243 = vunpack.c.l.b16 %v672
        %v1244 = vunpack.c.h.b16 %v672
        %v1245 = vunpack.c.l.b16 %v673
        %v1246 = vunpack.c.h.b16 %v673
        %v1247 = vunpack.c.l.b16 %v674
        %v1248 = vunpack.c.h.b16 %v674
        %v1249 = vunpack.c.l.b16 %v675
        %v1250 = vunpack.c.h.b16 %v675
        %v1251 = vunpack.c.l.b16 %v676
        %v1252 = vunpack.c.h.b16 %v676
        %v1253 = vunpack.c.l.b16 %v677
        %v1254 = vunpack.c.h.b16 %v677
        %v1255 = vunpack.c.l.b16 %v678
        %v1256 = vunpack.c.h.b16 %v678
        %v1257 = vunpack.c.l.b16 %v679
        %v1258 = vunpack.c.h.b16 %v679
        %v1259 = vpack.c.b16 %v1231, %v1227
        %v1260 = vpack.c.b16 %v1232, %v1228
        %v1261 = vpack.c.b16 %v1233, %v1229
        %v1262 = vpack.c.b16 %v1234, %v1230
        %v1263 = vpack.c.b16 %v1239, %v1235
        %v1264 = vpack.c.b16 %v1240, %v1236
        %v1265 = vpack.c.b16 %v1241, %v1237
        %v1266 = vpack.c.b16 %v1242, %v1238
        %v1267 = vpack.c.b16 %v1247, %v1243
        %v1268 = vpack.c.b16 %v1248, %v1244
        %v1269 = vpack.c.b16 %v1249, %v1245
        %v1270 = vpack.c.b16 %v1250, %v1246
        %v1271 = vpack.c.b16 %v1255, %v1251
        %v1272 = vpack.c.b16 %v1256, %v1252
        %v1273 = vpack.c.b16 %v1257, %v1253
        %v1274 = vpack.c.b16 %v1258, %v1254
        %v1292 = vsel %vm767, %v1210, 0
        %1294 = vmatprep.subr.bf16.mxu0 0
        %1295 = vmatpush1.bf16.msra.mxu0 0
        %1296 = vmatprep.subr.bf16.mxu0 0
        %1297 = vmatpush1.bf16.msra.mxu0 0
        %1298 = vmatprep.subr.bf16.mxu0 0
        %1299 = vmatpush1.bf16.msra.mxu0 0
        %1300 = vmatprep.subr.bf16.mxu0 0
        %1301 = vmatpush1.bf16.msra.mxu0 0
        %1302 = vmatprep.subr.bf16.mxu0 %v1272
        %1303 = vmatpush1.bf16.msra.mxu0 %v1271
        %1304 = vmatprep.subr.bf16.mxu0 %v1268
        %1305 = vmatpush1.bf16.msra.mxu0 %v1267
        %1306 = vmatprep.subr.bf16.mxu0 %v1264
        %1307 = vmatpush1.bf16.msra.mxu0 %v1263
        %1308 = vmatprep.subr.bf16.mxu0 %v1260
        %1309 = vmatpush1.bf16.msra.mxu0 %v1259
        %1310 = vmatprep.subr.bf16.mxu0 0
        %1311 = vmatpush2.bf16.msra.mxu0 0
        %1312 = vmatprep.subr.bf16.mxu0 0
        %1313 = vmatpush2.bf16.msra.mxu0 0
        %1314 = vmatprep.subr.bf16.mxu0 0
        %1315 = vmatpush2.bf16.msra.mxu0 0
        %1316 = vmatprep.subr.bf16.mxu0 0
        %1317 = vmatpush2.bf16.msra.mxu0 0
        %1318 = vmatprep.subr.bf16.mxu0 0
        %1319 = vmatpush2.bf16.msra.mxu0 0
        %1320 = vmatprep.subr.bf16.mxu0 0
        %1321 = vmatpush2.bf16.msra.mxu0 0
        %1322 = vmatprep.subr.bf16.mxu0 0
        %1323 = vmatpush2.bf16.msra.mxu0 0
        %1324 = vmatprep.subr.bf16.mxu0 0
        %1325 = vmatpush2.bf16.msra.mxu0 0
        %1326 = vmatprep.mubr.bf16.mxu0 0
        %1327 = vmatmul.mubr.bf16.gmra.mxu0 %v1292
        %v1328 = vpop.f32.mrf.mxu0
        %v1329 = vadd.f32 %v1158, %v1328
        %v1330 = vpop.f32.mrf.mxu0
        %v1331 = vadd.f32 %v1160, %v1330
        %v1332 = vpop.f32.mrf.mxu0
        %v1333 = vpop.f32.mrf.mxu0
        %1334 = vdwg.mxu0
        %1335 = vmatprep.subr.bf16.mxu0 0
        %1336 = vmatpush1.bf16.msra.mxu0 0
        %1337 = vmatprep.subr.bf16.mxu0 0
        %1338 = vmatpush1.bf16.msra.mxu0 0
        %1339 = vmatprep.subr.bf16.mxu0 0
        %1340 = vmatpush1.bf16.msra.mxu0 0
        %1341 = vmatprep.subr.bf16.mxu0 0
        %1342 = vmatpush1.bf16.msra.mxu0 0
        %1343 = vmatprep.subr.bf16.mxu0 %v1274
        %1344 = vmatpush1.bf16.msra.mxu0 %v1273
        %1345 = vmatprep.subr.bf16.mxu0 %v1270
        %1346 = vmatpush1.bf16.msra.mxu0 %v1269
        %1347 = vmatprep.subr.bf16.mxu0 %v1266
        %1348 = vmatpush1.bf16.msra.mxu0 %v1265
        %1349 = vmatprep.subr.bf16.mxu0 %v1262
        %1350 = vmatpush1.bf16.msra.mxu0 %v1261
        %1351 = vmatprep.subr.bf16.mxu0 0
        %1352 = vmatpush2.bf16.msra.mxu0 0
        %1353 = vmatprep.subr.bf16.mxu0 0
        %1354 = vmatpush2.bf16.msra.mxu0 0
        %1355 = vmatprep.subr.bf16.mxu0 0
        %1356 = vmatpush2.bf16.msra.mxu0 0
        %1357 = vmatprep.subr.bf16.mxu0 0
        %1358 = vmatpush2.bf16.msra.mxu0 0
        %1359 = vmatprep.subr.bf16.mxu0 0
        %1360 = vmatpush2.bf16.msra.mxu0 0
        %1361 = vmatprep.subr.bf16.mxu0 0
        %1362 = vmatpush2.bf16.msra.mxu0 0
        %1363 = vmatprep.subr.bf16.mxu0 0
        %1364 = vmatpush2.bf16.msra.mxu0 0
        %1365 = vmatprep.subr.bf16.mxu0 0
        %1366 = vmatpush2.bf16.msra.mxu0 0
        %1367 = vmatprep.mubr.bf16.mxu0 0
        %1368 = vmatmul.mubr.bf16.gmra.mxu0 %v1292
        %v1369 = vpop.f32.mrf.mxu0
        %v1370 = vadd.f32 %v1199, %v1369
        %v1371 = vpop.f32.mrf.mxu0
        %v1372 = vadd.f32 %v1201, %v1371
        %v1373 = vpop.f32.mrf.mxu0
        %v1374 = vpop.f32.mrf.mxu0
        %1375 = vdwg.mxu0
        %v1376 = vpack.c.bf16 %v761, %v761
        %v1409 = vunpack.c.l.b16 %v696
        %v1410 = vunpack.c.h.b16 %v696
        %v1411 = vunpack.c.l.b16 %v697
        %v1412 = vunpack.c.h.b16 %v697
        %v1413 = vunpack.c.l.b16 %v698
        %v1414 = vunpack.c.h.b16 %v698
        %v1415 = vunpack.c.l.b16 %v699
        %v1416 = vunpack.c.h.b16 %v699
        %v1417 = vunpack.c.l.b16 %v700
        %v1418 = vunpack.c.h.b16 %v700
        %v1419 = vunpack.c.l.b16 %v701
        %v1420 = vunpack.c.h.b16 %v701
        %v1421 = vunpack.c.l.b16 %v702
        %v1422 = vunpack.c.h.b16 %v702
        %v1423 = vunpack.c.l.b16 %v703
        %v1424 = vunpack.c.h.b16 %v703
        %v1425 = vunpack.c.l.b16 %v704
        %v1426 = vunpack.c.h.b16 %v704
        %v1427 = vunpack.c.l.b16 %v705
        %v1428 = vunpack.c.h.b16 %v705
        %v1429 = vunpack.c.l.b16 %v706
        %v1430 = vunpack.c.h.b16 %v706
        %v1431 = vunpack.c.l.b16 %v707
        %v1432 = vunpack.c.h.b16 %v707
        %v1433 = vunpack.c.l.b16 %v708
        %v1434 = vunpack.c.h.b16 %v708
        %v1435 = vunpack.c.l.b16 %v709
        %v1436 = vunpack.c.h.b16 %v709
        %v1437 = vunpack.c.l.b16 %v710
        %v1438 = vunpack.c.h.b16 %v710
        %v1439 = vunpack.c.l.b16 %v711
        %v1440 = vunpack.c.h.b16 %v711
        %v1441 = vunpack.c.l.b16 %v712
        %v1442 = vunpack.c.h.b16 %v712
        %v1443 = vunpack.c.l.b16 %v713
        %v1444 = vunpack.c.h.b16 %v713
        %v1445 = vunpack.c.l.b16 %v714
        %v1446 = vunpack.c.h.b16 %v714
        %v1447 = vunpack.c.l.b16 %v715
        %v1448 = vunpack.c.h.b16 %v715
        %v1449 = vunpack.c.l.b16 %v716
        %v1450 = vunpack.c.h.b16 %v716
        %v1451 = vunpack.c.l.b16 %v717
        %v1452 = vunpack.c.h.b16 %v717
        %v1453 = vunpack.c.l.b16 %v718
        %v1454 = vunpack.c.h.b16 %v718
        %v1455 = vunpack.c.l.b16 %v719
        %v1456 = vunpack.c.h.b16 %v719
        %v1457 = vunpack.c.l.b16 %v720
        %v1458 = vunpack.c.h.b16 %v720
        %v1459 = vunpack.c.l.b16 %v721
        %v1460 = vunpack.c.h.b16 %v721
        %v1461 = vunpack.c.l.b16 %v722
        %v1462 = vunpack.c.h.b16 %v722
        %v1463 = vunpack.c.l.b16 %v723
        %v1464 = vunpack.c.h.b16 %v723
        %v1465 = vunpack.c.l.b16 %v724
        %v1466 = vunpack.c.h.b16 %v724
        %v1467 = vunpack.c.l.b16 %v725
        %v1468 = vunpack.c.h.b16 %v725
        %v1469 = vunpack.c.l.b16 %v726
        %v1470 = vunpack.c.h.b16 %v726
        %v1471 = vunpack.c.l.b16 %v727
        %v1472 = vunpack.c.h.b16 %v727
        %v1473 = vpack.c.b16 %v1413, %v1409
        %v1474 = vpack.c.b16 %v1414, %v1410
        %v1475 = vpack.c.b16 %v1415, %v1411
        %v1476 = vpack.c.b16 %v1416, %v1412
        %v1477 = vpack.c.b16 %v1421, %v1417
        %v1478 = vpack.c.b16 %v1422, %v1418
        %v1479 = vpack.c.b16 %v1423, %v1419
        %v1480 = vpack.c.b16 %v1424, %v1420
        %v1481 = vpack.c.b16 %v1429, %v1425
        %v1482 = vpack.c.b16 %v1430, %v1426
        %v1483 = vpack.c.b16 %v1431, %v1427
        %v1484 = vpack.c.b16 %v1432, %v1428
        %v1485 = vpack.c.b16 %v1437, %v1433
        %v1486 = vpack.c.b16 %v1438, %v1434
        %v1487 = vpack.c.b16 %v1439, %v1435
        %v1488 = vpack.c.b16 %v1440, %v1436
        %v1489 = vpack.c.b16 %v1445, %v1441
        %v1490 = vpack.c.b16 %v1446, %v1442
        %v1491 = vpack.c.b16 %v1447, %v1443
        %v1492 = vpack.c.b16 %v1448, %v1444
        %v1493 = vpack.c.b16 %v1453, %v1449
        %v1494 = vpack.c.b16 %v1454, %v1450
        %v1495 = vpack.c.b16 %v1455, %v1451
        %v1496 = vpack.c.b16 %v1456, %v1452
        %v1497 = vpack.c.b16 %v1461, %v1457
        %v1498 = vpack.c.b16 %v1462, %v1458
        %v1499 = vpack.c.b16 %v1463, %v1459
        %v1500 = vpack.c.b16 %v1464, %v1460
        %v1501 = vpack.c.b16 %v1469, %v1465
        %v1502 = vpack.c.b16 %v1470, %v1466
        %v1503 = vpack.c.b16 %v1471, %v1467
        %v1504 = vpack.c.b16 %v1472, %v1468
        %1537 = vmatprep.subr.bf16.mxu0 %v1502
        %1538 = vmatpush1.bf16.msra.mxu0 %v1501
        %1539 = vmatprep.subr.bf16.mxu0 %v1498
        %1540 = vmatpush1.bf16.msra.mxu0 %v1497
        %1541 = vmatprep.subr.bf16.mxu0 %v1494
        %1542 = vmatpush1.bf16.msra.mxu0 %v1493
        %1543 = vmatprep.subr.bf16.mxu0 %v1490
        %1544 = vmatpush1.bf16.msra.mxu0 %v1489
        %1545 = vmatprep.subr.bf16.mxu0 %v1486
        %1546 = vmatpush1.bf16.msra.mxu0 %v1485
        %1547 = vmatprep.subr.bf16.mxu0 %v1482
        %1548 = vmatpush1.bf16.msra.mxu0 %v1481
        %1549 = vmatprep.subr.bf16.mxu0 %v1478
        %1550 = vmatpush1.bf16.msra.mxu0 %v1477
        %1551 = vmatprep.subr.bf16.mxu0 %v1474
        %1552 = vmatpush1.bf16.msra.mxu0 %v1473
        %1553 = vmatprep.subr.bf16.mxu0 0
        %1554 = vmatpush2.bf16.msra.mxu0 0
        %1555 = vmatprep.subr.bf16.mxu0 0
        %1556 = vmatpush2.bf16.msra.mxu0 0
        %1557 = vmatprep.subr.bf16.mxu0 0
        %1558 = vmatpush2.bf16.msra.mxu0 0
        %1559 = vmatprep.subr.bf16.mxu0 0
        %1560 = vmatpush2.bf16.msra.mxu0 0
        %1561 = vmatprep.subr.bf16.mxu0 0
        %1562 = vmatpush2.bf16.msra.mxu0 0
        %1563 = vmatprep.subr.bf16.mxu0 0
        %1564 = vmatpush2.bf16.msra.mxu0 0
        %1565 = vmatprep.subr.bf16.mxu0 0
        %1566 = vmatpush2.bf16.msra.mxu0 0
        %1567 = vmatprep.subr.bf16.mxu0 0
        %1568 = vmatpush2.bf16.msra.mxu0 0
        %1569 = vmatprep.mubr.bf16.mxu0 0
        %1570 = vmatmul.mubr.bf16.gmra.mxu0 %v1376
        %v1571 = vpop.f32.mrf.mxu0
        %v1572 = vadd.f32 0.0, %v1571
        %v1573 = vpop.f32.mrf.mxu0
        %v1574 = vadd.f32 0.0, %v1573
        %v1575 = vpop.f32.mrf.mxu0
        %v1576 = vpop.f32.mrf.mxu0
        %1577 = vdwg.mxu0
        %1578 = vmatprep.subr.bf16.mxu0 %v1504
        %1579 = vmatpush1.bf16.msra.mxu0 %v1503
        %1580 = vmatprep.subr.bf16.mxu0 %v1500
        %1581 = vmatpush1.bf16.msra.mxu0 %v1499
        %1582 = vmatprep.subr.bf16.mxu0 %v1496
        %1583 = vmatpush1.bf16.msra.mxu0 %v1495
        %1584 = vmatprep.subr.bf16.mxu0 %v1492
        %1585 = vmatpush1.bf16.msra.mxu0 %v1491
        %1586 = vmatprep.subr.bf16.mxu0 %v1488
        %1587 = vmatpush1.bf16.msra.mxu0 %v1487
        %1588 = vmatprep.subr.bf16.mxu0 %v1484
        %1589 = vmatpush1.bf16.msra.mxu0 %v1483
        %1590 = vmatprep.subr.bf16.mxu0 %v1480
        %1591 = vmatpush1.bf16.msra.mxu0 %v1479
        %1592 = vmatprep.subr.bf16.mxu0 %v1476
        %1593 = vmatpush1.bf16.msra.mxu0 %v1475
        %1594 = vmatprep.subr.bf16.mxu0 0
        %1595 = vmatpush2.bf16.msra.mxu0 0
        %1596 = vmatprep.subr.bf16.mxu0 0
        %1597 = vmatpush2.bf16.msra.mxu0 0
        %1598 = vmatprep.subr.bf16.mxu0 0
        %1599 = vmatpush2.bf16.msra.mxu0 0
        %1600 = vmatprep.subr.bf16.mxu0 0
        %1601 = vmatpush2.bf16.msra.mxu0 0
        %1602 = vmatprep.subr.bf16.mxu0 0
        %1603 = vmatpush2.bf16.msra.mxu0 0
        %1604 = vmatprep.subr.bf16.mxu0 0
        %1605 = vmatpush2.bf16.msra.mxu0 0
        %1606 = vmatprep.subr.bf16.mxu0 0
        %1607 = vmatpush2.bf16.msra.mxu0 0
        %1608 = vmatprep.subr.bf16.mxu0 0
        %1609 = vmatpush2.bf16.msra.mxu0 0
        %1610 = vmatprep.mubr.bf16.mxu0 0
        %1611 = vmatmul.mubr.bf16.gmra.mxu0 %v1376
        %v1612 = vpop.f32.mrf.mxu0
        %v1613 = vadd.f32 0.0, %v1612
        %v1614 = vpop.f32.mrf.mxu0
        %v1615 = vadd.f32 0.0, %v1614
        %v1616 = vpop.f32.mrf.mxu0
        %v1617 = vpop.f32.mrf.mxu0
        %1618 = vdwg.mxu0
        %v1619 = vadd.f32 %v1329, %v1572
        %v1620 = vadd.f32 %v1331, %v1574
        %v1621 = vadd.f32 %v1370, %v1613
        %v1622 = vadd.f32 %v1372, %v1615
        %v1623 = vpack.c.bf16 %v762, %v762
        %v1656 = vunpack.c.l.b16 %v728
        %v1657 = vunpack.c.h.b16 %v728
        %v1658 = vunpack.c.l.b16 %v729
        %v1659 = vunpack.c.h.b16 %v729
        %v1660 = vunpack.c.l.b16 %v730
        %v1661 = vunpack.c.h.b16 %v730
        %v1662 = vunpack.c.l.b16 %v731
        %v1663 = vunpack.c.h.b16 %v731
        %v1664 = vunpack.c.l.b16 %v732
        %v1665 = vunpack.c.h.b16 %v732
        %v1666 = vunpack.c.l.b16 %v733
        %v1667 = vunpack.c.h.b16 %v733
        %v1668 = vunpack.c.l.b16 %v734
        %v1669 = vunpack.c.h.b16 %v734
        %v1670 = vunpack.c.l.b16 %v735
        %v1671 = vunpack.c.h.b16 %v735
        %v1672 = vunpack.c.l.b16 %v736
        %v1673 = vunpack.c.h.b16 %v736
        %v1674 = vunpack.c.l.b16 %v737
        %v1675 = vunpack.c.h.b16 %v737
        %v1676 = vunpack.c.l.b16 %v738
        %v1677 = vunpack.c.h.b16 %v738
        %v1678 = vunpack.c.l.b16 %v739
        %v1679 = vunpack.c.h.b16 %v739
        %v1680 = vunpack.c.l.b16 %v740
        %v1681 = vunpack.c.h.b16 %v740
        %v1682 = vunpack.c.l.b16 %v741
        %v1683 = vunpack.c.h.b16 %v741
        %v1684 = vunpack.c.l.b16 %v742
        %v1685 = vunpack.c.h.b16 %v742
        %v1686 = vunpack.c.l.b16 %v743
        %v1687 = vunpack.c.h.b16 %v743
        %v1688 = vunpack.c.l.b16 %v744
        %v1689 = vunpack.c.h.b16 %v744
        %v1690 = vunpack.c.l.b16 %v745
        %v1691 = vunpack.c.h.b16 %v745
        %v1692 = vunpack.c.l.b16 %v746
        %v1693 = vunpack.c.h.b16 %v746
        %v1694 = vunpack.c.l.b16 %v747
        %v1695 = vunpack.c.h.b16 %v747
        %v1696 = vunpack.c.l.b16 %v748
        %v1697 = vunpack.c.h.b16 %v748
        %v1698 = vunpack.c.l.b16 %v749
        %v1699 = vunpack.c.h.b16 %v749
        %v1700 = vunpack.c.l.b16 %v750
        %v1701 = vunpack.c.h.b16 %v750
        %v1702 = vunpack.c.l.b16 %v751
        %v1703 = vunpack.c.h.b16 %v751
        %v1704 = vunpack.c.l.b16 %v752
        %v1705 = vunpack.c.h.b16 %v752
        %v1706 = vunpack.c.l.b16 %v753
        %v1707 = vunpack.c.h.b16 %v753
        %v1708 = vunpack.c.l.b16 %v754
        %v1709 = vunpack.c.h.b16 %v754
        %v1710 = vunpack.c.l.b16 %v755
        %v1711 = vunpack.c.h.b16 %v755
        %v1712 = vunpack.c.l.b16 %v756
        %v1713 = vunpack.c.h.b16 %v756
        %v1714 = vunpack.c.l.b16 %v757
        %v1715 = vunpack.c.h.b16 %v757
        %v1716 = vunpack.c.l.b16 %v758
        %v1717 = vunpack.c.h.b16 %v758
        %v1718 = vunpack.c.l.b16 %v759
        %v1719 = vunpack.c.h.b16 %v759
        %v1720 = vpack.c.b16 %v1660, %v1656
        %v1721 = vpack.c.b16 %v1661, %v1657
        %v1722 = vpack.c.b16 %v1662, %v1658
        %v1723 = vpack.c.b16 %v1663, %v1659
        %v1724 = vpack.c.b16 %v1668, %v1664
        %v1725 = vpack.c.b16 %v1669, %v1665
        %v1726 = vpack.c.b16 %v1670, %v1666
        %v1727 = vpack.c.b16 %v1671, %v1667
        %v1728 = vpack.c.b16 %v1676, %v1672
        %v1729 = vpack.c.b16 %v1677, %v1673
        %v1730 = vpack.c.b16 %v1678, %v1674
        %v1731 = vpack.c.b16 %v1679, %v1675
        %v1732 = vpack.c.b16 %v1684, %v1680
        %v1733 = vpack.c.b16 %v1685, %v1681
        %v1734 = vpack.c.b16 %v1686, %v1682
        %v1735 = vpack.c.b16 %v1687, %v1683
        %v1736 = vpack.c.b16 %v1692, %v1688
        %v1737 = vpack.c.b16 %v1693, %v1689
        %v1738 = vpack.c.b16 %v1694, %v1690
        %v1739 = vpack.c.b16 %v1695, %v1691
        %v1740 = vpack.c.b16 %v1700, %v1696
        %v1741 = vpack.c.b16 %v1701, %v1697
        %v1742 = vpack.c.b16 %v1702, %v1698
        %v1743 = vpack.c.b16 %v1703, %v1699
        %v1744 = vpack.c.b16 %v1708, %v1704
        %v1745 = vpack.c.b16 %v1709, %v1705
        %v1746 = vpack.c.b16 %v1710, %v1706
        %v1747 = vpack.c.b16 %v1711, %v1707
        %v1748 = vpack.c.b16 %v1716, %v1712
        %v1749 = vpack.c.b16 %v1717, %v1713
        %v1750 = vpack.c.b16 %v1718, %v1714
        %v1751 = vpack.c.b16 %v1719, %v1715
        %1784 = vmatprep.subr.bf16.mxu0 %v1749
        %1785 = vmatpush1.bf16.msra.mxu0 %v1748
        %1786 = vmatprep.subr.bf16.mxu0 %v1745
        %1787 = vmatpush1.bf16.msra.mxu0 %v1744
        %1788 = vmatprep.subr.bf16.mxu0 %v1741
        %1789 = vmatpush1.bf16.msra.mxu0 %v1740
        %1790 = vmatprep.subr.bf16.mxu0 %v1737
        %1791 = vmatpush1.bf16.msra.mxu0 %v1736
        %1792 = vmatprep.subr.bf16.mxu0 %v1733
        %1793 = vmatpush1.bf16.msra.mxu0 %v1732
        %1794 = vmatprep.subr.bf16.mxu0 %v1729
        %1795 = vmatpush1.bf16.msra.mxu0 %v1728
        %1796 = vmatprep.subr.bf16.mxu0 %v1725
        %1797 = vmatpush1.bf16.msra.mxu0 %v1724
        %1798 = vmatprep.subr.bf16.mxu0 %v1721
        %1799 = vmatpush1.bf16.msra.mxu0 %v1720
        %1800 = vmatprep.subr.bf16.mxu0 0
        %1801 = vmatpush2.bf16.msra.mxu0 0
        %1802 = vmatprep.subr.bf16.mxu0 0
        %1803 = vmatpush2.bf16.msra.mxu0 0
        %1804 = vmatprep.subr.bf16.mxu0 0
        %1805 = vmatpush2.bf16.msra.mxu0 0
        %1806 = vmatprep.subr.bf16.mxu0 0
        %1807 = vmatpush2.bf16.msra.mxu0 0
        %1808 = vmatprep.subr.bf16.mxu0 0
        %1809 = vmatpush2.bf16.msra.mxu0 0
        %1810 = vmatprep.subr.bf16.mxu0 0
        %1811 = vmatpush2.bf16.msra.mxu0 0
        %1812 = vmatprep.subr.bf16.mxu0 0
        %1813 = vmatpush2.bf16.msra.mxu0 0
        %1814 = vmatprep.subr.bf16.mxu0 0
        %1815 = vmatpush2.bf16.msra.mxu0 0
        %1816 = vmatprep.mubr.bf16.mxu0 0
        %1817 = vmatmul.mubr.bf16.gmra.mxu0 %v1623
        %v1818 = vpop.f32.mrf.mxu0
        %v1819 = vadd.f32 0.0, %v1818
        %v1820 = vpop.f32.mrf.mxu0
        %v1821 = vadd.f32 0.0, %v1820
        %v1822 = vpop.f32.mrf.mxu0
        %v1823 = vpop.f32.mrf.mxu0
        %1824 = vdwg.mxu0
        %1825 = vmatprep.subr.bf16.mxu0 %v1751
        %1826 = vmatpush1.bf16.msra.mxu0 %v1750
        %1827 = vmatprep.subr.bf16.mxu0 %v1747
        %1828 = vmatpush1.bf16.msra.mxu0 %v1746
        %1829 = vmatprep.subr.bf16.mxu0 %v1743
        %1830 = vmatpush1.bf16.msra.mxu0 %v1742
        %1831 = vmatprep.subr.bf16.mxu0 %v1739
        %1832 = vmatpush1.bf16.msra.mxu0 %v1738
        %1833 = vmatprep.subr.bf16.mxu0 %v1735
        %1834 = vmatpush1.bf16.msra.mxu0 %v1734
        %1835 = vmatprep.subr.bf16.mxu0 %v1731
        %1836 = vmatpush1.bf16.msra.mxu0 %v1730
        %1837 = vmatprep.subr.bf16.mxu0 %v1727
        %1838 = vmatpush1.bf16.msra.mxu0 %v1726
        %1839 = vmatprep.subr.bf16.mxu0 %v1723
        %1840 = vmatpush1.bf16.msra.mxu0 %v1722
        %1841 = vmatprep.subr.bf16.mxu0 0
        %1842 = vmatpush2.bf16.msra.mxu0 0
        %1843 = vmatprep.subr.bf16.mxu0 0
        %1844 = vmatpush2.bf16.msra.mxu0 0
        %1845 = vmatprep.subr.bf16.mxu0 0
        %1846 = vmatpush2.bf16.msra.mxu0 0
        %1847 = vmatprep.subr.bf16.mxu0 0
        %1848 = vmatpush2.bf16.msra.mxu0 0
        %1849 = vmatprep.subr.bf16.mxu0 0
        %1850 = vmatpush2.bf16.msra.mxu0 0
        %1851 = vmatprep.subr.bf16.mxu0 0
        %1852 = vmatpush2.bf16.msra.mxu0 0
        %1853 = vmatprep.subr.bf16.mxu0 0
        %1854 = vmatpush2.bf16.msra.mxu0 0
        %1855 = vmatprep.subr.bf16.mxu0 0
        %1856 = vmatpush2.bf16.msra.mxu0 0
        %1857 = vmatprep.mubr.bf16.mxu0 0
        %1858 = vmatmul.mubr.bf16.gmra.mxu0 %v1623
        %v1859 = vpop.f32.mrf.mxu0
        %v1860 = vadd.f32 0.0, %v1859
        %v1861 = vpop.f32.mrf.mxu0
        %v1862 = vadd.f32 0.0, %v1861
        %v1863 = vpop.f32.mrf.mxu0
        %v1864 = vpop.f32.mrf.mxu0
        %1865 = vdwg.mxu0
        %v1866 = vadd.f32 %v1619, %v1819
        %v1867 = vadd.f32 %v1620, %v1821
        %v1868 = vadd.f32 %v1621, %v1860
        %v1869 = vadd.f32 %v1622, %v1862
        %v1871 = vlaneseq
        %v1872 = vshrl.u32 %v1871, 7
        %v1873 = vsub.s32 0, %v1872
        %v1874 = vrot.slane %v760, %v1873
        %v1875 = vlaneseq
        %v1876 = vshrl.u32 %v1875, 7
        %v1877 = vsub.s32 1, %v1876
        %v1878 = vrot.slane %v760, %v1877
        %v1879 = vlaneseq
        %v1880 = vshrl.u32 %v1879, 7
        %v1881 = vsub.s32 2, %v1880
        %v1882 = vrot.slane %v760, %v1881
        %v1883 = vlaneseq
        %v1884 = vshrl.u32 %v1883, 7
        %v1885 = vsub.s32 3, %v1884
        %v1886 = vrot.slane %v760, %v1885
        %v1891 = vadd.f32 %v1866, %v1874
        %v1892 = vadd.f32 %v1867, %v1878
        %v1893 = vadd.f32 %v1868, %v1882
        %v1894 = vadd.f32 %v1869, %v1886
        %v1895 = vxor.u32 %v1891, 2147483648
        %v1896 = vmul.f32 %v1895, 1.442695
        %v1897 = vpow.pop %v1896
        %v1898 = vadd.f32 %v1897, 1.0
        %v1899 = vrcp.pop %v1898
        %v1900 = vmul.f32 1.0, %v1899
        %v1901 = vxor.u32 %v1892, 2147483648
        %v1902 = vmul.f32 %v1901, 1.442695
        %v1903 = vpow.pop %v1902
        %v1904 = vadd.f32 %v1903, 1.0
        %v1905 = vrcp.pop %v1904
        %v1906 = vmul.f32 1.0, %v1905
        %v1907 = vtanh.pop %v1893
        %v1908 = vxor.u32 %v1894, 2147483648
        %v1909 = vmul.f32 %v1908, 1.442695
        %v1910 = vpow.pop %v1909
        %v1911 = vadd.f32 %v1910, 1.0
        %v1912 = vrcp.pop %v1911
        %v1913 = vmul.f32 1.0, %v1912
        %v1914 = vmul.f32 %v1906, %v762
        %v1915 = vmul.f32 %v1900, %v1907
        %v1916 = vadd.f32 %v1914, %v1915
        %v1917 = vtanh.pop %v1916
        %v1918 = vmul.f32 %v1913, %v1917
        %1919 = vst [vmem:[%s627] sm:$0x3] %v1918
        %s1920 = scalar_lea.vmem %s553, 8 [#allocation4]
        %v1921 = vld [vmem:[%s1920] sm:$0xff]
        %v1922 = vld [vmem:[%s1920 + $0x20] sm:$0xff]
        %s1923 = scalar_lea.vmem %s615, 2
        %v1924 = vld [vmem:[%s1923] sm:$0x3]
        %s1925 = scalar_lea.vmem %s621, 2
        %v1926 = vld [vmem:[%s1925] sm:$0x3]
        %v1928 = vsel %vm767, %v1921, 0
        %v1931 = vsel %vm767, %v1922, 0
        %1933 = vmatprep.subr.mxu0 0.0
        %1934 = vmatpush1.msra.mxu0 0.0
        %1935 = vmatprep.subr.mxu0 0.0
        %1936 = vmatpush1.msra.mxu0 0.0
        %1937 = vmatprep.subr.mxu0 0.0
        %1938 = vmatpush1.msra.mxu0 0.0
        %1939 = vmatprep.subr.mxu0 0.0
        %1940 = vmatpush1.msra.mxu0 0.0
        %1941 = vmatprep.subr.mxu0 0.0
        %1942 = vmatpush1.msra.mxu0 0.0
        %1943 = vmatprep.subr.mxu0 0.0
        %1944 = vmatpush1.msra.mxu0 0.0
        %1945 = vmatprep.subr.mxu0 0.0
        %1946 = vmatpush1.msra.mxu0 0.0
        %1947 = vmatprep.subr.mxu0 0.0
        %1948 = vmatpush1.msra.mxu0 0.0
        %1949 = vmatprep.subr.mxu0 0.0
        %1950 = vmatpush1.msra.mxu0 %v645
        %1951 = vmatprep.subr.mxu0 0.0
        %1952 = vmatpush1.msra.mxu0 %v644
        %1953 = vmatprep.subr.mxu0 0.0
        %1954 = vmatpush1.msra.mxu0 %v643
        %1955 = vmatprep.subr.mxu0 0.0
        %1956 = vmatpush1.msra.mxu0 %v642
        %1957 = vmatprep.subr.mxu0 0.0
        %1958 = vmatpush1.msra.mxu0 %v641
        %1959 = vmatprep.subr.mxu0 0.0
        %1960 = vmatpush1.msra.mxu0 %v640
        %1961 = vmatprep.subr.mxu0 0.0
        %1962 = vmatpush1.msra.mxu0 %v639
        %1963 = vmatprep.subr.mxu0 0.0
        %1964 = vmatpush1.msra.mxu0 %v638
        %1965 = vmatprep.subr.mxu0 0.0
        %1966 = vmatpush2.msra.mxu0 0.0
        %1967 = vmatprep.subr.mxu0 0.0
        %1968 = vmatpush2.msra.mxu0 0.0
        %1969 = vmatprep.subr.mxu0 0.0
        %1970 = vmatpush2.msra.mxu0 0.0
        %1971 = vmatprep.subr.mxu0 0.0
        %1972 = vmatpush2.msra.mxu0 0.0
        %1973 = vmatprep.subr.mxu0 0.0
        %1974 = vmatpush2.msra.mxu0 0.0
        %1975 = vmatprep.subr.mxu0 0.0
        %1976 = vmatpush2.msra.mxu0 0.0
        %1977 = vmatprep.subr.mxu0 0.0
        %1978 = vmatpush2.msra.mxu0 0.0
        %1979 = vmatprep.subr.mxu0 0.0
        %1980 = vmatpush2.msra.mxu0 0.0
        %1981 = vmatprep.subr.mxu0 0.0
        %1982 = vmatpush2.msra.mxu0 0.0
        %1983 = vmatprep.subr.mxu0 0.0
        %1984 = vmatpush2.msra.mxu0 0.0
        %1985 = vmatprep.subr.mxu0 0.0
        %1986 = vmatpush2.msra.mxu0 0.0
        %1987 = vmatprep.subr.mxu0 0.0
        %1988 = vmatpush2.msra.mxu0 0.0
        %1989 = vmatprep.subr.mxu0 0.0
        %1990 = vmatpush2.msra.mxu0 0.0
        %1991 = vmatprep.subr.mxu0 0.0
        %1992 = vmatpush2.msra.mxu0 0.0
        %1993 = vmatprep.subr.mxu0 0.0
        %1994 = vmatpush2.msra.mxu0 0.0
        %1995 = vmatprep.subr.mxu0 0.0
        %1996 = vmatpush2.msra.mxu0 0.0
        %1997 = vmatprep.mubr.f32.mxu0 0.0
        %1998 = vmatmul.mubr.f32.gmra.mxu0 %v1928
        %v1999 = vpop.f32.mrf.mxu0
        %v2000 = vadd.f32 0.0, %v1999
        %v2001 = vpop.f32.mrf.mxu0
        %2002 = vmatprep.mubr.f32.mxu0 0.0
        %2003 = vmatmul.mubr.f32.gmra.mxu0 %v1931
        %v2004 = vpop.f32.mrf.mxu0
        %v2005 = vadd.f32 0.0, %v2004
        %v2006 = vpop.f32.mrf.mxu0
        %2007 = vdwg.mxu0
        %2008 = vmatprep.subr.mxu0 0.0
        %2009 = vmatpush1.msra.mxu0 %v662
        %2010 = vmatprep.subr.mxu0 0.0
        %2011 = vmatpush1.msra.mxu0 %v661
        %2012 = vmatprep.subr.mxu0 0.0
        %2013 = vmatpush1.msra.mxu0 %v660
        %2014 = vmatprep.subr.mxu0 0.0
        %2015 = vmatpush1.msra.mxu0 %v659
        %2016 = vmatprep.subr.mxu0 0.0
        %2017 = vmatpush1.msra.mxu0 %v658
        %2018 = vmatprep.subr.mxu0 0.0
        %2019 = vmatpush1.msra.mxu0 %v657
        %2020 = vmatprep.subr.mxu0 0.0
        %2021 = vmatpush1.msra.mxu0 %v656
        %2022 = vmatprep.subr.mxu0 0.0
        %2023 = vmatpush1.msra.mxu0 %v655
        %2024 = vmatprep.subr.mxu0 0.0
        %2025 = vmatpush1.msra.mxu0 %v654
        %2026 = vmatprep.subr.mxu0 0.0
        %2027 = vmatpush1.msra.mxu0 %v653
        %2028 = vmatprep.subr.mxu0 0.0
        %2029 = vmatpush1.msra.mxu0 %v652
        %2030 = vmatprep.subr.mxu0 0.0
        %2031 = vmatpush1.msra.mxu0 %v651
        %2032 = vmatprep.subr.mxu0 0.0
        %2033 = vmatpush1.msra.mxu0 %v650
        %2034 = vmatprep.subr.mxu0 0.0
        %2035 = vmatpush1.msra.mxu0 %v649
        %2036 = vmatprep.subr.mxu0 0.0
        %2037 = vmatpush1.msra.mxu0 %v648
        %2038 = vmatprep.subr.mxu0 0.0
        %2039 = vmatpush1.msra.mxu0 %v647
        %2040 = vmatprep.subr.mxu0 0.0
        %2041 = vmatpush2.msra.mxu0 0.0
        %2042 = vmatprep.subr.mxu0 0.0
        %2043 = vmatpush2.msra.mxu0 0.0
        %2044 = vmatprep.subr.mxu0 0.0
        %2045 = vmatpush2.msra.mxu0 0.0
        %2046 = vmatprep.subr.mxu0 0.0
        %2047 = vmatpush2.msra.mxu0 0.0
        %2048 = vmatprep.subr.mxu0 0.0
        %2049 = vmatpush2.msra.mxu0 0.0
        %2050 = vmatprep.subr.mxu0 0.0
        %2051 = vmatpush2.msra.mxu0 0.0
        %2052 = vmatprep.subr.mxu0 0.0
        %2053 = vmatpush2.msra.mxu0 0.0
        %2054 = vmatprep.subr.mxu0 0.0
        %2055 = vmatpush2.msra.mxu0 0.0
        %2056 = vmatprep.subr.mxu0 0.0
        %2057 = vmatpush2.msra.mxu0 0.0
        %2058 = vmatprep.subr.mxu0 0.0
        %2059 = vmatpush2.msra.mxu0 0.0
        %2060 = vmatprep.subr.mxu0 0.0
        %2061 = vmatpush2.msra.mxu0 0.0
        %2062 = vmatprep.subr.mxu0 0.0
        %2063 = vmatpush2.msra.mxu0 0.0
        %2064 = vmatprep.subr.mxu0 0.0
        %2065 = vmatpush2.msra.mxu0 0.0
        %2066 = vmatprep.subr.mxu0 0.0
        %2067 = vmatpush2.msra.mxu0 0.0
        %2068 = vmatprep.subr.mxu0 0.0
        %2069 = vmatpush2.msra.mxu0 0.0
        %2070 = vmatprep.subr.mxu0 0.0
        %2071 = vmatpush2.msra.mxu0 0.0
        %2072 = vmatprep.mubr.f32.mxu0 0.0
        %2073 = vmatmul.mubr.f32.gmra.mxu0 %v1918
        %v2074 = vpop.f32.mrf.mxu0
        %v2075 = vadd.f32 0.0, %v2074
        %v2076 = vpop.f32.mrf.mxu0
        %2077 = vdwg.mxu0
        %v2080 = vunpack.c.l.s4 1966171168
        %v2081 = vunpack.c.0.s8 %v2080
        %v2082 = vlaneseq
        %v2083 = vshrl.u32 %v2082, 7
        %v2084 = vsub.s32 %v2081, %v2083
        %v2085 = vrot.slane %v2075, %v2084
        %v2086 = vcombine.high %v2085, %v2085
        %v2088 = vunpack.c.l.s4 1966171168
        %v2089 = vunpack.c.0.s8 %v2088
        %v2090 = vlaneseq
        %v2091 = vshrl.u32 %v2090, 7
        %v2092 = vsub.s32 %v2089, %v2091
        %v2093 = vrot.slane %v2085, %v2092
        %v2095 = vunpack.c.l.s4 1966171168
        %v2096 = vunpack.c.0.s8 %v2095
        %v2097 = vlaneseq
        %v2098 = vshrl.u32 %v2097, 7
        %v2099 = vsub.s32 %v2096, %v2098
        %v2100 = vrot.slane %v2086, %v2099
        %v2101 = vlaneseq
        %v2102 = vshrl.u32 %v2101, 7
        %v2103 = vsub.s32 0, %v2102
        %v2104 = vrot.slane %v2093, %v2103
        %v2105 = vlaneseq
        %v2106 = vshrl.u32 %v2105, 7
        %v2107 = vsub.s32 0, %v2106
        %v2108 = vrot.slane %v2100, %v2107
        %v2111 = vadd.f32 %v2104, %v2000
        %v2112 = vadd.f32 %v2108, %v2005
        %v2113 = vadd.f32 %v2111, %v958
        %v2114 = vadd.f32 %v2112, %v958
        %v2115 = vtanh.pop %v2113
        %v2116 = vtanh.pop %v2114
        %v2117 = vmul.f32 %v2115, %v968
        %v2118 = vmul.f32 %v2116, %v968
        %v2119 = vsel %vm767, %v2117, 0.0
        %2120 = vadd.xlane.f32.xlu0 %v2119
        %v2121 = vpop.xlane.xlu0 %2120
        %v2122 = vsel %vm767, %v2118, 0.0
        %2123 = vadd.xlane.f32.xlu0 %v2122
        %v2124 = vpop.xlane.xlu0 %2123
        %vm2125 = vcmp.gt.f32.partialorder %v1924, 0.5
        %v2128 = vlaneseq
        %v2129 = vshrl.u32 %v2128, 7
        %v2130 = vsub.s32 %v982, %v2129
        %v2131 = vrot.slane %v2121, %v2130
        %v2132 = vlaneseq
        %v2133 = vshrl.u32 %v2132, 7
        %v2134 = vsub.s32 %v982, %v2133
        %v2135 = vrot.slane %v2124, %v2134
        %v2136 = vsel %vm991, %v2135, %v2131
        %v2138 = vsel %vm2125, %v2136, -1e+09
        %v2139 = vsel %vm995, %v2138, -inf
        %2140 = vmax.xlane.f32.xlu0 %v2139
        %v2141 = vpop.xlane.xlu0 %2140
        %v2142 = vsub.f32 %v2138, %v2141
        %v2143 = vmul.f32 %v2142, 1.442695
        %v2144 = vpow.pop %v2143
        %v2145 = vsel %vm995, %v2144, 0.0
        %2146 = vadd.xlane.f32.xlu0 %v2145
        %v2147 = vpop.xlane.xlu0 %2146
        %v2148 = vrcp.pop %v2147
        %v2149 = vmul.f32 %v2144, %v2148
        %v2150 = vlaneseq
        %v2151 = vshrl.u32 %v2150, 7
        %v2152 = vsub.s32 0, %v2151
        %v2153 = vrot.slane %v2149, %v2152
        %2155 = vbcast.lane.b32.xlu0 %v2153, 256
        %v2156 = vpop.permute.xlu0 %2155
        %v2157 = vlaneseq
        %v2158 = vshrl.u32 %v2157, 7
        %v2159 = vsub.s32 1, %v2158
        %v2160 = vrot.slane %v2149, %v2159
        %2162 = vbcast.lane.b32.xlu0 %v2160, 256
        %v2163 = vpop.permute.xlu0 %2162
        %v2164 = vmul.f32 %v2156, %v1921
        %v2165 = vmul.f32 %v2163, %v1922
        %v2166 = vsel %vm767, %v2164, 0.0
        %v2167 = vrot.slane %v2166, 4
        %v2168 = vadd.f32 %v2166, %v2167
        %v2169 = vrot.slane %v2168, 2
        %v2170 = vadd.f32 %v2168, %v2169
        %v2171 = vrot.slane %v2170, 1
        %v2172 = vadd.f32 %v2170, %v2171
        %v2173 = vsel %vm767, %v2165, 0.0
        %v2174 = vrot.slane %v2173, 4
        %v2175 = vadd.f32 %v2173, %v2174
        %v2176 = vrot.slane %v2175, 2
        %v2177 = vadd.f32 %v2175, %v2176
        %v2178 = vrot.slane %v2177, 1
        %v2179 = vadd.f32 %v2177, %v2178
        %v2180 = vpack.c.bf16 %v2172, %v2172
        %v2181 = vpack.c.bf16 %v2179, %v2179
        %v2182 = vpack.c.bf16 %v1926, %v1926
        %v2184 = vsel %vm767, %v2182, 0
        %2186 = vmatprep.subr.bf16.mxu0 0
        %2187 = vmatpush1.bf16.msra.mxu0 0
        %2188 = vmatprep.subr.bf16.mxu0 0
        %2189 = vmatpush1.bf16.msra.mxu0 0
        %2190 = vmatprep.subr.bf16.mxu0 0
        %2191 = vmatpush1.bf16.msra.mxu0 0
        %2192 = vmatprep.subr.bf16.mxu0 0
        %2193 = vmatpush1.bf16.msra.mxu0 0
        %2194 = vmatprep.subr.bf16.mxu0 %v1101
        %2195 = vmatpush1.bf16.msra.mxu0 %v1100
        %2196 = vmatprep.subr.bf16.mxu0 %v1097
        %2197 = vmatpush1.bf16.msra.mxu0 %v1096
        %2198 = vmatprep.subr.bf16.mxu0 %v1093
        %2199 = vmatpush1.bf16.msra.mxu0 %v1092
        %2200 = vmatprep.subr.bf16.mxu0 %v1089
        %2201 = vmatpush1.bf16.msra.mxu0 %v1088
        %2202 = vmatprep.subr.bf16.mxu0 0
        %2203 = vmatpush2.bf16.msra.mxu0 0
        %2204 = vmatprep.subr.bf16.mxu0 0
        %2205 = vmatpush2.bf16.msra.mxu0 0
        %2206 = vmatprep.subr.bf16.mxu0 0
        %2207 = vmatpush2.bf16.msra.mxu0 0
        %2208 = vmatprep.subr.bf16.mxu0 0
        %2209 = vmatpush2.bf16.msra.mxu0 0
        %2210 = vmatprep.subr.bf16.mxu0 0
        %2211 = vmatpush2.bf16.msra.mxu0 0
        %2212 = vmatprep.subr.bf16.mxu0 0
        %2213 = vmatpush2.bf16.msra.mxu0 0
        %2214 = vmatprep.subr.bf16.mxu0 0
        %2215 = vmatpush2.bf16.msra.mxu0 0
        %2216 = vmatprep.subr.bf16.mxu0 0
        %2217 = vmatpush2.bf16.msra.mxu0 0
        %2218 = vmatprep.mubr.bf16.mxu0 0
        %2219 = vmatmul.mubr.bf16.gmra.mxu0 %v2184
        %v2220 = vpop.f32.mrf.mxu0
        %v2221 = vadd.f32 0.0, %v2220
        %v2222 = vpop.f32.mrf.mxu0
        %v2223 = vadd.f32 0.0, %v2222
        %v2224 = vpop.f32.mrf.mxu0
        %v2225 = vpop.f32.mrf.mxu0
        %2226 = vdwg.mxu0
        %2227 = vmatprep.subr.bf16.mxu0 0
        %2228 = vmatpush1.bf16.msra.mxu0 0
        %2229 = vmatprep.subr.bf16.mxu0 0
        %2230 = vmatpush1.bf16.msra.mxu0 0
        %2231 = vmatprep.subr.bf16.mxu0 0
        %2232 = vmatpush1.bf16.msra.mxu0 0
        %2233 = vmatprep.subr.bf16.mxu0 0
        %2234 = vmatpush1.bf16.msra.mxu0 0
        %2235 = vmatprep.subr.bf16.mxu0 %v1103
        %2236 = vmatpush1.bf16.msra.mxu0 %v1102
        %2237 = vmatprep.subr.bf16.mxu0 %v1099
        %2238 = vmatpush1.bf16.msra.mxu0 %v1098
        %2239 = vmatprep.subr.bf16.mxu0 %v1095
        %2240 = vmatpush1.bf16.msra.mxu0 %v1094
        %2241 = vmatprep.subr.bf16.mxu0 %v1091
        %2242 = vmatpush1.bf16.msra.mxu0 %v1090
        %2243 = vmatprep.subr.bf16.mxu0 0
        %2244 = vmatpush2.bf16.msra.mxu0 0
        %2245 = vmatprep.subr.bf16.mxu0 0
        %2246 = vmatpush2.bf16.msra.mxu0 0
        %2247 = vmatprep.subr.bf16.mxu0 0
        %2248 = vmatpush2.bf16.msra.mxu0 0
        %2249 = vmatprep.subr.bf16.mxu0 0
        %2250 = vmatpush2.bf16.msra.mxu0 0
        %2251 = vmatprep.subr.bf16.mxu0 0
        %2252 = vmatpush2.bf16.msra.mxu0 0
        %2253 = vmatprep.subr.bf16.mxu0 0
        %2254 = vmatpush2.bf16.msra.mxu0 0
        %2255 = vmatprep.subr.bf16.mxu0 0
        %2256 = vmatpush2.bf16.msra.mxu0 0
        %2257 = vmatprep.subr.bf16.mxu0 0
        %2258 = vmatpush2.bf16.msra.mxu0 0
        %2259 = vmatprep.mubr.bf16.mxu0 0
        %2260 = vmatmul.mubr.bf16.gmra.mxu0 %v2184
        %v2261 = vpop.f32.mrf.mxu0
        %v2262 = vadd.f32 0.0, %v2261
        %v2263 = vpop.f32.mrf.mxu0
        %v2264 = vadd.f32 0.0, %v2263
        %v2265 = vpop.f32.mrf.mxu0
        %v2266 = vpop.f32.mrf.mxu0
        %2267 = vdwg.mxu0
        %v2270 = vunpack.c.l.b16 %v2180
        %v2271 = vunpack.c.l.b16 %v2181
        %v2272 = vsel %vm991, %v2271, %v2270
        %v2273 = vpack.c.b16 %v2272, %v2272
        %v2275 = vsel %vm767, %v2273, 0
        %2277 = vmatprep.subr.bf16.mxu0 0
        %2278 = vmatpush1.bf16.msra.mxu0 0
        %2279 = vmatprep.subr.bf16.mxu0 0
        %2280 = vmatpush1.bf16.msra.mxu0 0
        %2281 = vmatprep.subr.bf16.mxu0 0
        %2282 = vmatpush1.bf16.msra.mxu0 0
        %2283 = vmatprep.subr.bf16.mxu0 0
        %2284 = vmatpush1.bf16.msra.mxu0 0
        %2285 = vmatprep.subr.bf16.mxu0 %v1272
        %2286 = vmatpush1.bf16.msra.mxu0 %v1271
        %2287 = vmatprep.subr.bf16.mxu0 %v1268
        %2288 = vmatpush1.bf16.msra.mxu0 %v1267
        %2289 = vmatprep.subr.bf16.mxu0 %v1264
        %2290 = vmatpush1.bf16.msra.mxu0 %v1263
        %2291 = vmatprep.subr.bf16.mxu0 %v1260
        %2292 = vmatpush1.bf16.msra.mxu0 %v1259
        %2293 = vmatprep.subr.bf16.mxu0 0
        %2294 = vmatpush2.bf16.msra.mxu0 0
        %2295 = vmatprep.subr.bf16.mxu0 0
        %2296 = vmatpush2.bf16.msra.mxu0 0
        %2297 = vmatprep.subr.bf16.mxu0 0
        %2298 = vmatpush2.bf16.msra.mxu0 0
        %2299 = vmatprep.subr.bf16.mxu0 0
        %2300 = vmatpush2.bf16.msra.mxu0 0
        %2301 = vmatprep.subr.bf16.mxu0 0
        %2302 = vmatpush2.bf16.msra.mxu0 0
        %2303 = vmatprep.subr.bf16.mxu0 0
        %2304 = vmatpush2.bf16.msra.mxu0 0
        %2305 = vmatprep.subr.bf16.mxu0 0
        %2306 = vmatpush2.bf16.msra.mxu0 0
        %2307 = vmatprep.subr.bf16.mxu0 0
        %2308 = vmatpush2.bf16.msra.mxu0 0
        %2309 = vmatprep.mubr.bf16.mxu0 0
        %2310 = vmatmul.mubr.bf16.gmra.mxu0 %v2275
        %v2311 = vpop.f32.mrf.mxu0
        %v2312 = vadd.f32 %v2221, %v2311
        %v2313 = vpop.f32.mrf.mxu0
        %v2314 = vadd.f32 %v2223, %v2313
        %v2315 = vpop.f32.mrf.mxu0
        %v2316 = vpop.f32.mrf.mxu0
        %2317 = vdwg.mxu0
        %2318 = vmatprep.subr.bf16.mxu0 0
        %2319 = vmatpush1.bf16.msra.mxu0 0
        %2320 = vmatprep.subr.bf16.mxu0 0
        %2321 = vmatpush1.bf16.msra.mxu0 0
        %2322 = vmatprep.subr.bf16.mxu0 0
        %2323 = vmatpush1.bf16.msra.mxu0 0
        %2324 = vmatprep.subr.bf16.mxu0 0
        %2325 = vmatpush1.bf16.msra.mxu0 0
        %2326 = vmatprep.subr.bf16.mxu0 %v1274
        %2327 = vmatpush1.bf16.msra.mxu0 %v1273
        %2328 = vmatprep.subr.bf16.mxu0 %v1270
        %2329 = vmatpush1.bf16.msra.mxu0 %v1269
        %2330 = vmatprep.subr.bf16.mxu0 %v1266
        %2331 = vmatpush1.bf16.msra.mxu0 %v1265
        %2332 = vmatprep.subr.bf16.mxu0 %v1262
        %2333 = vmatpush1.bf16.msra.mxu0 %v1261
        %2334 = vmatprep.subr.bf16.mxu0 0
        %2335 = vmatpush2.bf16.msra.mxu0 0
        %2336 = vmatprep.subr.bf16.mxu0 0
        %2337 = vmatpush2.bf16.msra.mxu0 0
        %2338 = vmatprep.subr.bf16.mxu0 0
        %2339 = vmatpush2.bf16.msra.mxu0 0
        %2340 = vmatprep.subr.bf16.mxu0 0
        %2341 = vmatpush2.bf16.msra.mxu0 0
        %2342 = vmatprep.subr.bf16.mxu0 0
        %2343 = vmatpush2.bf16.msra.mxu0 0
        %2344 = vmatprep.subr.bf16.mxu0 0
        %2345 = vmatpush2.bf16.msra.mxu0 0
        %2346 = vmatprep.subr.bf16.mxu0 0
        %2347 = vmatpush2.bf16.msra.mxu0 0
        %2348 = vmatprep.subr.bf16.mxu0 0
        %2349 = vmatpush2.bf16.msra.mxu0 0
        %2350 = vmatprep.mubr.bf16.mxu0 0
        %2351 = vmatmul.mubr.bf16.gmra.mxu0 %v2275
        %v2352 = vpop.f32.mrf.mxu0
        %v2353 = vadd.f32 %v2262, %v2352
        %v2354 = vpop.f32.mrf.mxu0
        %v2355 = vadd.f32 %v2264, %v2354
        %v2356 = vpop.f32.mrf.mxu0
        %v2357 = vpop.f32.mrf.mxu0
        %2358 = vdwg.mxu0
        %v2359 = vpack.c.bf16 %v1918, %v1918
        %2360 = vmatprep.subr.bf16.mxu0 %v1502
        %2361 = vmatpush1.bf16.msra.mxu0 %v1501
        %2362 = vmatprep.subr.bf16.mxu0 %v1498
        %2363 = vmatpush1.bf16.msra.mxu0 %v1497
        %2364 = vmatprep.subr.bf16.mxu0 %v1494
        %2365 = vmatpush1.bf16.msra.mxu0 %v1493
        %2366 = vmatprep.subr.bf16.mxu0 %v1490
        %2367 = vmatpush1.bf16.msra.mxu0 %v1489
        %2368 = vmatprep.subr.bf16.mxu0 %v1486
        %2369 = vmatpush1.bf16.msra.mxu0 %v1485
        %2370 = vmatprep.subr.bf16.mxu0 %v1482
        %2371 = vmatpush1.bf16.msra.mxu0 %v1481
        %2372 = vmatprep.subr.bf16.mxu0 %v1478
        %2373 = vmatpush1.bf16.msra.mxu0 %v1477
        %2374 = vmatprep.subr.bf16.mxu0 %v1474
        %2375 = vmatpush1.bf16.msra.mxu0 %v1473
        %2376 = vmatprep.subr.bf16.mxu0 0
        %2377 = vmatpush2.bf16.msra.mxu0 0
        %2378 = vmatprep.subr.bf16.mxu0 0
        %2379 = vmatpush2.bf16.msra.mxu0 0
        %2380 = vmatprep.subr.bf16.mxu0 0
        %2381 = vmatpush2.bf16.msra.mxu0 0
        %2382 = vmatprep.subr.bf16.mxu0 0
        %2383 = vmatpush2.bf16.msra.mxu0 0
        %2384 = vmatprep.subr.bf16.mxu0 0
        %2385 = vmatpush2.bf16.msra.mxu0 0
        %2386 = vmatprep.subr.bf16.mxu0 0
        %2387 = vmatpush2.bf16.msra.mxu0 0
        %2388 = vmatprep.subr.bf16.mxu0 0
        %2389 = vmatpush2.bf16.msra.mxu0 0
        %2390 = vmatprep.subr.bf16.mxu0 0
        %2391 = vmatpush2.bf16.msra.mxu0 0
        %2392 = vmatprep.mubr.bf16.mxu0 0
        %2393 = vmatmul.mubr.bf16.gmra.mxu0 %v2359
        %v2394 = vpop.f32.mrf.mxu0
        %v2395 = vadd.f32 0.0, %v2394
        %v2396 = vpop.f32.mrf.mxu0
        %v2397 = vadd.f32 0.0, %v2396
        %v2398 = vpop.f32.mrf.mxu0
        %v2399 = vpop.f32.mrf.mxu0
        %2400 = vdwg.mxu0
        %2401 = vmatprep.subr.bf16.mxu0 %v1504
        %2402 = vmatpush1.bf16.msra.mxu0 %v1503
        %2403 = vmatprep.subr.bf16.mxu0 %v1500
        %2404 = vmatpush1.bf16.msra.mxu0 %v1499
        %2405 = vmatprep.subr.bf16.mxu0 %v1496
        %2406 = vmatpush1.bf16.msra.mxu0 %v1495
        %2407 = vmatprep.subr.bf16.mxu0 %v1492
        %2408 = vmatpush1.bf16.msra.mxu0 %v1491
        %2409 = vmatprep.subr.bf16.mxu0 %v1488
        %2410 = vmatpush1.bf16.msra.mxu0 %v1487
        %2411 = vmatprep.subr.bf16.mxu0 %v1484
        %2412 = vmatpush1.bf16.msra.mxu0 %v1483
        %2413 = vmatprep.subr.bf16.mxu0 %v1480
        %2414 = vmatpush1.bf16.msra.mxu0 %v1479
        %2415 = vmatprep.subr.bf16.mxu0 %v1476
        %2416 = vmatpush1.bf16.msra.mxu0 %v1475
        %2417 = vmatprep.subr.bf16.mxu0 0
        %2418 = vmatpush2.bf16.msra.mxu0 0
        %2419 = vmatprep.subr.bf16.mxu0 0
        %2420 = vmatpush2.bf16.msra.mxu0 0
        %2421 = vmatprep.subr.bf16.mxu0 0
        %2422 = vmatpush2.bf16.msra.mxu0 0
        %2423 = vmatprep.subr.bf16.mxu0 0
        %2424 = vmatpush2.bf16.msra.mxu0 0
        %2425 = vmatprep.subr.bf16.mxu0 0
        %2426 = vmatpush2.bf16.msra.mxu0 0
        %2427 = vmatprep.subr.bf16.mxu0 0
        %2428 = vmatpush2.bf16.msra.mxu0 0
        %2429 = vmatprep.subr.bf16.mxu0 0
        %2430 = vmatpush2.bf16.msra.mxu0 0
        %2431 = vmatprep.subr.bf16.mxu0 0
        %2432 = vmatpush2.bf16.msra.mxu0 0
        %2433 = vmatprep.mubr.bf16.mxu0 0
        %2434 = vmatmul.mubr.bf16.gmra.mxu0 %v2359
        %v2435 = vpop.f32.mrf.mxu0
        %v2436 = vadd.f32 0.0, %v2435
        %v2437 = vpop.f32.mrf.mxu0
        %v2438 = vadd.f32 0.0, %v2437
        %v2439 = vpop.f32.mrf.mxu0
        %v2440 = vpop.f32.mrf.mxu0
        %2441 = vdwg.mxu0
        %v2442 = vadd.f32 %v2312, %v2395
        %v2443 = vadd.f32 %v2314, %v2397
        %v2444 = vadd.f32 %v2353, %v2436
        %v2445 = vadd.f32 %v2355, %v2438
        %v2446 = vpack.c.bf16 %v1916, %v1916
        %2447 = vmatprep.subr.bf16.mxu0 %v1749
        %2448 = vmatpush1.bf16.msra.mxu0 %v1748
        %2449 = vmatprep.subr.bf16.mxu0 %v1745
        %2450 = vmatpush1.bf16.msra.mxu0 %v1744
        %2451 = vmatprep.subr.bf16.mxu0 %v1741
        %2452 = vmatpush1.bf16.msra.mxu0 %v1740
        %2453 = vmatprep.subr.bf16.mxu0 %v1737
        %2454 = vmatpush1.bf16.msra.mxu0 %v1736
        %2455 = vmatprep.subr.bf16.mxu0 %v1733
        %2456 = vmatpush1.bf16.msra.mxu0 %v1732
        %2457 = vmatprep.subr.bf16.mxu0 %v1729
        %2458 = vmatpush1.bf16.msra.mxu0 %v1728
        %2459 = vmatprep.subr.bf16.mxu0 %v1725
        %2460 = vmatpush1.bf16.msra.mxu0 %v1724
        %2461 = vmatprep.subr.bf16.mxu0 %v1721
        %2462 = vmatpush1.bf16.msra.mxu0 %v1720
        %2463 = vmatprep.subr.bf16.mxu0 0
        %2464 = vmatpush2.bf16.msra.mxu0 0
        %2465 = vmatprep.subr.bf16.mxu0 0
        %2466 = vmatpush2.bf16.msra.mxu0 0
        %2467 = vmatprep.subr.bf16.mxu0 0
        %2468 = vmatpush2.bf16.msra.mxu0 0
        %2469 = vmatprep.subr.bf16.mxu0 0
        %2470 = vmatpush2.bf16.msra.mxu0 0
        %2471 = vmatprep.subr.bf16.mxu0 0
        %2472 = vmatpush2.bf16.msra.mxu0 0
        %2473 = vmatprep.subr.bf16.mxu0 0
        %2474 = vmatpush2.bf16.msra.mxu0 0
        %2475 = vmatprep.subr.bf16.mxu0 0
        %2476 = vmatpush2.bf16.msra.mxu0 0
        %2477 = vmatprep.subr.bf16.mxu0 0
        %2478 = vmatpush2.bf16.msra.mxu0 0
        %2479 = vmatprep.mubr.bf16.mxu0 0
        %2480 = vmatmul.mubr.bf16.gmra.mxu0 %v2446
        %v2481 = vpop.f32.mrf.mxu0
        %v2482 = vadd.f32 0.0, %v2481
        %v2483 = vpop.f32.mrf.mxu0
        %v2484 = vadd.f32 0.0, %v2483
        %v2485 = vpop.f32.mrf.mxu0
        %v2486 = vpop.f32.mrf.mxu0
        %2487 = vdwg.mxu0
        %2488 = vmatprep.subr.bf16.mxu0 %v1751
        %2489 = vmatpush1.bf16.msra.mxu0 %v1750
        %2490 = vmatprep.subr.bf16.mxu0 %v1747
        %2491 = vmatpush1.bf16.msra.mxu0 %v1746
        %2492 = vmatprep.subr.bf16.mxu0 %v1743
        %2493 = vmatpush1.bf16.msra.mxu0 %v1742
        %2494 = vmatprep.subr.bf16.mxu0 %v1739
        %2495 = vmatpush1.bf16.msra.mxu0 %v1738
        %2496 = vmatprep.subr.bf16.mxu0 %v1735
        %2497 = vmatpush1.bf16.msra.mxu0 %v1734
        %2498 = vmatprep.subr.bf16.mxu0 %v1731
        %2499 = vmatpush1.bf16.msra.mxu0 %v1730
        %2500 = vmatprep.subr.bf16.mxu0 %v1727
        %2501 = vmatpush1.bf16.msra.mxu0 %v1726
        %2502 = vmatprep.subr.bf16.mxu0 %v1723
        %2503 = vmatpush1.bf16.msra.mxu0 %v1722
        %2504 = vmatprep.subr.bf16.mxu0 0
        %2505 = vmatpush2.bf16.msra.mxu0 0
        %2506 = vmatprep.subr.bf16.mxu0 0
        %2507 = vmatpush2.bf16.msra.mxu0 0
        %2508 = vmatprep.subr.bf16.mxu0 0
        %2509 = vmatpush2.bf16.msra.mxu0 0
        %2510 = vmatprep.subr.bf16.mxu0 0
        %2511 = vmatpush2.bf16.msra.mxu0 0
        %2512 = vmatprep.subr.bf16.mxu0 0
        %2513 = vmatpush2.bf16.msra.mxu0 0
        %2514 = vmatprep.subr.bf16.mxu0 0
        %2515 = vmatpush2.bf16.msra.mxu0 0
        %2516 = vmatprep.subr.bf16.mxu0 0
        %2517 = vmatpush2.bf16.msra.mxu0 0
        %2518 = vmatprep.subr.bf16.mxu0 0
        %2519 = vmatpush2.bf16.msra.mxu0 0
        %2520 = vmatprep.mubr.bf16.mxu0 0
        %2521 = vmatmul.mubr.bf16.gmra.mxu0 %v2446
        %v2522 = vpop.f32.mrf.mxu0
        %v2523 = vadd.f32 0.0, %v2522
        %v2524 = vpop.f32.mrf.mxu0
        %v2525 = vadd.f32 0.0, %v2524
        %v2526 = vpop.f32.mrf.mxu0
        %v2527 = vpop.f32.mrf.mxu0
        %2528 = vdwg.mxu0
        %v2529 = vadd.f32 %v2442, %v2482
        %v2530 = vadd.f32 %v2443, %v2484
        %v2531 = vadd.f32 %v2444, %v2523
        %v2532 = vadd.f32 %v2445, %v2525
        %v2533 = vadd.f32 %v2529, %v1874
        %v2534 = vadd.f32 %v2530, %v1878
        %v2535 = vadd.f32 %v2531, %v1882
        %v2536 = vadd.f32 %v2532, %v1886
        %v2537 = vxor.u32 %v2533, 2147483648
        %v2538 = vmul.f32 %v2537, 1.442695
        %v2539 = vpow.pop %v2538
        %v2540 = vadd.f32 %v2539, 1.0
        %v2541 = vrcp.pop %v2540
        %v2542 = vmul.f32 1.0, %v2541
        %v2543 = vxor.u32 %v2534, 2147483648
        %v2544 = vmul.f32 %v2543, 1.442695
        %v2545 = vpow.pop %v2544
        %v2546 = vadd.f32 %v2545, 1.0
        %v2547 = vrcp.pop %v2546
        %v2548 = vmul.f32 1.0, %v2547
        %v2549 = vtanh.pop %v2535
        %v2550 = vxor.u32 %v2536, 2147483648
        %v2551 = vmul.f32 %v2550, 1.442695
        %v2552 = vpow.pop %v2551
        %v2553 = vadd.f32 %v2552, 1.0
        %v2554 = vrcp.pop %v2553
        %v2555 = vmul.f32 1.0, %v2554
        %v2556 = vmul.f32 %v2548, %v1916
        %v2557 = vmul.f32 %v2542, %v2549
        %v2558 = vadd.f32 %v2556, %v2557
        %v2559 = vtanh.pop %v2558
        %v2560 = vmul.f32 %v2555, %v2559
        %s2561 = scalar_lea.vmem %s627, 2
        %2562 = vst [vmem:[%s2561] sm:$0x3] %v2560
        %s2563 = scalar_lea.vmem %s553, 16 [#allocation4]
        %v2564 = vld [vmem:[%s2563] sm:$0xff]
        %v2565 = vld [vmem:[%s2563 + $0x20] sm:$0xff]
        %s2566 = scalar_lea.vmem %s615, 4
        %v2567 = vld [vmem:[%s2566] sm:$0x3]
        %s2568 = scalar_lea.vmem %s621, 4
        %v2569 = vld [vmem:[%s2568] sm:$0x3]
        %v2571 = vsel %vm767, %v2564, 0
        %v2574 = vsel %vm767, %v2565, 0
        %2576 = vmatprep.subr.mxu0 0.0
        %2577 = vmatpush1.msra.mxu0 0.0
        %2578 = vmatprep.subr.mxu0 0.0
        %2579 = vmatpush1.msra.mxu0 0.0
        %2580 = vmatprep.subr.mxu0 0.0
        %2581 = vmatpush1.msra.mxu0 0.0
        %2582 = vmatprep.subr.mxu0 0.0
        %2583 = vmatpush1.msra.mxu0 0.0
        %2584 = vmatprep.subr.mxu0 0.0
        %2585 = vmatpush1.msra.mxu0 0.0
        %2586 = vmatprep.subr.mxu0 0.0
        %2587 = vmatpush1.msra.mxu0 0.0
        %2588 = vmatprep.subr.mxu0 0.0
        %2589 = vmatpush1.msra.mxu0 0.0
        %2590 = vmatprep.subr.mxu0 0.0
        %2591 = vmatpush1.msra.mxu0 0.0
        %2592 = vmatprep.subr.mxu0 0.0
        %2593 = vmatpush1.msra.mxu0 %v645
        %2594 = vmatprep.subr.mxu0 0.0
        %2595 = vmatpush1.msra.mxu0 %v644
        %2596 = vmatprep.subr.mxu0 0.0
        %2597 = vmatpush1.msra.mxu0 %v643
        %2598 = vmatprep.subr.mxu0 0.0
        %2599 = vmatpush1.msra.mxu0 %v642
        %2600 = vmatprep.subr.mxu0 0.0
        %2601 = vmatpush1.msra.mxu0 %v641
        %2602 = vmatprep.subr.mxu0 0.0
        %2603 = vmatpush1.msra.mxu0 %v640
        %2604 = vmatprep.subr.mxu0 0.0
        %2605 = vmatpush1.msra.mxu0 %v639
        %2606 = vmatprep.subr.mxu0 0.0
        %2607 = vmatpush1.msra.mxu0 %v638
        %2608 = vmatprep.subr.mxu0 0.0
        %2609 = vmatpush2.msra.mxu0 0.0
        %2610 = vmatprep.subr.mxu0 0.0
        %2611 = vmatpush2.msra.mxu0 0.0
        %2612 = vmatprep.subr.mxu0 0.0
        %2613 = vmatpush2.msra.mxu0 0.0
        %2614 = vmatprep.subr.mxu0 0.0
        %2615 = vmatpush2.msra.mxu0 0.0
        %2616 = vmatprep.subr.mxu0 0.0
        %2617 = vmatpush2.msra.mxu0 0.0
        %2618 = vmatprep.subr.mxu0 0.0
        %2619 = vmatpush2.msra.mxu0 0.0
        %2620 = vmatprep.subr.mxu0 0.0
        %2621 = vmatpush2.msra.mxu0 0.0
        %2622 = vmatprep.subr.mxu0 0.0
        %2623 = vmatpush2.msra.mxu0 0.0
        %2624 = vmatprep.subr.mxu0 0.0
        %2625 = vmatpush2.msra.mxu0 0.0
        %2626 = vmatprep.subr.mxu0 0.0
        %2627 = vmatpush2.msra.mxu0 0.0
        %2628 = vmatprep.subr.mxu0 0.0
        %2629 = vmatpush2.msra.mxu0 0.0
        %2630 = vmatprep.subr.mxu0 0.0
        %2631 = vmatpush2.msra.mxu0 0.0
        %2632 = vmatprep.subr.mxu0 0.0
        %2633 = vmatpush2.msra.mxu0 0.0
        %2634 = vmatprep.subr.mxu0 0.0
        %2635 = vmatpush2.msra.mxu0 0.0
        %2636 = vmatprep.subr.mxu0 0.0
        %2637 = vmatpush2.msra.mxu0 0.0
        %2638 = vmatprep.subr.mxu0 0.0
        %2639 = vmatpush2.msra.mxu0 0.0
        %2640 = vmatprep.mubr.f32.mxu0 0.0
        %2641 = vmatmul.mubr.f32.gmra.mxu0 %v2571
        %v2642 = vpop.f32.mrf.mxu0
        %v2643 = vadd.f32 0.0, %v2642
        %v2644 = vpop.f32.mrf.mxu0
        %2645 = vmatprep.mubr.f32.mxu0 0.0
        %2646 = vmatmul.mubr.f32.gmra.mxu0 %v2574
        %v2647 = vpop.f32.mrf.mxu0
        %v2648 = vadd.f32 0.0, %v2647
        %v2649 = vpop.f32.mrf.mxu0
        %2650 = vdwg.mxu0
        %2651 = vmatprep.subr.mxu0 0.0
        %2652 = vmatpush1.msra.mxu0 %v662
        %2653 = vmatprep.subr.mxu0 0.0
        %2654 = vmatpush1.msra.mxu0 %v661
        %2655 = vmatprep.subr.mxu0 0.0
        %2656 = vmatpush1.msra.mxu0 %v660
        %2657 = vmatprep.subr.mxu0 0.0
        %2658 = vmatpush1.msra.mxu0 %v659
        %2659 = vmatprep.subr.mxu0 0.0
        %2660 = vmatpush1.msra.mxu0 %v658
        %2661 = vmatprep.subr.mxu0 0.0
        %2662 = vmatpush1.msra.mxu0 %v657
        %2663 = vmatprep.subr.mxu0 0.0
        %2664 = vmatpush1.msra.mxu0 %v656
        %2665 = vmatprep.subr.mxu0 0.0
        %2666 = vmatpush1.msra.mxu0 %v655
        %2667 = vmatprep.subr.mxu0 0.0
        %2668 = vmatpush1.msra.mxu0 %v654
        %2669 = vmatprep.subr.mxu0 0.0
        %2670 = vmatpush1.msra.mxu0 %v653
        %2671 = vmatprep.subr.mxu0 0.0
        %2672 = vmatpush1.msra.mxu0 %v652
        %2673 = vmatprep.subr.mxu0 0.0
        %2674 = vmatpush1.msra.mxu0 %v651
        %2675 = vmatprep.subr.mxu0 0.0
        %2676 = vmatpush1.msra.mxu0 %v650
        %2677 = vmatprep.subr.mxu0 0.0
        %2678 = vmatpush1.msra.mxu0 %v649
        %2679 = vmatprep.subr.mxu0 0.0
        %2680 = vmatpush1.msra.mxu0 %v648
        %2681 = vmatprep.subr.mxu0 0.0
        %2682 = vmatpush1.msra.mxu0 %v647
        %2683 = vmatprep.subr.mxu0 0.0
        %2684 = vmatpush2.msra.mxu0 0.0
        %2685 = vmatprep.subr.mxu0 0.0
        %2686 = vmatpush2.msra.mxu0 0.0
        %2687 = vmatprep.subr.mxu0 0.0
        %2688 = vmatpush2.msra.mxu0 0.0
        %2689 = vmatprep.subr.mxu0 0.0
        %2690 = vmatpush2.msra.mxu0 0.0
        %2691 = vmatprep.subr.mxu0 0.0
        %2692 = vmatpush2.msra.mxu0 0.0
        %2693 = vmatprep.subr.mxu0 0.0
        %2694 = vmatpush2.msra.mxu0 0.0
        %2695 = vmatprep.subr.mxu0 0.0
        %2696 = vmatpush2.msra.mxu0 0.0
        %2697 = vmatprep.subr.mxu0 0.0
        %2698 = vmatpush2.msra.mxu0 0.0
        %2699 = vmatprep.subr.mxu0 0.0
        %2700 = vmatpush2.msra.mxu0 0.0
        %2701 = vmatprep.subr.mxu0 0.0
        %2702 = vmatpush2.msra.mxu0 0.0
        %2703 = vmatprep.subr.mxu0 0.0
        %2704 = vmatpush2.msra.mxu0 0.0
        %2705 = vmatprep.subr.mxu0 0.0
        %2706 = vmatpush2.msra.mxu0 0.0
        %2707 = vmatprep.subr.mxu0 0.0
        %2708 = vmatpush2.msra.mxu0 0.0
        %2709 = vmatprep.subr.mxu0 0.0
        %2710 = vmatpush2.msra.mxu0 0.0
        %2711 = vmatprep.subr.mxu0 0.0
        %2712 = vmatpush2.msra.mxu0 0.0
        %2713 = vmatprep.subr.mxu0 0.0
        %2714 = vmatpush2.msra.mxu0 0.0
        %2715 = vmatprep.mubr.f32.mxu0 0.0
        %2716 = vmatmul.mubr.f32.gmra.mxu0 %v2560
        %v2717 = vpop.f32.mrf.mxu0
        %v2718 = vadd.f32 0.0, %v2717
        %v2719 = vpop.f32.mrf.mxu0
        %2720 = vdwg.mxu0
        %v2723 = vunpack.c.l.s4 1966171168
        %v2724 = vunpack.c.0.s8 %v2723
        %v2725 = vlaneseq
        %v2726 = vshrl.u32 %v2725, 7
        %v2727 = vsub.s32 %v2724, %v2726
        %v2728 = vrot.slane %v2718, %v2727
        %v2729 = vcombine.high %v2728, %v2728
        %v2731 = vunpack.c.l.s4 1966171168
        %v2732 = vunpack.c.0.s8 %v2731
        %v2733 = vlaneseq
        %v2734 = vshrl.u32 %v2733, 7
        %v2735 = vsub.s32 %v2732, %v2734
        %v2736 = vrot.slane %v2728, %v2735
        %v2738 = vunpack.c.l.s4 1966171168
        %v2739 = vunpack.c.0.s8 %v2738
        %v2740 = vlaneseq
        %v2741 = vshrl.u32 %v2740, 7
        %v2742 = vsub.s32 %v2739, %v2741
        %v2743 = vrot.slane %v2729, %v2742
        %v2744 = vlaneseq
        %v2745 = vshrl.u32 %v2744, 7
        %v2746 = vsub.s32 0, %v2745
        %v2747 = vrot.slane %v2736, %v2746
        %v2748 = vlaneseq
        %v2749 = vshrl.u32 %v2748, 7
        %v2750 = vsub.s32 0, %v2749
        %v2751 = vrot.slane %v2743, %v2750
        %v2754 = vadd.f32 %v2747, %v2643
        %v2755 = vadd.f32 %v2751, %v2648
        %v2756 = vadd.f32 %v2754, %v958
        %v2757 = vadd.f32 %v2755, %v958
        %v2758 = vtanh.pop %v2756
        %v2759 = vtanh.pop %v2757
        %v2760 = vmul.f32 %v2758, %v968
        %v2761 = vmul.f32 %v2759, %v968
        %v2762 = vsel %vm767, %v2760, 0.0
        %2763 = vadd.xlane.f32.xlu0 %v2762
        %v2764 = vpop.xlane.xlu0 %2763
        %v2765 = vsel %vm767, %v2761, 0.0
        %2766 = vadd.xlane.f32.xlu0 %v2765
        %v2767 = vpop.xlane.xlu0 %2766
        %vm2768 = vcmp.gt.f32.partialorder %v2567, 0.5
        %v2771 = vlaneseq
        %v2772 = vshrl.u32 %v2771, 7
        %v2773 = vsub.s32 %v982, %v2772
        %v2774 = vrot.slane %v2764, %v2773
        %v2775 = vlaneseq
        %v2776 = vshrl.u32 %v2775, 7
        %v2777 = vsub.s32 %v982, %v2776
        %v2778 = vrot.slane %v2767, %v2777
        %v2779 = vsel %vm991, %v2778, %v2774
        %v2781 = vsel %vm2768, %v2779, -1e+09
        %v2782 = vsel %vm995, %v2781, -inf
        %2783 = vmax.xlane.f32.xlu0 %v2782
        %v2784 = vpop.xlane.xlu0 %2783
        %v2785 = vsub.f32 %v2781, %v2784
        %v2786 = vmul.f32 %v2785, 1.442695
        %v2787 = vpow.pop %v2786
        %v2788 = vsel %vm995, %v2787, 0.0
        %2789 = vadd.xlane.f32.xlu0 %v2788
        %v2790 = vpop.xlane.xlu0 %2789
        %v2791 = vrcp.pop %v2790
        %v2792 = vmul.f32 %v2787, %v2791
        %v2793 = vlaneseq
        %v2794 = vshrl.u32 %v2793, 7
        %v2795 = vsub.s32 0, %v2794
        %v2796 = vrot.slane %v2792, %v2795
        %2798 = vbcast.lane.b32.xlu0 %v2796, 256
        %v2799 = vpop.permute.xlu0 %2798
        %v2800 = vlaneseq
        %v2801 = vshrl.u32 %v2800, 7
        %v2802 = vsub.s32 1, %v2801
        %v2803 = vrot.slane %v2792, %v2802
        %2805 = vbcast.lane.b32.xlu0 %v2803, 256
        %v2806 = vpop.permute.xlu0 %2805
        %v2807 = vmul.f32 %v2799, %v2564
        %v2808 = vmul.f32 %v2806, %v2565
        %v2809 = vsel %vm767, %v2807, 0.0
        %v2810 = vrot.slane %v2809, 4
        %v2811 = vadd.f32 %v2809, %v2810
        %v2812 = vrot.slane %v2811, 2
        %v2813 = vadd.f32 %v2811, %v2812
        %v2814 = vrot.slane %v2813, 1
        %v2815 = vadd.f32 %v2813, %v2814
        %v2816 = vsel %vm767, %v2808, 0.0
        %v2817 = vrot.slane %v2816, 4
        %v2818 = vadd.f32 %v2816, %v2817
        %v2819 = vrot.slane %v2818, 2
        %v2820 = vadd.f32 %v2818, %v2819
        %v2821 = vrot.slane %v2820, 1
        %v2822 = vadd.f32 %v2820, %v2821
        %v2823 = vpack.c.bf16 %v2815, %v2815
        %v2824 = vpack.c.bf16 %v2822, %v2822
        %v2825 = vpack.c.bf16 %v2569, %v2569
        %v2827 = vsel %vm767, %v2825, 0
        %2829 = vmatprep.subr.bf16.mxu0 0
        %2830 = vmatpush1.bf16.msra.mxu0 0
        %2831 = vmatprep.subr.bf16.mxu0 0
        %2832 = vmatpush1.bf16.msra.mxu0 0
        %2833 = vmatprep.subr.bf16.mxu0 0
        %2834 = vmatpush1.bf16.msra.mxu0 0
        %2835 = vmatprep.subr.bf16.mxu0 0
        %2836 = vmatpush1.bf16.msra.mxu0 0
        %2837 = vmatprep.subr.bf16.mxu0 %v1101
        %2838 = vmatpush1.bf16.msra.mxu0 %v1100
        %2839 = vmatprep.subr.bf16.mxu0 %v1097
        %2840 = vmatpush1.bf16.msra.mxu0 %v1096
        %2841 = vmatprep.subr.bf16.mxu0 %v1093
        %2842 = vmatpush1.bf16.msra.mxu0 %v1092
        %2843 = vmatprep.subr.bf16.mxu0 %v1089
        %2844 = vmatpush1.bf16.msra.mxu0 %v1088
        %2845 = vmatprep.subr.bf16.mxu0 0
        %2846 = vmatpush2.bf16.msra.mxu0 0
        %2847 = vmatprep.subr.bf16.mxu0 0
        %2848 = vmatpush2.bf16.msra.mxu0 0
        %2849 = vmatprep.subr.bf16.mxu0 0
        %2850 = vmatpush2.bf16.msra.mxu0 0
        %2851 = vmatprep.subr.bf16.mxu0 0
        %2852 = vmatpush2.bf16.msra.mxu0 0
        %2853 = vmatprep.subr.bf16.mxu0 0
        %2854 = vmatpush2.bf16.msra.mxu0 0
        %2855 = vmatprep.subr.bf16.mxu0 0
        %2856 = vmatpush2.bf16.msra.mxu0 0
        %2857 = vmatprep.subr.bf16.mxu0 0
        %2858 = vmatpush2.bf16.msra.mxu0 0
        %2859 = vmatprep.subr.bf16.mxu0 0
        %2860 = vmatpush2.bf16.msra.mxu0 0
        %2861 = vmatprep.mubr.bf16.mxu0 0
        %2862 = vmatmul.mubr.bf16.gmra.mxu0 %v2827
        %v2863 = vpop.f32.mrf.mxu0
        %v2864 = vadd.f32 0.0, %v2863
        %v2865 = vpop.f32.mrf.mxu0
        %v2866 = vadd.f32 0.0, %v2865
        %v2867 = vpop.f32.mrf.mxu0
        %v2868 = vpop.f32.mrf.mxu0
        %2869 = vdwg.mxu0
        %2870 = vmatprep.subr.bf16.mxu0 0
        %2871 = vmatpush1.bf16.msra.mxu0 0
        %2872 = vmatprep.subr.bf16.mxu0 0
        %2873 = vmatpush1.bf16.msra.mxu0 0
        %2874 = vmatprep.subr.bf16.mxu0 0
        %2875 = vmatpush1.bf16.msra.mxu0 0
        %2876 = vmatprep.subr.bf16.mxu0 0
        %2877 = vmatpush1.bf16.msra.mxu0 0
        %2878 = vmatprep.subr.bf16.mxu0 %v1103
        %2879 = vmatpush1.bf16.msra.mxu0 %v1102
        %2880 = vmatprep.subr.bf16.mxu0 %v1099
        %2881 = vmatpush1.bf16.msra.mxu0 %v1098
        %2882 = vmatprep.subr.bf16.mxu0 %v1095
        %2883 = vmatpush1.bf16.msra.mxu0 %v1094
        %2884 = vmatprep.subr.bf16.mxu0 %v1091
        %2885 = vmatpush1.bf16.msra.mxu0 %v1090
        %2886 = vmatprep.subr.bf16.mxu0 0
        %2887 = vmatpush2.bf16.msra.mxu0 0
        %2888 = vmatprep.subr.bf16.mxu0 0
        %2889 = vmatpush2.bf16.msra.mxu0 0
        %2890 = vmatprep.subr.bf16.mxu0 0
        %2891 = vmatpush2.bf16.msra.mxu0 0
        %2892 = vmatprep.subr.bf16.mxu0 0
        %2893 = vmatpush2.bf16.msra.mxu0 0
        %2894 = vmatprep.subr.bf16.mxu0 0
        %2895 = vmatpush2.bf16.msra.mxu0 0
        %2896 = vmatprep.subr.bf16.mxu0 0
        %2897 = vmatpush2.bf16.msra.mxu0 0
        %2898 = vmatprep.subr.bf16.mxu0 0
        %2899 = vmatpush2.bf16.msra.mxu0 0
        %2900 = vmatprep.subr.bf16.mxu0 0
        %2901 = vmatpush2.bf16.msra.mxu0 0
        %2902 = vmatprep.mubr.bf16.mxu0 0
        %2903 = vmatmul.mubr.bf16.gmra.mxu0 %v2827
        %v2904 = vpop.f32.mrf.mxu0
        %v2905 = vadd.f32 0.0, %v2904
        %v2906 = vpop.f32.mrf.mxu0
        %v2907 = vadd.f32 0.0, %v2906
        %v2908 = vpop.f32.mrf.mxu0
        %v2909 = vpop.f32.mrf.mxu0
        %2910 = vdwg.mxu0
        %v2913 = vunpack.c.l.b16 %v2823
        %v2914 = vunpack.c.l.b16 %v2824
        %v2915 = vsel %vm991, %v2914, %v2913
        %v2916 = vpack.c.b16 %v2915, %v2915
        %v2918 = vsel %vm767, %v2916, 0
        %2920 = vmatprep.subr.bf16.mxu0 0
        %2921 = vmatpush1.bf16.msra.mxu0 0
        %2922 = vmatprep.subr.bf16.mxu0 0
        %2923 = vmatpush1.bf16.msra.mxu0 0
        %2924 = vmatprep.subr.bf16.mxu0 0
        %2925 = vmatpush1.bf16.msra.mxu0 0
        %2926 = vmatprep.subr.bf16.mxu0 0
        %2927 = vmatpush1.bf16.msra.mxu0 0
        %2928 = vmatprep.subr.bf16.mxu0 %v1272
        %2929 = vmatpush1.bf16.msra.mxu0 %v1271
        %2930 = vmatprep.subr.bf16.mxu0 %v1268
        %2931 = vmatpush1.bf16.msra.mxu0 %v1267
        %2932 = vmatprep.subr.bf16.mxu0 %v1264
        %2933 = vmatpush1.bf16.msra.mxu0 %v1263
        %2934 = vmatprep.subr.bf16.mxu0 %v1260
        %2935 = vmatpush1.bf16.msra.mxu0 %v1259
        %2936 = vmatprep.subr.bf16.mxu0 0
        %2937 = vmatpush2.bf16.msra.mxu0 0
        %2938 = vmatprep.subr.bf16.mxu0 0
        %2939 = vmatpush2.bf16.msra.mxu0 0
        %2940 = vmatprep.subr.bf16.mxu0 0
        %2941 = vmatpush2.bf16.msra.mxu0 0
        %2942 = vmatprep.subr.bf16.mxu0 0
        %2943 = vmatpush2.bf16.msra.mxu0 0
        %2944 = vmatprep.subr.bf16.mxu0 0
        %2945 = vmatpush2.bf16.msra.mxu0 0
        %2946 = vmatprep.subr.bf16.mxu0 0
        %2947 = vmatpush2.bf16.msra.mxu0 0
        %2948 = vmatprep.subr.bf16.mxu0 0
        %2949 = vmatpush2.bf16.msra.mxu0 0
        %2950 = vmatprep.subr.bf16.mxu0 0
        %2951 = vmatpush2.bf16.msra.mxu0 0
        %2952 = vmatprep.mubr.bf16.mxu0 0
        %2953 = vmatmul.mubr.bf16.gmra.mxu0 %v2918
        %v2954 = vpop.f32.mrf.mxu0
        %v2955 = vadd.f32 %v2864, %v2954
        %v2956 = vpop.f32.mrf.mxu0
        %v2957 = vadd.f32 %v2866, %v2956
        %v2958 = vpop.f32.mrf.mxu0
        %v2959 = vpop.f32.mrf.mxu0
        %2960 = vdwg.mxu0
        %2961 = vmatprep.subr.bf16.mxu0 0
        %2962 = vmatpush1.bf16.msra.mxu0 0
        %2963 = vmatprep.subr.bf16.mxu0 0
        %2964 = vmatpush1.bf16.msra.mxu0 0
        %2965 = vmatprep.subr.bf16.mxu0 0
        %2966 = vmatpush1.bf16.msra.mxu0 0
        %2967 = vmatprep.subr.bf16.mxu0 0
        %2968 = vmatpush1.bf16.msra.mxu0 0
        %2969 = vmatprep.subr.bf16.mxu0 %v1274
        %2970 = vmatpush1.bf16.msra.mxu0 %v1273
        %2971 = vmatprep.subr.bf16.mxu0 %v1270
        %2972 = vmatpush1.bf16.msra.mxu0 %v1269
        %2973 = vmatprep.subr.bf16.mxu0 %v1266
        %2974 = vmatpush1.bf16.msra.mxu0 %v1265
        %2975 = vmatprep.subr.bf16.mxu0 %v1262
        %2976 = vmatpush1.bf16.msra.mxu0 %v1261
        %2977 = vmatprep.subr.bf16.mxu0 0
        %2978 = vmatpush2.bf16.msra.mxu0 0
        %2979 = vmatprep.subr.bf16.mxu0 0
        %2980 = vmatpush2.bf16.msra.mxu0 0
        %2981 = vmatprep.subr.bf16.mxu0 0
        %2982 = vmatpush2.bf16.msra.mxu0 0
        %2983 = vmatprep.subr.bf16.mxu0 0
        %2984 = vmatpush2.bf16.msra.mxu0 0
        %2985 = vmatprep.subr.bf16.mxu0 0
        %2986 = vmatpush2.bf16.msra.mxu0 0
        %2987 = vmatprep.subr.bf16.mxu0 0
        %2988 = vmatpush2.bf16.msra.mxu0 0
        %2989 = vmatprep.subr.bf16.mxu0 0
        %2990 = vmatpush2.bf16.msra.mxu0 0
        %2991 = vmatprep.subr.bf16.mxu0 0
        %2992 = vmatpush2.bf16.msra.mxu0 0
        %2993 = vmatprep.mubr.bf16.mxu0 0
        %2994 = vmatmul.mubr.bf16.gmra.mxu0 %v2918
        %v2995 = vpop.f32.mrf.mxu0
        %v2996 = vadd.f32 %v2905, %v2995
        %v2997 = vpop.f32.mrf.mxu0
        %v2998 = vadd.f32 %v2907, %v2997
        %v2999 = vpop.f32.mrf.mxu0
        %v3000 = vpop.f32.mrf.mxu0
        %3001 = vdwg.mxu0
        %v3002 = vpack.c.bf16 %v2560, %v2560
        %3003 = vmatprep.subr.bf16.mxu0 %v1502
        %3004 = vmatpush1.bf16.msra.mxu0 %v1501
        %3005 = vmatprep.subr.bf16.mxu0 %v1498
        %3006 = vmatpush1.bf16.msra.mxu0 %v1497
        %3007 = vmatprep.subr.bf16.mxu0 %v1494
        %3008 = vmatpush1.bf16.msra.mxu0 %v1493
        %3009 = vmatprep.subr.bf16.mxu0 %v1490
        %3010 = vmatpush1.bf16.msra.mxu0 %v1489
        %3011 = vmatprep.subr.bf16.mxu0 %v1486
        %3012 = vmatpush1.bf16.msra.mxu0 %v1485
        %3013 = vmatprep.subr.bf16.mxu0 %v1482
        %3014 = vmatpush1.bf16.msra.mxu0 %v1481
        %3015 = vmatprep.subr.bf16.mxu0 %v1478
        %3016 = vmatpush1.bf16.msra.mxu0 %v1477
        %3017 = vmatprep.subr.bf16.mxu0 %v1474
        %3018 = vmatpush1.bf16.msra.mxu0 %v1473
        %3019 = vmatprep.subr.bf16.mxu0 0
        %3020 = vmatpush2.bf16.msra.mxu0 0
        %3021 = vmatprep.subr.bf16.mxu0 0
        %3022 = vmatpush2.bf16.msra.mxu0 0
        %3023 = vmatprep.subr.bf16.mxu0 0
        %3024 = vmatpush2.bf16.msra.mxu0 0
        %3025 = vmatprep.subr.bf16.mxu0 0
        %3026 = vmatpush2.bf16.msra.mxu0 0
        %3027 = vmatprep.subr.bf16.mxu0 0
        %3028 = vmatpush2.bf16.msra.mxu0 0
        %3029 = vmatprep.subr.bf16.mxu0 0
        %3030 = vmatpush2.bf16.msra.mxu0 0
        %3031 = vmatprep.subr.bf16.mxu0 0
        %3032 = vmatpush2.bf16.msra.mxu0 0
        %3033 = vmatprep.subr.bf16.mxu0 0
        %3034 = vmatpush2.bf16.msra.mxu0 0
        %3035 = vmatprep.mubr.bf16.mxu0 0
        %3036 = vmatmul.mubr.bf16.gmra.mxu0 %v3002
        %v3037 = vpop.f32.mrf.mxu0
        %v3038 = vadd.f32 0.0, %v3037
        %v3039 = vpop.f32.mrf.mxu0
        %v3040 = vadd.f32 0.0, %v3039
        %v3041 = vpop.f32.mrf.mxu0
        %v3042 = vpop.f32.mrf.mxu0
        %3043 = vdwg.mxu0
        %3044 = vmatprep.subr.bf16.mxu0 %v1504
        %3045 = vmatpush1.bf16.msra.mxu0 %v1503
        %3046 = vmatprep.subr.bf16.mxu0 %v1500
        %3047 = vmatpush1.bf16.msra.mxu0 %v1499
        %3048 = vmatprep.subr.bf16.mxu0 %v1496
        %3049 = vmatpush1.bf16.msra.mxu0 %v1495
        %3050 = vmatprep.subr.bf16.mxu0 %v1492
        %3051 = vmatpush1.bf16.msra.mxu0 %v1491
        %3052 = vmatprep.subr.bf16.mxu0 %v1488
        %3053 = vmatpush1.bf16.msra.mxu0 %v1487
        %3054 = vmatprep.subr.bf16.mxu0 %v1484
        %3055 = vmatpush1.bf16.msra.mxu0 %v1483
        %3056 = vmatprep.subr.bf16.mxu0 %v1480
        %3057 = vmatpush1.bf16.msra.mxu0 %v1479
        %3058 = vmatprep.subr.bf16.mxu0 %v1476
        %3059 = vmatpush1.bf16.msra.mxu0 %v1475
        %3060 = vmatprep.subr.bf16.mxu0 0
        %3061 = vmatpush2.bf16.msra.mxu0 0
        %3062 = vmatprep.subr.bf16.mxu0 0
        %3063 = vmatpush2.bf16.msra.mxu0 0
        %3064 = vmatprep.subr.bf16.mxu0 0
        %3065 = vmatpush2.bf16.msra.mxu0 0
        %3066 = vmatprep.subr.bf16.mxu0 0
        %3067 = vmatpush2.bf16.msra.mxu0 0
        %3068 = vmatprep.subr.bf16.mxu0 0
        %3069 = vmatpush2.bf16.msra.mxu0 0
        %3070 = vmatprep.subr.bf16.mxu0 0
        %3071 = vmatpush2.bf16.msra.mxu0 0
        %3072 = vmatprep.subr.bf16.mxu0 0
        %3073 = vmatpush2.bf16.msra.mxu0 0
        %3074 = vmatprep.subr.bf16.mxu0 0
        %3075 = vmatpush2.bf16.msra.mxu0 0
        %3076 = vmatprep.mubr.bf16.mxu0 0
        %3077 = vmatmul.mubr.bf16.gmra.mxu0 %v3002
        %v3078 = vpop.f32.mrf.mxu0
        %v3079 = vadd.f32 0.0, %v3078
        %v3080 = vpop.f32.mrf.mxu0
        %v3081 = vadd.f32 0.0, %v3080
        %v3082 = vpop.f32.mrf.mxu0
        %v3083 = vpop.f32.mrf.mxu0
        %3084 = vdwg.mxu0
        %v3085 = vadd.f32 %v2955, %v3038
        %v3086 = vadd.f32 %v2957, %v3040
        %v3087 = vadd.f32 %v2996, %v3079
        %v3088 = vadd.f32 %v2998, %v3081
        %v3089 = vpack.c.bf16 %v2558, %v2558
        %3090 = vmatprep.subr.bf16.mxu0 %v1749
        %3091 = vmatpush1.bf16.msra.mxu0 %v1748
        %3092 = vmatprep.subr.bf16.mxu0 %v1745
        %3093 = vmatpush1.bf16.msra.mxu0 %v1744
        %3094 = vmatprep.subr.bf16.mxu0 %v1741
        %3095 = vmatpush1.bf16.msra.mxu0 %v1740
        %3096 = vmatprep.subr.bf16.mxu0 %v1737
        %3097 = vmatpush1.bf16.msra.mxu0 %v1736
        %3098 = vmatprep.subr.bf16.mxu0 %v1733
        %3099 = vmatpush1.bf16.msra.mxu0 %v1732
        %3100 = vmatprep.subr.bf16.mxu0 %v1729
        %3101 = vmatpush1.bf16.msra.mxu0 %v1728
        %3102 = vmatprep.subr.bf16.mxu0 %v1725
        %3103 = vmatpush1.bf16.msra.mxu0 %v1724
        %3104 = vmatprep.subr.bf16.mxu0 %v1721
        %3105 = vmatpush1.bf16.msra.mxu0 %v1720
        %3106 = vmatprep.subr.bf16.mxu0 0
        %3107 = vmatpush2.bf16.msra.mxu0 0
        %3108 = vmatprep.subr.bf16.mxu0 0
        %3109 = vmatpush2.bf16.msra.mxu0 0
        %3110 = vmatprep.subr.bf16.mxu0 0
        %3111 = vmatpush2.bf16.msra.mxu0 0
        %3112 = vmatprep.subr.bf16.mxu0 0
        %3113 = vmatpush2.bf16.msra.mxu0 0
        %3114 = vmatprep.subr.bf16.mxu0 0
        %3115 = vmatpush2.bf16.msra.mxu0 0
        %3116 = vmatprep.subr.bf16.mxu0 0
        %3117 = vmatpush2.bf16.msra.mxu0 0
        %3118 = vmatprep.subr.bf16.mxu0 0
        %3119 = vmatpush2.bf16.msra.mxu0 0
        %3120 = vmatprep.subr.bf16.mxu0 0
        %3121 = vmatpush2.bf16.msra.mxu0 0
        %3122 = vmatprep.mubr.bf16.mxu0 0
        %3123 = vmatmul.mubr.bf16.gmra.mxu0 %v3089
        %v3124 = vpop.f32.mrf.mxu0
        %v3125 = vadd.f32 0.0, %v3124
        %v3126 = vpop.f32.mrf.mxu0
        %v3127 = vadd.f32 0.0, %v3126
        %v3128 = vpop.f32.mrf.mxu0
        %v3129 = vpop.f32.mrf.mxu0
        %3130 = vdwg.mxu0
        %3131 = vmatprep.subr.bf16.mxu0 %v1751
        %3132 = vmatpush1.bf16.msra.mxu0 %v1750
        %3133 = vmatprep.subr.bf16.mxu0 %v1747
        %3134 = vmatpush1.bf16.msra.mxu0 %v1746
        %3135 = vmatprep.subr.bf16.mxu0 %v1743
        %3136 = vmatpush1.bf16.msra.mxu0 %v1742
        %3137 = vmatprep.subr.bf16.mxu0 %v1739
        %3138 = vmatpush1.bf16.msra.mxu0 %v1738
        %3139 = vmatprep.subr.bf16.mxu0 %v1735
        %3140 = vmatpush1.bf16.msra.mxu0 %v1734
        %3141 = vmatprep.subr.bf16.mxu0 %v1731
        %3142 = vmatpush1.bf16.msra.mxu0 %v1730
        %3143 = vmatprep.subr.bf16.mxu0 %v1727
        %3144 = vmatpush1.bf16.msra.mxu0 %v1726
        %3145 = vmatprep.subr.bf16.mxu0 %v1723
        %3146 = vmatpush1.bf16.msra.mxu0 %v1722
        %3147 = vmatprep.subr.bf16.mxu0 0
        %3148 = vmatpush2.bf16.msra.mxu0 0
        %3149 = vmatprep.subr.bf16.mxu0 0
        %3150 = vmatpush2.bf16.msra.mxu0 0
        %3151 = vmatprep.subr.bf16.mxu0 0
        %3152 = vmatpush2.bf16.msra.mxu0 0
        %3153 = vmatprep.subr.bf16.mxu0 0
        %3154 = vmatpush2.bf16.msra.mxu0 0
        %3155 = vmatprep.subr.bf16.mxu0 0
        %3156 = vmatpush2.bf16.msra.mxu0 0
        %3157 = vmatprep.subr.bf16.mxu0 0
        %3158 = vmatpush2.bf16.msra.mxu0 0
        %3159 = vmatprep.subr.bf16.mxu0 0
        %3160 = vmatpush2.bf16.msra.mxu0 0
        %3161 = vmatprep.subr.bf16.mxu0 0
        %3162 = vmatpush2.bf16.msra.mxu0 0
        %3163 = vmatprep.mubr.bf16.mxu0 0
        %3164 = vmatmul.mubr.bf16.gmra.mxu0 %v3089
        %v3165 = vpop.f32.mrf.mxu0
        %v3166 = vadd.f32 0.0, %v3165
        %v3167 = vpop.f32.mrf.mxu0
        %v3168 = vadd.f32 0.0, %v3167
        %v3169 = vpop.f32.mrf.mxu0
        %v3170 = vpop.f32.mrf.mxu0
        %3171 = vdwg.mxu0
        %v3172 = vadd.f32 %v3085, %v3125
        %v3173 = vadd.f32 %v3086, %v3127
        %v3174 = vadd.f32 %v3087, %v3166
        %v3175 = vadd.f32 %v3088, %v3168
        %v3176 = vadd.f32 %v3172, %v1874
        %v3177 = vadd.f32 %v3173, %v1878
        %v3178 = vadd.f32 %v3174, %v1882
        %v3179 = vadd.f32 %v3175, %v1886
        %v3180 = vxor.u32 %v3176, 2147483648
        %v3181 = vmul.f32 %v3180, 1.442695
        %v3182 = vpow.pop %v3181
        %v3183 = vadd.f32 %v3182, 1.0
        %v3184 = vrcp.pop %v3183
        %v3185 = vmul.f32 1.0, %v3184
        %v3186 = vxor.u32 %v3177, 2147483648
        %v3187 = vmul.f32 %v3186, 1.442695
        %v3188 = vpow.pop %v3187
        %v3189 = vadd.f32 %v3188, 1.0
        %v3190 = vrcp.pop %v3189
        %v3191 = vmul.f32 1.0, %v3190
        %v3192 = vtanh.pop %v3178
        %v3193 = vxor.u32 %v3179, 2147483648
        %v3194 = vmul.f32 %v3193, 1.442695
        %v3195 = vpow.pop %v3194
        %v3196 = vadd.f32 %v3195, 1.0
        %v3197 = vrcp.pop %v3196
        %v3198 = vmul.f32 1.0, %v3197
        %v3199 = vmul.f32 %v3191, %v2558
        %v3200 = vmul.f32 %v3185, %v3192
        %v3201 = vadd.f32 %v3199, %v3200
        %v3202 = vtanh.pop %v3201
        %v3203 = vmul.f32 %v3198, %v3202
        %s3204 = scalar_lea.vmem %s627, 4
        %3205 = vst [vmem:[%s3204] sm:$0x3] %v3203
        %s3206 = scalar_lea.vmem %s553, 24 [#allocation4]
        %v3207 = vld [vmem:[%s3206] sm:$0xff]
        %v3208 = vld [vmem:[%s3206 + $0x20] sm:$0xff]
        %s3209 = scalar_lea.vmem %s615, 6
        %v3210 = vld [vmem:[%s3209] sm:$0x3]
        %s3211 = scalar_lea.vmem %s621, 6
        %v3212 = vld [vmem:[%s3211] sm:$0x3]
        %v3214 = vsel %vm767, %v3207, 0
        %v3217 = vsel %vm767, %v3208, 0
        %3219 = vmatprep.subr.mxu0 0.0
        %3220 = vmatpush1.msra.mxu0 0.0
        %3221 = vmatprep.subr.mxu0 0.0
        %3222 = vmatpush1.msra.mxu0 0.0
        %3223 = vmatprep.subr.mxu0 0.0
        %3224 = vmatpush1.msra.mxu0 0.0
        %3225 = vmatprep.subr.mxu0 0.0
        %3226 = vmatpush1.msra.mxu0 0.0
        %3227 = vmatprep.subr.mxu0 0.0
        %3228 = vmatpush1.msra.mxu0 0.0
        %3229 = vmatprep.subr.mxu0 0.0
        %3230 = vmatpush1.msra.mxu0 0.0
        %3231 = vmatprep.subr.mxu0 0.0
        %3232 = vmatpush1.msra.mxu0 0.0
        %3233 = vmatprep.subr.mxu0 0.0
        %3234 = vmatpush1.msra.mxu0 0.0
        %3235 = vmatprep.subr.mxu0 0.0
        %3236 = vmatpush1.msra.mxu0 %v645
        %3237 = vmatprep.subr.mxu0 0.0
        %3238 = vmatpush1.msra.mxu0 %v644
        %3239 = vmatprep.subr.mxu0 0.0
        %3240 = vmatpush1.msra.mxu0 %v643
        %3241 = vmatprep.subr.mxu0 0.0
        %3242 = vmatpush1.msra.mxu0 %v642
        %3243 = vmatprep.subr.mxu0 0.0
        %3244 = vmatpush1.msra.mxu0 %v641
        %3245 = vmatprep.subr.mxu0 0.0
        %3246 = vmatpush1.msra.mxu0 %v640
        %3247 = vmatprep.subr.mxu0 0.0
        %3248 = vmatpush1.msra.mxu0 %v639
        %3249 = vmatprep.subr.mxu0 0.0
        %3250 = vmatpush1.msra.mxu0 %v638
        %3251 = vmatprep.subr.mxu0 0.0
        %3252 = vmatpush2.msra.mxu0 0.0
        %3253 = vmatprep.subr.mxu0 0.0
        %3254 = vmatpush2.msra.mxu0 0.0
        %3255 = vmatprep.subr.mxu0 0.0
        %3256 = vmatpush2.msra.mxu0 0.0
        %3257 = vmatprep.subr.mxu0 0.0
        %3258 = vmatpush2.msra.mxu0 0.0
        %3259 = vmatprep.subr.mxu0 0.0
        %3260 = vmatpush2.msra.mxu0 0.0
        %3261 = vmatprep.subr.mxu0 0.0
        %3262 = vmatpush2.msra.mxu0 0.0
        %3263 = vmatprep.subr.mxu0 0.0
        %3264 = vmatpush2.msra.mxu0 0.0
        %3265 = vmatprep.subr.mxu0 0.0
        %3266 = vmatpush2.msra.mxu0 0.0
        %3267 = vmatprep.subr.mxu0 0.0
        %3268 = vmatpush2.msra.mxu0 0.0
        %3269 = vmatprep.subr.mxu0 0.0
        %3270 = vmatpush2.msra.mxu0 0.0
        %3271 = vmatprep.subr.mxu0 0.0
        %3272 = vmatpush2.msra.mxu0 0.0
        %3273 = vmatprep.subr.mxu0 0.0
        %3274 = vmatpush2.msra.mxu0 0.0
        %3275 = vmatprep.subr.mxu0 0.0
        %3276 = vmatpush2.msra.mxu0 0.0
        %3277 = vmatprep.subr.mxu0 0.0
        %3278 = vmatpush2.msra.mxu0 0.0
        %3279 = vmatprep.subr.mxu0 0.0
        %3280 = vmatpush2.msra.mxu0 0.0
        %3281 = vmatprep.subr.mxu0 0.0
        %3282 = vmatpush2.msra.mxu0 0.0
        %3283 = vmatprep.mubr.f32.mxu0 0.0
        %3284 = vmatmul.mubr.f32.gmra.mxu0 %v3214
        %v3285 = vpop.f32.mrf.mxu0
        %v3286 = vadd.f32 0.0, %v3285
        %v3287 = vpop.f32.mrf.mxu0
        %3288 = vmatprep.mubr.f32.mxu0 0.0
        %3289 = vmatmul.mubr.f32.gmra.mxu0 %v3217
        %v3290 = vpop.f32.mrf.mxu0
        %v3291 = vadd.f32 0.0, %v3290
        %v3292 = vpop.f32.mrf.mxu0
        %3293 = vdwg.mxu0
        %3294 = vmatprep.subr.mxu0 0.0
        %3295 = vmatpush1.msra.mxu0 %v662
        %3296 = vmatprep.subr.mxu0 0.0
        %3297 = vmatpush1.msra.mxu0 %v661
        %3298 = vmatprep.subr.mxu0 0.0
        %3299 = vmatpush1.msra.mxu0 %v660
        %3300 = vmatprep.subr.mxu0 0.0
        %3301 = vmatpush1.msra.mxu0 %v659
        %3302 = vmatprep.subr.mxu0 0.0
        %3303 = vmatpush1.msra.mxu0 %v658
        %3304 = vmatprep.subr.mxu0 0.0
        %3305 = vmatpush1.msra.mxu0 %v657
        %3306 = vmatprep.subr.mxu0 0.0
        %3307 = vmatpush1.msra.mxu0 %v656
        %3308 = vmatprep.subr.mxu0 0.0
        %3309 = vmatpush1.msra.mxu0 %v655
        %3310 = vmatprep.subr.mxu0 0.0
        %3311 = vmatpush1.msra.mxu0 %v654
        %3312 = vmatprep.subr.mxu0 0.0
        %3313 = vmatpush1.msra.mxu0 %v653
        %3314 = vmatprep.subr.mxu0 0.0
        %3315 = vmatpush1.msra.mxu0 %v652
        %3316 = vmatprep.subr.mxu0 0.0
        %3317 = vmatpush1.msra.mxu0 %v651
        %3318 = vmatprep.subr.mxu0 0.0
        %3319 = vmatpush1.msra.mxu0 %v650
        %3320 = vmatprep.subr.mxu0 0.0
        %3321 = vmatpush1.msra.mxu0 %v649
        %3322 = vmatprep.subr.mxu0 0.0
        %3323 = vmatpush1.msra.mxu0 %v648
        %3324 = vmatprep.subr.mxu0 0.0
        %3325 = vmatpush1.msra.mxu0 %v647
        %3326 = vmatprep.subr.mxu0 0.0
        %3327 = vmatpush2.msra.mxu0 0.0
        %3328 = vmatprep.subr.mxu0 0.0
        %3329 = vmatpush2.msra.mxu0 0.0
        %3330 = vmatprep.subr.mxu0 0.0
        %3331 = vmatpush2.msra.mxu0 0.0
        %3332 = vmatprep.subr.mxu0 0.0
        %3333 = vmatpush2.msra.mxu0 0.0
        %3334 = vmatprep.subr.mxu0 0.0
        %3335 = vmatpush2.msra.mxu0 0.0
        %3336 = vmatprep.subr.mxu0 0.0
        %3337 = vmatpush2.msra.mxu0 0.0
        %3338 = vmatprep.subr.mxu0 0.0
        %3339 = vmatpush2.msra.mxu0 0.0
        %3340 = vmatprep.subr.mxu0 0.0
        %3341 = vmatpush2.msra.mxu0 0.0
        %3342 = vmatprep.subr.mxu0 0.0
        %3343 = vmatpush2.msra.mxu0 0.0
        %3344 = vmatprep.subr.mxu0 0.0
        %3345 = vmatpush2.msra.mxu0 0.0
        %3346 = vmatprep.subr.mxu0 0.0
        %3347 = vmatpush2.msra.mxu0 0.0
        %3348 = vmatprep.subr.mxu0 0.0
        %3349 = vmatpush2.msra.mxu0 0.0
        %3350 = vmatprep.subr.mxu0 0.0
        %3351 = vmatpush2.msra.mxu0 0.0
        %3352 = vmatprep.subr.mxu0 0.0
        %3353 = vmatpush2.msra.mxu0 0.0
        %3354 = vmatprep.subr.mxu0 0.0
        %3355 = vmatpush2.msra.mxu0 0.0
        %3356 = vmatprep.subr.mxu0 0.0
        %3357 = vmatpush2.msra.mxu0 0.0
        %3358 = vmatprep.mubr.f32.mxu0 0.0
        %3359 = vmatmul.mubr.f32.gmra.mxu0 %v3203
        %v3360 = vpop.f32.mrf.mxu0
        %v3361 = vadd.f32 0.0, %v3360
        %v3362 = vpop.f32.mrf.mxu0
        %3363 = vdwg.mxu0
        %v3366 = vunpack.c.l.s4 1966171168
        %v3367 = vunpack.c.0.s8 %v3366
        %v3368 = vlaneseq
        %v3369 = vshrl.u32 %v3368, 7
        %v3370 = vsub.s32 %v3367, %v3369
        %v3371 = vrot.slane %v3361, %v3370
        %v3372 = vcombine.high %v3371, %v3371
        %v3374 = vunpack.c.l.s4 1966171168
        %v3375 = vunpack.c.0.s8 %v3374
        %v3376 = vlaneseq
        %v3377 = vshrl.u32 %v3376, 7
        %v3378 = vsub.s32 %v3375, %v3377
        %v3379 = vrot.slane %v3371, %v3378
        %v3381 = vunpack.c.l.s4 1966171168
        %v3382 = vunpack.c.0.s8 %v3381
        %v3383 = vlaneseq
        %v3384 = vshrl.u32 %v3383, 7
        %v3385 = vsub.s32 %v3382, %v3384
        %v3386 = vrot.slane %v3372, %v3385
        %v3387 = vlaneseq
        %v3388 = vshrl.u32 %v3387, 7
        %v3389 = vsub.s32 0, %v3388
        %v3390 = vrot.slane %v3379, %v3389
        %v3391 = vlaneseq
        %v3392 = vshrl.u32 %v3391, 7
        %v3393 = vsub.s32 0, %v3392
        %v3394 = vrot.slane %v3386, %v3393
        %v3397 = vadd.f32 %v3390, %v3286
        %v3398 = vadd.f32 %v3394, %v3291
        %v3399 = vadd.f32 %v3397, %v958
        %v3400 = vadd.f32 %v3398, %v958
        %v3401 = vtanh.pop %v3399
        %v3402 = vtanh.pop %v3400
        %v3403 = vmul.f32 %v3401, %v968
        %v3404 = vmul.f32 %v3402, %v968
        %v3405 = vsel %vm767, %v3403, 0.0
        %3406 = vadd.xlane.f32.xlu0 %v3405
        %v3407 = vpop.xlane.xlu0 %3406
        %v3408 = vsel %vm767, %v3404, 0.0
        %3409 = vadd.xlane.f32.xlu0 %v3408
        %v3410 = vpop.xlane.xlu0 %3409
        %vm3411 = vcmp.gt.f32.partialorder %v3210, 0.5
        %v3414 = vlaneseq
        %v3415 = vshrl.u32 %v3414, 7
        %v3416 = vsub.s32 %v982, %v3415
        %v3417 = vrot.slane %v3407, %v3416
        %v3418 = vlaneseq
        %v3419 = vshrl.u32 %v3418, 7
        %v3420 = vsub.s32 %v982, %v3419
        %v3421 = vrot.slane %v3410, %v3420
        %v3422 = vsel %vm991, %v3421, %v3417
        %v3424 = vsel %vm3411, %v3422, -1e+09
        %v3425 = vsel %vm995, %v3424, -inf
        %3426 = vmax.xlane.f32.xlu0 %v3425
        %v3427 = vpop.xlane.xlu0 %3426
        %v3428 = vsub.f32 %v3424, %v3427
        %v3429 = vmul.f32 %v3428, 1.442695
        %v3430 = vpow.pop %v3429
        %v3431 = vsel %vm995, %v3430, 0.0
        %3432 = vadd.xlane.f32.xlu0 %v3431
        %v3433 = vpop.xlane.xlu0 %3432
        %v3434 = vrcp.pop %v3433
        %v3435 = vmul.f32 %v3430, %v3434
        %v3436 = vlaneseq
        %v3437 = vshrl.u32 %v3436, 7
        %v3438 = vsub.s32 0, %v3437
        %v3439 = vrot.slane %v3435, %v3438
        %3441 = vbcast.lane.b32.xlu0 %v3439, 256
        %v3442 = vpop.permute.xlu0 %3441
        %v3443 = vlaneseq
        %v3444 = vshrl.u32 %v3443, 7
        %v3445 = vsub.s32 1, %v3444
        %v3446 = vrot.slane %v3435, %v3445
        %3448 = vbcast.lane.b32.xlu0 %v3446, 256
        %v3449 = vpop.permute.xlu0 %3448
        %v3450 = vmul.f32 %v3442, %v3207
        %v3451 = vmul.f32 %v3449, %v3208
        %v3452 = vsel %vm767, %v3450, 0.0
        %v3453 = vrot.slane %v3452, 4
        %v3454 = vadd.f32 %v3452, %v3453
        %v3455 = vrot.slane %v3454, 2
        %v3456 = vadd.f32 %v3454, %v3455
        %v3457 = vrot.slane %v3456, 1
        %v3458 = vadd.f32 %v3456, %v3457
        %v3459 = vsel %vm767, %v3451, 0.0
        %v3460 = vrot.slane %v3459, 4
        %v3461 = vadd.f32 %v3459, %v3460
        %v3462 = vrot.slane %v3461, 2
        %v3463 = vadd.f32 %v3461, %v3462
        %v3464 = vrot.slane %v3463, 1
        %v3465 = vadd.f32 %v3463, %v3464
        %v3466 = vpack.c.bf16 %v3458, %v3458
        %v3467 = vpack.c.bf16 %v3465, %v3465
        %v3468 = vpack.c.bf16 %v3212, %v3212
        %v3470 = vsel %vm767, %v3468, 0
        %3472 = vmatprep.subr.bf16.mxu0 0
        %3473 = vmatpush1.bf16.msra.mxu0 0
        %3474 = vmatprep.subr.bf16.mxu0 0
        %3475 = vmatpush1.bf16.msra.mxu0 0
        %3476 = vmatprep.subr.bf16.mxu0 0
        %3477 = vmatpush1.bf16.msra.mxu0 0
        %3478 = vmatprep.subr.bf16.mxu0 0
        %3479 = vmatpush1.bf16.msra.mxu0 0
        %3480 = vmatprep.subr.bf16.mxu0 %v1101
        %3481 = vmatpush1.bf16.msra.mxu0 %v1100
        %3482 = vmatprep.subr.bf16.mxu0 %v1097
        %3483 = vmatpush1.bf16.msra.mxu0 %v1096
        %3484 = vmatprep.subr.bf16.mxu0 %v1093
        %3485 = vmatpush1.bf16.msra.mxu0 %v1092
        %3486 = vmatprep.subr.bf16.mxu0 %v1089
        %3487 = vmatpush1.bf16.msra.mxu0 %v1088
        %3488 = vmatprep.subr.bf16.mxu0 0
        %3489 = vmatpush2.bf16.msra.mxu0 0
        %3490 = vmatprep.subr.bf16.mxu0 0
        %3491 = vmatpush2.bf16.msra.mxu0 0
        %3492 = vmatprep.subr.bf16.mxu0 0
        %3493 = vmatpush2.bf16.msra.mxu0 0
        %3494 = vmatprep.subr.bf16.mxu0 0
        %3495 = vmatpush2.bf16.msra.mxu0 0
        %3496 = vmatprep.subr.bf16.mxu0 0
        %3497 = vmatpush2.bf16.msra.mxu0 0
        %3498 = vmatprep.subr.bf16.mxu0 0
        %3499 = vmatpush2.bf16.msra.mxu0 0
        %3500 = vmatprep.subr.bf16.mxu0 0
        %3501 = vmatpush2.bf16.msra.mxu0 0
        %3502 = vmatprep.subr.bf16.mxu0 0
        %3503 = vmatpush2.bf16.msra.mxu0 0
        %3504 = vmatprep.mubr.bf16.mxu0 0
        %3505 = vmatmul.mubr.bf16.gmra.mxu0 %v3470
        %v3506 = vpop.f32.mrf.mxu0
        %v3507 = vadd.f32 0.0, %v3506
        %v3508 = vpop.f32.mrf.mxu0
        %v3509 = vadd.f32 0.0, %v3508
        %v3510 = vpop.f32.mrf.mxu0
        %v3511 = vpop.f32.mrf.mxu0
        %3512 = vdwg.mxu0
        %3513 = vmatprep.subr.bf16.mxu0 0
        %3514 = vmatpush1.bf16.msra.mxu0 0
        %3515 = vmatprep.subr.bf16.mxu0 0
        %3516 = vmatpush1.bf16.msra.mxu0 0
        %3517 = vmatprep.subr.bf16.mxu0 0
        %3518 = vmatpush1.bf16.msra.mxu0 0
        %3519 = vmatprep.subr.bf16.mxu0 0
        %3520 = vmatpush1.bf16.msra.mxu0 0
        %3521 = vmatprep.subr.bf16.mxu0 %v1103
        %3522 = vmatpush1.bf16.msra.mxu0 %v1102
        %3523 = vmatprep.subr.bf16.mxu0 %v1099
        %3524 = vmatpush1.bf16.msra.mxu0 %v1098
        %3525 = vmatprep.subr.bf16.mxu0 %v1095
        %3526 = vmatpush1.bf16.msra.mxu0 %v1094
        %3527 = vmatprep.subr.bf16.mxu0 %v1091
        %3528 = vmatpush1.bf16.msra.mxu0 %v1090
        %3529 = vmatprep.subr.bf16.mxu0 0
        %3530 = vmatpush2.bf16.msra.mxu0 0
        %3531 = vmatprep.subr.bf16.mxu0 0
        %3532 = vmatpush2.bf16.msra.mxu0 0
        %3533 = vmatprep.subr.bf16.mxu0 0
        %3534 = vmatpush2.bf16.msra.mxu0 0
        %3535 = vmatprep.subr.bf16.mxu0 0
        %3536 = vmatpush2.bf16.msra.mxu0 0
        %3537 = vmatprep.subr.bf16.mxu0 0
        %3538 = vmatpush2.bf16.msra.mxu0 0
        %3539 = vmatprep.subr.bf16.mxu0 0
        %3540 = vmatpush2.bf16.msra.mxu0 0
        %3541 = vmatprep.subr.bf16.mxu0 0
        %3542 = vmatpush2.bf16.msra.mxu0 0
        %3543 = vmatprep.subr.bf16.mxu0 0
        %3544 = vmatpush2.bf16.msra.mxu0 0
        %3545 = vmatprep.mubr.bf16.mxu0 0
        %3546 = vmatmul.mubr.bf16.gmra.mxu0 %v3470
        %v3547 = vpop.f32.mrf.mxu0
        %v3548 = vadd.f32 0.0, %v3547
        %v3549 = vpop.f32.mrf.mxu0
        %v3550 = vadd.f32 0.0, %v3549
        %v3551 = vpop.f32.mrf.mxu0
        %v3552 = vpop.f32.mrf.mxu0
        %3553 = vdwg.mxu0
        %v3556 = vunpack.c.l.b16 %v3466
        %v3557 = vunpack.c.l.b16 %v3467
        %v3558 = vsel %vm991, %v3557, %v3556
        %v3559 = vpack.c.b16 %v3558, %v3558
        %v3561 = vsel %vm767, %v3559, 0
        %3563 = vmatprep.subr.bf16.mxu0 0
        %3564 = vmatpush1.bf16.msra.mxu0 0
        %3565 = vmatprep.subr.bf16.mxu0 0
        %3566 = vmatpush1.bf16.msra.mxu0 0
        %3567 = vmatprep.subr.bf16.mxu0 0
        %3568 = vmatpush1.bf16.msra.mxu0 0
        %3569 = vmatprep.subr.bf16.mxu0 0
        %3570 = vmatpush1.bf16.msra.mxu0 0
        %3571 = vmatprep.subr.bf16.mxu0 %v1272
        %3572 = vmatpush1.bf16.msra.mxu0 %v1271
        %3573 = vmatprep.subr.bf16.mxu0 %v1268
        %3574 = vmatpush1.bf16.msra.mxu0 %v1267
        %3575 = vmatprep.subr.bf16.mxu0 %v1264
        %3576 = vmatpush1.bf16.msra.mxu0 %v1263
        %3577 = vmatprep.subr.bf16.mxu0 %v1260
        %3578 = vmatpush1.bf16.msra.mxu0 %v1259
        %3579 = vmatprep.subr.bf16.mxu0 0
        %3580 = vmatpush2.bf16.msra.mxu0 0
        %3581 = vmatprep.subr.bf16.mxu0 0
        %3582 = vmatpush2.bf16.msra.mxu0 0
        %3583 = vmatprep.subr.bf16.mxu0 0
        %3584 = vmatpush2.bf16.msra.mxu0 0
        %3585 = vmatprep.subr.bf16.mxu0 0
        %3586 = vmatpush2.bf16.msra.mxu0 0
        %3587 = vmatprep.subr.bf16.mxu0 0
        %3588 = vmatpush2.bf16.msra.mxu0 0
        %3589 = vmatprep.subr.bf16.mxu0 0
        %3590 = vmatpush2.bf16.msra.mxu0 0
        %3591 = vmatprep.subr.bf16.mxu0 0
        %3592 = vmatpush2.bf16.msra.mxu0 0
        %3593 = vmatprep.subr.bf16.mxu0 0
        %3594 = vmatpush2.bf16.msra.mxu0 0
        %3595 = vmatprep.mubr.bf16.mxu0 0
        %3596 = vmatmul.mubr.bf16.gmra.mxu0 %v3561
        %v3597 = vpop.f32.mrf.mxu0
        %v3598 = vadd.f32 %v3507, %v3597
        %v3599 = vpop.f32.mrf.mxu0
        %v3600 = vadd.f32 %v3509, %v3599
        %v3601 = vpop.f32.mrf.mxu0
        %v3602 = vpop.f32.mrf.mxu0
        %3603 = vdwg.mxu0
        %3604 = vmatprep.subr.bf16.mxu0 0
        %3605 = vmatpush1.bf16.msra.mxu0 0
        %3606 = vmatprep.subr.bf16.mxu0 0
        %3607 = vmatpush1.bf16.msra.mxu0 0
        %3608 = vmatprep.subr.bf16.mxu0 0
        %3609 = vmatpush1.bf16.msra.mxu0 0
        %3610 = vmatprep.subr.bf16.mxu0 0
        %3611 = vmatpush1.bf16.msra.mxu0 0
        %3612 = vmatprep.subr.bf16.mxu0 %v1274
        %3613 = vmatpush1.bf16.msra.mxu0 %v1273
        %3614 = vmatprep.subr.bf16.mxu0 %v1270
        %3615 = vmatpush1.bf16.msra.mxu0 %v1269
        %3616 = vmatprep.subr.bf16.mxu0 %v1266
        %3617 = vmatpush1.bf16.msra.mxu0 %v1265
        %3618 = vmatprep.subr.bf16.mxu0 %v1262
        %3619 = vmatpush1.bf16.msra.mxu0 %v1261
        %3620 = vmatprep.subr.bf16.mxu0 0
        %3621 = vmatpush2.bf16.msra.mxu0 0
        %3622 = vmatprep.subr.bf16.mxu0 0
        %3623 = vmatpush2.bf16.msra.mxu0 0
        %3624 = vmatprep.subr.bf16.mxu0 0
        %3625 = vmatpush2.bf16.msra.mxu0 0
        %3626 = vmatprep.subr.bf16.mxu0 0
        %3627 = vmatpush2.bf16.msra.mxu0 0
        %3628 = vmatprep.subr.bf16.mxu0 0
        %3629 = vmatpush2.bf16.msra.mxu0 0
        %3630 = vmatprep.subr.bf16.mxu0 0
        %3631 = vmatpush2.bf16.msra.mxu0 0
        %3632 = vmatprep.subr.bf16.mxu0 0
        %3633 = vmatpush2.bf16.msra.mxu0 0
        %3634 = vmatprep.subr.bf16.mxu0 0
        %3635 = vmatpush2.bf16.msra.mxu0 0
        %3636 = vmatprep.mubr.bf16.mxu0 0
        %3637 = vmatmul.mubr.bf16.gmra.mxu0 %v3561
        %v3638 = vpop.f32.mrf.mxu0
        %v3639 = vadd.f32 %v3548, %v3638
        %v3640 = vpop.f32.mrf.mxu0
        %v3641 = vadd.f32 %v3550, %v3640
        %v3642 = vpop.f32.mrf.mxu0
        %v3643 = vpop.f32.mrf.mxu0
        %3644 = vdwg.mxu0
        %v3645 = vpack.c.bf16 %v3203, %v3203
        %3646 = vmatprep.subr.bf16.mxu0 %v1502
        %3647 = vmatpush1.bf16.msra.mxu0 %v1501
        %3648 = vmatprep.subr.bf16.mxu0 %v1498
        %3649 = vmatpush1.bf16.msra.mxu0 %v1497
        %3650 = vmatprep.subr.bf16.mxu0 %v1494
        %3651 = vmatpush1.bf16.msra.mxu0 %v1493
        %3652 = vmatprep.subr.bf16.mxu0 %v1490
        %3653 = vmatpush1.bf16.msra.mxu0 %v1489
        %3654 = vmatprep.subr.bf16.mxu0 %v1486
        %3655 = vmatpush1.bf16.msra.mxu0 %v1485
        %3656 = vmatprep.subr.bf16.mxu0 %v1482
        %3657 = vmatpush1.bf16.msra.mxu0 %v1481
        %3658 = vmatprep.subr.bf16.mxu0 %v1478
        %3659 = vmatpush1.bf16.msra.mxu0 %v1477
        %3660 = vmatprep.subr.bf16.mxu0 %v1474
        %3661 = vmatpush1.bf16.msra.mxu0 %v1473
        %3662 = vmatprep.subr.bf16.mxu0 0
        %3663 = vmatpush2.bf16.msra.mxu0 0
        %3664 = vmatprep.subr.bf16.mxu0 0
        %3665 = vmatpush2.bf16.msra.mxu0 0
        %3666 = vmatprep.subr.bf16.mxu0 0
        %3667 = vmatpush2.bf16.msra.mxu0 0
        %3668 = vmatprep.subr.bf16.mxu0 0
        %3669 = vmatpush2.bf16.msra.mxu0 0
        %3670 = vmatprep.subr.bf16.mxu0 0
        %3671 = vmatpush2.bf16.msra.mxu0 0
        %3672 = vmatprep.subr.bf16.mxu0 0
        %3673 = vmatpush2.bf16.msra.mxu0 0
        %3674 = vmatprep.subr.bf16.mxu0 0
        %3675 = vmatpush2.bf16.msra.mxu0 0
        %3676 = vmatprep.subr.bf16.mxu0 0
        %3677 = vmatpush2.bf16.msra.mxu0 0
        %3678 = vmatprep.mubr.bf16.mxu0 0
        %3679 = vmatmul.mubr.bf16.gmra.mxu0 %v3645
        %v3680 = vpop.f32.mrf.mxu0
        %v3681 = vadd.f32 0.0, %v3680
        %v3682 = vpop.f32.mrf.mxu0
        %v3683 = vadd.f32 0.0, %v3682
        %v3684 = vpop.f32.mrf.mxu0
        %v3685 = vpop.f32.mrf.mxu0
        %3686 = vdwg.mxu0
        %3687 = vmatprep.subr.bf16.mxu0 %v1504
        %3688 = vmatpush1.bf16.msra.mxu0 %v1503
        %3689 = vmatprep.subr.bf16.mxu0 %v1500
        %3690 = vmatpush1.bf16.msra.mxu0 %v1499
        %3691 = vmatprep.subr.bf16.mxu0 %v1496
        %3692 = vmatpush1.bf16.msra.mxu0 %v1495
        %3693 = vmatprep.subr.bf16.mxu0 %v1492
        %3694 = vmatpush1.bf16.msra.mxu0 %v1491
        %3695 = vmatprep.subr.bf16.mxu0 %v1488
        %3696 = vmatpush1.bf16.msra.mxu0 %v1487
        %3697 = vmatprep.subr.bf16.mxu0 %v1484
        %3698 = vmatpush1.bf16.msra.mxu0 %v1483
        %3699 = vmatprep.subr.bf16.mxu0 %v1480
        %3700 = vmatpush1.bf16.msra.mxu0 %v1479
        %3701 = vmatprep.subr.bf16.mxu0 %v1476
        %3702 = vmatpush1.bf16.msra.mxu0 %v1475
        %3703 = vmatprep.subr.bf16.mxu0 0
        %3704 = vmatpush2.bf16.msra.mxu0 0
        %3705 = vmatprep.subr.bf16.mxu0 0
        %3706 = vmatpush2.bf16.msra.mxu0 0
        %3707 = vmatprep.subr.bf16.mxu0 0
        %3708 = vmatpush2.bf16.msra.mxu0 0
        %3709 = vmatprep.subr.bf16.mxu0 0
        %3710 = vmatpush2.bf16.msra.mxu0 0
        %3711 = vmatprep.subr.bf16.mxu0 0
        %3712 = vmatpush2.bf16.msra.mxu0 0
        %3713 = vmatprep.subr.bf16.mxu0 0
        %3714 = vmatpush2.bf16.msra.mxu0 0
        %3715 = vmatprep.subr.bf16.mxu0 0
        %3716 = vmatpush2.bf16.msra.mxu0 0
        %3717 = vmatprep.subr.bf16.mxu0 0
        %3718 = vmatpush2.bf16.msra.mxu0 0
        %3719 = vmatprep.mubr.bf16.mxu0 0
        %3720 = vmatmul.mubr.bf16.gmra.mxu0 %v3645
        %v3721 = vpop.f32.mrf.mxu0
        %v3722 = vadd.f32 0.0, %v3721
        %v3723 = vpop.f32.mrf.mxu0
        %v3724 = vadd.f32 0.0, %v3723
        %v3725 = vpop.f32.mrf.mxu0
        %v3726 = vpop.f32.mrf.mxu0
        %3727 = vdwg.mxu0
        %v3728 = vadd.f32 %v3598, %v3681
        %v3729 = vadd.f32 %v3600, %v3683
        %v3730 = vadd.f32 %v3639, %v3722
        %v3731 = vadd.f32 %v3641, %v3724
        %v3732 = vpack.c.bf16 %v3201, %v3201
        %3733 = vmatprep.subr.bf16.mxu0 %v1749
        %3734 = vmatpush1.bf16.msra.mxu0 %v1748
        %3735 = vmatprep.subr.bf16.mxu0 %v1745
        %3736 = vmatpush1.bf16.msra.mxu0 %v1744
        %3737 = vmatprep.subr.bf16.mxu0 %v1741
        %3738 = vmatpush1.bf16.msra.mxu0 %v1740
        %3739 = vmatprep.subr.bf16.mxu0 %v1737
        %3740 = vmatpush1.bf16.msra.mxu0 %v1736
        %3741 = vmatprep.subr.bf16.mxu0 %v1733
        %3742 = vmatpush1.bf16.msra.mxu0 %v1732
        %3743 = vmatprep.subr.bf16.mxu0 %v1729
        %3744 = vmatpush1.bf16.msra.mxu0 %v1728
        %3745 = vmatprep.subr.bf16.mxu0 %v1725
        %3746 = vmatpush1.bf16.msra.mxu0 %v1724
        %3747 = vmatprep.subr.bf16.mxu0 %v1721
        %3748 = vmatpush1.bf16.msra.mxu0 %v1720
        %3749 = vmatprep.subr.bf16.mxu0 0
        %3750 = vmatpush2.bf16.msra.mxu0 0
        %3751 = vmatprep.subr.bf16.mxu0 0
        %3752 = vmatpush2.bf16.msra.mxu0 0
        %3753 = vmatprep.subr.bf16.mxu0 0
        %3754 = vmatpush2.bf16.msra.mxu0 0
        %3755 = vmatprep.subr.bf16.mxu0 0
        %3756 = vmatpush2.bf16.msra.mxu0 0
        %3757 = vmatprep.subr.bf16.mxu0 0
        %3758 = vmatpush2.bf16.msra.mxu0 0
        %3759 = vmatprep.subr.bf16.mxu0 0
        %3760 = vmatpush2.bf16.msra.mxu0 0
        %3761 = vmatprep.subr.bf16.mxu0 0
        %3762 = vmatpush2.bf16.msra.mxu0 0
        %3763 = vmatprep.subr.bf16.mxu0 0
        %3764 = vmatpush2.bf16.msra.mxu0 0
        %3765 = vmatprep.mubr.bf16.mxu0 0
        %3766 = vmatmul.mubr.bf16.gmra.mxu0 %v3732
        %v3767 = vpop.f32.mrf.mxu0
        %v3768 = vadd.f32 0.0, %v3767
        %v3769 = vpop.f32.mrf.mxu0
        %v3770 = vadd.f32 0.0, %v3769
        %v3771 = vpop.f32.mrf.mxu0
        %v3772 = vpop.f32.mrf.mxu0
        %3773 = vdwg.mxu0
        %3774 = vmatprep.subr.bf16.mxu0 %v1751
        %3775 = vmatpush1.bf16.msra.mxu0 %v1750
        %3776 = vmatprep.subr.bf16.mxu0 %v1747
        %3777 = vmatpush1.bf16.msra.mxu0 %v1746
        %3778 = vmatprep.subr.bf16.mxu0 %v1743
        %3779 = vmatpush1.bf16.msra.mxu0 %v1742
        %3780 = vmatprep.subr.bf16.mxu0 %v1739
        %3781 = vmatpush1.bf16.msra.mxu0 %v1738
        %3782 = vmatprep.subr.bf16.mxu0 %v1735
        %3783 = vmatpush1.bf16.msra.mxu0 %v1734
        %3784 = vmatprep.subr.bf16.mxu0 %v1731
        %3785 = vmatpush1.bf16.msra.mxu0 %v1730
        %3786 = vmatprep.subr.bf16.mxu0 %v1727
        %3787 = vmatpush1.bf16.msra.mxu0 %v1726
        %3788 = vmatprep.subr.bf16.mxu0 %v1723
        %3789 = vmatpush1.bf16.msra.mxu0 %v1722
        %3790 = vmatprep.subr.bf16.mxu0 0
        %3791 = vmatpush2.bf16.msra.mxu0 0
        %3792 = vmatprep.subr.bf16.mxu0 0
        %3793 = vmatpush2.bf16.msra.mxu0 0
        %3794 = vmatprep.subr.bf16.mxu0 0
        %3795 = vmatpush2.bf16.msra.mxu0 0
        %3796 = vmatprep.subr.bf16.mxu0 0
        %3797 = vmatpush2.bf16.msra.mxu0 0
        %3798 = vmatprep.subr.bf16.mxu0 0
        %3799 = vmatpush2.bf16.msra.mxu0 0
        %3800 = vmatprep.subr.bf16.mxu0 0
        %3801 = vmatpush2.bf16.msra.mxu0 0
        %3802 = vmatprep.subr.bf16.mxu0 0
        %3803 = vmatpush2.bf16.msra.mxu0 0
        %3804 = vmatprep.subr.bf16.mxu0 0
        %3805 = vmatpush2.bf16.msra.mxu0 0
        %3806 = vmatprep.mubr.bf16.mxu0 0
        %3807 = vmatmul.mubr.bf16.gmra.mxu0 %v3732
        %v3808 = vpop.f32.mrf.mxu0
        %v3809 = vadd.f32 0.0, %v3808
        %v3810 = vpop.f32.mrf.mxu0
        %v3811 = vadd.f32 0.0, %v3810
        %v3812 = vpop.f32.mrf.mxu0
        %v3813 = vpop.f32.mrf.mxu0
        %3814 = vdwg.mxu0
        %v3815 = vadd.f32 %v3728, %v3768
        %v3816 = vadd.f32 %v3729, %v3770
        %v3817 = vadd.f32 %v3730, %v3809
        %v3818 = vadd.f32 %v3731, %v3811
        %v3819 = vadd.f32 %v3815, %v1874
        %v3820 = vadd.f32 %v3816, %v1878
        %v3821 = vadd.f32 %v3817, %v1882
        %v3822 = vadd.f32 %v3818, %v1886
        %v3823 = vxor.u32 %v3819, 2147483648
        %v3824 = vmul.f32 %v3823, 1.442695
        %v3825 = vpow.pop %v3824
        %v3826 = vadd.f32 %v3825, 1.0
        %v3827 = vrcp.pop %v3826
        %v3828 = vmul.f32 1.0, %v3827
        %v3829 = vxor.u32 %v3820, 2147483648
        %v3830 = vmul.f32 %v3829, 1.442695
        %v3831 = vpow.pop %v3830
        %v3832 = vadd.f32 %v3831, 1.0
        %v3833 = vrcp.pop %v3832
        %v3834 = vmul.f32 1.0, %v3833
        %v3835 = vtanh.pop %v3821
        %v3836 = vxor.u32 %v3822, 2147483648
        %v3837 = vmul.f32 %v3836, 1.442695
        %v3838 = vpow.pop %v3837
        %v3839 = vadd.f32 %v3838, 1.0
        %v3840 = vrcp.pop %v3839
        %v3841 = vmul.f32 1.0, %v3840
        %v3842 = vmul.f32 %v3834, %v3201
        %v3843 = vmul.f32 %v3828, %v3835
        %v3844 = vadd.f32 %v3842, %v3843
        %v3845 = vtanh.pop %v3844
        %v3846 = vmul.f32 %v3841, %v3845
        %s3847 = scalar_lea.vmem %s627, 6
        %3848 = vst [vmem:[%s3847] sm:$0x3] %v3846
        %3849 = vst [vmem:[#allocation2] sm:$0x3] %v3846
        %3850 = vst [vmem:[#allocation3] sm:$0x3] %v3844
        %3851 = vst [vmem:[#allocation5] sm:$0x3] %v3846
        %3852 = vst [vmem:[#allocation7] sm:$0x3] %v3844
        %s3853 = smul.u32 4, %s30
        %p3854 = scmp.lt.s32.totalorder %s3853, 7
        %s3855 = scalar_select %p3854, %s3853, 7
        %s3856 = smul.addr %s3855, 2
        %s3857 = scalar_lea.vmem %s14, %s3856
        // Predicated region
        $region119: #{dsa_rnn_forward.5} parent=109 // pred_check
          %p3858 = pneg %p357
        $region120: #{dsa_rnn_forward.5} parent=109 // pred_check_branch
          %3860 = sbr.rel (%p3858) target = $region122
        $region121: #{dsa_rnn_forward.5} parent=109 // pred_region
          %s3861 = smul.u32 4, %s30
        $region122: #{dsa_rnn_forward.5} parent=109 // pred_fallthru
          _
        // Predicated region
        $region123: #{dsa_rnn_forward.5} parent=109 // pred_check
          %p3862 = pneg %p378
        $region124: #{dsa_rnn_forward.5} parent=109 // pred_check_branch
          %3864 = sbr.rel (%p3862) target = $region126
        $region125: #{dsa_rnn_forward.5} parent=109 // pred_region
          %s3866 = ssub.s32 32, 32
          %3867 = vsyncadd [#allocation6], %s3866
          %s3869 = sshll.u32 [#allocation5], 4
          %s3870 = int_to_ptr.vmem [resolvable:$true] %s3869
          %3872 = dma.vmem_to_hbm [thread:$0]  %s3870, 32, %s15, [#allocation6]
        $region126: #{dsa_rnn_forward.5} parent=109 // pred_fallthru
          _
        // Predicated region
        $region127: #{dsa_rnn_forward.5} parent=109 // pred_check
          %p3873 = pneg %p399
        $region128: #{dsa_rnn_forward.5} parent=109 // pred_check_branch
          %3875 = sbr.rel (%p3873) target = $region130
        $region129: #{dsa_rnn_forward.5} parent=109 // pred_region
          %s3877 = ssub.s32 32, 32
          %3878 = vsyncadd [#allocation8], %s3877
          %s3880 = sshll.u32 [#allocation7], 4
          %s3881 = int_to_ptr.vmem [resolvable:$true] %s3880
          %3883 = dma.vmem_to_hbm [thread:$0]  %s3881, 32, %s16, [#allocation8]
        $region130: #{dsa_rnn_forward.5} parent=109 // pred_fallthru
          _
        // Predicated region
        $region131: #{dsa_rnn_forward.5} parent=109 // pred_check
          %p3884 = pneg %p378
        $region132: #{dsa_rnn_forward.5} parent=109 // pred_check_branch
          %3886 = sbr.rel (%p3884) target = $region134
        $region133: #{dsa_rnn_forward.5} parent=109 // pred_region
          %3887 = dma.done [#allocation6], 32
        $region134: #{dsa_rnn_forward.5} parent=109 // pred_fallthru
          _
        // Predicated region
        $region135: #{dsa_rnn_forward.5} parent=109 // pred_check
          %p3888 = pneg %p399
        $region136: #{dsa_rnn_forward.5} parent=109 // pred_check_branch
          %3890 = sbr.rel (%p3888) target = $region138
        $region137: #{dsa_rnn_forward.5} parent=109 // pred_region
          %3891 = dma.done [#allocation8], 32
        $region138: #{dsa_rnn_forward.5} parent=109 // pred_fallthru
          _
      $region110: #{dsa_rnn_forward.5} parent=5 // pred_fallthru
        _
      %p3892 = scmp.le.s32.totalorder 2, %s25
      // Predicated region
      $region139: #{dsa_rnn_forward.5} parent=5 // pred_check
        %p3893 = pneg %p3892
      $region140: #{dsa_rnn_forward.5} parent=5 // pred_check_branch
        %3895 = sbr.rel (%p3893) target = $region142
      $region141: #{dsa_rnn_forward.5} parent=5 // pred_region
        %s3896 = ssub.s32 %s25, 2
        // Predicated region
        $region143: #{dsa_rnn_forward.5} parent=141 // pred_check
          %p3897 = pneg %p363
        $region144: #{dsa_rnn_forward.5} parent=141 // pred_check_branch
          %3899 = sbr.rel (%p3897) target = $region146
        $region145: #{dsa_rnn_forward.5} parent=141 // pred_region
          %s3900 = smul.u32 4, %s31
          %p3901 = scmp.lt.s32.totalorder %s3900, 7
          %s3902 = scalar_select %p3901, %s3900, 7
          %s3903 = smul.addr %s3902, 2
          %s3904 = scalar_lea.vmem %s14, %s3903
        $region146: #{dsa_rnn_forward.5} parent=141 // pred_fallthru
          _
      $region142: #{dsa_rnn_forward.5} parent=5 // pred_fallthru
        _
    $region6: #{dsa_rnn_forward.5} parent=1 // loop_footer
      %s29 = sadd.s32 1, %s25
    $region7: #{dsa_rnn_forward.5} parent=1 // loop_footer_branch
      %24 = sbr.rel target = $region3
    $region8: #{dsa_rnn_forward.5} parent=1 // loop_exit
      _
    %3905 = vsyncpa [#allocation6], 1
    %s3906 = scalar_lea.sflag [#allocation6], 1
    %3907 = vsyncpa %s3906, 1
    %3908 = vsyncpa [#allocation8], 1

</llo_original>
